<compile_context>
chip_gen: v5e
topology: v5e:2x2
jax: 0.10.0
libtpu: 0.0.40
codegen_flags: <defaults>
</compile_context>

<pallas_src>
import math
import numpy as np

import jax
import jax.numpy as jnp
from jax.experimental import pallas as pl
from jax.experimental.pallas import tpu as pltpu


def vca_masking_kernel(vlen_ref,                     # (B,) int32 in SMEM
                       aud_ref, vid_ref,             # (B*T, 512) f32 in VMEM
                       wq_ref, bq_ref,               # (512, Od) bf16, (1, Od) f32
                       wk_ref, bk_ref,
                       wv_ref, bv_ref,
                       b1_ref, b2_ref, bf_ref,       # (1, 512) f32 biases
                       w1_hbm, w2_hbm, wfe_hbm, wfv_hbm,   # bf16 weights left in HBM
                       out_ref,                      # (B*T, 512) f32
                       w1_vmem, w2_vmem, wfe_vmem, wfv_vmem, dma_sem):
    BT, D = aud_ref.shape
    B = vlen_ref.shape[0]
    T = BT // B
    Od = wq_ref.shape[1]
    scale = 1.0 / math.sqrt(Od)
    bf16 = jnp.bfloat16
    f32 = jnp.float32

    # --- kick off late-stage weight DMAs; they overlap the q/k/v + attention phase ---
    cp_w1 = pltpu.make_async_copy(w1_hbm, w1_vmem, dma_sem.at[0])
    cp_w2 = pltpu.make_async_copy(w2_hbm, w2_vmem, dma_sem.at[1])
    cp_fe = pltpu.make_async_copy(wfe_hbm, wfe_vmem, dma_sem.at[2])
    cp_fv = pltpu.make_async_copy(wfv_hbm, wfv_vmem, dma_sem.at[3])
    cp_w1.start(); cp_w2.start(); cp_fe.start(); cp_fv.start()

    # --- narrow (BT, 1) per-row columns: batch base row + absolute validity threshold ---
    # (scalar SMEM reads happen before any DMA wait)
    row = jax.lax.broadcasted_iota(jnp.int32, (BT, 1), 0)
    base = jnp.zeros((BT, 1), jnp.int32)
    vlen_col = jnp.zeros((BT, 1), jnp.int32) + vlen_ref[0]
    for b in range(1, B):
        sel = row >= (b * T)
        base = jnp.where(sel, b * T, base)
        vlen_col = jnp.where(sel, vlen_ref[b], vlen_col)
    thresh = base + vlen_col            # row r (in batch b) is valid iff r < thresh[r]

    aud = aud_ref[...]                   # f32, reused for the elementwise enhance
    aud_bf = aud.astype(bf16)
    vid_bf = vid_ref[...].astype(bf16)

    # --- q/k/v projections on the whole (B*T, 512) slab (bf16 in, f32 accum) ---
    q = jnp.dot(aud_bf, wq_ref[...], preferred_element_type=f32) + bq_ref[...]
    k = jnp.dot(vid_bf, wk_ref[...], preferred_element_type=f32) + bk_ref[...]
    v = jnp.dot(vid_bf, wv_ref[...], preferred_element_type=f32) + bv_ref[...]

    # --- block-diagonal masked-softmax attention over the whole slab ---
    # q @ k^T without an explicit transpose (contract last axes); batch-block and
    # v_len column masks come from one where on (BT, 1) columns vs. a col iota.
    s = jax.lax.dot_general(q.astype(bf16), k.astype(bf16),
                            (((1,), (1,)), ((), ())),
                            preferred_element_type=f32) * scale        # (BT, BT)
    col = jax.lax.broadcasted_iota(jnp.int32, (BT, BT), 1)
    valid = (col >= base) & (col < thresh)
    s = jnp.where(valid, s, -jnp.inf)
    m = jnp.max(s, axis=-1, keepdims=True)
    p = jnp.exp(s - m)
    att = p * pl.reciprocal(jnp.sum(p, axis=-1, keepdims=True), approx=True)
    val = jnp.dot(att.astype(bf16), v.astype(bf16),
                  preferred_element_type=f32)                          # (BT, Od)

    # --- [prev | center | next] conv-tap slab in registers (XLU roll + narrow masks) ---
    prev = pltpu.roll(val, 1, axis=0)           # prev[t] = val[t-1]  (wraps at row 0)
    nxt = pltpu.roll(val, BT - 1, axis=0)       # nxt[t]  = val[t+1]  (wraps at last row)
    prev = jnp.where(row == base, 0.0, prev)            # zero first row of each batch
    nxt = jnp.where(row == base + (T - 1), 0.0, nxt)    # zero last row of each batch
    xcat_bf = jnp.concatenate([prev, val, nxt], axis=1).astype(bf16)   # (BT, 3*Od)

    # --- mask head: merged Conv1d(k=3) matmul -> ReLU -> Conv1d(k=1) matmul ---
    cp_w1.wait()
    h = jnp.dot(xcat_bf, w1_vmem[...], preferred_element_type=f32) + b1_ref[...]
    h = jnp.maximum(h, 0.0)
    cp_w2.wait()
    mpre = jnp.dot(h.astype(bf16), w2_vmem[...], preferred_element_type=f32) + b2_ref[...]

    # --- sequence-length masking via a narrow 0/1 column (== sigmoid(-inf) = 0) ---
    validf = jnp.where(row < thresh, 1.0, 0.0)          # (BT, 1) f32
    mask1p = jax.nn.sigmoid(mpre) * validf + 1.0        # mask + 1
    enhanced = aud * mask1p                             # == aud * mask + aud

    # --- fusion Linear(1024->512): concat folded into two pre-split matmuls ---
    cp_fe.wait()
    cp_fv.wait()
    out = (jnp.dot(enhanced.astype(bf16), wfe_vmem[...], preferred_element_type=f32)
           + jnp.dot(vid_bf, wfv_vmem[...], preferred_element_type=f32)
           + bf_ref[...])
    out_ref[...] = out


def prepare_params(params):
    """One-time weight preparation (bf16 casts, conv reshape, fusion-weight split).

    Done once at init so the per-call path never re-reads/casts the f32 weights.
    """
    D = params["w2"].shape[0]
    Od = params["wq"].shape[1]
    bf16 = jnp.bfloat16
    return {
        "wq": params["wq"].astype(bf16), "bq": params["bq"],
        "wk": params["wk"].astype(bf16), "bk": params["bk"],
        "wv": params["wv"].astype(bf16), "bv": params["bv"],
        "w1": params["w1"].reshape(3 * Od, D).astype(bf16),   # [tap0; tap1; tap2]
        "b1": params["b1"],
        "w2": params["w2"].astype(bf16), "b2": params["b2"],
        "wfe": params["wf"][:D, :].astype(bf16),              # acts on `enhanced`
        "wfv": params["wf"][D:, :].astype(bf16),              # acts on `vid`
        "bf": params["bf"],
    }


def vca_masking_forward(aud, vid, v_len, prep):
    B, T, D = aud.shape
    Od = prep["wq"].shape[1]
    BT = B * T

    aud2 = aud.reshape(BT, D).astype(jnp.float32)
    vid2 = vid.reshape(BT, D).astype(jnp.float32)

    smem = pl.BlockSpec(memory_space=pltpu.MemorySpace.SMEM)
    vmem = pl.BlockSpec(memory_space=pltpu.MemorySpace.VMEM)
    anyspace = pl.BlockSpec(memory_space=pl.ANY)

    out2 = pl.pallas_call(
        vca_masking_kernel,
        out_shape=jax.ShapeDtypeStruct((BT, D), jnp.float32),
        in_specs=[smem] + [vmem] * 11 + [anyspace] * 4,
        out_specs=vmem,
        scratch_shapes=[
            pltpu.VMEM((3 * Od, D), jnp.bfloat16),   # w1 landing buffer
            pltpu.VMEM((D, D), jnp.bfloat16),        # w2
            pltpu.VMEM((D, D), jnp.bfloat16),        # wfe
            pltpu.VMEM((D, D), jnp.bfloat16),        # wfv
            pltpu.SemaphoreType.DMA((4,)),
        ],
        # No grid -> no pipelining -> single-buffered; ~4 MB VMEM used, 32 MiB limit is
        # valid on every generation (v7x has 64 MiB physical).
        compiler_params=pltpu.CompilerParams(vmem_limit_bytes=32 << 20),
    )(v_len.astype(jnp.int32), aud2, vid2,
      prep["wq"], prep["bq"], prep["wk"], prep["bk"], prep["wv"], prep["bv"],
      prep["b1"], prep["b2"], prep["bf"],
      prep["w1"], prep["w2"], prep["wfe"], prep["wfv"])
    return out2.reshape(B, T, D)


def reference_forward(aud, vid, v_len, params):
    """Pure-JAX f32 reference mirroring the PyTorch forward (eval mode)."""
    B, T, D = aud.shape
    Od = params["wq"].shape[1]
    q = aud @ params["wq"] + params["bq"]
    k = vid @ params["wk"] + params["bk"]
    v = vid @ params["wv"] + params["bv"]
    att = jnp.einsum("btd,bsd->bts", q, k) / math.sqrt(Od)
    col = jnp.arange(T)[None, None, :]
    att = jnp.where(col < v_len[:, None, None], att, -jnp.inf)
    att = jax.nn.softmax(att, axis=-1)
    value = jnp.einsum("bts,bsd->btd", att, v)
    prev = jnp.pad(value, ((0, 0), (1, 0), (0, 0)))[:, :T, :]
    nxt = jnp.pad(value, ((0, 0), (0, 1), (0, 0)))[:, 1:, :]
    h = (prev @ params["w1"][0] + value @ params["w1"][1]
         + nxt @ params["w1"][2] + params["b1"])
    h = jnp.maximum(h, 0.0)
    mpre = h @ params["w2"] + params["b2"]
    row = jnp.arange(T)[None, :, None]
    mpre = jnp.where(row < v_len[:, None, None], mpre, -jnp.inf)
    mask = jax.nn.sigmoid(mpre)
    enhanced = aud * mask + aud
    fused = jnp.concatenate([enhanced, vid], axis=-1)
    return fused @ params["wf"] + params["bf"]


def init_params(key, D=512, out_dim=256):
    ks = jax.random.split(key, 7)
    s = 0.02
    return {
        "wq": jax.random.normal(ks[0], (D, out_dim), jnp.float32) * s,
        "bq": jnp.zeros((1, out_dim), jnp.float32),
        "wk": jax.random.normal(ks[1], (D, out_dim), jnp.float32) * s,
        "bk": jnp.zeros((1, out_dim), jnp.float32),
        "wv": jax.random.normal(ks[2], (D, out_dim), jnp.float32) * s,
        "bv": jnp.zeros((1, out_dim), jnp.float32),
        # Conv1d(out_dim, 512, 3, padding=1): stored tap-major, (3, out_dim, 512)
        "w1": jax.random.normal(ks[3], (3, out_dim, D), jnp.float32) * s,
        "b1": jax.random.normal(ks[4], (1, D), jnp.float32) * s,
        # Conv1d(512, 512, 1): stored as (512, 512)
        "w2": jax.random.normal(ks[5], (D, D), jnp.float32) * s,
        "b2": jnp.zeros((1, D), jnp.float32),
        # Linear(1024, 512): stored as (1024, 512)
        "wf": jax.random.normal(ks[6], (2 * D, D), jnp.float32) * s,
        "bf": jnp.zeros((1, D), jnp.float32),
    }


if __name__ == "__main__":
    key = jax.random.PRNGKey(0)
    B, T, D, Od = 2, 16, 512, 256

    k_aud, k_vid, k_par = jax.random.split(key, 3)
    aud = jax.random.normal(k_aud, (B, T, D), jnp.float32)
    vid = jax.random.normal(k_vid, (B, T, D), jnp.float32)
    v_len = jnp.array([9, 16], dtype=jnp.int32)
    params = init_params(k_par, D=D, out_dim=Od)

    prep = prepare_params(params)   # one-time weight prep, hoisted out of the hot path
    out = vca_masking_forward(aud, vid, v_len, prep)
    out = jax.block_until_ready(out)

    ref = reference_forward(aud, vid, v_len, params)
    assert out.shape == (B, T, D)
    assert np.all(np.isfinite(np.asarray(out)))
    np.testing.assert_allclose(np.asarray(out), np.asarray(ref), rtol=2e-2, atol=2e-2)

    print("KERNEL_OK")
</pallas_src>

<mosaic_0001>
module attributes {stable_mosaic.version = 11 : i64} {
  func.func @vca_masking_kernel(%arg0: memref<2xi32, #tpu.memory_space<smem>>, %arg1: memref<32x512xf32, #tpu.memory_space<vmem>>, %arg2: memref<32x512xf32, #tpu.memory_space<vmem>>, %arg3: memref<512x256xbf16, #tpu.memory_space<vmem>>, %arg4: memref<1x256xf32, #tpu.memory_space<vmem>>, %arg5: memref<512x256xbf16, #tpu.memory_space<vmem>>, %arg6: memref<1x256xf32, #tpu.memory_space<vmem>>, %arg7: memref<512x256xbf16, #tpu.memory_space<vmem>>, %arg8: memref<1x256xf32, #tpu.memory_space<vmem>>, %arg9: memref<1x512xf32, #tpu.memory_space<vmem>>, %arg10: memref<1x512xf32, #tpu.memory_space<vmem>>, %arg11: memref<1x512xf32, #tpu.memory_space<vmem>>, %arg12: memref<768x512xbf16, #tpu.memory_space<any>>, %arg13: memref<512x512xbf16, #tpu.memory_space<any>>, %arg14: memref<512x512xbf16, #tpu.memory_space<any>>, %arg15: memref<512x512xbf16, #tpu.memory_space<any>>, %arg16: memref<32x512xf32, #tpu.memory_space<vmem>>, %arg17: memref<768x512xbf16, #tpu.memory_space<vmem>>, %arg18: memref<512x512xbf16, #tpu.memory_space<vmem>>, %arg19: memref<512x512xbf16, #tpu.memory_space<vmem>>, %arg20: memref<512x512xbf16, #tpu.memory_space<vmem>>, %arg21: memref<4x!tpu.dma_semaphore, #tpu.memory_space<semaphore_mem>>) attributes {dimension_semantics = [], scalar_prefetch = 0 : i64, scratch_operands = 5 : i64, tpu.core_type = #tpu.core_type<tc>} {
    %c0_i32 = arith.constant 0 : i32
    %0 = tpu.memref_slice %arg21[%c0_i32] : memref<4x!tpu.dma_semaphore, #tpu.memory_space<semaphore_mem>> -> memref<1x!tpu.dma_semaphore, #tpu.memory_space<semaphore_mem>>
    %1 = tpu.memref_squeeze %0 : memref<1x!tpu.dma_semaphore, #tpu.memory_space<semaphore_mem>> -> memref<!tpu.dma_semaphore, #tpu.memory_space<semaphore_mem>>
    tpu.enqueue_dma source(%arg12 : memref<768x512xbf16, #tpu.memory_space<any>>) target(%arg17 : memref<768x512xbf16, #tpu.memory_space<vmem>>) target_semaphore(%1 : memref<!tpu.dma_semaphore, #tpu.memory_space<semaphore_mem>>)
    %c1_i32 = arith.constant 1 : i32
    %2 = tpu.memref_slice %arg21[%c1_i32] : memref<4x!tpu.dma_semaphore, #tpu.memory_space<semaphore_mem>> -> memref<1x!tpu.dma_semaphore, #tpu.memory_space<semaphore_mem>>
    %3 = tpu.memref_squeeze %2 : memref<1x!tpu.dma_semaphore, #tpu.memory_space<semaphore_mem>> -> memref<!tpu.dma_semaphore, #tpu.memory_space<semaphore_mem>>
    tpu.enqueue_dma source(%arg13 : memref<512x512xbf16, #tpu.memory_space<any>>) target(%arg18 : memref<512x512xbf16, #tpu.memory_space<vmem>>) target_semaphore(%3 : memref<!tpu.dma_semaphore, #tpu.memory_space<semaphore_mem>>)
    %c2_i32 = arith.constant 2 : i32
    %4 = tpu.memref_slice %arg21[%c2_i32] : memref<4x!tpu.dma_semaphore, #tpu.memory_space<semaphore_mem>> -> memref<1x!tpu.dma_semaphore, #tpu.memory_space<semaphore_mem>>
    %5 = tpu.memref_squeeze %4 : memref<1x!tpu.dma_semaphore, #tpu.memory_space<semaphore_mem>> -> memref<!tpu.dma_semaphore, #tpu.memory_space<semaphore_mem>>
    tpu.enqueue_dma source(%arg14 : memref<512x512xbf16, #tpu.memory_space<any>>) target(%arg19 : memref<512x512xbf16, #tpu.memory_space<vmem>>) target_semaphore(%5 : memref<!tpu.dma_semaphore, #tpu.memory_space<semaphore_mem>>)
    %c3_i32 = arith.constant 3 : i32
    %6 = tpu.memref_slice %arg21[%c3_i32] : memref<4x!tpu.dma_semaphore, #tpu.memory_space<semaphore_mem>> -> memref<1x!tpu.dma_semaphore, #tpu.memory_space<semaphore_mem>>
    %7 = tpu.memref_squeeze %6 : memref<1x!tpu.dma_semaphore, #tpu.memory_space<semaphore_mem>> -> memref<!tpu.dma_semaphore, #tpu.memory_space<semaphore_mem>>
    tpu.enqueue_dma source(%arg15 : memref<512x512xbf16, #tpu.memory_space<any>>) target(%arg20 : memref<512x512xbf16, #tpu.memory_space<vmem>>) target_semaphore(%7 : memref<!tpu.dma_semaphore, #tpu.memory_space<semaphore_mem>>)
    %8 = tpu.iota {dimensions = array<i32: 0>} : vector<32x1xi32>
    %c0_i32_0 = arith.constant 0 : i32
    %9 = vector.broadcast %c0_i32_0 : i32 to vector<32x1xi32>
    %c0_i32_1 = arith.constant 0 : i32
    %10 = vector.broadcast %c0_i32_1 : i32 to vector<32x1xi32>
    %c0 = arith.constant 0 : index
    %11 = memref.load %arg0[%c0] : memref<2xi32, #tpu.memory_space<smem>>
    %12 = vector.broadcast %11 : i32 to vector<32x1xi32>
    %13 = arith.addi %10, %12 : vector<32x1xi32>
    %c16_i32 = arith.constant 16 : i32
    %14 = vector.broadcast %c16_i32 : i32 to vector<32x1xi32>
    %15 = arith.cmpi sge, %8, %14 : vector<32x1xi32>
    %c16_i32_2 = arith.constant 16 : i32
    %16 = vector.broadcast %c16_i32_2 : i32 to vector<32x1xi32>
    %17 = arith.select %15, %16, %9 : vector<32x1xi1>, vector<32x1xi32>
    %c1 = arith.constant 1 : index
    %18 = memref.load %arg0[%c1] : memref<2xi32, #tpu.memory_space<smem>>
    %19 = vector.broadcast %18 : i32 to vector<32x1xi32>
    %20 = arith.select %15, %19, %13 : vector<32x1xi1>, vector<32x1xi32>
    %21 = arith.addi %17, %20 : vector<32x1xi32>
    %c0_3 = arith.constant 0 : index
    %c0_4 = arith.constant 0 : index
    %22 = vector.load %arg1[%c0_3, %c0_4] : memref<32x512xf32, #tpu.memory_space<vmem>>, vector<32x512xf32>
    %23 = arith.truncf %22 : vector<32x512xf32> to vector<32x512xbf16>
    %c0_5 = arith.constant 0 : index
    %c0_6 = arith.constant 0 : index
    %24 = vector.load %arg2[%c0_5, %c0_6] : memref<32x512xf32, #tpu.memory_space<vmem>>, vector<32x512xf32>
    %25 = arith.truncf %24 : vector<32x512xf32> to vector<32x512xbf16>
    %c0_7 = arith.constant 0 : index
    %c0_8 = arith.constant 0 : index
    %26 = vector.load %arg3[%c0_7, %c0_8] : memref<512x256xbf16, #tpu.memory_space<vmem>>, vector<512x256xbf16>
    %cst = arith.constant dense<0.000000e+00> : vector<32x256xf32>
    %27 = tpu.matmul %23, %26, %cst {dimension_numbers = #tpu.dot_dimension_numbers<[1], [0], [0], [1], [0, 0, 1, 1], [], []>} : vector<32x512xbf16>, vector<512x256xbf16>, vector<32x256xf32> -> vector<32x256xf32>
    %c0_9 = arith.constant 0 : index
    %c0_10 = arith.constant 0 : index
    %28 = vector.load %arg4[%c0_9, %c0_10] : memref<1x256xf32, #tpu.memory_space<vmem>>, vector<1x256xf32>
    %29 = vector.broadcast %28 : vector<1x256xf32> to vector<32x256xf32>
    %30 = arith.addf %27, %29 : vector<32x256xf32>
    %c0_11 = arith.constant 0 : index
    %c0_12 = arith.constant 0 : index
    %31 = vector.load %arg5[%c0_11, %c0_12] : memref<512x256xbf16, #tpu.memory_space<vmem>>, vector<512x256xbf16>
    %cst_13 = arith.constant dense<0.000000e+00> : vector<32x256xf32>
    %32 = tpu.matmul %25, %31, %cst_13 {dimension_numbers = #tpu.dot_dimension_numbers<[1], [0], [0], [1], [0, 0, 1, 1], [], []>} : vector<32x512xbf16>, vector<512x256xbf16>, vector<32x256xf32> -> vector<32x256xf32>
    %c0_14 = arith.constant 0 : index
    %c0_15 = arith.constant 0 : index
    %33 = vector.load %arg6[%c0_14, %c0_15] : memref<1x256xf32, #tpu.memory_space<vmem>>, vector<1x256xf32>
    %34 = vector.broadcast %33 : vector<1x256xf32> to vector<32x256xf32>
    %35 = arith.addf %32, %34 : vector<32x256xf32>
    %c0_16 = arith.constant 0 : index
    %c0_17 = arith.constant 0 : index
    %36 = vector.load %arg7[%c0_16, %c0_17] : memref<512x256xbf16, #tpu.memory_space<vmem>>, vector<512x256xbf16>
    %cst_18 = arith.constant dense<0.000000e+00> : vector<32x256xf32>
    %37 = tpu.matmul %25, %36, %cst_18 {dimension_numbers = #tpu.dot_dimension_numbers<[1], [0], [0], [1], [0, 0, 1, 1], [], []>} : vector<32x512xbf16>, vector<512x256xbf16>, vector<32x256xf32> -> vector<32x256xf32>
    %c0_19 = arith.constant 0 : index
    %c0_20 = arith.constant 0 : index
    %38 = vector.load %arg8[%c0_19, %c0_20] : memref<1x256xf32, #tpu.memory_space<vmem>>, vector<1x256xf32>
    %39 = vector.broadcast %38 : vector<1x256xf32> to vector<32x256xf32>
    %40 = arith.addf %37, %39 : vector<32x256xf32>
    %41 = arith.truncf %30 : vector<32x256xf32> to vector<32x256xbf16>
    %42 = arith.truncf %35 : vector<32x256xf32> to vector<32x256xbf16>
    %cst_21 = arith.constant dense<0.000000e+00> : vector<32x32xf32>
    %43 = tpu.matmul %41, %42, %cst_21 {dimension_numbers = #tpu.dot_dimension_numbers<[1], [1], [0], [0], [0, 0, 1, 0], [], []>} : vector<32x256xbf16>, vector<32x256xbf16>, vector<32x32xf32> -> vector<32x32xf32>
    %cst_22 = arith.constant 6.250000e-02 : f32
    %44 = vector.broadcast %cst_22 : f32 to vector<32x32xf32>
    %45 = arith.mulf %43, %44 : vector<32x32xf32>
    %46 = tpu.iota {dimensions = array<i32: 1>} : vector<32x32xi32>
    %47 = vector.broadcast %17 : vector<32x1xi32> to vector<32x32xi32>
    %48 = arith.cmpi sge, %46, %47 : vector<32x32xi32>
    %49 = vector.broadcast %21 : vector<32x1xi32> to vector<32x32xi32>
    %50 = arith.cmpi slt, %46, %49 : vector<32x32xi32>
    %51 = arith.andi %48, %50 : vector<32x32xi1>
    %cst_23 = arith.constant 0xFF800000 : f32
    %52 = vector.broadcast %cst_23 : f32 to vector<32x32xf32>
    %53 = arith.select %51, %45, %52 : vector<32x32xi1>, vector<32x32xf32>
    %cst_24 = arith.constant dense<0xFF800000> : vector<32xf32>
    %54 = vector.multi_reduction <maximumf>, %53, %cst_24 [1] : vector<32x32xf32> to vector<32xf32>
    %55 = vector.shape_cast %54 : vector<32xf32> to vector<32x1xf32>
    %56 = vector.broadcast %55 : vector<32x1xf32> to vector<32x32xf32>
    %57 = arith.subf %53, %56 : vector<32x32xf32>
    %58 = math.exp %57 : vector<32x32xf32>
    %cst_25 = arith.constant dense<0.000000e+00> : vector<32xf32>
    %59 = vector.multi_reduction <add>, %58, %cst_25 [1] : vector<32x32xf32> to vector<32xf32>
    %60 = vector.shape_cast %59 : vector<32xf32> to vector<32x1xf32>
    %61 = tpu.reciprocal %60 {approx = true} : vector<32x1xf32> -> vector<32x1xf32>
    %62 = vector.broadcast %61 : vector<32x1xf32> to vector<32x32xf32>
    %63 = arith.mulf %58, %62 : vector<32x32xf32>
    %64 = arith.truncf %63 : vector<32x32xf32> to vector<32x32xbf16>
    %65 = arith.truncf %40 : vector<32x256xf32> to vector<32x256xbf16>
    %cst_26 = arith.constant dense<0.000000e+00> : vector<32x256xf32>
    %66 = tpu.matmul %64, %65, %cst_26 {dimension_numbers = #tpu.dot_dimension_numbers<[1], [0], [0], [1], [0, 0, 1, 1], [], []>} : vector<32x32xbf16>, vector<32x256xbf16>, vector<32x256xf32> -> vector<32x256xf32>
    %c1_i32_27 = arith.constant 1 : i32
    %67 = tpu.dynamic_rotate %66 by %c1_i32_27 dim 0 : vector<32x256xf32>, i32 -> vector<32x256xf32>
    %c31_i32 = arith.constant 31 : i32
    %68 = tpu.dynamic_rotate %66 by %c31_i32 dim 0 : vector<32x256xf32>, i32 -> vector<32x256xf32>
    %69 = arith.cmpi eq, %8, %17 : vector<32x1xi32>
    %cst_28 = arith.constant 0.000000e+00 : f32
    %70 = vector.shape_cast %69 : vector<32x1xi1> to vector<32x1xi1>
    %71 = vector.broadcast %70 : vector<32x1xi1> to vector<32x256xi1>
    %72 = vector.broadcast %cst_28 : f32 to vector<32x256xf32>
    %73 = arith.select %71, %72, %67 : vector<32x256xi1>, vector<32x256xf32>
    %c15_i32 = arith.constant 15 : i32
    %74 = vector.broadcast %c15_i32 : i32 to vector<32x1xi32>
    %75 = arith.addi %17, %74 : vector<32x1xi32>
    %76 = arith.cmpi eq, %8, %75 : vector<32x1xi32>
    %cst_29 = arith.constant 0.000000e+00 : f32
    %77 = vector.shape_cast %76 : vector<32x1xi1> to vector<32x1xi1>
    %78 = vector.broadcast %77 : vector<32x1xi1> to vector<32x256xi1>
    %79 = vector.broadcast %cst_29 : f32 to vector<32x256xf32>
    %80 = arith.select %78, %79, %68 : vector<32x256xi1>, vector<32x256xf32>
    %81 = tpu.concatenate %73, %66, %80 in 1 : vector<32x256xf32>, vector<32x256xf32>, vector<32x256xf32> -> vector<32x768xf32>
    %82 = arith.truncf %81 : vector<32x768xf32> to vector<32x768xbf16>
    %c0_i32_30 = arith.constant 0 : i32
    %83 = tpu.memref_slice %arg21[%c0_i32_30] : memref<4x!tpu.dma_semaphore, #tpu.memory_space<semaphore_mem>> -> memref<1x!tpu.dma_semaphore, #tpu.memory_space<semaphore_mem>>
    %84 = tpu.memref_squeeze %83 : memref<1x!tpu.dma_semaphore, #tpu.memory_space<semaphore_mem>> -> memref<!tpu.dma_semaphore, #tpu.memory_space<semaphore_mem>>
    tpu.wait_dma2 semaphore(%84 : memref<!tpu.dma_semaphore, #tpu.memory_space<semaphore_mem>>) src(%arg12 : memref<768x512xbf16, #tpu.memory_space<any>>) dst(%arg17 : memref<768x512xbf16, #tpu.memory_space<vmem>>)
    %c0_31 = arith.constant 0 : index
    %c0_32 = arith.constant 0 : index
    %85 = vector.load %arg17[%c0_31, %c0_32] : memref<768x512xbf16, #tpu.memory_space<vmem>>, vector<768x512xbf16>
    %cst_33 = arith.constant dense<0.000000e+00> : vector<32x512xf32>
    %86 = tpu.matmul %82, %85, %cst_33 {dimension_numbers = #tpu.dot_dimension_numbers<[1], [0], [0], [1], [0, 0, 1, 1], [], []>} : vector<32x768xbf16>, vector<768x512xbf16>, vector<32x512xf32> -> vector<32x512xf32>
    %c0_34 = arith.constant 0 : index
    %c0_35 = arith.constant 0 : index
    %87 = vector.load %arg9[%c0_34, %c0_35] : memref<1x512xf32, #tpu.memory_space<vmem>>, vector<1x512xf32>
    %88 = vector.broadcast %87 : vector<1x512xf32> to vector<32x512xf32>
    %89 = arith.addf %86, %88 : vector<32x512xf32>
    %cst_36 = arith.constant 0.000000e+00 : f32
    %90 = vector.broadcast %cst_36 : f32 to vector<32x512xf32>
    %91 = arith.maximumf %89, %90 : vector<32x512xf32>
    %c1_i32_37 = arith.constant 1 : i32
    %92 = tpu.memref_slice %arg21[%c1_i32_37] : memref<4x!tpu.dma_semaphore, #tpu.memory_space<semaphore_mem>> -> memref<1x!tpu.dma_semaphore, #tpu.memory_space<semaphore_mem>>
    %93 = tpu.memref_squeeze %92 : memref<1x!tpu.dma_semaphore, #tpu.memory_space<semaphore_mem>> -> memref<!tpu.dma_semaphore, #tpu.memory_space<semaphore_mem>>
    tpu.wait_dma2 semaphore(%93 : memref<!tpu.dma_semaphore, #tpu.memory_space<semaphore_mem>>) src(%arg13 : memref<512x512xbf16, #tpu.memory_space<any>>) dst(%arg18 : memref<512x512xbf16, #tpu.memory_space<vmem>>)
    %94 = arith.truncf %91 : vector<32x512xf32> to vector<32x512xbf16>
    %c0_38 = arith.constant 0 : index
    %c0_39 = arith.constant 0 : index
    %95 = vector.load %arg18[%c0_38, %c0_39] : memref<512x512xbf16, #tpu.memory_space<vmem>>, vector<512x512xbf16>
    %cst_40 = arith.constant dense<0.000000e+00> : vector<32x512xf32>
    %96 = tpu.matmul %94, %95, %cst_40 {dimension_numbers = #tpu.dot_dimension_numbers<[1], [0], [0], [1], [0, 0, 1, 1], [], []>} : vector<32x512xbf16>, vector<512x512xbf16>, vector<32x512xf32> -> vector<32x512xf32>
    %c0_41 = arith.constant 0 : index
    %c0_42 = arith.constant 0 : index
    %97 = vector.load %arg10[%c0_41, %c0_42] : memref<1x512xf32, #tpu.memory_space<vmem>>, vector<1x512xf32>
    %98 = vector.broadcast %97 : vector<1x512xf32> to vector<32x512xf32>
    %99 = arith.addf %96, %98 : vector<32x512xf32>
    %100 = arith.cmpi slt, %8, %21 : vector<32x1xi32>
    %cst_43 = arith.constant 1.000000e+00 : f32
    %cst_44 = arith.constant 0.000000e+00 : f32
    %101 = vector.broadcast %cst_43 : f32 to vector<32x1xf32>
    %102 = vector.broadcast %cst_44 : f32 to vector<32x1xf32>
    %103 = arith.select %100, %101, %102 : vector<32x1xi1>, vector<32x1xf32>
    %104 = arith.negf %99 : vector<32x512xf32>
    %105 = math.exp %104 : vector<32x512xf32>
    %cst_45 = arith.constant 1.000000e+00 : f32
    %106 = vector.broadcast %cst_45 : f32 to vector<32x512xf32>
    %107 = arith.addf %106, %105 : vector<32x512xf32>
    %108 = arith.divf %106, %107 : vector<32x512xf32>
    %109 = vector.broadcast %103 : vector<32x1xf32> to vector<32x512xf32>
    %110 = arith.mulf %108, %109 : vector<32x512xf32>
    %cst_46 = arith.constant 1.000000e+00 : f32
    %111 = vector.broadcast %cst_46 : f32 to vector<32x512xf32>
    %112 = arith.addf %110, %111 : vector<32x512xf32>
    %113 = arith.mulf %22, %112 : vector<32x512xf32>
    %c2_i32_47 = arith.constant 2 : i32
    %114 = tpu.memref_slice %arg21[%c2_i32_47] : memref<4x!tpu.dma_semaphore, #tpu.memory_space<semaphore_mem>> -> memref<1x!tpu.dma_semaphore, #tpu.memory_space<semaphore_mem>>
    %115 = tpu.memref_squeeze %114 : memref<1x!tpu.dma_semaphore, #tpu.memory_space<semaphore_mem>> -> memref<!tpu.dma_semaphore, #tpu.memory_space<semaphore_mem>>
    tpu.wait_dma2 semaphore(%115 : memref<!tpu.dma_semaphore, #tpu.memory_space<semaphore_mem>>) src(%arg14 : memref<512x512xbf16, #tpu.memory_space<any>>) dst(%arg19 : memref<512x512xbf16, #tpu.memory_space<vmem>>)
    %c3_i32_48 = arith.constant 3 : i32
    %116 = tpu.memref_slice %arg21[%c3_i32_48] : memref<4x!tpu.dma_semaphore, #tpu.memory_space<semaphore_mem>> -> memref<1x!tpu.dma_semaphore, #tpu.memory_space<semaphore_mem>>
    %117 = tpu.memref_squeeze %116 : memref<1x!tpu.dma_semaphore, #tpu.memory_space<semaphore_mem>> -> memref<!tpu.dma_semaphore, #tpu.memory_space<semaphore_mem>>
    tpu.wait_dma2 semaphore(%117 : memref<!tpu.dma_semaphore, #tpu.memory_space<semaphore_mem>>) src(%arg15 : memref<512x512xbf16, #tpu.memory_space<any>>) dst(%arg20 : memref<512x512xbf16, #tpu.memory_space<vmem>>)
    %118 = arith.truncf %113 : vector<32x512xf32> to vector<32x512xbf16>
    %c0_49 = arith.constant 0 : index
    %c0_50 = arith.constant 0 : index
    %119 = vector.load %arg19[%c0_49, %c0_50] : memref<512x512xbf16, #tpu.memory_space<vmem>>, vector<512x512xbf16>
    %cst_51 = arith.constant dense<0.000000e+00> : vector<32x512xf32>
    %120 = tpu.matmul %118, %119, %cst_51 {dimension_numbers = #tpu.dot_dimension_numbers<[1], [0], [0], [1], [0, 0, 1, 1], [], []>} : vector<32x512xbf16>, vector<512x512xbf16>, vector<32x512xf32> -> vector<32x512xf32>
    %c0_52 = arith.constant 0 : index
    %c0_53 = arith.constant 0 : index
    %121 = vector.load %arg20[%c0_52, %c0_53] : memref<512x512xbf16, #tpu.memory_space<vmem>>, vector<512x512xbf16>
    %cst_54 = arith.constant dense<0.000000e+00> : vector<32x512xf32>
    %122 = tpu.matmul %25, %121, %cst_54 {dimension_numbers = #tpu.dot_dimension_numbers<[1], [0], [0], [1], [0, 0, 1, 1], [], []>} : vector<32x512xbf16>, vector<512x512xbf16>, vector<32x512xf32> -> vector<32x512xf32>
    %123 = arith.addf %120, %122 : vector<32x512xf32>
    %c0_55 = arith.constant 0 : index
    %c0_56 = arith.constant 0 : index
    %124 = vector.load %arg11[%c0_55, %c0_56] : memref<1x512xf32, #tpu.memory_space<vmem>>, vector<1x512xf32>
    %125 = vector.broadcast %124 : vector<1x512xf32> to vector<32x512xf32>
    %126 = arith.addf %123, %125 : vector<32x512xf32>
    %c0_57 = arith.constant 0 : index
    %c0_58 = arith.constant 0 : index
    %127 = vector.load %arg16[%c0_57, %c0_58] : memref<32x512xf32, #tpu.memory_space<vmem>>, vector<32x512xf32>
    tpu.vector_store %arg16[%c0_57, %c0_58], %126 {strides = array<i32>} : memref<32x512xf32, #tpu.memory_space<vmem>>, vector<32x512xf32>,
    return
  }
}

</mosaic_0001>

<llo_original>
// kernel: tpu_custom_call.1
$region0: #{tpu_custom_call.1}
  #allocation0 [shape = 'u32[]', space=smem, size = 0x4, offset = 0x4, fixed_abs, tag = 'smem constant byte address 0x4 - core index']
  #allocation1 [shape = 'u32[72,128]{1,0:T(1,128)}', space=vmem, size = 0x9000, scoped, tag = 'internal scratch']
  #allocation2 [shape = 'bf16[768,512]{1,0:T(8,128)(2,1)}', space=vmem, size = 0xc0000, scoped, tag = 'scratch operand']
  #allocation3 [shape = 'bf16[512,512]{1,0:T(8,128)(2,1)}', space=vmem, size = 0x80000, scoped, tag = 'scratch operand']
  #allocation4 [shape = 'bf16[512,512]{1,0:T(8,128)(2,1)}', space=vmem, size = 0x80000, scoped, tag = 'scratch operand']
  #allocation5 [shape = 'bf16[512,512]{1,0:T(8,128)(2,1)}', space=vmem, size = 0x80000, scoped, tag = 'scratch operand']
  #allocation6 [shape = 's32[4]{0}', space=sflag, size = 0x10, scoped, tag = 'scratch operand']
  #allocation25 [shape = 's32[]', space=sflag, size = 0x4, offset = 0, fixed_abs, tag = 'sflag constant byte address 0x0 - dummy sync flag']
  #allocation26 [shape = 's32[]', space=sflag, size = 0x4, offset = 0, fixed_abs, tag = 'sflag constant byte address 0x0 - dummy sync flag']
  #allocation27 [shape = 'u32[]', space=smem, size = 0x4, offset = 0x44, fixed_abs, tag = 'smem constant byte address 0x44 - assertion arg 0']
  #allocation28 [shape = 'u32[]', space=smem, size = 0x4, offset = 0x48, fixed_abs, tag = 'smem constant byte address 0x48 - assertion arg 1']
  #allocation29 [shape = 's32[]', space=sflag, size = 0x4, offset = 0, fixed_abs, tag = 'sflag constant byte address 0x0 - dummy sync flag']
  #allocation30 [shape = 's32[]', space=sflag, size = 0x4, offset = 0, fixed_abs, tag = 'sflag constant byte address 0x0 - dummy sync flag']
  #allocation31 [shape = 's32[]', space=sflag, size = 0x4, offset = 0, fixed_abs, tag = 'sflag constant byte address 0x0 - dummy sync flag']
  #allocation32 [shape = 's32[]', space=sflag, size = 0x4, offset = 0, fixed_abs, tag = 'sflag constant byte address 0x0 - dummy sync flag']
  #allocation33 [shape = 's32[]', space=sflag, size = 0x4, offset = 0, fixed_abs, tag = 'sflag constant byte address 0x0 - dummy sync flag']
  #allocation34 [shape = 's32[]', space=sflag, size = 0x4, offset = 0, fixed_abs, tag = 'sflag constant byte address 0x0 - dummy sync flag']
  %s0 = inlined_call_operand.hbm [shape: s32[2], index: 0, kind: input, shape index: {}]
  %s1 = inlined_call_operand.hbm [shape: f32[32,512], index: 1, kind: input, shape index: {}]
  %s2 = inlined_call_operand.hbm [shape: f32[32,512], index: 2, kind: input, shape index: {}]
  %s3 = inlined_call_operand.hbm [shape: bf16[512,256], index: 3, kind: input, shape index: {}]
  %s4 = inlined_call_operand.hbm [shape: f32[1,256], index: 4, kind: input, shape index: {}]
  %s5 = inlined_call_operand.hbm [shape: bf16[512,256], index: 5, kind: input, shape index: {}]
  %s6 = inlined_call_operand.hbm [shape: f32[1,256], index: 6, kind: input, shape index: {}]
  %s7 = inlined_call_operand.hbm [shape: bf16[512,256], index: 7, kind: input, shape index: {}]
  %s8 = inlined_call_operand.hbm [shape: f32[1,256], index: 8, kind: input, shape index: {}]
  %s9 = inlined_call_operand.vmem [shape: f32[1,512], index: 9, kind: input, shape index: {}]
  %s10 = inlined_call_operand.vmem [shape: f32[1,512], index: 10, kind: input, shape index: {}]
  %s11 = inlined_call_operand.hbm [shape: f32[1,512], index: 11, kind: input, shape index: {}]
  %s12 = inlined_call_operand.hbm [shape: bf16[768,512], index: 12, kind: input, shape index: {}]
  %s13 = inlined_call_operand.hbm [shape: bf16[512,512], index: 13, kind: input, shape index: {}]
  %s14 = inlined_call_operand.hbm [shape: bf16[512,512], index: 14, kind: input, shape index: {}]
  %s15 = inlined_call_operand.hbm [shape: bf16[512,512], index: 15, kind: input, shape index: {}]
  %s16 = inlined_call_operand.hbm [shape: f32[32,512], index: 16, kind: output, shape index: {}]
  %s17 = sld [smem:[#allocation0]]
  $region114: #{tpu_custom_call.1} parent=0
    _
  %s19 = ssub.s32 1, %s17
  %s20 = scalar_select 0, %s19, %s17
  $region1: #{tpu_custom_call.1} parent=0
    #allocation7 [shape = 'u8[512]{0}', space=smem, size = 0x200, scoped, tag = 'input window, operand 0, single buffered']
    #allocation8 [shape = 's32[1]{0}', space=sflag, size = 0x4, scoped, tag = 'scoped memory for tpu_custom_call.1']
    #allocation9 [shape = 's32[1]{0}', space=sflag, size = 0x4, scoped, tag = 'scoped memory for tpu_custom_call.1']
    #allocation10 [shape = 's32[1]{0}', space=sflag, size = 0x4, scoped, tag = 'scoped memory for tpu_custom_call.1']
    #allocation11 [shape = 'u8[65536]{0}', space=vmem, size = 0x10000, scoped, tag = 'input window, operand 1, single buffered']
    #allocation12 [shape = 'u8[65536]{0}', space=vmem, size = 0x10000, scoped, tag = 'input window, operand 2, single buffered']
    #allocation13 [shape = 's32[1]{0}', space=sflag, size = 0x4, scoped, tag = 'scoped memory for tpu_custom_call.1']
    #allocation14 [shape = 'u8[262144]{0}', space=vmem, size = 0x40000, scoped, tag = 'input window, operand 3, single buffered']
    #allocation15 [shape = 'u8[1024]{0}', space=vmem, size = 0x400, scoped, tag = 'input window, operand 4, single buffered']
    #allocation16 [shape = 's32[1]{0}', space=sflag, size = 0x4, scoped, tag = 'scoped memory for tpu_custom_call.1']
    #allocation17 [shape = 'u8[262144]{0}', space=vmem, size = 0x40000, scoped, tag = 'input window, operand 5, single buffered']
    #allocation18 [shape = 'u8[1024]{0}', space=vmem, size = 0x400, scoped, tag = 'input window, operand 6, single buffered']
    #allocation19 [shape = 's32[1]{0}', space=sflag, size = 0x4, scoped, tag = 'scoped memory for tpu_custom_call.1']
    #allocation20 [shape = 'u8[262144]{0}', space=vmem, size = 0x40000, scoped, tag = 'input window, operand 7, single buffered']
    #allocation21 [shape = 'u8[1024]{0}', space=vmem, size = 0x400, scoped, tag = 'input window, operand 8, single buffered']
    #allocation22 [shape = 's32[1]{0}', space=sflag, size = 0x4, scoped, tag = 'scoped memory for tpu_custom_call.1']
    #allocation23 [shape = 'u8[2048]{0}', space=vmem, size = 0x800, scoped, tag = 'input window, operand 11, single buffered']
    #allocation24 [shape = 'u8[65536]{0}', space=vmem, size = 0x10000, scoped, tag = 'output window, operand 0, single buffered']
    %21 = vsyncpa [#allocation10], 0
    %22 = vsyncpa [#allocation8], 0
    %23 = vsyncpa [#allocation13], 0
    %24 = vsyncpa [#allocation16], 0
    %25 = vsyncpa [#allocation19], 0
    %26 = vsyncpa [#allocation22], 0
    %27 = vsyncpa [#allocation9], 0
    // Predicated region
    $region2: #{tpu_custom_call.1} parent=1 // pred_check
      _
    $region3: #{tpu_custom_call.1} parent=1 // pred_check_branch
      %29 = sbr.rel (0) target = $region5
    $region4: #{tpu_custom_call.1} parent=1 // pred_region
      %31 = vsyncadd [#allocation10], 0
      %s33 = sshll.u32 %s0, 4
      %s34 = int_to_ptr.hbm [resolvable:$true] %s33
      %36 = dma.hbm_to_smem %s34, 16, [#allocation7], [#allocation10]
    $region5: #{tpu_custom_call.1} parent=1 // pred_fallthru
      _
    // Predicated region
    $region6: #{tpu_custom_call.1} parent=1 // pred_check
      _
    $region7: #{tpu_custom_call.1} parent=1 // pred_check_branch
      %38 = sbr.rel (0) target = $region9
    $region8: #{tpu_custom_call.1} parent=1 // pred_region
      %40 = vsyncadd [#allocation8], 0
      %s41 = sshll.u32 %s1, 4
      %s42 = int_to_ptr.hbm [resolvable:$true] %s41
      %s43 = sshll.u32 [#allocation11], 4
      %s44 = int_to_ptr.vmem [resolvable:$true] %s43
      %49 = dma.hbm_to_vmem [thread:$0]  %s42, 2048, %s44, [#allocation8], 512, 512, 32
    $region9: #{tpu_custom_call.1} parent=1 // pred_fallthru
      _
    // Predicated region
    $region10: #{tpu_custom_call.1} parent=1 // pred_check
      _
    $region11: #{tpu_custom_call.1} parent=1 // pred_check_branch
      %51 = sbr.rel (0) target = $region13
    $region12: #{tpu_custom_call.1} parent=1 // pred_region
      %53 = vsyncadd [#allocation13], 0
      %s54 = sshll.u32 %s2, 4
      %s55 = int_to_ptr.hbm [resolvable:$true] %s54
      %s56 = sshll.u32 [#allocation12], 4
      %s57 = int_to_ptr.vmem [resolvable:$true] %s56
      %62 = dma.hbm_to_vmem [thread:$0]  %s55, 2048, %s57, [#allocation13], 512, 512, 32
    $region13: #{tpu_custom_call.1} parent=1 // pred_fallthru
      _
    // Predicated region
    $region14: #{tpu_custom_call.1} parent=1 // pred_check
      _
    $region15: #{tpu_custom_call.1} parent=1 // pred_check_branch
      %64 = sbr.rel (0) target = $region17
    $region16: #{tpu_custom_call.1} parent=1 // pred_region
      %66 = vsyncadd [#allocation13], 0
      %s67 = sshll.u32 %s3, 4
      %s68 = int_to_ptr.hbm [resolvable:$true] %s67
      %s69 = sshll.u32 [#allocation14], 4
      %s70 = int_to_ptr.vmem [resolvable:$true] %s69
      %75 = dma.hbm_to_vmem [thread:$0]  %s68, 8192, %s70, [#allocation13], 128, 128, 8
    $region17: #{tpu_custom_call.1} parent=1 // pred_fallthru
      _
    // Predicated region
    $region18: #{tpu_custom_call.1} parent=1 // pred_check
      _
    $region19: #{tpu_custom_call.1} parent=1 // pred_check_branch
      %77 = sbr.rel (0) target = $region21
    $region20: #{tpu_custom_call.1} parent=1 // pred_region
      %79 = vsyncadd [#allocation16], 0
      %s81 = sshll.u32 %s4, 4
      %s82 = int_to_ptr.hbm [resolvable:$true] %s81
      %s83 = sshll.u32 [#allocation15], 4
      %s84 = int_to_ptr.vmem [resolvable:$true] %s83
      %86 = dma.hbm_to_vmem [thread:$0]  %s82, 32, %s84, [#allocation16]
    $region21: #{tpu_custom_call.1} parent=1 // pred_fallthru
      _
    // Predicated region
    $region22: #{tpu_custom_call.1} parent=1 // pred_check
      _
    $region23: #{tpu_custom_call.1} parent=1 // pred_check_branch
      %88 = sbr.rel (0) target = $region25
    $region24: #{tpu_custom_call.1} parent=1 // pred_region
      %90 = vsyncadd [#allocation16], 0
      %s91 = sshll.u32 %s5, 4
      %s92 = int_to_ptr.hbm [resolvable:$true] %s91
      %s93 = sshll.u32 [#allocation17], 4
      %s94 = int_to_ptr.vmem [resolvable:$true] %s93
      %99 = dma.hbm_to_vmem [thread:$0]  %s92, 8192, %s94, [#allocation16], 128, 128, 8
    $region25: #{tpu_custom_call.1} parent=1 // pred_fallthru
      _
    // Predicated region
    $region26: #{tpu_custom_call.1} parent=1 // pred_check
      _
    $region27: #{tpu_custom_call.1} parent=1 // pred_check_branch
      %101 = sbr.rel (0) target = $region29
    $region28: #{tpu_custom_call.1} parent=1 // pred_region
      %103 = vsyncadd [#allocation19], 0
      %s105 = sshll.u32 %s6, 4
      %s106 = int_to_ptr.hbm [resolvable:$true] %s105
      %s107 = sshll.u32 [#allocation18], 4
      %s108 = int_to_ptr.vmem [resolvable:$true] %s107
      %110 = dma.hbm_to_vmem [thread:$0]  %s106, 32, %s108, [#allocation19]
    $region29: #{tpu_custom_call.1} parent=1 // pred_fallthru
      _
    // Predicated region
    $region30: #{tpu_custom_call.1} parent=1 // pred_check
      _
    $region31: #{tpu_custom_call.1} parent=1 // pred_check_branch
      %112 = sbr.rel (0) target = $region33
    $region32: #{tpu_custom_call.1} parent=1 // pred_region
      %114 = vsyncadd [#allocation19], 0
      %s115 = sshll.u32 %s7, 4
      %s116 = int_to_ptr.hbm [resolvable:$true] %s115
      %s117 = sshll.u32 [#allocation20], 4
      %s118 = int_to_ptr.vmem [resolvable:$true] %s117
      %123 = dma.hbm_to_vmem [thread:$0]  %s116, 8192, %s118, [#allocation19], 128, 128, 8
    $region33: #{tpu_custom_call.1} parent=1 // pred_fallthru
      _
    // Predicated region
    $region34: #{tpu_custom_call.1} parent=1 // pred_check
      _
    $region35: #{tpu_custom_call.1} parent=1 // pred_check_branch
      %125 = sbr.rel (0) target = $region37
    $region36: #{tpu_custom_call.1} parent=1 // pred_region
      %127 = vsyncadd [#allocation22], 0
      %s129 = sshll.u32 %s8, 4
      %s130 = int_to_ptr.hbm [resolvable:$true] %s129
      %s131 = sshll.u32 [#allocation21], 4
      %s132 = int_to_ptr.vmem [resolvable:$true] %s131
      %134 = dma.hbm_to_vmem [thread:$0]  %s130, 32, %s132, [#allocation22]
    $region37: #{tpu_custom_call.1} parent=1 // pred_fallthru
      _
    // Predicated region
    $region38: #{tpu_custom_call.1} parent=1 // pred_check
      _
    $region39: #{tpu_custom_call.1} parent=1 // pred_check_branch
      %136 = sbr.rel (0) target = $region41
    $region40: #{tpu_custom_call.1} parent=1 // pred_region
      _
    $region41: #{tpu_custom_call.1} parent=1 // pred_fallthru
      _
    // Predicated region
    $region42: #{tpu_custom_call.1} parent=1 // pred_check
      _
    $region43: #{tpu_custom_call.1} parent=1 // pred_check_branch
      %138 = sbr.rel (0) target = $region45
    $region44: #{tpu_custom_call.1} parent=1 // pred_region
      _
    $region45: #{tpu_custom_call.1} parent=1 // pred_fallthru
      _
    // Predicated region
    $region46: #{tpu_custom_call.1} parent=1 // pred_check
      _
    $region47: #{tpu_custom_call.1} parent=1 // pred_check_branch
      %140 = sbr.rel (0) target = $region49
    $region48: #{tpu_custom_call.1} parent=1 // pred_region
      %142 = vsyncadd [#allocation22], 0
      %s144 = sshll.u32 %s11, 4
      %s145 = int_to_ptr.hbm [resolvable:$true] %s144
      %s146 = sshll.u32 [#allocation23], 4
      %s147 = int_to_ptr.vmem [resolvable:$true] %s146
      %149 = dma.hbm_to_vmem [thread:$0]  %s145, 64, %s147, [#allocation22]
    $region49: #{tpu_custom_call.1} parent=1 // pred_fallthru
      _
    // Predicated region
    $region50: #{tpu_custom_call.1} parent=1 // pred_check
      _
    $region51: #{tpu_custom_call.1} parent=1 // pred_check_branch
      %151 = sbr.rel (0) target = $region53
    $region52: #{tpu_custom_call.1} parent=1 // pred_region
      %153 = dma.done [#allocation10], 16
    $region53: #{tpu_custom_call.1} parent=1 // pred_fallthru
      _
    // Predicated region
    $region54: #{tpu_custom_call.1} parent=1 // pred_check
      _
    $region55: #{tpu_custom_call.1} parent=1 // pred_check_branch
      %155 = sbr.rel (0) target = $region57
    $region56: #{tpu_custom_call.1} parent=1 // pred_region
      %157 = dma.done [#allocation8], 2048
    $region57: #{tpu_custom_call.1} parent=1 // pred_fallthru
      _
    // Predicated region
    $region58: #{tpu_custom_call.1} parent=1 // pred_check
      _
    $region59: #{tpu_custom_call.1} parent=1 // pred_check_branch
      %159 = sbr.rel (0) target = $region61
    $region60: #{tpu_custom_call.1} parent=1 // pred_region
      %161 = dma.done [#allocation13], 2048
    $region61: #{tpu_custom_call.1} parent=1 // pred_fallthru
      _
    // Predicated region
    $region62: #{tpu_custom_call.1} parent=1 // pred_check
      _
    $region63: #{tpu_custom_call.1} parent=1 // pred_check_branch
      %163 = sbr.rel (0) target = $region65
    $region64: #{tpu_custom_call.1} parent=1 // pred_region
      %165 = dma.done [#allocation13], 8192
    $region65: #{tpu_custom_call.1} parent=1 // pred_fallthru
      _
    // Predicated region
    $region66: #{tpu_custom_call.1} parent=1 // pred_check
      _
    $region67: #{tpu_custom_call.1} parent=1 // pred_check_branch
      %167 = sbr.rel (0) target = $region69
    $region68: #{tpu_custom_call.1} parent=1 // pred_region
      %169 = dma.done [#allocation16], 32
    $region69: #{tpu_custom_call.1} parent=1 // pred_fallthru
      _
    // Predicated region
    $region70: #{tpu_custom_call.1} parent=1 // pred_check
      _
    $region71: #{tpu_custom_call.1} parent=1 // pred_check_branch
      %171 = sbr.rel (0) target = $region73
    $region72: #{tpu_custom_call.1} parent=1 // pred_region
      %173 = dma.done [#allocation16], 8192
    $region73: #{tpu_custom_call.1} parent=1 // pred_fallthru
      _
    // Predicated region
    $region74: #{tpu_custom_call.1} parent=1 // pred_check
      _
    $region75: #{tpu_custom_call.1} parent=1 // pred_check_branch
      %175 = sbr.rel (0) target = $region77
    $region76: #{tpu_custom_call.1} parent=1 // pred_region
      %177 = dma.done [#allocation19], 32
    $region77: #{tpu_custom_call.1} parent=1 // pred_fallthru
      _
    // Predicated region
    $region78: #{tpu_custom_call.1} parent=1 // pred_check
      _
    $region79: #{tpu_custom_call.1} parent=1 // pred_check_branch
      %179 = sbr.rel (0) target = $region81
    $region80: #{tpu_custom_call.1} parent=1 // pred_region
      %181 = dma.done [#allocation19], 8192
    $region81: #{tpu_custom_call.1} parent=1 // pred_fallthru
      _
    // Predicated region
    $region82: #{tpu_custom_call.1} parent=1 // pred_check
      _
    $region83: #{tpu_custom_call.1} parent=1 // pred_check_branch
      %183 = sbr.rel (0) target = $region85
    $region84: #{tpu_custom_call.1} parent=1 // pred_region
      %185 = dma.done [#allocation22], 32
    $region85: #{tpu_custom_call.1} parent=1 // pred_fallthru
      _
    // Predicated region
    $region86: #{tpu_custom_call.1} parent=1 // pred_check
      _
    $region87: #{tpu_custom_call.1} parent=1 // pred_check_branch
      %187 = sbr.rel (0) target = $region89
    $region88: #{tpu_custom_call.1} parent=1 // pred_region
      %189 = dma.done [#allocation22], 64
    $region89: #{tpu_custom_call.1} parent=1 // pred_fallthru
      _
    %190 = sfence
    // Predicated region
    $region90: #{tpu_custom_call.1} parent=1 // pred_check
      _
    $region91: #{tpu_custom_call.1} parent=1 // pred_check_branch
      %193 = sbr.rel target = $region93
    $region92: #{tpu_custom_call.1} parent=1 // pred_region
      %194 = sst [smem:[#allocation27]] [#allocation26]
      %195 = sst [smem:[#allocation28]] [#allocation25]
    $region93: #{tpu_custom_call.1} parent=1 // pred_fallthru
      _
    %197 = shalt.err (0)
    %s199 = sshll.u32 %s12, 4
    %s200 = int_to_ptr.hbm [resolvable:$true] %s199
    %s201 = sshll.u32 [#allocation2], 4
    %s202 = int_to_ptr.vmem [resolvable:$true] %s201
    %204 = dma.hbm_to_vmem [thread:$0]  %s200, 24576, %s202, [#allocation6]
    %s205 = scalar_lea.sflag [#allocation6], 1
    // Predicated region
    $region94: #{tpu_custom_call.1} parent=1 // pred_check
      _
    $region95: #{tpu_custom_call.1} parent=1 // pred_check_branch
      %207 = sbr.rel target = $region97
    $region96: #{tpu_custom_call.1} parent=1 // pred_region
      %208 = sst [smem:[#allocation27]] [#allocation30]
      %209 = sst [smem:[#allocation28]] [#allocation29]
    $region97: #{tpu_custom_call.1} parent=1 // pred_fallthru
      _
    %211 = shalt.err (0)
    %s213 = sshll.u32 %s13, 4
    %s214 = int_to_ptr.hbm [resolvable:$true] %s213
    %s215 = sshll.u32 [#allocation3], 4
    %s216 = int_to_ptr.vmem [resolvable:$true] %s215
    %218 = dma.hbm_to_vmem [thread:$0]  %s214, 16384, %s216, %s205
    %s219 = scalar_lea.sflag [#allocation6], 2
    // Predicated region
    $region98: #{tpu_custom_call.1} parent=1 // pred_check
      _
    $region99: #{tpu_custom_call.1} parent=1 // pred_check_branch
      %221 = sbr.rel target = $region101
    $region100: #{tpu_custom_call.1} parent=1 // pred_region
      %222 = sst [smem:[#allocation27]] [#allocation32]
      %223 = sst [smem:[#allocation28]] [#allocation31]
    $region101: #{tpu_custom_call.1} parent=1 // pred_fallthru
      _
    %225 = shalt.err (0)
    %s227 = sshll.u32 %s14, 4
    %s228 = int_to_ptr.hbm [resolvable:$true] %s227
    %s229 = sshll.u32 [#allocation4], 4
    %s230 = int_to_ptr.vmem [resolvable:$true] %s229
    %232 = dma.hbm_to_vmem [thread:$0]  %s228, 16384, %s230, %s219
    %s233 = scalar_lea.sflag [#allocation6], 3
    // Predicated region
    $region102: #{tpu_custom_call.1} parent=1 // pred_check
      _
    $region103: #{tpu_custom_call.1} parent=1 // pred_check_branch
      %235 = sbr.rel target = $region105
    $region104: #{tpu_custom_call.1} parent=1 // pred_region
      %236 = sst [smem:[#allocation27]] [#allocation34]
      %237 = sst [smem:[#allocation28]] [#allocation33]
    $region105: #{tpu_custom_call.1} parent=1 // pred_fallthru
      _
    %239 = shalt.err (0)
    %s241 = sshll.u32 %s15, 4
    %s242 = int_to_ptr.hbm [resolvable:$true] %s241
    %s243 = sshll.u32 [#allocation5], 4
    %s244 = int_to_ptr.vmem [resolvable:$true] %s243
    %246 = dma.hbm_to_vmem [thread:$0]  %s242, 16384, %s244, %s233
    %v247 = vlaneseq
    %v248 = vshrl.u32 %v247, 7
    %v249 = vadd.s32 %v248, 8
    %v250 = vadd.s32 %v248, 16
    %v251 = vadd.s32 %v248, 24
    %s252 = sld [smem:[#allocation7]]
    %v253 = vstv %s252
    %vm254 = vcmp.ge.s32.totalorder %v248, 16
    %vm255 = vcmp.ge.s32.totalorder %v249, 16
    %vm256 = vcmp.ge.s32.totalorder %v250, 16
    %vm257 = vcmp.ge.s32.totalorder %v251, 16
    %v258 = vsel %vm254, 16, 0
    %v259 = vsel %vm255, 16, 0
    %v260 = vsel %vm256, 16, 0
    %v261 = vsel %vm257, 16, 0
    %s262 = sld [smem:[#allocation7 + $0x1]]
    %v263 = vstv %s262
    %v264 = vsel %vm254, %v263, %v253
    %v265 = vsel %vm255, %v263, %v253
    %v266 = vsel %vm256, %v263, %v253
    %v267 = vsel %vm257, %v263, %v253
    %v268 = vadd.s32 %v258, %v264
    %v269 = vadd.s32 %v259, %v265
    %v270 = vadd.s32 %v260, %v266
    %v271 = vadd.s32 %v261, %v267
    %v272 = vld [vmem:[#allocation11] sm:$0xff]
    %v273 = vld [vmem:[#allocation11 + $0x8] sm:$0xff]
    %v274 = vld [vmem:[#allocation11 + $0x10] sm:$0xff]
    %v275 = vld [vmem:[#allocation11 + $0x18] sm:$0xff]
    %v276 = vld [vmem:[#allocation11 + $0x20] sm:$0xff]
    %v277 = vld [vmem:[#allocation11 + $0x28] sm:$0xff]
    %v278 = vld [vmem:[#allocation11 + $0x30] sm:$0xff]
    %v279 = vld [vmem:[#allocation11 + $0x38] sm:$0xff]
    %v280 = vld [vmem:[#allocation11 + $0x40] sm:$0xff]
    %v281 = vld [vmem:[#allocation11 + $0x48] sm:$0xff]
    %v282 = vld [vmem:[#allocation11 + $0x50] sm:$0xff]
    %v283 = vld [vmem:[#allocation11 + $0x58] sm:$0xff]
    %v284 = vld [vmem:[#allocation11 + $0x60] sm:$0xff]
    %v285 = vld [vmem:[#allocation11 + $0x68] sm:$0xff]
    %v286 = vld [vmem:[#allocation11 + $0x70] sm:$0xff]
    %v287 = vld [vmem:[#allocation11 + $0x78] sm:$0xff]
    %v288 = vpack.c.bf16 %v276, %v272
    %v289 = vpack.c.bf16 %v277, %v273
    %v290 = vpack.c.bf16 %v278, %v274
    %v291 = vpack.c.bf16 %v279, %v275
    %v292 = vpack.c.bf16 %v284, %v280
    %v293 = vpack.c.bf16 %v285, %v281
    %v294 = vpack.c.bf16 %v286, %v282
    %v295 = vpack.c.bf16 %v287, %v283
    %v296 = vld [vmem:[#allocation12] sm:$0xff]
    %v297 = vld [vmem:[#allocation12 + $0x8] sm:$0xff]
    %v298 = vld [vmem:[#allocation12 + $0x10] sm:$0xff]
    %v299 = vld [vmem:[#allocation12 + $0x18] sm:$0xff]
    %v300 = vld [vmem:[#allocation12 + $0x20] sm:$0xff]
    %v301 = vld [vmem:[#allocation12 + $0x28] sm:$0xff]
    %v302 = vld [vmem:[#allocation12 + $0x30] sm:$0xff]
    %v303 = vld [vmem:[#allocation12 + $0x38] sm:$0xff]
    %v304 = vld [vmem:[#allocation12 + $0x40] sm:$0xff]
    %v305 = vld [vmem:[#allocation12 + $0x48] sm:$0xff]
    %v306 = vld [vmem:[#allocation12 + $0x50] sm:$0xff]
    %v307 = vld [vmem:[#allocation12 + $0x58] sm:$0xff]
    %v308 = vld [vmem:[#allocation12 + $0x60] sm:$0xff]
    %v309 = vld [vmem:[#allocation12 + $0x68] sm:$0xff]
    %v310 = vld [vmem:[#allocation12 + $0x70] sm:$0xff]
    %v311 = vld [vmem:[#allocation12 + $0x78] sm:$0xff]
    %v312 = vpack.c.bf16 %v300, %v296
    %v313 = vpack.c.bf16 %v301, %v297
    %v314 = vpack.c.bf16 %v302, %v298
    %v315 = vpack.c.bf16 %v303, %v299
    %v316 = vpack.c.bf16 %v308, %v304
    %v317 = vpack.c.bf16 %v309, %v305
    %v318 = vpack.c.bf16 %v310, %v306
    %v319 = vpack.c.bf16 %v311, %v307
    %v320 = vld [vmem:[#allocation14] sm:$0xff]
    %v321 = vld [vmem:[#allocation14 + $0x8] sm:$0xff]
    %v322 = vld [vmem:[#allocation14 + $0x10] sm:$0xff]
    %v323 = vld [vmem:[#allocation14 + $0x18] sm:$0xff]
    %v324 = vld [vmem:[#allocation14 + $0x20] sm:$0xff]
    %v325 = vld [vmem:[#allocation14 + $0x28] sm:$0xff]
    %v326 = vld [vmem:[#allocation14 + $0x30] sm:$0xff]
    %v327 = vld [vmem:[#allocation14 + $0x38] sm:$0xff]
    %v328 = vld [vmem:[#allocation14 + $0x40] sm:$0xff]
    %v329 = vld [vmem:[#allocation14 + $0x48] sm:$0xff]
    %v330 = vld [vmem:[#allocation14 + $0x50] sm:$0xff]
    %v331 = vld [vmem:[#allocation14 + $0x58] sm:$0xff]
    %v332 = vld [vmem:[#allocation14 + $0x60] sm:$0xff]
    %v333 = vld [vmem:[#allocation14 + $0x68] sm:$0xff]
    %v334 = vld [vmem:[#allocation14 + $0x70] sm:$0xff]
    %v335 = vld [vmem:[#allocation14 + $0x78] sm:$0xff]
    %v336 = vld [vmem:[#allocation14 + $0x80] sm:$0xff]
    %v337 = vld [vmem:[#allocation14 + $0x88] sm:$0xff]
    %v338 = vld [vmem:[#allocation14 + $0x90] sm:$0xff]
    %v339 = vld [vmem:[#allocation14 + $0x98] sm:$0xff]
    %v340 = vld [vmem:[#allocation14 + $0xa0] sm:$0xff]
    %v341 = vld [vmem:[#allocation14 + $0xa8] sm:$0xff]
    %v342 = vld [vmem:[#allocation14 + $0xb0] sm:$0xff]
    %v343 = vld [vmem:[#allocation14 + $0xb8] sm:$0xff]
    %v344 = vld [vmem:[#allocation14 + $0xc0] sm:$0xff]
    %v345 = vld [vmem:[#allocation14 + $0xc8] sm:$0xff]
    %v346 = vld [vmem:[#allocation14 + $0xd0] sm:$0xff]
    %v347 = vld [vmem:[#allocation14 + $0xd8] sm:$0xff]
    %v348 = vld [vmem:[#allocation14 + $0xe0] sm:$0xff]
    %v349 = vld [vmem:[#allocation14 + $0xe8] sm:$0xff]
    %v350 = vld [vmem:[#allocation14 + $0xf0] sm:$0xff]
    %v351 = vld [vmem:[#allocation14 + $0xf8] sm:$0xff]
    %v352 = vld [vmem:[#allocation14 + $0x100] sm:$0xff]
    %v353 = vld [vmem:[#allocation14 + $0x108] sm:$0xff]
    %v354 = vld [vmem:[#allocation14 + $0x110] sm:$0xff]
    %v355 = vld [vmem:[#allocation14 + $0x118] sm:$0xff]
    %v356 = vld [vmem:[#allocation14 + $0x120] sm:$0xff]
    %v357 = vld [vmem:[#allocation14 + $0x128] sm:$0xff]
    %v358 = vld [vmem:[#allocation14 + $0x130] sm:$0xff]
    %v359 = vld [vmem:[#allocation14 + $0x138] sm:$0xff]
    %v360 = vld [vmem:[#allocation14 + $0x140] sm:$0xff]
    %v361 = vld [vmem:[#allocation14 + $0x148] sm:$0xff]
    %v362 = vld [vmem:[#allocation14 + $0x150] sm:$0xff]
    %v363 = vld [vmem:[#allocation14 + $0x158] sm:$0xff]
    %v364 = vld [vmem:[#allocation14 + $0x160] sm:$0xff]
    %v365 = vld [vmem:[#allocation14 + $0x168] sm:$0xff]
    %v366 = vld [vmem:[#allocation14 + $0x170] sm:$0xff]
    %v367 = vld [vmem:[#allocation14 + $0x178] sm:$0xff]
    %v368 = vld [vmem:[#allocation14 + $0x180] sm:$0xff]
    %v369 = vld [vmem:[#allocation14 + $0x188] sm:$0xff]
    %v370 = vld [vmem:[#allocation14 + $0x190] sm:$0xff]
    %v371 = vld [vmem:[#allocation14 + $0x198] sm:$0xff]
    %v372 = vld [vmem:[#allocation14 + $0x1a0] sm:$0xff]
    %v373 = vld [vmem:[#allocation14 + $0x1a8] sm:$0xff]
    %v374 = vld [vmem:[#allocation14 + $0x1b0] sm:$0xff]
    %v375 = vld [vmem:[#allocation14 + $0x1b8] sm:$0xff]
    %v376 = vld [vmem:[#allocation14 + $0x1c0] sm:$0xff]
    %v377 = vld [vmem:[#allocation14 + $0x1c8] sm:$0xff]
    %v378 = vld [vmem:[#allocation14 + $0x1d0] sm:$0xff]
    %v379 = vld [vmem:[#allocation14 + $0x1d8] sm:$0xff]
    %v380 = vld [vmem:[#allocation14 + $0x1e0] sm:$0xff]
    %v381 = vld [vmem:[#allocation14 + $0x1e8] sm:$0xff]
    %v382 = vld [vmem:[#allocation14 + $0x1f0] sm:$0xff]
    %v383 = vld [vmem:[#allocation14 + $0x1f8] sm:$0xff]
    %v384 = vld [vmem:[#allocation15] sm:$0x3]
    %v386 = vperm.slane %v384, 0
    %v387 = vperm.slane %v384, 1
    %v454 = vunpack.c.l.b16 %v320
    %v455 = vunpack.c.h.b16 %v320
    %v456 = vunpack.c.l.b16 %v321
    %v457 = vunpack.c.h.b16 %v321
    %v458 = vunpack.c.l.b16 %v322
    %v459 = vunpack.c.h.b16 %v322
    %v460 = vunpack.c.l.b16 %v323
    %v461 = vunpack.c.h.b16 %v323
    %v462 = vunpack.c.l.b16 %v324
    %v463 = vunpack.c.h.b16 %v324
    %v464 = vunpack.c.l.b16 %v325
    %v465 = vunpack.c.h.b16 %v325
    %v466 = vunpack.c.l.b16 %v326
    %v467 = vunpack.c.h.b16 %v326
    %v468 = vunpack.c.l.b16 %v327
    %v469 = vunpack.c.h.b16 %v327
    %v470 = vunpack.c.l.b16 %v328
    %v471 = vunpack.c.h.b16 %v328
    %v472 = vunpack.c.l.b16 %v329
    %v473 = vunpack.c.h.b16 %v329
    %v474 = vunpack.c.l.b16 %v330
    %v475 = vunpack.c.h.b16 %v330
    %v476 = vunpack.c.l.b16 %v331
    %v477 = vunpack.c.h.b16 %v331
    %v478 = vunpack.c.l.b16 %v332
    %v479 = vunpack.c.h.b16 %v332
    %v480 = vunpack.c.l.b16 %v333
    %v481 = vunpack.c.h.b16 %v333
    %v482 = vunpack.c.l.b16 %v334
    %v483 = vunpack.c.h.b16 %v334
    %v484 = vunpack.c.l.b16 %v335
    %v485 = vunpack.c.h.b16 %v335
    %v486 = vunpack.c.l.b16 %v336
    %v487 = vunpack.c.h.b16 %v336
    %v488 = vunpack.c.l.b16 %v337
    %v489 = vunpack.c.h.b16 %v337
    %v490 = vunpack.c.l.b16 %v338
    %v491 = vunpack.c.h.b16 %v338
    %v492 = vunpack.c.l.b16 %v339
    %v493 = vunpack.c.h.b16 %v339
    %v494 = vunpack.c.l.b16 %v340
    %v495 = vunpack.c.h.b16 %v340
    %v496 = vunpack.c.l.b16 %v341
    %v497 = vunpack.c.h.b16 %v341
    %v498 = vunpack.c.l.b16 %v342
    %v499 = vunpack.c.h.b16 %v342
    %v500 = vunpack.c.l.b16 %v343
    %v501 = vunpack.c.h.b16 %v343
    %v502 = vunpack.c.l.b16 %v344
    %v503 = vunpack.c.h.b16 %v344
    %v504 = vunpack.c.l.b16 %v345
    %v505 = vunpack.c.h.b16 %v345
    %v506 = vunpack.c.l.b16 %v346
    %v507 = vunpack.c.h.b16 %v346
    %v508 = vunpack.c.l.b16 %v347
    %v509 = vunpack.c.h.b16 %v347
    %v510 = vunpack.c.l.b16 %v348
    %v511 = vunpack.c.h.b16 %v348
    %v512 = vunpack.c.l.b16 %v349
    %v513 = vunpack.c.h.b16 %v349
    %v514 = vunpack.c.l.b16 %v350
    %v515 = vunpack.c.h.b16 %v350
    %v516 = vunpack.c.l.b16 %v351
    %v517 = vunpack.c.h.b16 %v351
    %v518 = vunpack.c.l.b16 %v352
    %v519 = vunpack.c.h.b16 %v352
    %v520 = vunpack.c.l.b16 %v353
    %v521 = vunpack.c.h.b16 %v353
    %v522 = vunpack.c.l.b16 %v354
    %v523 = vunpack.c.h.b16 %v354
    %v524 = vunpack.c.l.b16 %v355
    %v525 = vunpack.c.h.b16 %v355
    %v526 = vunpack.c.l.b16 %v356
    %v527 = vunpack.c.h.b16 %v356
    %v528 = vunpack.c.l.b16 %v357
    %v529 = vunpack.c.h.b16 %v357
    %v530 = vunpack.c.l.b16 %v358
    %v531 = vunpack.c.h.b16 %v358
    %v532 = vunpack.c.l.b16 %v359
    %v533 = vunpack.c.h.b16 %v359
    %v534 = vunpack.c.l.b16 %v360
    %v535 = vunpack.c.h.b16 %v360
    %v536 = vunpack.c.l.b16 %v361
    %v537 = vunpack.c.h.b16 %v361
    %v538 = vunpack.c.l.b16 %v362
    %v539 = vunpack.c.h.b16 %v362
    %v540 = vunpack.c.l.b16 %v363
    %v541 = vunpack.c.h.b16 %v363
    %v542 = vunpack.c.l.b16 %v364
    %v543 = vunpack.c.h.b16 %v364
    %v544 = vunpack.c.l.b16 %v365
    %v545 = vunpack.c.h.b16 %v365
    %v546 = vunpack.c.l.b16 %v366
    %v547 = vunpack.c.h.b16 %v366
    %v548 = vunpack.c.l.b16 %v367
    %v549 = vunpack.c.h.b16 %v367
    %v550 = vunpack.c.l.b16 %v368
    %v551 = vunpack.c.h.b16 %v368
    %v552 = vunpack.c.l.b16 %v369
    %v553 = vunpack.c.h.b16 %v369
    %v554 = vunpack.c.l.b16 %v370
    %v555 = vunpack.c.h.b16 %v370
    %v556 = vunpack.c.l.b16 %v371
    %v557 = vunpack.c.h.b16 %v371
    %v558 = vunpack.c.l.b16 %v372
    %v559 = vunpack.c.h.b16 %v372
    %v560 = vunpack.c.l.b16 %v373
    %v561 = vunpack.c.h.b16 %v373
    %v562 = vunpack.c.l.b16 %v374
    %v563 = vunpack.c.h.b16 %v374
    %v564 = vunpack.c.l.b16 %v375
    %v565 = vunpack.c.h.b16 %v375
    %v566 = vunpack.c.l.b16 %v376
    %v567 = vunpack.c.h.b16 %v376
    %v568 = vunpack.c.l.b16 %v377
    %v569 = vunpack.c.h.b16 %v377
    %v570 = vunpack.c.l.b16 %v378
    %v571 = vunpack.c.h.b16 %v378
    %v572 = vunpack.c.l.b16 %v379
    %v573 = vunpack.c.h.b16 %v379
    %v574 = vunpack.c.l.b16 %v380
    %v575 = vunpack.c.h.b16 %v380
    %v576 = vunpack.c.l.b16 %v381
    %v577 = vunpack.c.h.b16 %v381
    %v578 = vunpack.c.l.b16 %v382
    %v579 = vunpack.c.h.b16 %v382
    %v580 = vunpack.c.l.b16 %v383
    %v581 = vunpack.c.h.b16 %v383
    %v582 = vpack.c.b16 %v456, %v454
    %v583 = vpack.c.b16 %v457, %v455
    %v584 = vpack.c.b16 %v460, %v458
    %v585 = vpack.c.b16 %v461, %v459
    %v586 = vpack.c.b16 %v464, %v462
    %v587 = vpack.c.b16 %v465, %v463
    %v588 = vpack.c.b16 %v468, %v466
    %v589 = vpack.c.b16 %v469, %v467
    %v590 = vpack.c.b16 %v472, %v470
    %v591 = vpack.c.b16 %v473, %v471
    %v592 = vpack.c.b16 %v476, %v474
    %v593 = vpack.c.b16 %v477, %v475
    %v594 = vpack.c.b16 %v480, %v478
    %v595 = vpack.c.b16 %v481, %v479
    %v596 = vpack.c.b16 %v484, %v482
    %v597 = vpack.c.b16 %v485, %v483
    %v598 = vpack.c.b16 %v488, %v486
    %v599 = vpack.c.b16 %v489, %v487
    %v600 = vpack.c.b16 %v492, %v490
    %v601 = vpack.c.b16 %v493, %v491
    %v602 = vpack.c.b16 %v496, %v494
    %v603 = vpack.c.b16 %v497, %v495
    %v604 = vpack.c.b16 %v500, %v498
    %v605 = vpack.c.b16 %v501, %v499
    %v606 = vpack.c.b16 %v504, %v502
    %v607 = vpack.c.b16 %v505, %v503
    %v608 = vpack.c.b16 %v508, %v506
    %v609 = vpack.c.b16 %v509, %v507
    %v610 = vpack.c.b16 %v512, %v510
    %v611 = vpack.c.b16 %v513, %v511
    %v612 = vpack.c.b16 %v516, %v514
    %v613 = vpack.c.b16 %v517, %v515
    %v614 = vpack.c.b16 %v520, %v518
    %v615 = vpack.c.b16 %v521, %v519
    %v616 = vpack.c.b16 %v524, %v522
    %v617 = vpack.c.b16 %v525, %v523
    %v618 = vpack.c.b16 %v528, %v526
    %v619 = vpack.c.b16 %v529, %v527
    %v620 = vpack.c.b16 %v532, %v530
    %v621 = vpack.c.b16 %v533, %v531
    %v622 = vpack.c.b16 %v536, %v534
    %v623 = vpack.c.b16 %v537, %v535
    %v624 = vpack.c.b16 %v540, %v538
    %v625 = vpack.c.b16 %v541, %v539
    %v626 = vpack.c.b16 %v544, %v542
    %v627 = vpack.c.b16 %v545, %v543
    %v628 = vpack.c.b16 %v548, %v546
    %v629 = vpack.c.b16 %v549, %v547
    %v630 = vpack.c.b16 %v552, %v550
    %v631 = vpack.c.b16 %v553, %v551
    %v632 = vpack.c.b16 %v556, %v554
    %v633 = vpack.c.b16 %v557, %v555
    %v634 = vpack.c.b16 %v560, %v558
    %v635 = vpack.c.b16 %v561, %v559
    %v636 = vpack.c.b16 %v564, %v562
    %v637 = vpack.c.b16 %v565, %v563
    %v638 = vpack.c.b16 %v568, %v566
    %v639 = vpack.c.b16 %v569, %v567
    %v640 = vpack.c.b16 %v572, %v570
    %v641 = vpack.c.b16 %v573, %v571
    %v642 = vpack.c.b16 %v576, %v574
    %v643 = vpack.c.b16 %v577, %v575
    %v644 = vpack.c.b16 %v580, %v578
    %v645 = vpack.c.b16 %v581, %v579
    %710 = vmatpush.bf16.msra.mxu0 %v596
    %711 = vmatpush.bf16.msra.mxu0 %v594
    %712 = vmatpush.bf16.msra.mxu0 %v592
    %713 = vmatpush.bf16.msra.mxu0 %v590
    %714 = vmatpush.bf16.msra.mxu0 %v588
    %715 = vmatpush.bf16.msra.mxu0 %v586
    %716 = vmatpush.bf16.msra.mxu0 %v584
    %717 = vmatpush.bf16.msra.mxu0 %v582
    %718 = vmatmul.bf16.gmra.mxu0 %v288
    %v719 = vpop.f32.mrf.mxu0
    %v720 = vadd.f32 %v386, %v719
    %v721 = vpop.f32.mrf.mxu0
    %v722 = vadd.f32 %v386, %v721
    %723 = vmatmul.bf16.gmra.mxu0 %v292
    %v724 = vpop.f32.mrf.mxu0
    %v725 = vadd.f32 %v386, %v724
    %v726 = vpop.f32.mrf.mxu0
    %v727 = vadd.f32 %v386, %v726
    %728 = vdwg.mxu0
    %729 = vmatpush.bf16.msra.mxu0 %v612
    %730 = vmatpush.bf16.msra.mxu0 %v610
    %731 = vmatpush.bf16.msra.mxu0 %v608
    %732 = vmatpush.bf16.msra.mxu0 %v606
    %733 = vmatpush.bf16.msra.mxu0 %v604
    %734 = vmatpush.bf16.msra.mxu0 %v602
    %735 = vmatpush.bf16.msra.mxu0 %v600
    %736 = vmatpush.bf16.msra.mxu0 %v598
    %737 = vmatmul.bf16.gmra.mxu0 %v289
    %v738 = vpop.f32.mrf.mxu0
    %v739 = vadd.f32 %v720, %v738
    %v740 = vpop.f32.mrf.mxu0
    %v741 = vadd.f32 %v722, %v740
    %742 = vmatmul.bf16.gmra.mxu0 %v293
    %v743 = vpop.f32.mrf.mxu0
    %v744 = vadd.f32 %v725, %v743
    %v745 = vpop.f32.mrf.mxu0
    %v746 = vadd.f32 %v727, %v745
    %747 = vdwg.mxu0
    %748 = vmatpush.bf16.msra.mxu0 %v628
    %749 = vmatpush.bf16.msra.mxu0 %v626
    %750 = vmatpush.bf16.msra.mxu0 %v624
    %751 = vmatpush.bf16.msra.mxu0 %v622
    %752 = vmatpush.bf16.msra.mxu0 %v620
    %753 = vmatpush.bf16.msra.mxu0 %v618
    %754 = vmatpush.bf16.msra.mxu0 %v616
    %755 = vmatpush.bf16.msra.mxu0 %v614
    %756 = vmatmul.bf16.gmra.mxu0 %v290
    %v757 = vpop.f32.mrf.mxu0
    %v758 = vadd.f32 %v739, %v757
    %v759 = vpop.f32.mrf.mxu0
    %v760 = vadd.f32 %v741, %v759
    %761 = vmatmul.bf16.gmra.mxu0 %v294
    %v762 = vpop.f32.mrf.mxu0
    %v763 = vadd.f32 %v744, %v762
    %v764 = vpop.f32.mrf.mxu0
    %v765 = vadd.f32 %v746, %v764
    %766 = vdwg.mxu0
    %767 = vmatpush.bf16.msra.mxu0 %v644
    %768 = vmatpush.bf16.msra.mxu0 %v642
    %769 = vmatpush.bf16.msra.mxu0 %v640
    %770 = vmatpush.bf16.msra.mxu0 %v638
    %771 = vmatpush.bf16.msra.mxu0 %v636
    %772 = vmatpush.bf16.msra.mxu0 %v634
    %773 = vmatpush.bf16.msra.mxu0 %v632
    %774 = vmatpush.bf16.msra.mxu0 %v630
    %775 = vmatmul.bf16.gmra.mxu0 %v291
    %v776 = vpop.f32.mrf.mxu0
    %v777 = vadd.f32 %v758, %v776
    %v778 = vpop.f32.mrf.mxu0
    %v779 = vadd.f32 %v760, %v778
    %780 = vmatmul.bf16.gmra.mxu0 %v295
    %v781 = vpop.f32.mrf.mxu0
    %v782 = vadd.f32 %v763, %v781
    %v783 = vpop.f32.mrf.mxu0
    %v784 = vadd.f32 %v765, %v783
    %785 = vdwg.mxu0
    %786 = vmatpush.bf16.msra.mxu0 %v597
    %787 = vmatpush.bf16.msra.mxu0 %v595
    %788 = vmatpush.bf16.msra.mxu0 %v593
    %789 = vmatpush.bf16.msra.mxu0 %v591
    %790 = vmatpush.bf16.msra.mxu0 %v589
    %791 = vmatpush.bf16.msra.mxu0 %v587
    %792 = vmatpush.bf16.msra.mxu0 %v585
    %793 = vmatpush.bf16.msra.mxu0 %v583
    %794 = vmatmul.bf16.gmra.mxu0 %v288
    %v795 = vpop.f32.mrf.mxu0
    %v796 = vadd.f32 %v387, %v795
    %v797 = vpop.f32.mrf.mxu0
    %v798 = vadd.f32 %v387, %v797
    %799 = vmatmul.bf16.gmra.mxu0 %v292
    %v800 = vpop.f32.mrf.mxu0
    %v801 = vadd.f32 %v387, %v800
    %v802 = vpop.f32.mrf.mxu0
    %v803 = vadd.f32 %v387, %v802
    %804 = vdwg.mxu0
    %805 = vmatpush.bf16.msra.mxu0 %v613
    %806 = vmatpush.bf16.msra.mxu0 %v611
    %807 = vmatpush.bf16.msra.mxu0 %v609
    %808 = vmatpush.bf16.msra.mxu0 %v607
    %809 = vmatpush.bf16.msra.mxu0 %v605
    %810 = vmatpush.bf16.msra.mxu0 %v603
    %811 = vmatpush.bf16.msra.mxu0 %v601
    %812 = vmatpush.bf16.msra.mxu0 %v599
    %813 = vmatmul.bf16.gmra.mxu0 %v289
    %v814 = vpop.f32.mrf.mxu0
    %v815 = vadd.f32 %v796, %v814
    %v816 = vpop.f32.mrf.mxu0
    %v817 = vadd.f32 %v798, %v816
    %818 = vmatmul.bf16.gmra.mxu0 %v293
    %v819 = vpop.f32.mrf.mxu0
    %v820 = vadd.f32 %v801, %v819
    %v821 = vpop.f32.mrf.mxu0
    %v822 = vadd.f32 %v803, %v821
    %823 = vdwg.mxu0
    %824 = vmatpush.bf16.msra.mxu0 %v629
    %825 = vmatpush.bf16.msra.mxu0 %v627
    %826 = vmatpush.bf16.msra.mxu0 %v625
    %827 = vmatpush.bf16.msra.mxu0 %v623
    %828 = vmatpush.bf16.msra.mxu0 %v621
    %829 = vmatpush.bf16.msra.mxu0 %v619
    %830 = vmatpush.bf16.msra.mxu0 %v617
    %831 = vmatpush.bf16.msra.mxu0 %v615
    %832 = vmatmul.bf16.gmra.mxu0 %v290
    %v833 = vpop.f32.mrf.mxu0
    %v834 = vadd.f32 %v815, %v833
    %v835 = vpop.f32.mrf.mxu0
    %v836 = vadd.f32 %v817, %v835
    %837 = vmatmul.bf16.gmra.mxu0 %v294
    %v838 = vpop.f32.mrf.mxu0
    %v839 = vadd.f32 %v820, %v838
    %v840 = vpop.f32.mrf.mxu0
    %v841 = vadd.f32 %v822, %v840
    %842 = vdwg.mxu0
    %843 = vmatpush.bf16.msra.mxu0 %v645
    %844 = vmatpush.bf16.msra.mxu0 %v643
    %845 = vmatpush.bf16.msra.mxu0 %v641
    %846 = vmatpush.bf16.msra.mxu0 %v639
    %847 = vmatpush.bf16.msra.mxu0 %v637
    %848 = vmatpush.bf16.msra.mxu0 %v635
    %849 = vmatpush.bf16.msra.mxu0 %v633
    %850 = vmatpush.bf16.msra.mxu0 %v631
    %851 = vmatmul.bf16.gmra.mxu0 %v291
    %v852 = vpop.f32.mrf.mxu0
    %v853 = vadd.f32 %v834, %v852
    %v854 = vpop.f32.mrf.mxu0
    %v855 = vadd.f32 %v836, %v854
    %856 = vmatmul.bf16.gmra.mxu0 %v295
    %v857 = vpop.f32.mrf.mxu0
    %v858 = vadd.f32 %v839, %v857
    %v859 = vpop.f32.mrf.mxu0
    %v860 = vadd.f32 %v841, %v859
    %861 = vdwg.mxu0
    %v862 = vld [vmem:[#allocation17] sm:$0xff]
    %v863 = vld [vmem:[#allocation17 + $0x8] sm:$0xff]
    %v864 = vld [vmem:[#allocation17 + $0x10] sm:$0xff]
    %v865 = vld [vmem:[#allocation17 + $0x18] sm:$0xff]
    %v866 = vld [vmem:[#allocation17 + $0x20] sm:$0xff]
    %v867 = vld [vmem:[#allocation17 + $0x28] sm:$0xff]
    %v868 = vld [vmem:[#allocation17 + $0x30] sm:$0xff]
    %v869 = vld [vmem:[#allocation17 + $0x38] sm:$0xff]
    %v870 = vld [vmem:[#allocation17 + $0x40] sm:$0xff]
    %v871 = vld [vmem:[#allocation17 + $0x48] sm:$0xff]
    %v872 = vld [vmem:[#allocation17 + $0x50] sm:$0xff]
    %v873 = vld [vmem:[#allocation17 + $0x58] sm:$0xff]
    %v874 = vld [vmem:[#allocation17 + $0x60] sm:$0xff]
    %v875 = vld [vmem:[#allocation17 + $0x68] sm:$0xff]
    %v876 = vld [vmem:[#allocation17 + $0x70] sm:$0xff]
    %v877 = vld [vmem:[#allocation17 + $0x78] sm:$0xff]
    %v878 = vld [vmem:[#allocation17 + $0x80] sm:$0xff]
    %v879 = vld [vmem:[#allocation17 + $0x88] sm:$0xff]
    %v880 = vld [vmem:[#allocation17 + $0x90] sm:$0xff]
    %v881 = vld [vmem:[#allocation17 + $0x98] sm:$0xff]
    %v882 = vld [vmem:[#allocation17 + $0xa0] sm:$0xff]
    %v883 = vld [vmem:[#allocation17 + $0xa8] sm:$0xff]
    %v884 = vld [vmem:[#allocation17 + $0xb0] sm:$0xff]
    %v885 = vld [vmem:[#allocation17 + $0xb8] sm:$0xff]
    %v886 = vld [vmem:[#allocation17 + $0xc0] sm:$0xff]
    %v887 = vld [vmem:[#allocation17 + $0xc8] sm:$0xff]
    %v888 = vld [vmem:[#allocation17 + $0xd0] sm:$0xff]
    %v889 = vld [vmem:[#allocation17 + $0xd8] sm:$0xff]
    %v890 = vld [vmem:[#allocation17 + $0xe0] sm:$0xff]
    %v891 = vld [vmem:[#allocation17 + $0xe8] sm:$0xff]
    %v892 = vld [vmem:[#allocation17 + $0xf0] sm:$0xff]
    %v893 = vld [vmem:[#allocation17 + $0xf8] sm:$0xff]
    %v894 = vld [vmem:[#allocation17 + $0x100] sm:$0xff]
    %v895 = vld [vmem:[#allocation17 + $0x108] sm:$0xff]
    %v896 = vld [vmem:[#allocation17 + $0x110] sm:$0xff]
    %v897 = vld [vmem:[#allocation17 + $0x118] sm:$0xff]
    %v898 = vld [vmem:[#allocation17 + $0x120] sm:$0xff]
    %v899 = vld [vmem:[#allocation17 + $0x128] sm:$0xff]
    %v900 = vld [vmem:[#allocation17 + $0x130] sm:$0xff]
    %v901 = vld [vmem:[#allocation17 + $0x138] sm:$0xff]
    %v902 = vld [vmem:[#allocation17 + $0x140] sm:$0xff]
    %v903 = vld [vmem:[#allocation17 + $0x148] sm:$0xff]
    %v904 = vld [vmem:[#allocation17 + $0x150] sm:$0xff]
    %v905 = vld [vmem:[#allocation17 + $0x158] sm:$0xff]
    %v906 = vld [vmem:[#allocation17 + $0x160] sm:$0xff]
    %v907 = vld [vmem:[#allocation17 + $0x168] sm:$0xff]
    %v908 = vld [vmem:[#allocation17 + $0x170] sm:$0xff]
    %v909 = vld [vmem:[#allocation17 + $0x178] sm:$0xff]
    %v910 = vld [vmem:[#allocation17 + $0x180] sm:$0xff]
    %v911 = vld [vmem:[#allocation17 + $0x188] sm:$0xff]
    %v912 = vld [vmem:[#allocation17 + $0x190] sm:$0xff]
    %v913 = vld [vmem:[#allocation17 + $0x198] sm:$0xff]
    %v914 = vld [vmem:[#allocation17 + $0x1a0] sm:$0xff]
    %v915 = vld [vmem:[#allocation17 + $0x1a8] sm:$0xff]
    %v916 = vld [vmem:[#allocation17 + $0x1b0] sm:$0xff]
    %v917 = vld [vmem:[#allocation17 + $0x1b8] sm:$0xff]
    %v918 = vld [vmem:[#allocation17 + $0x1c0] sm:$0xff]
    %v919 = vld [vmem:[#allocation17 + $0x1c8] sm:$0xff]
    %v920 = vld [vmem:[#allocation17 + $0x1d0] sm:$0xff]
    %v921 = vld [vmem:[#allocation17 + $0x1d8] sm:$0xff]
    %v922 = vld [vmem:[#allocation17 + $0x1e0] sm:$0xff]
    %v923 = vld [vmem:[#allocation17 + $0x1e8] sm:$0xff]
    %v924 = vld [vmem:[#allocation17 + $0x1f0] sm:$0xff]
    %v925 = vld [vmem:[#allocation17 + $0x1f8] sm:$0xff]
    %v926 = vld [vmem:[#allocation18] sm:$0x3]
    %v928 = vperm.slane %v926, 0
    %v929 = vperm.slane %v926, 1
    %v996 = vunpack.c.l.b16 %v862
    %v997 = vunpack.c.h.b16 %v862
    %v998 = vunpack.c.l.b16 %v863
    %v999 = vunpack.c.h.b16 %v863
    %v1000 = vunpack.c.l.b16 %v864
    %v1001 = vunpack.c.h.b16 %v864
    %v1002 = vunpack.c.l.b16 %v865
    %v1003 = vunpack.c.h.b16 %v865
    %v1004 = vunpack.c.l.b16 %v866
    %v1005 = vunpack.c.h.b16 %v866
    %v1006 = vunpack.c.l.b16 %v867
    %v1007 = vunpack.c.h.b16 %v867
    %v1008 = vunpack.c.l.b16 %v868
    %v1009 = vunpack.c.h.b16 %v868
    %v1010 = vunpack.c.l.b16 %v869
    %v1011 = vunpack.c.h.b16 %v869
    %v1012 = vunpack.c.l.b16 %v870
    %v1013 = vunpack.c.h.b16 %v870
    %v1014 = vunpack.c.l.b16 %v871
    %v1015 = vunpack.c.h.b16 %v871
    %v1016 = vunpack.c.l.b16 %v872
    %v1017 = vunpack.c.h.b16 %v872
    %v1018 = vunpack.c.l.b16 %v873
    %v1019 = vunpack.c.h.b16 %v873
    %v1020 = vunpack.c.l.b16 %v874
    %v1021 = vunpack.c.h.b16 %v874
    %v1022 = vunpack.c.l.b16 %v875
    %v1023 = vunpack.c.h.b16 %v875
    %v1024 = vunpack.c.l.b16 %v876
    %v1025 = vunpack.c.h.b16 %v876
    %v1026 = vunpack.c.l.b16 %v877
    %v1027 = vunpack.c.h.b16 %v877
    %v1028 = vunpack.c.l.b16 %v878
    %v1029 = vunpack.c.h.b16 %v878
    %v1030 = vunpack.c.l.b16 %v879
    %v1031 = vunpack.c.h.b16 %v879
    %v1032 = vunpack.c.l.b16 %v880
    %v1033 = vunpack.c.h.b16 %v880
    %v1034 = vunpack.c.l.b16 %v881
    %v1035 = vunpack.c.h.b16 %v881
    %v1036 = vunpack.c.l.b16 %v882
    %v1037 = vunpack.c.h.b16 %v882
    %v1038 = vunpack.c.l.b16 %v883
    %v1039 = vunpack.c.h.b16 %v883
    %v1040 = vunpack.c.l.b16 %v884
    %v1041 = vunpack.c.h.b16 %v884
    %v1042 = vunpack.c.l.b16 %v885
    %v1043 = vunpack.c.h.b16 %v885
    %v1044 = vunpack.c.l.b16 %v886
    %v1045 = vunpack.c.h.b16 %v886
    %v1046 = vunpack.c.l.b16 %v887
    %v1047 = vunpack.c.h.b16 %v887
    %v1048 = vunpack.c.l.b16 %v888
    %v1049 = vunpack.c.h.b16 %v888
    %v1050 = vunpack.c.l.b16 %v889
    %v1051 = vunpack.c.h.b16 %v889
    %v1052 = vunpack.c.l.b16 %v890
    %v1053 = vunpack.c.h.b16 %v890
    %v1054 = vunpack.c.l.b16 %v891
    %v1055 = vunpack.c.h.b16 %v891
    %v1056 = vunpack.c.l.b16 %v892
    %v1057 = vunpack.c.h.b16 %v892
    %v1058 = vunpack.c.l.b16 %v893
    %v1059 = vunpack.c.h.b16 %v893
    %v1060 = vunpack.c.l.b16 %v894
    %v1061 = vunpack.c.h.b16 %v894
    %v1062 = vunpack.c.l.b16 %v895
    %v1063 = vunpack.c.h.b16 %v895
    %v1064 = vunpack.c.l.b16 %v896
    %v1065 = vunpack.c.h.b16 %v896
    %v1066 = vunpack.c.l.b16 %v897
    %v1067 = vunpack.c.h.b16 %v897
    %v1068 = vunpack.c.l.b16 %v898
    %v1069 = vunpack.c.h.b16 %v898
    %v1070 = vunpack.c.l.b16 %v899
    %v1071 = vunpack.c.h.b16 %v899
    %v1072 = vunpack.c.l.b16 %v900
    %v1073 = vunpack.c.h.b16 %v900
    %v1074 = vunpack.c.l.b16 %v901
    %v1075 = vunpack.c.h.b16 %v901
    %v1076 = vunpack.c.l.b16 %v902
    %v1077 = vunpack.c.h.b16 %v902
    %v1078 = vunpack.c.l.b16 %v903
    %v1079 = vunpack.c.h.b16 %v903
    %v1080 = vunpack.c.l.b16 %v904
    %v1081 = vunpack.c.h.b16 %v904
    %v1082 = vunpack.c.l.b16 %v905
    %v1083 = vunpack.c.h.b16 %v905
    %v1084 = vunpack.c.l.b16 %v906
    %v1085 = vunpack.c.h.b16 %v906
    %v1086 = vunpack.c.l.b16 %v907
    %v1087 = vunpack.c.h.b16 %v907
    %v1088 = vunpack.c.l.b16 %v908
    %v1089 = vunpack.c.h.b16 %v908
    %v1090 = vunpack.c.l.b16 %v909
    %v1091 = vunpack.c.h.b16 %v909
    %v1092 = vunpack.c.l.b16 %v910
    %v1093 = vunpack.c.h.b16 %v910
    %v1094 = vunpack.c.l.b16 %v911
    %v1095 = vunpack.c.h.b16 %v911
    %v1096 = vunpack.c.l.b16 %v912
    %v1097 = vunpack.c.h.b16 %v912
    %v1098 = vunpack.c.l.b16 %v913
    %v1099 = vunpack.c.h.b16 %v913
    %v1100 = vunpack.c.l.b16 %v914
    %v1101 = vunpack.c.h.b16 %v914
    %v1102 = vunpack.c.l.b16 %v915
    %v1103 = vunpack.c.h.b16 %v915
    %v1104 = vunpack.c.l.b16 %v916
    %v1105 = vunpack.c.h.b16 %v916
    %v1106 = vunpack.c.l.b16 %v917
    %v1107 = vunpack.c.h.b16 %v917
    %v1108 = vunpack.c.l.b16 %v918
    %v1109 = vunpack.c.h.b16 %v918
    %v1110 = vunpack.c.l.b16 %v919
    %v1111 = vunpack.c.h.b16 %v919
    %v1112 = vunpack.c.l.b16 %v920
    %v1113 = vunpack.c.h.b16 %v920
    %v1114 = vunpack.c.l.b16 %v921
    %v1115 = vunpack.c.h.b16 %v921
    %v1116 = vunpack.c.l.b16 %v922
    %v1117 = vunpack.c.h.b16 %v922
    %v1118 = vunpack.c.l.b16 %v923
    %v1119 = vunpack.c.h.b16 %v923
    %v1120 = vunpack.c.l.b16 %v924
    %v1121 = vunpack.c.h.b16 %v924
    %v1122 = vunpack.c.l.b16 %v925
    %v1123 = vunpack.c.h.b16 %v925
    %v1124 = vpack.c.b16 %v998, %v996
    %v1125 = vpack.c.b16 %v999, %v997
    %v1126 = vpack.c.b16 %v1002, %v1000
    %v1127 = vpack.c.b16 %v1003, %v1001
    %v1128 = vpack.c.b16 %v1006, %v1004
    %v1129 = vpack.c.b16 %v1007, %v1005
    %v1130 = vpack.c.b16 %v1010, %v1008
    %v1131 = vpack.c.b16 %v1011, %v1009
    %v1132 = vpack.c.b16 %v1014, %v1012
    %v1133 = vpack.c.b16 %v1015, %v1013
    %v1134 = vpack.c.b16 %v1018, %v1016
    %v1135 = vpack.c.b16 %v1019, %v1017
    %v1136 = vpack.c.b16 %v1022, %v1020
    %v1137 = vpack.c.b16 %v1023, %v1021
    %v1138 = vpack.c.b16 %v1026, %v1024
    %v1139 = vpack.c.b16 %v1027, %v1025
    %v1140 = vpack.c.b16 %v1030, %v1028
    %v1141 = vpack.c.b16 %v1031, %v1029
    %v1142 = vpack.c.b16 %v1034, %v1032
    %v1143 = vpack.c.b16 %v1035, %v1033
    %v1144 = vpack.c.b16 %v1038, %v1036
    %v1145 = vpack.c.b16 %v1039, %v1037
    %v1146 = vpack.c.b16 %v1042, %v1040
    %v1147 = vpack.c.b16 %v1043, %v1041
    %v1148 = vpack.c.b16 %v1046, %v1044
    %v1149 = vpack.c.b16 %v1047, %v1045
    %v1150 = vpack.c.b16 %v1050, %v1048
    %v1151 = vpack.c.b16 %v1051, %v1049
    %v1152 = vpack.c.b16 %v1054, %v1052
    %v1153 = vpack.c.b16 %v1055, %v1053
    %v1154 = vpack.c.b16 %v1058, %v1056
    %v1155 = vpack.c.b16 %v1059, %v1057
    %v1156 = vpack.c.b16 %v1062, %v1060
    %v1157 = vpack.c.b16 %v1063, %v1061
    %v1158 = vpack.c.b16 %v1066, %v1064
    %v1159 = vpack.c.b16 %v1067, %v1065
    %v1160 = vpack.c.b16 %v1070, %v1068
    %v1161 = vpack.c.b16 %v1071, %v1069
    %v1162 = vpack.c.b16 %v1074, %v1072
    %v1163 = vpack.c.b16 %v1075, %v1073
    %v1164 = vpack.c.b16 %v1078, %v1076
    %v1165 = vpack.c.b16 %v1079, %v1077
    %v1166 = vpack.c.b16 %v1082, %v1080
    %v1167 = vpack.c.b16 %v1083, %v1081
    %v1168 = vpack.c.b16 %v1086, %v1084
    %v1169 = vpack.c.b16 %v1087, %v1085
    %v1170 = vpack.c.b16 %v1090, %v1088
    %v1171 = vpack.c.b16 %v1091, %v1089
    %v1172 = vpack.c.b16 %v1094, %v1092
    %v1173 = vpack.c.b16 %v1095, %v1093
    %v1174 = vpack.c.b16 %v1098, %v1096
    %v1175 = vpack.c.b16 %v1099, %v1097
    %v1176 = vpack.c.b16 %v1102, %v1100
    %v1177 = vpack.c.b16 %v1103, %v1101
    %v1178 = vpack.c.b16 %v1106, %v1104
    %v1179 = vpack.c.b16 %v1107, %v1105
    %v1180 = vpack.c.b16 %v1110, %v1108
    %v1181 = vpack.c.b16 %v1111, %v1109
    %v1182 = vpack.c.b16 %v1114, %v1112
    %v1183 = vpack.c.b16 %v1115, %v1113
    %v1184 = vpack.c.b16 %v1118, %v1116
    %v1185 = vpack.c.b16 %v1119, %v1117
    %v1186 = vpack.c.b16 %v1122, %v1120
    %v1187 = vpack.c.b16 %v1123, %v1121
    %1252 = vmatpush.bf16.msra.mxu0 %v1138
    %1253 = vmatpush.bf16.msra.mxu0 %v1136
    %1254 = vmatpush.bf16.msra.mxu0 %v1134
    %1255 = vmatpush.bf16.msra.mxu0 %v1132
    %1256 = vmatpush.bf16.msra.mxu0 %v1130
    %1257 = vmatpush.bf16.msra.mxu0 %v1128
    %1258 = vmatpush.bf16.msra.mxu0 %v1126
    %1259 = vmatpush.bf16.msra.mxu0 %v1124
    %1260 = vmatmul.bf16.gmra.mxu0 %v312
    %v1261 = vpop.f32.mrf.mxu0
    %v1262 = vadd.f32 %v928, %v1261
    %v1263 = vpop.f32.mrf.mxu0
    %v1264 = vadd.f32 %v928, %v1263
    %1265 = vmatmul.bf16.gmra.mxu0 %v316
    %v1266 = vpop.f32.mrf.mxu0
    %v1267 = vadd.f32 %v928, %v1266
    %v1268 = vpop.f32.mrf.mxu0
    %v1269 = vadd.f32 %v928, %v1268
    %1270 = vdwg.mxu0
    %1271 = vmatpush.bf16.msra.mxu0 %v1154
    %1272 = vmatpush.bf16.msra.mxu0 %v1152
    %1273 = vmatpush.bf16.msra.mxu0 %v1150
    %1274 = vmatpush.bf16.msra.mxu0 %v1148
    %1275 = vmatpush.bf16.msra.mxu0 %v1146
    %1276 = vmatpush.bf16.msra.mxu0 %v1144
    %1277 = vmatpush.bf16.msra.mxu0 %v1142
    %1278 = vmatpush.bf16.msra.mxu0 %v1140
    %1279 = vmatmul.bf16.gmra.mxu0 %v313
    %v1280 = vpop.f32.mrf.mxu0
    %v1281 = vadd.f32 %v1262, %v1280
    %v1282 = vpop.f32.mrf.mxu0
    %v1283 = vadd.f32 %v1264, %v1282
    %1284 = vmatmul.bf16.gmra.mxu0 %v317
    %v1285 = vpop.f32.mrf.mxu0
    %v1286 = vadd.f32 %v1267, %v1285
    %v1287 = vpop.f32.mrf.mxu0
    %v1288 = vadd.f32 %v1269, %v1287
    %1289 = vdwg.mxu0
    %1290 = vmatpush.bf16.msra.mxu0 %v1170
    %1291 = vmatpush.bf16.msra.mxu0 %v1168
    %1292 = vmatpush.bf16.msra.mxu0 %v1166
    %1293 = vmatpush.bf16.msra.mxu0 %v1164
    %1294 = vmatpush.bf16.msra.mxu0 %v1162
    %1295 = vmatpush.bf16.msra.mxu0 %v1160
    %1296 = vmatpush.bf16.msra.mxu0 %v1158
    %1297 = vmatpush.bf16.msra.mxu0 %v1156
    %1298 = vmatmul.bf16.gmra.mxu0 %v314
    %v1299 = vpop.f32.mrf.mxu0
    %v1300 = vadd.f32 %v1281, %v1299
    %v1301 = vpop.f32.mrf.mxu0
    %v1302 = vadd.f32 %v1283, %v1301
    %1303 = vmatmul.bf16.gmra.mxu0 %v318
    %v1304 = vpop.f32.mrf.mxu0
    %v1305 = vadd.f32 %v1286, %v1304
    %v1306 = vpop.f32.mrf.mxu0
    %v1307 = vadd.f32 %v1288, %v1306
    %1308 = vdwg.mxu0
    %1309 = vmatpush.bf16.msra.mxu0 %v1186
    %1310 = vmatpush.bf16.msra.mxu0 %v1184
    %1311 = vmatpush.bf16.msra.mxu0 %v1182
    %1312 = vmatpush.bf16.msra.mxu0 %v1180
    %1313 = vmatpush.bf16.msra.mxu0 %v1178
    %1314 = vmatpush.bf16.msra.mxu0 %v1176
    %1315 = vmatpush.bf16.msra.mxu0 %v1174
    %1316 = vmatpush.bf16.msra.mxu0 %v1172
    %1317 = vmatmul.bf16.gmra.mxu0 %v315
    %v1318 = vpop.f32.mrf.mxu0
    %v1319 = vadd.f32 %v1300, %v1318
    %v1320 = vpop.f32.mrf.mxu0
    %v1321 = vadd.f32 %v1302, %v1320
    %1322 = vmatmul.bf16.gmra.mxu0 %v319
    %v1323 = vpop.f32.mrf.mxu0
    %v1324 = vadd.f32 %v1305, %v1323
    %v1325 = vpop.f32.mrf.mxu0
    %v1326 = vadd.f32 %v1307, %v1325
    %1327 = vdwg.mxu0
    %1328 = vmatpush.bf16.msra.mxu0 %v1139
    %1329 = vmatpush.bf16.msra.mxu0 %v1137
    %1330 = vmatpush.bf16.msra.mxu0 %v1135
    %1331 = vmatpush.bf16.msra.mxu0 %v1133
    %1332 = vmatpush.bf16.msra.mxu0 %v1131
    %1333 = vmatpush.bf16.msra.mxu0 %v1129
    %1334 = vmatpush.bf16.msra.mxu0 %v1127
    %1335 = vmatpush.bf16.msra.mxu0 %v1125
    %1336 = vmatmul.bf16.gmra.mxu0 %v312
    %v1337 = vpop.f32.mrf.mxu0
    %v1338 = vadd.f32 %v929, %v1337
    %v1339 = vpop.f32.mrf.mxu0
    %v1340 = vadd.f32 %v929, %v1339
    %1341 = vmatmul.bf16.gmra.mxu0 %v316
    %v1342 = vpop.f32.mrf.mxu0
    %v1343 = vadd.f32 %v929, %v1342
    %v1344 = vpop.f32.mrf.mxu0
    %v1345 = vadd.f32 %v929, %v1344
    %1346 = vdwg.mxu0
    %1347 = vmatpush.bf16.msra.mxu0 %v1155
    %1348 = vmatpush.bf16.msra.mxu0 %v1153
    %1349 = vmatpush.bf16.msra.mxu0 %v1151
    %1350 = vmatpush.bf16.msra.mxu0 %v1149
    %1351 = vmatpush.bf16.msra.mxu0 %v1147
    %1352 = vmatpush.bf16.msra.mxu0 %v1145
    %1353 = vmatpush.bf16.msra.mxu0 %v1143
    %1354 = vmatpush.bf16.msra.mxu0 %v1141
    %1355 = vmatmul.bf16.gmra.mxu0 %v313
    %v1356 = vpop.f32.mrf.mxu0
    %v1357 = vadd.f32 %v1338, %v1356
    %v1358 = vpop.f32.mrf.mxu0
    %v1359 = vadd.f32 %v1340, %v1358
    %1360 = vmatmul.bf16.gmra.mxu0 %v317
    %v1361 = vpop.f32.mrf.mxu0
    %v1362 = vadd.f32 %v1343, %v1361
    %v1363 = vpop.f32.mrf.mxu0
    %v1364 = vadd.f32 %v1345, %v1363
    %1365 = vdwg.mxu0
    %1366 = vmatpush.bf16.msra.mxu0 %v1171
    %1367 = vmatpush.bf16.msra.mxu0 %v1169
    %1368 = vmatpush.bf16.msra.mxu0 %v1167
    %1369 = vmatpush.bf16.msra.mxu0 %v1165
    %1370 = vmatpush.bf16.msra.mxu0 %v1163
    %1371 = vmatpush.bf16.msra.mxu0 %v1161
    %1372 = vmatpush.bf16.msra.mxu0 %v1159
    %1373 = vmatpush.bf16.msra.mxu0 %v1157
    %1374 = vmatmul.bf16.gmra.mxu0 %v314
    %v1375 = vpop.f32.mrf.mxu0
    %v1376 = vadd.f32 %v1357, %v1375
    %v1377 = vpop.f32.mrf.mxu0
    %v1378 = vadd.f32 %v1359, %v1377
    %1379 = vmatmul.bf16.gmra.mxu0 %v318
    %v1380 = vpop.f32.mrf.mxu0
    %v1381 = vadd.f32 %v1362, %v1380
    %v1382 = vpop.f32.mrf.mxu0
    %v1383 = vadd.f32 %v1364, %v1382
    %1384 = vdwg.mxu0
    %1385 = vmatpush.bf16.msra.mxu0 %v1187
    %1386 = vmatpush.bf16.msra.mxu0 %v1185
    %1387 = vmatpush.bf16.msra.mxu0 %v1183
    %1388 = vmatpush.bf16.msra.mxu0 %v1181
    %1389 = vmatpush.bf16.msra.mxu0 %v1179
    %1390 = vmatpush.bf16.msra.mxu0 %v1177
    %1391 = vmatpush.bf16.msra.mxu0 %v1175
    %1392 = vmatpush.bf16.msra.mxu0 %v1173
    %1393 = vmatmul.bf16.gmra.mxu0 %v315
    %v1394 = vpop.f32.mrf.mxu0
    %v1395 = vadd.f32 %v1376, %v1394
    %v1396 = vpop.f32.mrf.mxu0
    %v1397 = vadd.f32 %v1378, %v1396
    %1398 = vmatmul.bf16.gmra.mxu0 %v319
    %v1399 = vpop.f32.mrf.mxu0
    %v1400 = vadd.f32 %v1381, %v1399
    %v1401 = vpop.f32.mrf.mxu0
    %v1402 = vadd.f32 %v1383, %v1401
    %1403 = vdwg.mxu0
    %v1404 = vld [vmem:[#allocation20] sm:$0xff]
    %v1405 = vld [vmem:[#allocation20 + $0x8] sm:$0xff]
    %v1406 = vld [vmem:[#allocation20 + $0x10] sm:$0xff]
    %v1407 = vld [vmem:[#allocation20 + $0x18] sm:$0xff]
    %v1408 = vld [vmem:[#allocation20 + $0x20] sm:$0xff]
    %v1409 = vld [vmem:[#allocation20 + $0x28] sm:$0xff]
    %v1410 = vld [vmem:[#allocation20 + $0x30] sm:$0xff]
    %v1411 = vld [vmem:[#allocation20 + $0x38] sm:$0xff]
    %v1412 = vld [vmem:[#allocation20 + $0x40] sm:$0xff]
    %v1413 = vld [vmem:[#allocation20 + $0x48] sm:$0xff]
    %v1414 = vld [vmem:[#allocation20 + $0x50] sm:$0xff]
    %v1415 = vld [vmem:[#allocation20 + $0x58] sm:$0xff]
    %v1416 = vld [vmem:[#allocation20 + $0x60] sm:$0xff]
    %v1417 = vld [vmem:[#allocation20 + $0x68] sm:$0xff]
    %v1418 = vld [vmem:[#allocation20 + $0x70] sm:$0xff]
    %v1419 = vld [vmem:[#allocation20 + $0x78] sm:$0xff]
    %v1420 = vld [vmem:[#allocation20 + $0x80] sm:$0xff]
    %v1421 = vld [vmem:[#allocation20 + $0x88] sm:$0xff]
    %v1422 = vld [vmem:[#allocation20 + $0x90] sm:$0xff]
    %v1423 = vld [vmem:[#allocation20 + $0x98] sm:$0xff]
    %v1424 = vld [vmem:[#allocation20 + $0xa0] sm:$0xff]
    %v1425 = vld [vmem:[#allocation20 + $0xa8] sm:$0xff]
    %v1426 = vld [vmem:[#allocation20 + $0xb0] sm:$0xff]
    %v1427 = vld [vmem:[#allocation20 + $0xb8] sm:$0xff]
    %v1428 = vld [vmem:[#allocation20 + $0xc0] sm:$0xff]
    %v1429 = vld [vmem:[#allocation20 + $0xc8] sm:$0xff]
    %v1430 = vld [vmem:[#allocation20 + $0xd0] sm:$0xff]
    %v1431 = vld [vmem:[#allocation20 + $0xd8] sm:$0xff]
    %v1432 = vld [vmem:[#allocation20 + $0xe0] sm:$0xff]
    %v1433 = vld [vmem:[#allocation20 + $0xe8] sm:$0xff]
    %v1434 = vld [vmem:[#allocation20 + $0xf0] sm:$0xff]
    %v1435 = vld [vmem:[#allocation20 + $0xf8] sm:$0xff]
    %v1436 = vld [vmem:[#allocation20 + $0x100] sm:$0xff]
    %v1437 = vld [vmem:[#allocation20 + $0x108] sm:$0xff]
    %v1438 = vld [vmem:[#allocation20 + $0x110] sm:$0xff]
    %v1439 = vld [vmem:[#allocation20 + $0x118] sm:$0xff]
    %v1440 = vld [vmem:[#allocation20 + $0x120] sm:$0xff]
    %v1441 = vld [vmem:[#allocation20 + $0x128] sm:$0xff]
    %v1442 = vld [vmem:[#allocation20 + $0x130] sm:$0xff]
    %v1443 = vld [vmem:[#allocation20 + $0x138] sm:$0xff]
    %v1444 = vld [vmem:[#allocation20 + $0x140] sm:$0xff]
    %v1445 = vld [vmem:[#allocation20 + $0x148] sm:$0xff]
    %v1446 = vld [vmem:[#allocation20 + $0x150] sm:$0xff]
    %v1447 = vld [vmem:[#allocation20 + $0x158] sm:$0xff]
    %v1448 = vld [vmem:[#allocation20 + $0x160] sm:$0xff]
    %v1449 = vld [vmem:[#allocation20 + $0x168] sm:$0xff]
    %v1450 = vld [vmem:[#allocation20 + $0x170] sm:$0xff]
    %v1451 = vld [vmem:[#allocation20 + $0x178] sm:$0xff]
    %v1452 = vld [vmem:[#allocation20 + $0x180] sm:$0xff]
    %v1453 = vld [vmem:[#allocation20 + $0x188] sm:$0xff]
    %v1454 = vld [vmem:[#allocation20 + $0x190] sm:$0xff]
    %v1455 = vld [vmem:[#allocation20 + $0x198] sm:$0xff]
    %v1456 = vld [vmem:[#allocation20 + $0x1a0] sm:$0xff]
    %v1457 = vld [vmem:[#allocation20 + $0x1a8] sm:$0xff]
    %v1458 = vld [vmem:[#allocation20 + $0x1b0] sm:$0xff]
    %v1459 = vld [vmem:[#allocation20 + $0x1b8] sm:$0xff]
    %v1460 = vld [vmem:[#allocation20 + $0x1c0] sm:$0xff]
    %v1461 = vld [vmem:[#allocation20 + $0x1c8] sm:$0xff]
    %v1462 = vld [vmem:[#allocation20 + $0x1d0] sm:$0xff]
    %v1463 = vld [vmem:[#allocation20 + $0x1d8] sm:$0xff]
    %v1464 = vld [vmem:[#allocation20 + $0x1e0] sm:$0xff]
    %v1465 = vld [vmem:[#allocation20 + $0x1e8] sm:$0xff]
    %v1466 = vld [vmem:[#allocation20 + $0x1f0] sm:$0xff]
    %v1467 = vld [vmem:[#allocation20 + $0x1f8] sm:$0xff]
    %v1468 = vld [vmem:[#allocation21] sm:$0x3]
    %v1470 = vperm.slane %v1468, 0
    %v1471 = vperm.slane %v1468, 1
    %v1538 = vunpack.c.l.b16 %v1404
    %v1539 = vunpack.c.h.b16 %v1404
    %v1540 = vunpack.c.l.b16 %v1405
    %v1541 = vunpack.c.h.b16 %v1405
    %v1542 = vunpack.c.l.b16 %v1406
    %v1543 = vunpack.c.h.b16 %v1406
    %v1544 = vunpack.c.l.b16 %v1407
    %v1545 = vunpack.c.h.b16 %v1407
    %v1546 = vunpack.c.l.b16 %v1408
    %v1547 = vunpack.c.h.b16 %v1408
    %v1548 = vunpack.c.l.b16 %v1409
    %v1549 = vunpack.c.h.b16 %v1409
    %v1550 = vunpack.c.l.b16 %v1410
    %v1551 = vunpack.c.h.b16 %v1410
    %v1552 = vunpack.c.l.b16 %v1411
    %v1553 = vunpack.c.h.b16 %v1411
    %v1554 = vunpack.c.l.b16 %v1412
    %v1555 = vunpack.c.h.b16 %v1412
    %v1556 = vunpack.c.l.b16 %v1413
    %v1557 = vunpack.c.h.b16 %v1413
    %v1558 = vunpack.c.l.b16 %v1414
    %v1559 = vunpack.c.h.b16 %v1414
    %v1560 = vunpack.c.l.b16 %v1415
    %v1561 = vunpack.c.h.b16 %v1415
    %v1562 = vunpack.c.l.b16 %v1416
    %v1563 = vunpack.c.h.b16 %v1416
    %v1564 = vunpack.c.l.b16 %v1417
    %v1565 = vunpack.c.h.b16 %v1417
    %v1566 = vunpack.c.l.b16 %v1418
    %v1567 = vunpack.c.h.b16 %v1418
    %v1568 = vunpack.c.l.b16 %v1419
    %v1569 = vunpack.c.h.b16 %v1419
    %v1570 = vunpack.c.l.b16 %v1420
    %v1571 = vunpack.c.h.b16 %v1420
    %v1572 = vunpack.c.l.b16 %v1421
    %v1573 = vunpack.c.h.b16 %v1421
    %v1574 = vunpack.c.l.b16 %v1422
    %v1575 = vunpack.c.h.b16 %v1422
    %v1576 = vunpack.c.l.b16 %v1423
    %v1577 = vunpack.c.h.b16 %v1423
    %v1578 = vunpack.c.l.b16 %v1424
    %v1579 = vunpack.c.h.b16 %v1424
    %v1580 = vunpack.c.l.b16 %v1425
    %v1581 = vunpack.c.h.b16 %v1425
    %v1582 = vunpack.c.l.b16 %v1426
    %v1583 = vunpack.c.h.b16 %v1426
    %v1584 = vunpack.c.l.b16 %v1427
    %v1585 = vunpack.c.h.b16 %v1427
    %v1586 = vunpack.c.l.b16 %v1428
    %v1587 = vunpack.c.h.b16 %v1428
    %v1588 = vunpack.c.l.b16 %v1429
    %v1589 = vunpack.c.h.b16 %v1429
    %v1590 = vunpack.c.l.b16 %v1430
    %v1591 = vunpack.c.h.b16 %v1430
    %v1592 = vunpack.c.l.b16 %v1431
    %v1593 = vunpack.c.h.b16 %v1431
    %v1594 = vunpack.c.l.b16 %v1432
    %v1595 = vunpack.c.h.b16 %v1432
    %v1596 = vunpack.c.l.b16 %v1433
    %v1597 = vunpack.c.h.b16 %v1433
    %v1598 = vunpack.c.l.b16 %v1434
    %v1599 = vunpack.c.h.b16 %v1434
    %v1600 = vunpack.c.l.b16 %v1435
    %v1601 = vunpack.c.h.b16 %v1435
    %v1602 = vunpack.c.l.b16 %v1436
    %v1603 = vunpack.c.h.b16 %v1436
    %v1604 = vunpack.c.l.b16 %v1437
    %v1605 = vunpack.c.h.b16 %v1437
    %v1606 = vunpack.c.l.b16 %v1438
    %v1607 = vunpack.c.h.b16 %v1438
    %v1608 = vunpack.c.l.b16 %v1439
    %v1609 = vunpack.c.h.b16 %v1439
    %v1610 = vunpack.c.l.b16 %v1440
    %v1611 = vunpack.c.h.b16 %v1440
    %v1612 = vunpack.c.l.b16 %v1441
    %v1613 = vunpack.c.h.b16 %v1441
    %v1614 = vunpack.c.l.b16 %v1442
    %v1615 = vunpack.c.h.b16 %v1442
    %v1616 = vunpack.c.l.b16 %v1443
    %v1617 = vunpack.c.h.b16 %v1443
    %v1618 = vunpack.c.l.b16 %v1444
    %v1619 = vunpack.c.h.b16 %v1444
    %v1620 = vunpack.c.l.b16 %v1445
    %v1621 = vunpack.c.h.b16 %v1445
    %v1622 = vunpack.c.l.b16 %v1446
    %v1623 = vunpack.c.h.b16 %v1446
    %v1624 = vunpack.c.l.b16 %v1447
    %v1625 = vunpack.c.h.b16 %v1447
    %v1626 = vunpack.c.l.b16 %v1448
    %v1627 = vunpack.c.h.b16 %v1448
    %v1628 = vunpack.c.l.b16 %v1449
    %v1629 = vunpack.c.h.b16 %v1449
    %v1630 = vunpack.c.l.b16 %v1450
    %v1631 = vunpack.c.h.b16 %v1450
    %v1632 = vunpack.c.l.b16 %v1451
    %v1633 = vunpack.c.h.b16 %v1451
    %v1634 = vunpack.c.l.b16 %v1452
    %v1635 = vunpack.c.h.b16 %v1452
    %v1636 = vunpack.c.l.b16 %v1453
    %v1637 = vunpack.c.h.b16 %v1453
    %v1638 = vunpack.c.l.b16 %v1454
    %v1639 = vunpack.c.h.b16 %v1454
    %v1640 = vunpack.c.l.b16 %v1455
    %v1641 = vunpack.c.h.b16 %v1455
    %v1642 = vunpack.c.l.b16 %v1456
    %v1643 = vunpack.c.h.b16 %v1456
    %v1644 = vunpack.c.l.b16 %v1457
    %v1645 = vunpack.c.h.b16 %v1457
    %v1646 = vunpack.c.l.b16 %v1458
    %v1647 = vunpack.c.h.b16 %v1458
    %v1648 = vunpack.c.l.b16 %v1459
    %v1649 = vunpack.c.h.b16 %v1459
    %v1650 = vunpack.c.l.b16 %v1460
    %v1651 = vunpack.c.h.b16 %v1460
    %v1652 = vunpack.c.l.b16 %v1461
    %v1653 = vunpack.c.h.b16 %v1461
    %v1654 = vunpack.c.l.b16 %v1462
    %v1655 = vunpack.c.h.b16 %v1462
    %v1656 = vunpack.c.l.b16 %v1463
    %v1657 = vunpack.c.h.b16 %v1463
    %v1658 = vunpack.c.l.b16 %v1464
    %v1659 = vunpack.c.h.b16 %v1464
    %v1660 = vunpack.c.l.b16 %v1465
    %v1661 = vunpack.c.h.b16 %v1465
    %v1662 = vunpack.c.l.b16 %v1466
    %v1663 = vunpack.c.h.b16 %v1466
    %v1664 = vunpack.c.l.b16 %v1467
    %v1665 = vunpack.c.h.b16 %v1467
    %v1666 = vpack.c.b16 %v1540, %v1538
    %v1667 = vpack.c.b16 %v1541, %v1539
    %v1668 = vpack.c.b16 %v1544, %v1542
    %v1669 = vpack.c.b16 %v1545, %v1543
    %v1670 = vpack.c.b16 %v1548, %v1546
    %v1671 = vpack.c.b16 %v1549, %v1547
    %v1672 = vpack.c.b16 %v1552, %v1550
    %v1673 = vpack.c.b16 %v1553, %v1551
    %v1674 = vpack.c.b16 %v1556, %v1554
    %v1675 = vpack.c.b16 %v1557, %v1555
    %v1676 = vpack.c.b16 %v1560, %v1558
    %v1677 = vpack.c.b16 %v1561, %v1559
    %v1678 = vpack.c.b16 %v1564, %v1562
    %v1679 = vpack.c.b16 %v1565, %v1563
    %v1680 = vpack.c.b16 %v1568, %v1566
    %v1681 = vpack.c.b16 %v1569, %v1567
    %v1682 = vpack.c.b16 %v1572, %v1570
    %v1683 = vpack.c.b16 %v1573, %v1571
    %v1684 = vpack.c.b16 %v1576, %v1574
    %v1685 = vpack.c.b16 %v1577, %v1575
    %v1686 = vpack.c.b16 %v1580, %v1578
    %v1687 = vpack.c.b16 %v1581, %v1579
    %v1688 = vpack.c.b16 %v1584, %v1582
    %v1689 = vpack.c.b16 %v1585, %v1583
    %v1690 = vpack.c.b16 %v1588, %v1586
    %v1691 = vpack.c.b16 %v1589, %v1587
    %v1692 = vpack.c.b16 %v1592, %v1590
    %v1693 = vpack.c.b16 %v1593, %v1591
    %v1694 = vpack.c.b16 %v1596, %v1594
    %v1695 = vpack.c.b16 %v1597, %v1595
    %v1696 = vpack.c.b16 %v1600, %v1598
    %v1697 = vpack.c.b16 %v1601, %v1599
    %v1698 = vpack.c.b16 %v1604, %v1602
    %v1699 = vpack.c.b16 %v1605, %v1603
    %v1700 = vpack.c.b16 %v1608, %v1606
    %v1701 = vpack.c.b16 %v1609, %v1607
    %v1702 = vpack.c.b16 %v1612, %v1610
    %v1703 = vpack.c.b16 %v1613, %v1611
    %v1704 = vpack.c.b16 %v1616, %v1614
    %v1705 = vpack.c.b16 %v1617, %v1615
    %v1706 = vpack.c.b16 %v1620, %v1618
    %v1707 = vpack.c.b16 %v1621, %v1619
    %v1708 = vpack.c.b16 %v1624, %v1622
    %v1709 = vpack.c.b16 %v1625, %v1623
    %v1710 = vpack.c.b16 %v1628, %v1626
    %v1711 = vpack.c.b16 %v1629, %v1627
    %v1712 = vpack.c.b16 %v1632, %v1630
    %v1713 = vpack.c.b16 %v1633, %v1631
    %v1714 = vpack.c.b16 %v1636, %v1634
    %v1715 = vpack.c.b16 %v1637, %v1635
    %v1716 = vpack.c.b16 %v1640, %v1638
    %v1717 = vpack.c.b16 %v1641, %v1639
    %v1718 = vpack.c.b16 %v1644, %v1642
    %v1719 = vpack.c.b16 %v1645, %v1643
    %v1720 = vpack.c.b16 %v1648, %v1646
    %v1721 = vpack.c.b16 %v1649, %v1647
    %v1722 = vpack.c.b16 %v1652, %v1650
    %v1723 = vpack.c.b16 %v1653, %v1651
    %v1724 = vpack.c.b16 %v1656, %v1654
    %v1725 = vpack.c.b16 %v1657, %v1655
    %v1726 = vpack.c.b16 %v1660, %v1658
    %v1727 = vpack.c.b16 %v1661, %v1659
    %v1728 = vpack.c.b16 %v1664, %v1662
    %v1729 = vpack.c.b16 %v1665, %v1663
    %1794 = vmatpush.bf16.msra.mxu0 %v1680
    %1795 = vmatpush.bf16.msra.mxu0 %v1678
    %1796 = vmatpush.bf16.msra.mxu0 %v1676
    %1797 = vmatpush.bf16.msra.mxu0 %v1674
    %1798 = vmatpush.bf16.msra.mxu0 %v1672
    %1799 = vmatpush.bf16.msra.mxu0 %v1670
    %1800 = vmatpush.bf16.msra.mxu0 %v1668
    %1801 = vmatpush.bf16.msra.mxu0 %v1666
    %1802 = vmatmul.bf16.gmra.mxu0 %v312
    %v1803 = vpop.f32.mrf.mxu0
    %v1804 = vadd.f32 %v1470, %v1803
    %v1805 = vpop.f32.mrf.mxu0
    %v1806 = vadd.f32 %v1470, %v1805
    %1807 = vmatmul.bf16.gmra.mxu0 %v316
    %v1808 = vpop.f32.mrf.mxu0
    %v1809 = vadd.f32 %v1470, %v1808
    %v1810 = vpop.f32.mrf.mxu0
    %v1811 = vadd.f32 %v1470, %v1810
    %1812 = vdwg.mxu0
    %1813 = vmatpush.bf16.msra.mxu0 %v1696
    %1814 = vmatpush.bf16.msra.mxu0 %v1694
    %1815 = vmatpush.bf16.msra.mxu0 %v1692
    %1816 = vmatpush.bf16.msra.mxu0 %v1690
    %1817 = vmatpush.bf16.msra.mxu0 %v1688
    %1818 = vmatpush.bf16.msra.mxu0 %v1686
    %1819 = vmatpush.bf16.msra.mxu0 %v1684
    %1820 = vmatpush.bf16.msra.mxu0 %v1682
    %1821 = vmatmul.bf16.gmra.mxu0 %v313
    %v1822 = vpop.f32.mrf.mxu0
    %v1823 = vadd.f32 %v1804, %v1822
    %v1824 = vpop.f32.mrf.mxu0
    %v1825 = vadd.f32 %v1806, %v1824
    %1826 = vmatmul.bf16.gmra.mxu0 %v317
    %v1827 = vpop.f32.mrf.mxu0
    %v1828 = vadd.f32 %v1809, %v1827
    %v1829 = vpop.f32.mrf.mxu0
    %v1830 = vadd.f32 %v1811, %v1829
    %1831 = vdwg.mxu0
    %1832 = vmatpush.bf16.msra.mxu0 %v1712
    %1833 = vmatpush.bf16.msra.mxu0 %v1710
    %1834 = vmatpush.bf16.msra.mxu0 %v1708
    %1835 = vmatpush.bf16.msra.mxu0 %v1706
    %1836 = vmatpush.bf16.msra.mxu0 %v1704
    %1837 = vmatpush.bf16.msra.mxu0 %v1702
    %1838 = vmatpush.bf16.msra.mxu0 %v1700
    %1839 = vmatpush.bf16.msra.mxu0 %v1698
    %1840 = vmatmul.bf16.gmra.mxu0 %v314
    %v1841 = vpop.f32.mrf.mxu0
    %v1842 = vadd.f32 %v1823, %v1841
    %v1843 = vpop.f32.mrf.mxu0
    %v1844 = vadd.f32 %v1825, %v1843
    %1845 = vmatmul.bf16.gmra.mxu0 %v318
    %v1846 = vpop.f32.mrf.mxu0
    %v1847 = vadd.f32 %v1828, %v1846
    %v1848 = vpop.f32.mrf.mxu0
    %v1849 = vadd.f32 %v1830, %v1848
    %1850 = vdwg.mxu0
    %1851 = vmatpush.bf16.msra.mxu0 %v1728
    %1852 = vmatpush.bf16.msra.mxu0 %v1726
    %1853 = vmatpush.bf16.msra.mxu0 %v1724
    %1854 = vmatpush.bf16.msra.mxu0 %v1722
    %1855 = vmatpush.bf16.msra.mxu0 %v1720
    %1856 = vmatpush.bf16.msra.mxu0 %v1718
    %1857 = vmatpush.bf16.msra.mxu0 %v1716
    %1858 = vmatpush.bf16.msra.mxu0 %v1714
    %1859 = vmatmul.bf16.gmra.mxu0 %v315
    %v1860 = vpop.f32.mrf.mxu0
    %v1861 = vadd.f32 %v1842, %v1860
    %v1862 = vpop.f32.mrf.mxu0
    %v1863 = vadd.f32 %v1844, %v1862
    %1864 = vmatmul.bf16.gmra.mxu0 %v319
    %v1865 = vpop.f32.mrf.mxu0
    %v1866 = vadd.f32 %v1847, %v1865
    %v1867 = vpop.f32.mrf.mxu0
    %v1868 = vadd.f32 %v1849, %v1867
    %1869 = vdwg.mxu0
    %1870 = vmatpush.bf16.msra.mxu0 %v1681
    %1871 = vmatpush.bf16.msra.mxu0 %v1679
    %1872 = vmatpush.bf16.msra.mxu0 %v1677
    %1873 = vmatpush.bf16.msra.mxu0 %v1675
    %1874 = vmatpush.bf16.msra.mxu0 %v1673
    %1875 = vmatpush.bf16.msra.mxu0 %v1671
    %1876 = vmatpush.bf16.msra.mxu0 %v1669
    %1877 = vmatpush.bf16.msra.mxu0 %v1667
    %1878 = vmatmul.bf16.gmra.mxu0 %v312
    %v1879 = vpop.f32.mrf.mxu0
    %v1880 = vadd.f32 %v1471, %v1879
    %v1881 = vpop.f32.mrf.mxu0
    %v1882 = vadd.f32 %v1471, %v1881
    %1883 = vmatmul.bf16.gmra.mxu0 %v316
    %v1884 = vpop.f32.mrf.mxu0
    %v1885 = vadd.f32 %v1471, %v1884
    %v1886 = vpop.f32.mrf.mxu0
    %v1887 = vadd.f32 %v1471, %v1886
    %1888 = vdwg.mxu0
    %1889 = vmatpush.bf16.msra.mxu0 %v1697
    %1890 = vmatpush.bf16.msra.mxu0 %v1695
    %1891 = vmatpush.bf16.msra.mxu0 %v1693
    %1892 = vmatpush.bf16.msra.mxu0 %v1691
    %1893 = vmatpush.bf16.msra.mxu0 %v1689
    %1894 = vmatpush.bf16.msra.mxu0 %v1687
    %1895 = vmatpush.bf16.msra.mxu0 %v1685
    %1896 = vmatpush.bf16.msra.mxu0 %v1683
    %1897 = vmatmul.bf16.gmra.mxu0 %v313
    %v1898 = vpop.f32.mrf.mxu0
    %v1899 = vadd.f32 %v1880, %v1898
    %v1900 = vpop.f32.mrf.mxu0
    %v1901 = vadd.f32 %v1882, %v1900
    %1902 = vmatmul.bf16.gmra.mxu0 %v317
    %v1903 = vpop.f32.mrf.mxu0
    %v1904 = vadd.f32 %v1885, %v1903
    %v1905 = vpop.f32.mrf.mxu0
    %v1906 = vadd.f32 %v1887, %v1905
    %1907 = vdwg.mxu0
    %1908 = vmatpush.bf16.msra.mxu0 %v1713
    %1909 = vmatpush.bf16.msra.mxu0 %v1711
    %1910 = vmatpush.bf16.msra.mxu0 %v1709
    %1911 = vmatpush.bf16.msra.mxu0 %v1707
    %1912 = vmatpush.bf16.msra.mxu0 %v1705
    %1913 = vmatpush.bf16.msra.mxu0 %v1703
    %1914 = vmatpush.bf16.msra.mxu0 %v1701
    %1915 = vmatpush.bf16.msra.mxu0 %v1699
    %1916 = vmatmul.bf16.gmra.mxu0 %v314
    %v1917 = vpop.f32.mrf.mxu0
    %v1918 = vadd.f32 %v1899, %v1917
    %v1919 = vpop.f32.mrf.mxu0
    %v1920 = vadd.f32 %v1901, %v1919
    %1921 = vmatmul.bf16.gmra.mxu0 %v318
    %v1922 = vpop.f32.mrf.mxu0
    %v1923 = vadd.f32 %v1904, %v1922
    %v1924 = vpop.f32.mrf.mxu0
    %v1925 = vadd.f32 %v1906, %v1924
    %1926 = vdwg.mxu0
    %1927 = vmatpush.bf16.msra.mxu0 %v1729
    %1928 = vmatpush.bf16.msra.mxu0 %v1727
    %1929 = vmatpush.bf16.msra.mxu0 %v1725
    %1930 = vmatpush.bf16.msra.mxu0 %v1723
    %1931 = vmatpush.bf16.msra.mxu0 %v1721
    %1932 = vmatpush.bf16.msra.mxu0 %v1719
    %1933 = vmatpush.bf16.msra.mxu0 %v1717
    %1934 = vmatpush.bf16.msra.mxu0 %v1715
    %1935 = vmatmul.bf16.gmra.mxu0 %v315
    %v1936 = vpop.f32.mrf.mxu0
    %v1937 = vadd.f32 %v1918, %v1936
    %v1938 = vpop.f32.mrf.mxu0
    %v1939 = vadd.f32 %v1920, %v1938
    %1940 = vmatmul.bf16.gmra.mxu0 %v319
    %v1941 = vpop.f32.mrf.mxu0
    %v1942 = vadd.f32 %v1923, %v1941
    %v1943 = vpop.f32.mrf.mxu0
    %v1944 = vadd.f32 %v1925, %v1943
    %1945 = vdwg.mxu0
    %v1946 = vpack.c.bf16 %v779, %v777
    %v1947 = vpack.c.bf16 %v855, %v853
    %v1948 = vpack.c.bf16 %v784, %v782
    %v1949 = vpack.c.bf16 %v860, %v858
    %v1950 = vpack.c.bf16 %v1321, %v1319
    %v1951 = vpack.c.bf16 %v1397, %v1395
    %v1952 = vpack.c.bf16 %v1326, %v1324
    %v1953 = vpack.c.bf16 %v1402, %v1400
    %1954 = vmatpush.bf16.xpose.msra.mxu0 0
    %1955 = vmatpush.bf16.xpose.msra.mxu0 0
    %1956 = vmatpush.bf16.xpose.msra.mxu0 0
    %1957 = vmatpush.bf16.xpose.msra.mxu0 0
    %1958 = vmatpush.bf16.xpose.msra.mxu0 0
    %1959 = vmatpush.bf16.xpose.msra.mxu0 0
    %1960 = vmatpush.bf16.xpose.msra.mxu0 %v1952
    %1961 = vmatpush.bf16.xpose.msra.mxu0 %v1950
    %1962 = vmatmul.bf16.gmra.mxu0 %v1946
    %v1963 = vpop.f32.mrf.mxu0
    %v1964 = vadd.f32 0.0, %v1963
    %v1965 = vpop.f32.mrf.mxu0
    %v1966 = vadd.f32 0.0, %v1965
    %1967 = vmatmul.bf16.gmra.mxu0 %v1948
    %v1968 = vpop.f32.mrf.mxu0
    %v1969 = vadd.f32 0.0, %v1968
    %v1970 = vpop.f32.mrf.mxu0
    %v1971 = vadd.f32 0.0, %v1970
    %1972 = vdwg.mxu0
    %1973 = vmatpush.bf16.xpose.msra.mxu0 0
    %1974 = vmatpush.bf16.xpose.msra.mxu0 0
    %1975 = vmatpush.bf16.xpose.msra.mxu0 0
    %1976 = vmatpush.bf16.xpose.msra.mxu0 0
    %1977 = vmatpush.bf16.xpose.msra.mxu0 0
    %1978 = vmatpush.bf16.xpose.msra.mxu0 0
    %1979 = vmatpush.bf16.xpose.msra.mxu0 %v1953
    %1980 = vmatpush.bf16.xpose.msra.mxu0 %v1951
    %1981 = vmatmul.bf16.gmra.mxu0 %v1947
    %v1982 = vpop.f32.mrf.mxu0
    %v1983 = vadd.f32 %v1964, %v1982
    %v1984 = vpop.f32.mrf.mxu0
    %v1985 = vadd.f32 %v1966, %v1984
    %1986 = vmatmul.bf16.gmra.mxu0 %v1949
    %v1987 = vpop.f32.mrf.mxu0
    %v1988 = vadd.f32 %v1969, %v1987
    %v1989 = vpop.f32.mrf.mxu0
    %v1990 = vadd.f32 %v1971, %v1989
    %1991 = vdwg.mxu0
    %v1992 = vmul.f32 %v1983, 0.0625
    %v1993 = vmul.f32 %v1985, 0.0625
    %v1994 = vmul.f32 %v1988, 0.0625
    %v1995 = vmul.f32 %v1990, 0.0625
    %v1996 = vlaneseq
    %v1997 = vand.u32 %v1996, 127
    %vm1998 = vcmp.ge.s32.totalorder %v1997, %v258
    %vm1999 = vcmp.ge.s32.totalorder %v1997, %v259
    %vm2000 = vcmp.ge.s32.totalorder %v1997, %v260
    %vm2001 = vcmp.ge.s32.totalorder %v1997, %v261
    %vm2002 = vcmp.lt.s32.totalorder %v1997, %v268
    %vm2003 = vcmp.lt.s32.totalorder %v1997, %v269
    %vm2004 = vcmp.lt.s32.totalorder %v1997, %v270
    %vm2005 = vcmp.lt.s32.totalorder %v1997, %v271
    %vm2006 = vmand %vm1998, %vm2002
    %vm2007 = vmand %vm1999, %vm2003
    %vm2008 = vmand %vm2000, %vm2004
    %vm2009 = vmand %vm2001, %vm2005
    %v2010 = vsel %vm2006, %v1992, -inf
    %v2011 = vsel %vm2007, %v1993, -inf
    %v2012 = vsel %vm2008, %v1994, -inf
    %v2013 = vsel %vm2009, %v1995, -inf
    %vm2014 = vcmask 261120
    %v2015 = vsel %vm2014, %v2010, -inf
    %2016 = vmax.xlane.f32.xlu0 %v2015
    %v2017 = vpop.xlane.xlu0 %2016
    %v2018 = vsel %vm2014, %v2011, -inf
    %2019 = vmax.xlane.f32.xlu0 %v2018
    %v2020 = vpop.xlane.xlu0 %2019
    %v2021 = vsel %vm2014, %v2012, -inf
    %2022 = vmax.xlane.f32.xlu0 %v2021
    %v2023 = vpop.xlane.xlu0 %2022
    %v2024 = vsel %vm2014, %v2013, -inf
    %2025 = vmax.xlane.f32.xlu0 %v2024
    %v2026 = vpop.xlane.xlu0 %2025
    %v2027 = vsub.f32 %v2010, %v2017
    %v2028 = vsub.f32 %v2011, %v2020
    %v2029 = vsub.f32 %v2012, %v2023
    %v2030 = vsub.f32 %v2013, %v2026
    %v2031 = vmul.f32 %v2027, 1.442695
    %v2032 = vpow.pop %v2031
    %v2033 = vmul.f32 %v2028, 1.442695
    %v2034 = vpow.pop %v2033
    %v2035 = vmul.f32 %v2029, 1.442695
    %v2036 = vpow.pop %v2035
    %v2037 = vmul.f32 %v2030, 1.442695
    %v2038 = vpow.pop %v2037
    %v2039 = vsel %vm2014, %v2032, 0.0
    %2040 = vadd.xlane.f32.xlu0 %v2039
    %v2041 = vpop.xlane.xlu0 %2040
    %v2042 = vsel %vm2014, %v2034, 0.0
    %2043 = vadd.xlane.f32.xlu0 %v2042
    %v2044 = vpop.xlane.xlu0 %2043
    %v2045 = vsel %vm2014, %v2036, 0.0
    %2046 = vadd.xlane.f32.xlu0 %v2045
    %v2047 = vpop.xlane.xlu0 %2046
    %v2048 = vsel %vm2014, %v2038, 0.0
    %2049 = vadd.xlane.f32.xlu0 %v2048
    %v2050 = vpop.xlane.xlu0 %2049
    %v2051 = vrcp.pop %v2041
    %v2052 = vrcp.pop %v2044
    %v2053 = vrcp.pop %v2047
    %v2054 = vrcp.pop %v2050
    %v2055 = vmul.f32 %v2032, %v2051
    %v2056 = vmul.f32 %v2034, %v2052
    %v2057 = vmul.f32 %v2036, %v2053
    %v2058 = vmul.f32 %v2038, %v2054
    %v2059 = vpack.c.bf16 %v2056, %v2055
    %v2060 = vpack.c.bf16 %v2058, %v2057
    %v2061 = vpack.c.bf16 %v1863, %v1861
    %v2062 = vpack.c.bf16 %v1939, %v1937
    %v2063 = vpack.c.bf16 %v1868, %v1866
    %v2064 = vpack.c.bf16 %v1944, %v1942
    %v2066 = vsel %vm2014, %v2059, 0
    %v2069 = vsel %vm2014, %v2060, 0
    %2071 = vmatpush.bf16.msra.mxu0 0
    %2072 = vmatpush.bf16.msra.mxu0 0
    %2073 = vmatpush.bf16.msra.mxu0 0
    %2074 = vmatpush.bf16.msra.mxu0 0
    %2075 = vmatpush.bf16.msra.mxu0 0
    %2076 = vmatpush.bf16.msra.mxu0 0
    %2077 = vmatpush.bf16.msra.mxu0 %v2063
    %2078 = vmatpush.bf16.msra.mxu0 %v2061
    %2079 = vmatmul.bf16.gmra.mxu0 %v2066
    %v2080 = vpop.f32.mrf.mxu0
    %v2081 = vadd.f32 0.0, %v2080
    %v2082 = vpop.f32.mrf.mxu0
    %v2083 = vadd.f32 0.0, %v2082
    %2084 = vmatmul.bf16.gmra.mxu0 %v2069
    %v2085 = vpop.f32.mrf.mxu0
    %v2086 = vadd.f32 0.0, %v2085
    %v2087 = vpop.f32.mrf.mxu0
    %v2088 = vadd.f32 0.0, %v2087
    %2089 = vdwg.mxu0
    %2090 = vmatpush.bf16.msra.mxu0 0
    %2091 = vmatpush.bf16.msra.mxu0 0
    %2092 = vmatpush.bf16.msra.mxu0 0
    %2093 = vmatpush.bf16.msra.mxu0 0
    %2094 = vmatpush.bf16.msra.mxu0 0
    %2095 = vmatpush.bf16.msra.mxu0 0
    %2096 = vmatpush.bf16.msra.mxu0 %v2064
    %2097 = vmatpush.bf16.msra.mxu0 %v2062
    %2098 = vmatmul.bf16.gmra.mxu0 %v2066
    %v2099 = vpop.f32.mrf.mxu0
    %v2100 = vadd.f32 0.0, %v2099
    %v2101 = vpop.f32.mrf.mxu0
    %v2102 = vadd.f32 0.0, %v2101
    %2103 = vmatmul.bf16.gmra.mxu0 %v2069
    %v2104 = vpop.f32.mrf.mxu0
    %v2105 = vadd.f32 0.0, %v2104
    %v2106 = vpop.f32.mrf.mxu0
    %v2107 = vadd.f32 0.0, %v2106
    %2108 = vdwg.mxu0
    %v2109 = vrot.slane %v2081, 7
    %v2110 = vrot.slane %v2100, 7
    %v2111 = vrot.slane %v2083, 7
    %v2112 = vrot.slane %v2102, 7
    %v2113 = vrot.slane %v2086, 7
    %v2114 = vrot.slane %v2105, 7
    %v2115 = vrot.slane %v2088, 7
    %v2116 = vrot.slane %v2107, 7
    %vm2117 = vcmp.lt.s32.totalorder %v248, 1
    %v2118 = vsel %vm2117, %v2113, %v2115
    %v2119 = vsel %vm2117, %v2114, %v2116
    %v2120 = vsel %vm2117, %v2111, %v2113
    %v2121 = vsel %vm2117, %v2112, %v2114
    %v2122 = vsel %vm2117, %v2109, %v2111
    %v2123 = vsel %vm2117, %v2110, %v2112
    %v2124 = vsel %vm2117, %v2115, %v2109
    %v2125 = vsel %vm2117, %v2116, %v2110
    %v2126 = vrot.slane %v2081, 1
    %v2127 = vrot.slane %v2100, 1
    %v2128 = vrot.slane %v2083, 1
    %v2129 = vrot.slane %v2102, 1
    %v2130 = vrot.slane %v2086, 1
    %v2131 = vrot.slane %v2105, 1
    %v2132 = vrot.slane %v2088, 1
    %v2133 = vrot.slane %v2107, 1
    %vm2134 = vcmp.lt.s32.totalorder %v248, 7
    %v2135 = vsel %vm2134, %v2130, %v2132
    %v2136 = vsel %vm2134, %v2131, %v2133
    %v2137 = vsel %vm2134, %v2128, %v2130
    %v2138 = vsel %vm2134, %v2129, %v2131
    %v2139 = vsel %vm2134, %v2126, %v2128
    %v2140 = vsel %vm2134, %v2127, %v2129
    %v2141 = vsel %vm2134, %v2132, %v2126
    %v2142 = vsel %vm2134, %v2133, %v2127
    %vm2143 = vcmp.eq.s32.totalorder %v248, %v258
    %vm2144 = vcmp.eq.s32.totalorder %v249, %v259
    %vm2145 = vcmp.eq.s32.totalorder %v250, %v260
    %vm2146 = vcmp.eq.s32.totalorder %v251, %v261
    %v2147 = vsel %vm2143, 1, 0
    %v2148 = vsel %vm2144, 1, 0
    %v2149 = vsel %vm2145, 1, 0
    %v2150 = vsel %vm2146, 1, 0
    %vm2151 = vcmp.eq.s32.totalorder %v2147, 1
    %vm2152 = vcmp.eq.s32.totalorder %v2148, 1
    %vm2153 = vcmp.eq.s32.totalorder %v2149, 1
    %vm2154 = vcmp.eq.s32.totalorder %v2150, 1
    %v2155 = vsel %vm2151, 0.0, %v2124
    %v2156 = vsel %vm2151, 0.0, %v2125
    %v2157 = vsel %vm2152, 0.0, %v2122
    %v2158 = vsel %vm2152, 0.0, %v2123
    %v2159 = vsel %vm2153, 0.0, %v2120
    %v2160 = vsel %vm2153, 0.0, %v2121
    %v2161 = vsel %vm2154, 0.0, %v2118
    %v2162 = vsel %vm2154, 0.0, %v2119
    %v2163 = vadd.s32 %v258, 15
    %v2164 = vadd.s32 %v259, 15
    %v2165 = vadd.s32 %v260, 15
    %v2166 = vadd.s32 %v261, 15
    %vm2167 = vcmp.eq.s32.totalorder %v248, %v2163
    %vm2168 = vcmp.eq.s32.totalorder %v249, %v2164
    %vm2169 = vcmp.eq.s32.totalorder %v250, %v2165
    %vm2170 = vcmp.eq.s32.totalorder %v251, %v2166
    %v2171 = vsel %vm2167, 1, 0
    %v2172 = vsel %vm2168, 1, 0
    %v2173 = vsel %vm2169, 1, 0
    %v2174 = vsel %vm2170, 1, 0
    %vm2175 = vcmp.eq.s32.totalorder %v2171, 1
    %vm2176 = vcmp.eq.s32.totalorder %v2172, 1
    %vm2177 = vcmp.eq.s32.totalorder %v2173, 1
    %vm2178 = vcmp.eq.s32.totalorder %v2174, 1
    %v2179 = vsel %vm2175, 0.0, %v2139
    %v2180 = vsel %vm2175, 0.0, %v2140
    %v2181 = vsel %vm2176, 0.0, %v2137
    %v2182 = vsel %vm2176, 0.0, %v2138
    %v2183 = vsel %vm2177, 0.0, %v2135
    %v2184 = vsel %vm2177, 0.0, %v2136
    %v2185 = vsel %vm2178, 0.0, %v2141
    %v2186 = vsel %vm2178, 0.0, %v2142
    %v2187 = vpack.c.bf16 %v2157, %v2155
    %v2188 = vpack.c.bf16 %v2158, %v2156
    %v2189 = vpack.c.bf16 %v2083, %v2081
    %v2190 = vpack.c.bf16 %v2102, %v2100
    %v2191 = vpack.c.bf16 %v2181, %v2179
    %v2192 = vpack.c.bf16 %v2182, %v2180
    %v2193 = vpack.c.bf16 %v2161, %v2159
    %v2194 = vpack.c.bf16 %v2162, %v2160
    %v2195 = vpack.c.bf16 %v2088, %v2086
    %v2196 = vpack.c.bf16 %v2107, %v2105
    %v2197 = vpack.c.bf16 %v2185, %v2183
    %v2198 = vpack.c.bf16 %v2186, %v2184
    %s2199 = smul.u32 4, 96
    %s2200 = smul.u32 %s2199, 4
    %s2201 = sshll.u32 %s2200, 4
    %2202 = dma.done [#allocation6], %s2201
    %v2203 = vld [vmem:[#allocation2] sm:$0xff]
    %v2204 = vld [vmem:[#allocation2 + $0x8] sm:$0xff]
    %v2205 = vld [vmem:[#allocation2 + $0x10] sm:$0xff]
    %v2206 = vld [vmem:[#allocation2 + $0x18] sm:$0xff]
    %v2207 = vld [vmem:[#allocation2 + $0x20] sm:$0xff]
    %v2208 = vld [vmem:[#allocation2 + $0x28] sm:$0xff]
    %v2209 = vld [vmem:[#allocation2 + $0x30] sm:$0xff]
    %v2210 = vld [vmem:[#allocation2 + $0x38] sm:$0xff]
    %v2211 = vld [vmem:[#allocation2 + $0x40] sm:$0xff]
    %v2212 = vld [vmem:[#allocation2 + $0x48] sm:$0xff]
    %v2213 = vld [vmem:[#allocation2 + $0x50] sm:$0xff]
    %v2214 = vld [vmem:[#allocation2 + $0x58] sm:$0xff]
    %v2215 = vld [vmem:[#allocation2 + $0x60] sm:$0xff]
    %v2216 = vld [vmem:[#allocation2 + $0x68] sm:$0xff]
    %v2217 = vld [vmem:[#allocation2 + $0x70] sm:$0xff]
    %v2218 = vld [vmem:[#allocation2 + $0x78] sm:$0xff]
    %v2219 = vld [vmem:[#allocation2 + $0x80] sm:$0xff]
    %v2220 = vld [vmem:[#allocation2 + $0x88] sm:$0xff]
    %v2221 = vld [vmem:[#allocation2 + $0x90] sm:$0xff]
    %v2222 = vld [vmem:[#allocation2 + $0x98] sm:$0xff]
    %v2223 = vld [vmem:[#allocation2 + $0xa0] sm:$0xff]
    %v2224 = vld [vmem:[#allocation2 + $0xa8] sm:$0xff]
    %v2225 = vld [vmem:[#allocation2 + $0xb0] sm:$0xff]
    %v2226 = vld [vmem:[#allocation2 + $0xb8] sm:$0xff]
    %v2227 = vld [vmem:[#allocation2 + $0xc0] sm:$0xff]
    %v2228 = vld [vmem:[#allocation2 + $0xc8] sm:$0xff]
    %v2229 = vld [vmem:[#allocation2 + $0xd0] sm:$0xff]
    %v2230 = vld [vmem:[#allocation2 + $0xd8] sm:$0xff]
    %v2231 = vld [vmem:[#allocation2 + $0xe0] sm:$0xff]
    %v2232 = vld [vmem:[#allocation2 + $0xe8] sm:$0xff]
    %v2233 = vld [vmem:[#allocation2 + $0xf0] sm:$0xff]
    %v2234 = vld [vmem:[#allocation2 + $0xf8] sm:$0xff]
    %v2235 = vld [vmem:[#allocation2 + $0x100] sm:$0xff]
    %v2236 = vld [vmem:[#allocation2 + $0x108] sm:$0xff]
    %v2237 = vld [vmem:[#allocation2 + $0x110] sm:$0xff]
    %v2238 = vld [vmem:[#allocation2 + $0x118] sm:$0xff]
    %v2239 = vld [vmem:[#allocation2 + $0x120] sm:$0xff]
    %v2240 = vld [vmem:[#allocation2 + $0x128] sm:$0xff]
    %v2241 = vld [vmem:[#allocation2 + $0x130] sm:$0xff]
    %v2242 = vld [vmem:[#allocation2 + $0x138] sm:$0xff]
    %v2243 = vld [vmem:[#allocation2 + $0x140] sm:$0xff]
    %v2244 = vld [vmem:[#allocation2 + $0x148] sm:$0xff]
    %v2245 = vld [vmem:[#allocation2 + $0x150] sm:$0xff]
    %v2246 = vld [vmem:[#allocation2 + $0x158] sm:$0xff]
    %v2247 = vld [vmem:[#allocation2 + $0x160] sm:$0xff]
    %v2248 = vld [vmem:[#allocation2 + $0x168] sm:$0xff]
    %v2249 = vld [vmem:[#allocation2 + $0x170] sm:$0xff]
    %v2250 = vld [vmem:[#allocation2 + $0x178] sm:$0xff]
    %v2251 = vld [vmem:[#allocation2 + $0x180] sm:$0xff]
    %v2252 = vld [vmem:[#allocation2 + $0x188] sm:$0xff]
    %v2253 = vld [vmem:[#allocation2 + $0x190] sm:$0xff]
    %v2254 = vld [vmem:[#allocation2 + $0x198] sm:$0xff]
    %v2255 = vld [vmem:[#allocation2 + $0x1a0] sm:$0xff]
    %v2256 = vld [vmem:[#allocation2 + $0x1a8] sm:$0xff]
    %v2257 = vld [vmem:[#allocation2 + $0x1b0] sm:$0xff]
    %v2258 = vld [vmem:[#allocation2 + $0x1b8] sm:$0xff]
    %v2259 = vld [vmem:[#allocation2 + $0x1c0] sm:$0xff]
    %v2260 = vld [vmem:[#allocation2 + $0x1c8] sm:$0xff]
    %v2261 = vld [vmem:[#allocation2 + $0x1d0] sm:$0xff]
    %v2262 = vld [vmem:[#allocation2 + $0x1d8] sm:$0xff]
    %v2263 = vld [vmem:[#allocation2 + $0x1e0] sm:$0xff]
    %v2264 = vld [vmem:[#allocation2 + $0x1e8] sm:$0xff]
    %v2265 = vld [vmem:[#allocation2 + $0x1f0] sm:$0xff]
    %v2266 = vld [vmem:[#allocation2 + $0x1f8] sm:$0xff]
    %v2267 = vld [vmem:[#allocation2 + $0x200] sm:$0xff]
    %v2268 = vld [vmem:[#allocation2 + $0x208] sm:$0xff]
    %v2269 = vld [vmem:[#allocation2 + $0x210] sm:$0xff]
    %v2270 = vld [vmem:[#allocation2 + $0x218] sm:$0xff]
    %v2271 = vld [vmem:[#allocation2 + $0x220] sm:$0xff]
    %v2272 = vld [vmem:[#allocation2 + $0x228] sm:$0xff]
    %v2273 = vld [vmem:[#allocation2 + $0x230] sm:$0xff]
    %v2274 = vld [vmem:[#allocation2 + $0x238] sm:$0xff]
    %v2275 = vld [vmem:[#allocation2 + $0x240] sm:$0xff]
    %v2276 = vld [vmem:[#allocation2 + $0x248] sm:$0xff]
    %v2277 = vld [vmem:[#allocation2 + $0x250] sm:$0xff]
    %v2278 = vld [vmem:[#allocation2 + $0x258] sm:$0xff]
    %v2279 = vld [vmem:[#allocation2 + $0x260] sm:$0xff]
    %v2280 = vld [vmem:[#allocation2 + $0x268] sm:$0xff]
    %v2281 = vld [vmem:[#allocation2 + $0x270] sm:$0xff]
    %v2282 = vld [vmem:[#allocation2 + $0x278] sm:$0xff]
    %v2283 = vld [vmem:[#allocation2 + $0x280] sm:$0xff]
    %v2284 = vld [vmem:[#allocation2 + $0x288] sm:$0xff]
    %v2285 = vld [vmem:[#allocation2 + $0x290] sm:$0xff]
    %v2286 = vld [vmem:[#allocation2 + $0x298] sm:$0xff]
    %v2287 = vld [vmem:[#allocation2 + $0x2a0] sm:$0xff]
    %v2288 = vld [vmem:[#allocation2 + $0x2a8] sm:$0xff]
    %v2289 = vld [vmem:[#allocation2 + $0x2b0] sm:$0xff]
    %v2290 = vld [vmem:[#allocation2 + $0x2b8] sm:$0xff]
    %v2291 = vld [vmem:[#allocation2 + $0x2c0] sm:$0xff]
    %v2292 = vld [vmem:[#allocation2 + $0x2c8] sm:$0xff]
    %v2293 = vld [vmem:[#allocation2 + $0x2d0] sm:$0xff]
    %v2294 = vld [vmem:[#allocation2 + $0x2d8] sm:$0xff]
    %v2295 = vld [vmem:[#allocation2 + $0x2e0] sm:$0xff]
    %v2296 = vld [vmem:[#allocation2 + $0x2e8] sm:$0xff]
    %v2297 = vld [vmem:[#allocation2 + $0x2f0] sm:$0xff]
    %v2298 = vld [vmem:[#allocation2 + $0x2f8] sm:$0xff]
    %v2299 = vld [vmem:[#allocation2 + $0x300] sm:$0xff]
    %v2300 = vld [vmem:[#allocation2 + $0x308] sm:$0xff]
    %v2301 = vld [vmem:[#allocation2 + $0x310] sm:$0xff]
    %v2302 = vld [vmem:[#allocation2 + $0x318] sm:$0xff]
    %v2303 = vld [vmem:[#allocation2 + $0x320] sm:$0xff]
    %v2304 = vld [vmem:[#allocation2 + $0x328] sm:$0xff]
    %v2305 = vld [vmem:[#allocation2 + $0x330] sm:$0xff]
    %v2306 = vld [vmem:[#allocation2 + $0x338] sm:$0xff]
    %v2307 = vld [vmem:[#allocation2 + $0x340] sm:$0xff]
    %v2308 = vld [vmem:[#allocation2 + $0x348] sm:$0xff]
    %v2309 = vld [vmem:[#allocation2 + $0x350] sm:$0xff]
    %v2310 = vld [vmem:[#allocation2 + $0x358] sm:$0xff]
    %v2311 = vld [vmem:[#allocation2 + $0x360] sm:$0xff]
    %v2312 = vld [vmem:[#allocation2 + $0x368] sm:$0xff]
    %v2313 = vld [vmem:[#allocation2 + $0x370] sm:$0xff]
    %v2314 = vld [vmem:[#allocation2 + $0x378] sm:$0xff]
    %v2315 = vld [vmem:[#allocation2 + $0x380] sm:$0xff]
    %v2316 = vld [vmem:[#allocation2 + $0x388] sm:$0xff]
    %v2317 = vld [vmem:[#allocation2 + $0x390] sm:$0xff]
    %v2318 = vld [vmem:[#allocation2 + $0x398] sm:$0xff]
    %v2319 = vld [vmem:[#allocation2 + $0x3a0] sm:$0xff]
    %v2320 = vld [vmem:[#allocation2 + $0x3a8] sm:$0xff]
    %v2321 = vld [vmem:[#allocation2 + $0x3b0] sm:$0xff]
    %v2322 = vld [vmem:[#allocation2 + $0x3b8] sm:$0xff]
    %v2323 = vld [vmem:[#allocation2 + $0x3c0] sm:$0xff]
    %v2324 = vld [vmem:[#allocation2 + $0x3c8] sm:$0xff]
    %v2325 = vld [vmem:[#allocation2 + $0x3d0] sm:$0xff]
    %v2326 = vld [vmem:[#allocation2 + $0x3d8] sm:$0xff]
    %v2327 = vld [vmem:[#allocation2 + $0x3e0] sm:$0xff]
    %v2328 = vld [vmem:[#allocation2 + $0x3e8] sm:$0xff]
    %v2329 = vld [vmem:[#allocation2 + $0x3f0] sm:$0xff]
    %v2330 = vld [vmem:[#allocation2 + $0x3f8] sm:$0xff]
    %v2331 = vld [vmem:[#allocation2 + $0x400] sm:$0xff]
    %v2332 = vld [vmem:[#allocation2 + $0x408] sm:$0xff]
    %v2333 = vld [vmem:[#allocation2 + $0x410] sm:$0xff]
    %v2334 = vld [vmem:[#allocation2 + $0x418] sm:$0xff]
    %v2335 = vld [vmem:[#allocation2 + $0x420] sm:$0xff]
    %v2336 = vld [vmem:[#allocation2 + $0x428] sm:$0xff]
    %v2337 = vld [vmem:[#allocation2 + $0x430] sm:$0xff]
    %v2338 = vld [vmem:[#allocation2 + $0x438] sm:$0xff]
    %v2339 = vld [vmem:[#allocation2 + $0x440] sm:$0xff]
    %v2340 = vld [vmem:[#allocation2 + $0x448] sm:$0xff]
    %v2341 = vld [vmem:[#allocation2 + $0x450] sm:$0xff]
    %v2342 = vld [vmem:[#allocation2 + $0x458] sm:$0xff]
    %v2343 = vld [vmem:[#allocation2 + $0x460] sm:$0xff]
    %v2344 = vld [vmem:[#allocation2 + $0x468] sm:$0xff]
    %v2345 = vld [vmem:[#allocation2 + $0x470] sm:$0xff]
    %v2346 = vld [vmem:[#allocation2 + $0x478] sm:$0xff]
    %v2347 = vld [vmem:[#allocation2 + $0x480] sm:$0xff]
    %v2348 = vld [vmem:[#allocation2 + $0x488] sm:$0xff]
    %v2349 = vld [vmem:[#allocation2 + $0x490] sm:$0xff]
    %v2350 = vld [vmem:[#allocation2 + $0x498] sm:$0xff]
    %v2351 = vld [vmem:[#allocation2 + $0x4a0] sm:$0xff]
    %v2352 = vld [vmem:[#allocation2 + $0x4a8] sm:$0xff]
    %v2353 = vld [vmem:[#allocation2 + $0x4b0] sm:$0xff]
    %v2354 = vld [vmem:[#allocation2 + $0x4b8] sm:$0xff]
    %v2355 = vld [vmem:[#allocation2 + $0x4c0] sm:$0xff]
    %v2356 = vld [vmem:[#allocation2 + $0x4c8] sm:$0xff]
    %v2357 = vld [vmem:[#allocation2 + $0x4d0] sm:$0xff]
    %v2358 = vld [vmem:[#allocation2 + $0x4d8] sm:$0xff]
    %v2359 = vld [vmem:[#allocation2 + $0x4e0] sm:$0xff]
    %v2360 = vld [vmem:[#allocation2 + $0x4e8] sm:$0xff]
    %v2361 = vld [vmem:[#allocation2 + $0x4f0] sm:$0xff]
    %v2362 = vld [vmem:[#allocation2 + $0x4f8] sm:$0xff]
    %v2363 = vld [vmem:[#allocation2 + $0x500] sm:$0xff]
    %v2364 = vld [vmem:[#allocation2 + $0x508] sm:$0xff]
    %v2365 = vld [vmem:[#allocation2 + $0x510] sm:$0xff]
    %v2366 = vld [vmem:[#allocation2 + $0x518] sm:$0xff]
    %v2367 = vld [vmem:[#allocation2 + $0x520] sm:$0xff]
    %v2368 = vld [vmem:[#allocation2 + $0x528] sm:$0xff]
    %v2369 = vld [vmem:[#allocation2 + $0x530] sm:$0xff]
    %v2370 = vld [vmem:[#allocation2 + $0x538] sm:$0xff]
    %v2371 = vld [vmem:[#allocation2 + $0x540] sm:$0xff]
    %v2372 = vld [vmem:[#allocation2 + $0x548] sm:$0xff]
    %v2373 = vld [vmem:[#allocation2 + $0x550] sm:$0xff]
    %v2374 = vld [vmem:[#allocation2 + $0x558] sm:$0xff]
    %v2375 = vld [vmem:[#allocation2 + $0x560] sm:$0xff]
    %v2376 = vld [vmem:[#allocation2 + $0x568] sm:$0xff]
    %v2377 = vld [vmem:[#allocation2 + $0x570] sm:$0xff]
    %v2378 = vld [vmem:[#allocation2 + $0x578] sm:$0xff]
    %v2379 = vld [vmem:[#allocation2 + $0x580] sm:$0xff]
    %v2380 = vld [vmem:[#allocation2 + $0x588] sm:$0xff]
    %v2381 = vld [vmem:[#allocation2 + $0x590] sm:$0xff]
    %v2382 = vld [vmem:[#allocation2 + $0x598] sm:$0xff]
    %v2383 = vld [vmem:[#allocation2 + $0x5a0] sm:$0xff]
    %v2384 = vld [vmem:[#allocation2 + $0x5a8] sm:$0xff]
    %v2385 = vld [vmem:[#allocation2 + $0x5b0] sm:$0xff]
    %v2386 = vld [vmem:[#allocation2 + $0x5b8] sm:$0xff]
    %v2387 = vld [vmem:[#allocation2 + $0x5c0] sm:$0xff]
    %v2388 = vld [vmem:[#allocation2 + $0x5c8] sm:$0xff]
    %v2389 = vld [vmem:[#allocation2 + $0x5d0] sm:$0xff]
    %v2390 = vld [vmem:[#allocation2 + $0x5d8] sm:$0xff]
    %v2391 = vld [vmem:[#allocation2 + $0x5e0] sm:$0xff]
    %v2392 = vld [vmem:[#allocation2 + $0x5e8] sm:$0xff]
    %v2393 = vld [vmem:[#allocation2 + $0x5f0] sm:$0xff]
    %v2394 = vld [vmem:[#allocation2 + $0x5f8] sm:$0xff]
    %v2395 = vld [vmem:[%s9] sm:$0xf]
    %v2397 = vperm.slane %v2395, 0
    %v2398 = vperm.slane %v2395, 1
    %v2399 = vperm.slane %v2395, 2
    %v2400 = vperm.slane %v2395, 3
    %v2597 = vunpack.c.l.b16 %v2203
    %v2598 = vunpack.c.h.b16 %v2203
    %v2599 = vunpack.c.l.b16 %v2204
    %v2600 = vunpack.c.h.b16 %v2204
    %v2601 = vunpack.c.l.b16 %v2205
    %v2602 = vunpack.c.h.b16 %v2205
    %v2603 = vunpack.c.l.b16 %v2206
    %v2604 = vunpack.c.h.b16 %v2206
    %v2605 = vunpack.c.l.b16 %v2207
    %v2606 = vunpack.c.h.b16 %v2207
    %v2607 = vunpack.c.l.b16 %v2208
    %v2608 = vunpack.c.h.b16 %v2208
    %v2609 = vunpack.c.l.b16 %v2209
    %v2610 = vunpack.c.h.b16 %v2209
    %v2611 = vunpack.c.l.b16 %v2210
    %v2612 = vunpack.c.h.b16 %v2210
    %v2613 = vunpack.c.l.b16 %v2211
    %v2614 = vunpack.c.h.b16 %v2211
    %v2615 = vunpack.c.l.b16 %v2212
    %v2616 = vunpack.c.h.b16 %v2212
    %v2617 = vunpack.c.l.b16 %v2213
    %v2618 = vunpack.c.h.b16 %v2213
    %v2619 = vunpack.c.l.b16 %v2214
    %v2620 = vunpack.c.h.b16 %v2214
    %v2621 = vunpack.c.l.b16 %v2215
    %v2622 = vunpack.c.h.b16 %v2215
    %v2623 = vunpack.c.l.b16 %v2216
    %v2624 = vunpack.c.h.b16 %v2216
    %v2625 = vunpack.c.l.b16 %v2217
    %v2626 = vunpack.c.h.b16 %v2217
    %v2627 = vunpack.c.l.b16 %v2218
    %v2628 = vunpack.c.h.b16 %v2218
    %v2629 = vunpack.c.l.b16 %v2219
    %v2630 = vunpack.c.h.b16 %v2219
    %v2631 = vunpack.c.l.b16 %v2220
    %v2632 = vunpack.c.h.b16 %v2220
    %v2633 = vunpack.c.l.b16 %v2221
    %v2634 = vunpack.c.h.b16 %v2221
    %v2635 = vunpack.c.l.b16 %v2222
    %v2636 = vunpack.c.h.b16 %v2222
    %v2637 = vunpack.c.l.b16 %v2223
    %v2638 = vunpack.c.h.b16 %v2223
    %v2639 = vunpack.c.l.b16 %v2224
    %v2640 = vunpack.c.h.b16 %v2224
    %v2641 = vunpack.c.l.b16 %v2225
    %v2642 = vunpack.c.h.b16 %v2225
    %v2643 = vunpack.c.l.b16 %v2226
    %v2644 = vunpack.c.h.b16 %v2226
    %v2645 = vunpack.c.l.b16 %v2227
    %v2646 = vunpack.c.h.b16 %v2227
    %v2647 = vunpack.c.l.b16 %v2228
    %v2648 = vunpack.c.h.b16 %v2228
    %v2649 = vunpack.c.l.b16 %v2229
    %v2650 = vunpack.c.h.b16 %v2229
    %v2651 = vunpack.c.l.b16 %v2230
    %v2652 = vunpack.c.h.b16 %v2230
    %v2653 = vunpack.c.l.b16 %v2231
    %v2654 = vunpack.c.h.b16 %v2231
    %v2655 = vunpack.c.l.b16 %v2232
    %v2656 = vunpack.c.h.b16 %v2232
    %v2657 = vunpack.c.l.b16 %v2233
    %v2658 = vunpack.c.h.b16 %v2233
    %v2659 = vunpack.c.l.b16 %v2234
    %v2660 = vunpack.c.h.b16 %v2234
    %v2661 = vunpack.c.l.b16 %v2235
    %v2662 = vunpack.c.h.b16 %v2235
    %v2663 = vunpack.c.l.b16 %v2236
    %v2664 = vunpack.c.h.b16 %v2236
    %v2665 = vunpack.c.l.b16 %v2237
    %v2666 = vunpack.c.h.b16 %v2237
    %v2667 = vunpack.c.l.b16 %v2238
    %v2668 = vunpack.c.h.b16 %v2238
    %v2669 = vunpack.c.l.b16 %v2239
    %v2670 = vunpack.c.h.b16 %v2239
    %v2671 = vunpack.c.l.b16 %v2240
    %v2672 = vunpack.c.h.b16 %v2240
    %v2673 = vunpack.c.l.b16 %v2241
    %v2674 = vunpack.c.h.b16 %v2241
    %v2675 = vunpack.c.l.b16 %v2242
    %v2676 = vunpack.c.h.b16 %v2242
    %v2677 = vunpack.c.l.b16 %v2243
    %v2678 = vunpack.c.h.b16 %v2243
    %v2679 = vunpack.c.l.b16 %v2244
    %v2680 = vunpack.c.h.b16 %v2244
    %v2681 = vunpack.c.l.b16 %v2245
    %v2682 = vunpack.c.h.b16 %v2245
    %v2683 = vunpack.c.l.b16 %v2246
    %v2684 = vunpack.c.h.b16 %v2246
    %v2685 = vunpack.c.l.b16 %v2247
    %v2686 = vunpack.c.h.b16 %v2247
    %v2687 = vunpack.c.l.b16 %v2248
    %v2688 = vunpack.c.h.b16 %v2248
    %v2689 = vunpack.c.l.b16 %v2249
    %v2690 = vunpack.c.h.b16 %v2249
    %v2691 = vunpack.c.l.b16 %v2250
    %v2692 = vunpack.c.h.b16 %v2250
    %v2693 = vunpack.c.l.b16 %v2251
    %v2694 = vunpack.c.h.b16 %v2251
    %v2695 = vunpack.c.l.b16 %v2252
    %v2696 = vunpack.c.h.b16 %v2252
    %v2697 = vunpack.c.l.b16 %v2253
    %v2698 = vunpack.c.h.b16 %v2253
    %v2699 = vunpack.c.l.b16 %v2254
    %v2700 = vunpack.c.h.b16 %v2254
    %v2701 = vunpack.c.l.b16 %v2255
    %v2702 = vunpack.c.h.b16 %v2255
    %v2703 = vunpack.c.l.b16 %v2256
    %v2704 = vunpack.c.h.b16 %v2256
    %v2705 = vunpack.c.l.b16 %v2257
    %v2706 = vunpack.c.h.b16 %v2257
    %v2707 = vunpack.c.l.b16 %v2258
    %v2708 = vunpack.c.h.b16 %v2258
    %v2709 = vunpack.c.l.b16 %v2259
    %v2710 = vunpack.c.h.b16 %v2259
    %v2711 = vunpack.c.l.b16 %v2260
    %v2712 = vunpack.c.h.b16 %v2260
    %v2713 = vunpack.c.l.b16 %v2261
    %v2714 = vunpack.c.h.b16 %v2261
    %v2715 = vunpack.c.l.b16 %v2262
    %v2716 = vunpack.c.h.b16 %v2262
    %v2717 = vunpack.c.l.b16 %v2263
    %v2718 = vunpack.c.h.b16 %v2263
    %v2719 = vunpack.c.l.b16 %v2264
    %v2720 = vunpack.c.h.b16 %v2264
    %v2721 = vunpack.c.l.b16 %v2265
    %v2722 = vunpack.c.h.b16 %v2265
    %v2723 = vunpack.c.l.b16 %v2266
    %v2724 = vunpack.c.h.b16 %v2266
    %v2725 = vunpack.c.l.b16 %v2267
    %v2726 = vunpack.c.h.b16 %v2267
    %v2727 = vunpack.c.l.b16 %v2268
    %v2728 = vunpack.c.h.b16 %v2268
    %v2729 = vunpack.c.l.b16 %v2269
    %v2730 = vunpack.c.h.b16 %v2269
    %v2731 = vunpack.c.l.b16 %v2270
    %v2732 = vunpack.c.h.b16 %v2270
    %v2733 = vunpack.c.l.b16 %v2271
    %v2734 = vunpack.c.h.b16 %v2271
    %v2735 = vunpack.c.l.b16 %v2272
    %v2736 = vunpack.c.h.b16 %v2272
    %v2737 = vunpack.c.l.b16 %v2273
    %v2738 = vunpack.c.h.b16 %v2273
    %v2739 = vunpack.c.l.b16 %v2274
    %v2740 = vunpack.c.h.b16 %v2274
    %v2741 = vunpack.c.l.b16 %v2275
    %v2742 = vunpack.c.h.b16 %v2275
    %v2743 = vunpack.c.l.b16 %v2276
    %v2744 = vunpack.c.h.b16 %v2276
    %v2745 = vunpack.c.l.b16 %v2277
    %v2746 = vunpack.c.h.b16 %v2277
    %v2747 = vunpack.c.l.b16 %v2278
    %v2748 = vunpack.c.h.b16 %v2278
    %v2749 = vunpack.c.l.b16 %v2279
    %v2750 = vunpack.c.h.b16 %v2279
    %v2751 = vunpack.c.l.b16 %v2280
    %v2752 = vunpack.c.h.b16 %v2280
    %v2753 = vunpack.c.l.b16 %v2281
    %v2754 = vunpack.c.h.b16 %v2281
    %v2755 = vunpack.c.l.b16 %v2282
    %v2756 = vunpack.c.h.b16 %v2282
    %v2757 = vunpack.c.l.b16 %v2283
    %v2758 = vunpack.c.h.b16 %v2283
    %v2759 = vunpack.c.l.b16 %v2284
    %v2760 = vunpack.c.h.b16 %v2284
    %v2761 = vunpack.c.l.b16 %v2285
    %v2762 = vunpack.c.h.b16 %v2285
    %v2763 = vunpack.c.l.b16 %v2286
    %v2764 = vunpack.c.h.b16 %v2286
    %v2765 = vunpack.c.l.b16 %v2287
    %v2766 = vunpack.c.h.b16 %v2287
    %v2767 = vunpack.c.l.b16 %v2288
    %v2768 = vunpack.c.h.b16 %v2288
    %v2769 = vunpack.c.l.b16 %v2289
    %v2770 = vunpack.c.h.b16 %v2289
    %v2771 = vunpack.c.l.b16 %v2290
    %v2772 = vunpack.c.h.b16 %v2290
    %v2773 = vunpack.c.l.b16 %v2291
    %v2774 = vunpack.c.h.b16 %v2291
    %v2775 = vunpack.c.l.b16 %v2292
    %v2776 = vunpack.c.h.b16 %v2292
    %v2777 = vunpack.c.l.b16 %v2293
    %v2778 = vunpack.c.h.b16 %v2293
    %v2779 = vunpack.c.l.b16 %v2294
    %v2780 = vunpack.c.h.b16 %v2294
    %v2781 = vunpack.c.l.b16 %v2295
    %v2782 = vunpack.c.h.b16 %v2295
    %v2783 = vunpack.c.l.b16 %v2296
    %v2784 = vunpack.c.h.b16 %v2296
    %v2785 = vunpack.c.l.b16 %v2297
    %v2786 = vunpack.c.h.b16 %v2297
    %v2787 = vunpack.c.l.b16 %v2298
    %v2788 = vunpack.c.h.b16 %v2298
    %v2789 = vunpack.c.l.b16 %v2299
    %v2790 = vunpack.c.h.b16 %v2299
    %v2791 = vunpack.c.l.b16 %v2300
    %v2792 = vunpack.c.h.b16 %v2300
    %v2793 = vunpack.c.l.b16 %v2301
    %v2794 = vunpack.c.h.b16 %v2301
    %v2795 = vunpack.c.l.b16 %v2302
    %v2796 = vunpack.c.h.b16 %v2302
    %v2797 = vunpack.c.l.b16 %v2303
    %v2798 = vunpack.c.h.b16 %v2303
    %v2799 = vunpack.c.l.b16 %v2304
    %v2800 = vunpack.c.h.b16 %v2304
    %v2801 = vunpack.c.l.b16 %v2305
    %v2802 = vunpack.c.h.b16 %v2305
    %v2803 = vunpack.c.l.b16 %v2306
    %v2804 = vunpack.c.h.b16 %v2306
    %v2805 = vunpack.c.l.b16 %v2307
    %v2806 = vunpack.c.h.b16 %v2307
    %v2807 = vunpack.c.l.b16 %v2308
    %v2808 = vunpack.c.h.b16 %v2308
    %v2809 = vunpack.c.l.b16 %v2309
    %v2810 = vunpack.c.h.b16 %v2309
    %v2811 = vunpack.c.l.b16 %v2310
    %v2812 = vunpack.c.h.b16 %v2310
    %v2813 = vunpack.c.l.b16 %v2311
    %v2814 = vunpack.c.h.b16 %v2311
    %v2815 = vunpack.c.l.b16 %v2312
    %v2816 = vunpack.c.h.b16 %v2312
    %v2817 = vunpack.c.l.b16 %v2313
    %v2818 = vunpack.c.h.b16 %v2313
    %v2819 = vunpack.c.l.b16 %v2314
    %v2820 = vunpack.c.h.b16 %v2314
    %v2821 = vunpack.c.l.b16 %v2315
    %v2822 = vunpack.c.h.b16 %v2315
    %v2823 = vunpack.c.l.b16 %v2316
    %v2824 = vunpack.c.h.b16 %v2316
    %v2825 = vunpack.c.l.b16 %v2317
    %v2826 = vunpack.c.h.b16 %v2317
    %v2827 = vunpack.c.l.b16 %v2318
    %v2828 = vunpack.c.h.b16 %v2318
    %v2829 = vunpack.c.l.b16 %v2319
    %v2830 = vunpack.c.h.b16 %v2319
    %v2831 = vunpack.c.l.b16 %v2320
    %v2832 = vunpack.c.h.b16 %v2320
    %v2833 = vunpack.c.l.b16 %v2321
    %v2834 = vunpack.c.h.b16 %v2321
    %v2835 = vunpack.c.l.b16 %v2322
    %v2836 = vunpack.c.h.b16 %v2322
    %v2837 = vunpack.c.l.b16 %v2323
    %v2838 = vunpack.c.h.b16 %v2323
    %v2839 = vunpack.c.l.b16 %v2324
    %v2840 = vunpack.c.h.b16 %v2324
    %v2841 = vunpack.c.l.b16 %v2325
    %v2842 = vunpack.c.h.b16 %v2325
    %v2843 = vunpack.c.l.b16 %v2326
    %v2844 = vunpack.c.h.b16 %v2326
    %v2845 = vunpack.c.l.b16 %v2327
    %v2846 = vunpack.c.h.b16 %v2327
    %v2847 = vunpack.c.l.b16 %v2328
    %v2848 = vunpack.c.h.b16 %v2328
    %v2849 = vunpack.c.l.b16 %v2329
    %v2850 = vunpack.c.h.b16 %v2329
    %v2851 = vunpack.c.l.b16 %v2330
    %v2852 = vunpack.c.h.b16 %v2330
    %v2853 = vunpack.c.l.b16 %v2331
    %v2854 = vunpack.c.h.b16 %v2331
    %v2855 = vunpack.c.l.b16 %v2332
    %v2856 = vunpack.c.h.b16 %v2332
    %v2857 = vunpack.c.l.b16 %v2333
    %v2858 = vunpack.c.h.b16 %v2333
    %v2859 = vunpack.c.l.b16 %v2334
    %v2860 = vunpack.c.h.b16 %v2334
    %v2861 = vunpack.c.l.b16 %v2335
    %v2862 = vunpack.c.h.b16 %v2335
    %v2863 = vunpack.c.l.b16 %v2336
    %v2864 = vunpack.c.h.b16 %v2336
    %v2865 = vunpack.c.l.b16 %v2337
    %v2866 = vunpack.c.h.b16 %v2337
    %v2867 = vunpack.c.l.b16 %v2338
    %v2868 = vunpack.c.h.b16 %v2338
    %v2869 = vunpack.c.l.b16 %v2339
    %v2870 = vunpack.c.h.b16 %v2339
    %v2871 = vunpack.c.l.b16 %v2340
    %v2872 = vunpack.c.h.b16 %v2340
    %v2873 = vunpack.c.l.b16 %v2341
    %v2874 = vunpack.c.h.b16 %v2341
    %v2875 = vunpack.c.l.b16 %v2342
    %v2876 = vunpack.c.h.b16 %v2342
    %v2877 = vunpack.c.l.b16 %v2343
    %v2878 = vunpack.c.h.b16 %v2343
    %v2879 = vunpack.c.l.b16 %v2344
    %v2880 = vunpack.c.h.b16 %v2344
    %v2881 = vunpack.c.l.b16 %v2345
    %v2882 = vunpack.c.h.b16 %v2345
    %v2883 = vunpack.c.l.b16 %v2346
    %v2884 = vunpack.c.h.b16 %v2346
    %v2885 = vunpack.c.l.b16 %v2347
    %v2886 = vunpack.c.h.b16 %v2347
    %v2887 = vunpack.c.l.b16 %v2348
    %v2888 = vunpack.c.h.b16 %v2348
    %v2889 = vunpack.c.l.b16 %v2349
    %v2890 = vunpack.c.h.b16 %v2349
    %v2891 = vunpack.c.l.b16 %v2350
    %v2892 = vunpack.c.h.b16 %v2350
    %v2893 = vunpack.c.l.b16 %v2351
    %v2894 = vunpack.c.h.b16 %v2351
    %v2895 = vunpack.c.l.b16 %v2352
    %v2896 = vunpack.c.h.b16 %v2352
    %v2897 = vunpack.c.l.b16 %v2353
    %v2898 = vunpack.c.h.b16 %v2353
    %v2899 = vunpack.c.l.b16 %v2354
    %v2900 = vunpack.c.h.b16 %v2354
    %v2901 = vunpack.c.l.b16 %v2355
    %v2902 = vunpack.c.h.b16 %v2355
    %v2903 = vunpack.c.l.b16 %v2356
    %v2904 = vunpack.c.h.b16 %v2356
    %v2905 = vunpack.c.l.b16 %v2357
    %v2906 = vunpack.c.h.b16 %v2357
    %v2907 = vunpack.c.l.b16 %v2358
    %v2908 = vunpack.c.h.b16 %v2358
    %v2909 = vunpack.c.l.b16 %v2359
    %v2910 = vunpack.c.h.b16 %v2359
    %v2911 = vunpack.c.l.b16 %v2360
    %v2912 = vunpack.c.h.b16 %v2360
    %v2913 = vunpack.c.l.b16 %v2361
    %v2914 = vunpack.c.h.b16 %v2361
    %v2915 = vunpack.c.l.b16 %v2362
    %v2916 = vunpack.c.h.b16 %v2362
    %v2917 = vunpack.c.l.b16 %v2363
    %v2918 = vunpack.c.h.b16 %v2363
    %v2919 = vunpack.c.l.b16 %v2364
    %v2920 = vunpack.c.h.b16 %v2364
    %v2921 = vunpack.c.l.b16 %v2365
    %v2922 = vunpack.c.h.b16 %v2365
    %v2923 = vunpack.c.l.b16 %v2366
    %v2924 = vunpack.c.h.b16 %v2366
    %v2925 = vunpack.c.l.b16 %v2367
    %v2926 = vunpack.c.h.b16 %v2367
    %v2927 = vunpack.c.l.b16 %v2368
    %v2928 = vunpack.c.h.b16 %v2368
    %v2929 = vunpack.c.l.b16 %v2369
    %v2930 = vunpack.c.h.b16 %v2369
    %v2931 = vunpack.c.l.b16 %v2370
    %v2932 = vunpack.c.h.b16 %v2370
    %v2933 = vunpack.c.l.b16 %v2371
    %v2934 = vunpack.c.h.b16 %v2371
    %v2935 = vunpack.c.l.b16 %v2372
    %v2936 = vunpack.c.h.b16 %v2372
    %v2937 = vunpack.c.l.b16 %v2373
    %v2938 = vunpack.c.h.b16 %v2373
    %v2939 = vunpack.c.l.b16 %v2374
    %v2940 = vunpack.c.h.b16 %v2374
    %v2941 = vunpack.c.l.b16 %v2375
    %v2942 = vunpack.c.h.b16 %v2375
    %v2943 = vunpack.c.l.b16 %v2376
    %v2944 = vunpack.c.h.b16 %v2376
    %v2945 = vunpack.c.l.b16 %v2377
    %v2946 = vunpack.c.h.b16 %v2377
    %v2947 = vunpack.c.l.b16 %v2378
    %v2948 = vunpack.c.h.b16 %v2378
    %v2949 = vunpack.c.l.b16 %v2379
    %v2950 = vunpack.c.h.b16 %v2379
    %v2951 = vunpack.c.l.b16 %v2380
    %v2952 = vunpack.c.h.b16 %v2380
    %v2953 = vunpack.c.l.b16 %v2381
    %v2954 = vunpack.c.h.b16 %v2381
    %v2955 = vunpack.c.l.b16 %v2382
    %v2956 = vunpack.c.h.b16 %v2382
    %v2957 = vunpack.c.l.b16 %v2383
    %v2958 = vunpack.c.h.b16 %v2383
    %v2959 = vunpack.c.l.b16 %v2384
    %v2960 = vunpack.c.h.b16 %v2384
    %v2961 = vunpack.c.l.b16 %v2385
    %v2962 = vunpack.c.h.b16 %v2385
    %v2963 = vunpack.c.l.b16 %v2386
    %v2964 = vunpack.c.h.b16 %v2386
    %v2965 = vunpack.c.l.b16 %v2387
    %v2966 = vunpack.c.h.b16 %v2387
    %v2967 = vunpack.c.l.b16 %v2388
    %v2968 = vunpack.c.h.b16 %v2388
    %v2969 = vunpack.c.l.b16 %v2389
    %v2970 = vunpack.c.h.b16 %v2389
    %v2971 = vunpack.c.l.b16 %v2390
    %v2972 = vunpack.c.h.b16 %v2390
    %v2973 = vunpack.c.l.b16 %v2391
    %v2974 = vunpack.c.h.b16 %v2391
    %v2975 = vunpack.c.l.b16 %v2392
    %v2976 = vunpack.c.h.b16 %v2392
    %v2977 = vunpack.c.l.b16 %v2393
    %v2978 = vunpack.c.h.b16 %v2393
    %v2979 = vunpack.c.l.b16 %v2394
    %v2980 = vunpack.c.h.b16 %v2394
    %v2981 = vpack.c.b16 %v2601, %v2597
    %v2982 = vpack.c.b16 %v2602, %v2598
    %v2983 = vpack.c.b16 %v2603, %v2599
    %v2984 = vpack.c.b16 %v2604, %v2600
    %v2985 = vpack.c.b16 %v2609, %v2605
    %v2986 = vpack.c.b16 %v2610, %v2606
    %v2987 = vpack.c.b16 %v2611, %v2607
    %v2988 = vpack.c.b16 %v2612, %v2608
    %v2989 = vpack.c.b16 %v2617, %v2613
    %v2990 = vpack.c.b16 %v2618, %v2614
    %v2991 = vpack.c.b16 %v2619, %v2615
    %v2992 = vpack.c.b16 %v2620, %v2616
    %v2993 = vpack.c.b16 %v2625, %v2621
    %v2994 = vpack.c.b16 %v2626, %v2622
    %v2995 = vpack.c.b16 %v2627, %v2623
    %v2996 = vpack.c.b16 %v2628, %v2624
    %v2997 = vpack.c.b16 %v2633, %v2629
    %v2998 = vpack.c.b16 %v2634, %v2630
    %v2999 = vpack.c.b16 %v2635, %v2631
    %v3000 = vpack.c.b16 %v2636, %v2632
    %v3001 = vpack.c.b16 %v2641, %v2637
    %v3002 = vpack.c.b16 %v2642, %v2638
    %v3003 = vpack.c.b16 %v2643, %v2639
    %v3004 = vpack.c.b16 %v2644, %v2640
    %v3005 = vpack.c.b16 %v2649, %v2645
    %v3006 = vpack.c.b16 %v2650, %v2646
    %v3007 = vpack.c.b16 %v2651, %v2647
    %v3008 = vpack.c.b16 %v2652, %v2648
    %v3009 = vpack.c.b16 %v2657, %v2653
    %v3010 = vpack.c.b16 %v2658, %v2654
    %v3011 = vpack.c.b16 %v2659, %v2655
    %v3012 = vpack.c.b16 %v2660, %v2656
    %v3013 = vpack.c.b16 %v2665, %v2661
    %v3014 = vpack.c.b16 %v2666, %v2662
    %v3015 = vpack.c.b16 %v2667, %v2663
    %v3016 = vpack.c.b16 %v2668, %v2664
    %v3017 = vpack.c.b16 %v2673, %v2669
    %v3018 = vpack.c.b16 %v2674, %v2670
    %v3019 = vpack.c.b16 %v2675, %v2671
    %v3020 = vpack.c.b16 %v2676, %v2672
    %v3021 = vpack.c.b16 %v2681, %v2677
    %v3022 = vpack.c.b16 %v2682, %v2678
    %v3023 = vpack.c.b16 %v2683, %v2679
    %v3024 = vpack.c.b16 %v2684, %v2680
    %v3025 = vpack.c.b16 %v2689, %v2685
    %v3026 = vpack.c.b16 %v2690, %v2686
    %v3027 = vpack.c.b16 %v2691, %v2687
    %v3028 = vpack.c.b16 %v2692, %v2688
    %v3029 = vpack.c.b16 %v2697, %v2693
    %v3030 = vpack.c.b16 %v2698, %v2694
    %v3031 = vpack.c.b16 %v2699, %v2695
    %v3032 = vpack.c.b16 %v2700, %v2696
    %v3033 = vpack.c.b16 %v2705, %v2701
    %v3034 = vpack.c.b16 %v2706, %v2702
    %v3035 = vpack.c.b16 %v2707, %v2703
    %v3036 = vpack.c.b16 %v2708, %v2704
    %v3037 = vpack.c.b16 %v2713, %v2709
    %v3038 = vpack.c.b16 %v2714, %v2710
    %v3039 = vpack.c.b16 %v2715, %v2711
    %v3040 = vpack.c.b16 %v2716, %v2712
    %v3041 = vpack.c.b16 %v2721, %v2717
    %v3042 = vpack.c.b16 %v2722, %v2718
    %v3043 = vpack.c.b16 %v2723, %v2719
    %v3044 = vpack.c.b16 %v2724, %v2720
    %v3045 = vpack.c.b16 %v2729, %v2725
    %v3046 = vpack.c.b16 %v2730, %v2726
    %v3047 = vpack.c.b16 %v2731, %v2727
    %v3048 = vpack.c.b16 %v2732, %v2728
    %v3049 = vpack.c.b16 %v2737, %v2733
    %v3050 = vpack.c.b16 %v2738, %v2734
    %v3051 = vpack.c.b16 %v2739, %v2735
    %v3052 = vpack.c.b16 %v2740, %v2736
    %v3053 = vpack.c.b16 %v2745, %v2741
    %v3054 = vpack.c.b16 %v2746, %v2742
    %v3055 = vpack.c.b16 %v2747, %v2743
    %v3056 = vpack.c.b16 %v2748, %v2744
    %v3057 = vpack.c.b16 %v2753, %v2749
    %v3058 = vpack.c.b16 %v2754, %v2750
    %v3059 = vpack.c.b16 %v2755, %v2751
    %v3060 = vpack.c.b16 %v2756, %v2752
    %v3061 = vpack.c.b16 %v2761, %v2757
    %v3062 = vpack.c.b16 %v2762, %v2758
    %v3063 = vpack.c.b16 %v2763, %v2759
    %v3064 = vpack.c.b16 %v2764, %v2760
    %v3065 = vpack.c.b16 %v2769, %v2765
    %v3066 = vpack.c.b16 %v2770, %v2766
    %v3067 = vpack.c.b16 %v2771, %v2767
    %v3068 = vpack.c.b16 %v2772, %v2768
    %v3069 = vpack.c.b16 %v2777, %v2773
    %v3070 = vpack.c.b16 %v2778, %v2774
    %v3071 = vpack.c.b16 %v2779, %v2775
    %v3072 = vpack.c.b16 %v2780, %v2776
    %v3073 = vpack.c.b16 %v2785, %v2781
    %v3074 = vpack.c.b16 %v2786, %v2782
    %v3075 = vpack.c.b16 %v2787, %v2783
    %v3076 = vpack.c.b16 %v2788, %v2784
    %v3077 = vpack.c.b16 %v2793, %v2789
    %v3078 = vpack.c.b16 %v2794, %v2790
    %v3079 = vpack.c.b16 %v2795, %v2791
    %v3080 = vpack.c.b16 %v2796, %v2792
    %v3081 = vpack.c.b16 %v2801, %v2797
    %v3082 = vpack.c.b16 %v2802, %v2798
    %v3083 = vpack.c.b16 %v2803, %v2799
    %v3084 = vpack.c.b16 %v2804, %v2800
    %v3085 = vpack.c.b16 %v2809, %v2805
    %v3086 = vpack.c.b16 %v2810, %v2806
    %v3087 = vpack.c.b16 %v2811, %v2807
    %v3088 = vpack.c.b16 %v2812, %v2808
    %v3089 = vpack.c.b16 %v2817, %v2813
    %v3090 = vpack.c.b16 %v2818, %v2814
    %v3091 = vpack.c.b16 %v2819, %v2815
    %v3092 = vpack.c.b16 %v2820, %v2816
    %v3093 = vpack.c.b16 %v2825, %v2821
    %v3094 = vpack.c.b16 %v2826, %v2822
    %v3095 = vpack.c.b16 %v2827, %v2823
    %v3096 = vpack.c.b16 %v2828, %v2824
    %v3097 = vpack.c.b16 %v2833, %v2829
    %v3098 = vpack.c.b16 %v2834, %v2830
    %v3099 = vpack.c.b16 %v2835, %v2831
    %v3100 = vpack.c.b16 %v2836, %v2832
    %v3101 = vpack.c.b16 %v2841, %v2837
    %v3102 = vpack.c.b16 %v2842, %v2838
    %v3103 = vpack.c.b16 %v2843, %v2839
    %v3104 = vpack.c.b16 %v2844, %v2840
    %v3105 = vpack.c.b16 %v2849, %v2845
    %v3106 = vpack.c.b16 %v2850, %v2846
    %v3107 = vpack.c.b16 %v2851, %v2847
    %v3108 = vpack.c.b16 %v2852, %v2848
    %v3109 = vpack.c.b16 %v2857, %v2853
    %v3110 = vpack.c.b16 %v2858, %v2854
    %v3111 = vpack.c.b16 %v2859, %v2855
    %v3112 = vpack.c.b16 %v2860, %v2856
    %v3113 = vpack.c.b16 %v2865, %v2861
    %v3114 = vpack.c.b16 %v2866, %v2862
    %v3115 = vpack.c.b16 %v2867, %v2863
    %v3116 = vpack.c.b16 %v2868, %v2864
    %v3117 = vpack.c.b16 %v2873, %v2869
    %v3118 = vpack.c.b16 %v2874, %v2870
    %v3119 = vpack.c.b16 %v2875, %v2871
    %v3120 = vpack.c.b16 %v2876, %v2872
    %v3121 = vpack.c.b16 %v2881, %v2877
    %v3122 = vpack.c.b16 %v2882, %v2878
    %v3123 = vpack.c.b16 %v2883, %v2879
    %v3124 = vpack.c.b16 %v2884, %v2880
    %v3125 = vpack.c.b16 %v2889, %v2885
    %v3126 = vpack.c.b16 %v2890, %v2886
    %v3127 = vpack.c.b16 %v2891, %v2887
    %v3128 = vpack.c.b16 %v2892, %v2888
    %v3129 = vpack.c.b16 %v2897, %v2893
    %v3130 = vpack.c.b16 %v2898, %v2894
    %v3131 = vpack.c.b16 %v2899, %v2895
    %v3132 = vpack.c.b16 %v2900, %v2896
    %v3133 = vpack.c.b16 %v2905, %v2901
    %v3134 = vpack.c.b16 %v2906, %v2902
    %v3135 = vpack.c.b16 %v2907, %v2903
    %v3136 = vpack.c.b16 %v2908, %v2904
    %v3137 = vpack.c.b16 %v2913, %v2909
    %v3138 = vpack.c.b16 %v2914, %v2910
    %v3139 = vpack.c.b16 %v2915, %v2911
    %v3140 = vpack.c.b16 %v2916, %v2912
    %v3141 = vpack.c.b16 %v2921, %v2917
    %v3142 = vpack.c.b16 %v2922, %v2918
    %v3143 = vpack.c.b16 %v2923, %v2919
    %v3144 = vpack.c.b16 %v2924, %v2920
    %v3145 = vpack.c.b16 %v2929, %v2925
    %v3146 = vpack.c.b16 %v2930, %v2926
    %v3147 = vpack.c.b16 %v2931, %v2927
    %v3148 = vpack.c.b16 %v2932, %v2928
    %v3149 = vpack.c.b16 %v2937, %v2933
    %v3150 = vpack.c.b16 %v2938, %v2934
    %v3151 = vpack.c.b16 %v2939, %v2935
    %v3152 = vpack.c.b16 %v2940, %v2936
    %v3153 = vpack.c.b16 %v2945, %v2941
    %v3154 = vpack.c.b16 %v2946, %v2942
    %v3155 = vpack.c.b16 %v2947, %v2943
    %v3156 = vpack.c.b16 %v2948, %v2944
    %v3157 = vpack.c.b16 %v2953, %v2949
    %v3158 = vpack.c.b16 %v2954, %v2950
    %v3159 = vpack.c.b16 %v2955, %v2951
    %v3160 = vpack.c.b16 %v2956, %v2952
    %v3161 = vpack.c.b16 %v2961, %v2957
    %v3162 = vpack.c.b16 %v2962, %v2958
    %v3163 = vpack.c.b16 %v2963, %v2959
    %v3164 = vpack.c.b16 %v2964, %v2960
    %v3165 = vpack.c.b16 %v2969, %v2965
    %v3166 = vpack.c.b16 %v2970, %v2966
    %v3167 = vpack.c.b16 %v2971, %v2967
    %v3168 = vpack.c.b16 %v2972, %v2968
    %v3169 = vpack.c.b16 %v2977, %v2973
    %v3170 = vpack.c.b16 %v2978, %v2974
    %v3171 = vpack.c.b16 %v2979, %v2975
    %v3172 = vpack.c.b16 %v2980, %v2976
    %3365 = vmatpush.bf16.msra.mxu0 %v3009
    %3366 = vmatpush.bf16.msra.mxu0 %v3005
    %3367 = vmatpush.bf16.msra.mxu0 %v3001
    %3368 = vmatpush.bf16.msra.mxu0 %v2997
    %3369 = vmatpush.bf16.msra.mxu0 %v2993
    %3370 = vmatpush.bf16.msra.mxu0 %v2989
    %3371 = vmatpush.bf16.msra.mxu0 %v2985
    %3372 = vmatpush.bf16.msra.mxu0 %v2981
    %3373 = vmatmul.bf16.gmra.mxu0 %v2187
    %v3374 = vpop.f32.mrf.mxu0
    %v3375 = vadd.f32 %v2397, %v3374
    %v3376 = vpop.f32.mrf.mxu0
    %v3377 = vadd.f32 %v2397, %v3376
    %3378 = vmatmul.bf16.gmra.mxu0 %v2193
    %v3379 = vpop.f32.mrf.mxu0
    %v3380 = vadd.f32 %v2397, %v3379
    %v3381 = vpop.f32.mrf.mxu0
    %v3382 = vadd.f32 %v2397, %v3381
    %3383 = vdwg.mxu0
    %3384 = vmatpush.bf16.msra.mxu0 %v3041
    %3385 = vmatpush.bf16.msra.mxu0 %v3037
    %3386 = vmatpush.bf16.msra.mxu0 %v3033
    %3387 = vmatpush.bf16.msra.mxu0 %v3029
    %3388 = vmatpush.bf16.msra.mxu0 %v3025
    %3389 = vmatpush.bf16.msra.mxu0 %v3021
    %3390 = vmatpush.bf16.msra.mxu0 %v3017
    %3391 = vmatpush.bf16.msra.mxu0 %v3013
    %3392 = vmatmul.bf16.gmra.mxu0 %v2188
    %v3393 = vpop.f32.mrf.mxu0
    %v3394 = vadd.f32 %v3375, %v3393
    %v3395 = vpop.f32.mrf.mxu0
    %v3396 = vadd.f32 %v3377, %v3395
    %3397 = vmatmul.bf16.gmra.mxu0 %v2194
    %v3398 = vpop.f32.mrf.mxu0
    %v3399 = vadd.f32 %v3380, %v3398
    %v3400 = vpop.f32.mrf.mxu0
    %v3401 = vadd.f32 %v3382, %v3400
    %3402 = vdwg.mxu0
    %3403 = vmatpush.bf16.msra.mxu0 %v3073
    %3404 = vmatpush.bf16.msra.mxu0 %v3069
    %3405 = vmatpush.bf16.msra.mxu0 %v3065
    %3406 = vmatpush.bf16.msra.mxu0 %v3061
    %3407 = vmatpush.bf16.msra.mxu0 %v3057
    %3408 = vmatpush.bf16.msra.mxu0 %v3053
    %3409 = vmatpush.bf16.msra.mxu0 %v3049
    %3410 = vmatpush.bf16.msra.mxu0 %v3045
    %3411 = vmatmul.bf16.gmra.mxu0 %v2189
    %v3412 = vpop.f32.mrf.mxu0
    %v3413 = vadd.f32 %v3394, %v3412
    %v3414 = vpop.f32.mrf.mxu0
    %v3415 = vadd.f32 %v3396, %v3414
    %3416 = vmatmul.bf16.gmra.mxu0 %v2195
    %v3417 = vpop.f32.mrf.mxu0
    %v3418 = vadd.f32 %v3399, %v3417
    %v3419 = vpop.f32.mrf.mxu0
    %v3420 = vadd.f32 %v3401, %v3419
    %3421 = vdwg.mxu0
    %3422 = vmatpush.bf16.msra.mxu0 %v3105
    %3423 = vmatpush.bf16.msra.mxu0 %v3101
    %3424 = vmatpush.bf16.msra.mxu0 %v3097
    %3425 = vmatpush.bf16.msra.mxu0 %v3093
    %3426 = vmatpush.bf16.msra.mxu0 %v3089
    %3427 = vmatpush.bf16.msra.mxu0 %v3085
    %3428 = vmatpush.bf16.msra.mxu0 %v3081
    %3429 = vmatpush.bf16.msra.mxu0 %v3077
    %3430 = vmatmul.bf16.gmra.mxu0 %v2190
    %v3431 = vpop.f32.mrf.mxu0
    %v3432 = vadd.f32 %v3413, %v3431
    %v3433 = vpop.f32.mrf.mxu0
    %v3434 = vadd.f32 %v3415, %v3433
    %3435 = vmatmul.bf16.gmra.mxu0 %v2196
    %v3436 = vpop.f32.mrf.mxu0
    %v3437 = vadd.f32 %v3418, %v3436
    %v3438 = vpop.f32.mrf.mxu0
    %v3439 = vadd.f32 %v3420, %v3438
    %3440 = vdwg.mxu0
    %3441 = vmatpush.bf16.msra.mxu0 %v3137
    %3442 = vmatpush.bf16.msra.mxu0 %v3133
    %3443 = vmatpush.bf16.msra.mxu0 %v3129
    %3444 = vmatpush.bf16.msra.mxu0 %v3125
    %3445 = vmatpush.bf16.msra.mxu0 %v3121
    %3446 = vmatpush.bf16.msra.mxu0 %v3117
    %3447 = vmatpush.bf16.msra.mxu0 %v3113
    %3448 = vmatpush.bf16.msra.mxu0 %v3109
    %3449 = vmatmul.bf16.gmra.mxu0 %v2191
    %v3450 = vpop.f32.mrf.mxu0
    %v3451 = vadd.f32 %v3432, %v3450
    %v3452 = vpop.f32.mrf.mxu0
    %v3453 = vadd.f32 %v3434, %v3452
    %3454 = vmatmul.bf16.gmra.mxu0 %v2197
    %v3455 = vpop.f32.mrf.mxu0
    %v3456 = vadd.f32 %v3437, %v3455
    %v3457 = vpop.f32.mrf.mxu0
    %v3458 = vadd.f32 %v3439, %v3457
    %3459 = vdwg.mxu0
    %3460 = vmatpush.bf16.msra.mxu0 %v3169
    %3461 = vmatpush.bf16.msra.mxu0 %v3165
    %3462 = vmatpush.bf16.msra.mxu0 %v3161
    %3463 = vmatpush.bf16.msra.mxu0 %v3157
    %3464 = vmatpush.bf16.msra.mxu0 %v3153
    %3465 = vmatpush.bf16.msra.mxu0 %v3149
    %3466 = vmatpush.bf16.msra.mxu0 %v3145
    %3467 = vmatpush.bf16.msra.mxu0 %v3141
    %3468 = vmatmul.bf16.gmra.mxu0 %v2192
    %v3469 = vpop.f32.mrf.mxu0
    %v3470 = vadd.f32 %v3451, %v3469
    %v3471 = vpop.f32.mrf.mxu0
    %v3472 = vadd.f32 %v3453, %v3471
    %3473 = vmatmul.bf16.gmra.mxu0 %v2198
    %v3474 = vpop.f32.mrf.mxu0
    %v3475 = vadd.f32 %v3456, %v3474
    %v3476 = vpop.f32.mrf.mxu0
    %v3477 = vadd.f32 %v3458, %v3476
    %3478 = vdwg.mxu0
    %3479 = vmatpush.bf16.msra.mxu0 %v3010
    %3480 = vmatpush.bf16.msra.mxu0 %v3006
    %3481 = vmatpush.bf16.msra.mxu0 %v3002
    %3482 = vmatpush.bf16.msra.mxu0 %v2998
    %3483 = vmatpush.bf16.msra.mxu0 %v2994
    %3484 = vmatpush.bf16.msra.mxu0 %v2990
    %3485 = vmatpush.bf16.msra.mxu0 %v2986
    %3486 = vmatpush.bf16.msra.mxu0 %v2982
    %3487 = vmatmul.bf16.gmra.mxu0 %v2187
    %v3488 = vpop.f32.mrf.mxu0
    %v3489 = vadd.f32 %v2398, %v3488
    %v3490 = vpop.f32.mrf.mxu0
    %v3491 = vadd.f32 %v2398, %v3490
    %3492 = vmatmul.bf16.gmra.mxu0 %v2193
    %v3493 = vpop.f32.mrf.mxu0
    %v3494 = vadd.f32 %v2398, %v3493
    %v3495 = vpop.f32.mrf.mxu0
    %v3496 = vadd.f32 %v2398, %v3495
    %3497 = vdwg.mxu0
    %3498 = vmatpush.bf16.msra.mxu0 %v3042
    %3499 = vmatpush.bf16.msra.mxu0 %v3038
    %3500 = vmatpush.bf16.msra.mxu0 %v3034
    %3501 = vmatpush.bf16.msra.mxu0 %v3030
    %3502 = vmatpush.bf16.msra.mxu0 %v3026
    %3503 = vmatpush.bf16.msra.mxu0 %v3022
    %3504 = vmatpush.bf16.msra.mxu0 %v3018
    %3505 = vmatpush.bf16.msra.mxu0 %v3014
    %3506 = vmatmul.bf16.gmra.mxu0 %v2188
    %v3507 = vpop.f32.mrf.mxu0
    %v3508 = vadd.f32 %v3489, %v3507
    %v3509 = vpop.f32.mrf.mxu0
    %v3510 = vadd.f32 %v3491, %v3509
    %3511 = vmatmul.bf16.gmra.mxu0 %v2194
    %v3512 = vpop.f32.mrf.mxu0
    %v3513 = vadd.f32 %v3494, %v3512
    %v3514 = vpop.f32.mrf.mxu0
    %v3515 = vadd.f32 %v3496, %v3514
    %3516 = vdwg.mxu0
    %3517 = vmatpush.bf16.msra.mxu0 %v3074
    %3518 = vmatpush.bf16.msra.mxu0 %v3070
    %3519 = vmatpush.bf16.msra.mxu0 %v3066
    %3520 = vmatpush.bf16.msra.mxu0 %v3062
    %3521 = vmatpush.bf16.msra.mxu0 %v3058
    %3522 = vmatpush.bf16.msra.mxu0 %v3054
    %3523 = vmatpush.bf16.msra.mxu0 %v3050
    %3524 = vmatpush.bf16.msra.mxu0 %v3046
    %3525 = vmatmul.bf16.gmra.mxu0 %v2189
    %v3526 = vpop.f32.mrf.mxu0
    %v3527 = vadd.f32 %v3508, %v3526
    %v3528 = vpop.f32.mrf.mxu0
    %v3529 = vadd.f32 %v3510, %v3528
    %3530 = vmatmul.bf16.gmra.mxu0 %v2195
    %v3531 = vpop.f32.mrf.mxu0
    %v3532 = vadd.f32 %v3513, %v3531
    %v3533 = vpop.f32.mrf.mxu0
    %v3534 = vadd.f32 %v3515, %v3533
    %3535 = vdwg.mxu0
    %3536 = vmatpush.bf16.msra.mxu0 %v3106
    %3537 = vmatpush.bf16.msra.mxu0 %v3102
    %3538 = vmatpush.bf16.msra.mxu0 %v3098
    %3539 = vmatpush.bf16.msra.mxu0 %v3094
    %3540 = vmatpush.bf16.msra.mxu0 %v3090
    %3541 = vmatpush.bf16.msra.mxu0 %v3086
    %3542 = vmatpush.bf16.msra.mxu0 %v3082
    %3543 = vmatpush.bf16.msra.mxu0 %v3078
    %3544 = vmatmul.bf16.gmra.mxu0 %v2190
    %v3545 = vpop.f32.mrf.mxu0
    %v3546 = vadd.f32 %v3527, %v3545
    %v3547 = vpop.f32.mrf.mxu0
    %v3548 = vadd.f32 %v3529, %v3547
    %3549 = vmatmul.bf16.gmra.mxu0 %v2196
    %v3550 = vpop.f32.mrf.mxu0
    %v3551 = vadd.f32 %v3532, %v3550
    %v3552 = vpop.f32.mrf.mxu0
    %v3553 = vadd.f32 %v3534, %v3552
    %3554 = vdwg.mxu0
    %3555 = vmatpush.bf16.msra.mxu0 %v3138
    %3556 = vmatpush.bf16.msra.mxu0 %v3134
    %3557 = vmatpush.bf16.msra.mxu0 %v3130
    %3558 = vmatpush.bf16.msra.mxu0 %v3126
    %3559 = vmatpush.bf16.msra.mxu0 %v3122
    %3560 = vmatpush.bf16.msra.mxu0 %v3118
    %3561 = vmatpush.bf16.msra.mxu0 %v3114
    %3562 = vmatpush.bf16.msra.mxu0 %v3110
    %3563 = vmatmul.bf16.gmra.mxu0 %v2191
    %v3564 = vpop.f32.mrf.mxu0
    %v3565 = vadd.f32 %v3546, %v3564
    %v3566 = vpop.f32.mrf.mxu0
    %v3567 = vadd.f32 %v3548, %v3566
    %3568 = vmatmul.bf16.gmra.mxu0 %v2197
    %v3569 = vpop.f32.mrf.mxu0
    %v3570 = vadd.f32 %v3551, %v3569
    %v3571 = vpop.f32.mrf.mxu0
    %v3572 = vadd.f32 %v3553, %v3571
    %3573 = vdwg.mxu0
    %3574 = vmatpush.bf16.msra.mxu0 %v3170
    %3575 = vmatpush.bf16.msra.mxu0 %v3166
    %3576 = vmatpush.bf16.msra.mxu0 %v3162
    %3577 = vmatpush.bf16.msra.mxu0 %v3158
    %3578 = vmatpush.bf16.msra.mxu0 %v3154
    %3579 = vmatpush.bf16.msra.mxu0 %v3150
    %3580 = vmatpush.bf16.msra.mxu0 %v3146
    %3581 = vmatpush.bf16.msra.mxu0 %v3142
    %3582 = vmatmul.bf16.gmra.mxu0 %v2192
    %v3583 = vpop.f32.mrf.mxu0
    %v3584 = vadd.f32 %v3565, %v3583
    %v3585 = vpop.f32.mrf.mxu0
    %v3586 = vadd.f32 %v3567, %v3585
    %3587 = vmatmul.bf16.gmra.mxu0 %v2198
    %v3588 = vpop.f32.mrf.mxu0
    %v3589 = vadd.f32 %v3570, %v3588
    %v3590 = vpop.f32.mrf.mxu0
    %v3591 = vadd.f32 %v3572, %v3590
    %3592 = vdwg.mxu0
    %3593 = vmatpush.bf16.msra.mxu0 %v3011
    %3594 = vmatpush.bf16.msra.mxu0 %v3007
    %3595 = vmatpush.bf16.msra.mxu0 %v3003
    %3596 = vmatpush.bf16.msra.mxu0 %v2999
    %3597 = vmatpush.bf16.msra.mxu0 %v2995
    %3598 = vmatpush.bf16.msra.mxu0 %v2991
    %3599 = vmatpush.bf16.msra.mxu0 %v2987
    %3600 = vmatpush.bf16.msra.mxu0 %v2983
    %3601 = vmatmul.bf16.gmra.mxu0 %v2187
    %v3602 = vpop.f32.mrf.mxu0
    %v3603 = vadd.f32 %v2399, %v3602
    %v3604 = vpop.f32.mrf.mxu0
    %v3605 = vadd.f32 %v2399, %v3604
    %3606 = vmatmul.bf16.gmra.mxu0 %v2193
    %v3607 = vpop.f32.mrf.mxu0
    %v3608 = vadd.f32 %v2399, %v3607
    %v3609 = vpop.f32.mrf.mxu0
    %v3610 = vadd.f32 %v2399, %v3609
    %3611 = vdwg.mxu0
    %3612 = vmatpush.bf16.msra.mxu0 %v3043
    %3613 = vmatpush.bf16.msra.mxu0 %v3039
    %3614 = vmatpush.bf16.msra.mxu0 %v3035
    %3615 = vmatpush.bf16.msra.mxu0 %v3031
    %3616 = vmatpush.bf16.msra.mxu0 %v3027
    %3617 = vmatpush.bf16.msra.mxu0 %v3023
    %3618 = vmatpush.bf16.msra.mxu0 %v3019
    %3619 = vmatpush.bf16.msra.mxu0 %v3015
    %3620 = vmatmul.bf16.gmra.mxu0 %v2188
    %v3621 = vpop.f32.mrf.mxu0
    %v3622 = vadd.f32 %v3603, %v3621
    %v3623 = vpop.f32.mrf.mxu0
    %v3624 = vadd.f32 %v3605, %v3623
    %3625 = vmatmul.bf16.gmra.mxu0 %v2194
    %v3626 = vpop.f32.mrf.mxu0
    %v3627 = vadd.f32 %v3608, %v3626
    %v3628 = vpop.f32.mrf.mxu0
    %v3629 = vadd.f32 %v3610, %v3628
    %3630 = vdwg.mxu0
    %3631 = vmatpush.bf16.msra.mxu0 %v3075
    %3632 = vmatpush.bf16.msra.mxu0 %v3071
    %3633 = vmatpush.bf16.msra.mxu0 %v3067
    %3634 = vmatpush.bf16.msra.mxu0 %v3063
    %3635 = vmatpush.bf16.msra.mxu0 %v3059
    %3636 = vmatpush.bf16.msra.mxu0 %v3055
    %3637 = vmatpush.bf16.msra.mxu0 %v3051
    %3638 = vmatpush.bf16.msra.mxu0 %v3047
    %3639 = vmatmul.bf16.gmra.mxu0 %v2189
    %v3640 = vpop.f32.mrf.mxu0
    %v3641 = vadd.f32 %v3622, %v3640
    %v3642 = vpop.f32.mrf.mxu0
    %v3643 = vadd.f32 %v3624, %v3642
    %3644 = vmatmul.bf16.gmra.mxu0 %v2195
    %v3645 = vpop.f32.mrf.mxu0
    %v3646 = vadd.f32 %v3627, %v3645
    %v3647 = vpop.f32.mrf.mxu0
    %v3648 = vadd.f32 %v3629, %v3647
    %3649 = vdwg.mxu0
    %3650 = vmatpush.bf16.msra.mxu0 %v3107
    %3651 = vmatpush.bf16.msra.mxu0 %v3103
    %3652 = vmatpush.bf16.msra.mxu0 %v3099
    %3653 = vmatpush.bf16.msra.mxu0 %v3095
    %3654 = vmatpush.bf16.msra.mxu0 %v3091
    %3655 = vmatpush.bf16.msra.mxu0 %v3087
    %3656 = vmatpush.bf16.msra.mxu0 %v3083
    %3657 = vmatpush.bf16.msra.mxu0 %v3079
    %3658 = vmatmul.bf16.gmra.mxu0 %v2190
    %v3659 = vpop.f32.mrf.mxu0
    %v3660 = vadd.f32 %v3641, %v3659
    %v3661 = vpop.f32.mrf.mxu0
    %v3662 = vadd.f32 %v3643, %v3661
    %3663 = vmatmul.bf16.gmra.mxu0 %v2196
    %v3664 = vpop.f32.mrf.mxu0
    %v3665 = vadd.f32 %v3646, %v3664
    %v3666 = vpop.f32.mrf.mxu0
    %v3667 = vadd.f32 %v3648, %v3666
    %3668 = vdwg.mxu0
    %3669 = vmatpush.bf16.msra.mxu0 %v3139
    %3670 = vmatpush.bf16.msra.mxu0 %v3135
    %3671 = vmatpush.bf16.msra.mxu0 %v3131
    %3672 = vmatpush.bf16.msra.mxu0 %v3127
    %3673 = vmatpush.bf16.msra.mxu0 %v3123
    %3674 = vmatpush.bf16.msra.mxu0 %v3119
    %3675 = vmatpush.bf16.msra.mxu0 %v3115
    %3676 = vmatpush.bf16.msra.mxu0 %v3111
    %3677 = vmatmul.bf16.gmra.mxu0 %v2191
    %v3678 = vpop.f32.mrf.mxu0
    %v3679 = vadd.f32 %v3660, %v3678
    %v3680 = vpop.f32.mrf.mxu0
    %v3681 = vadd.f32 %v3662, %v3680
    %3682 = vmatmul.bf16.gmra.mxu0 %v2197
    %v3683 = vpop.f32.mrf.mxu0
    %v3684 = vadd.f32 %v3665, %v3683
    %v3685 = vpop.f32.mrf.mxu0
    %v3686 = vadd.f32 %v3667, %v3685
    %3687 = vdwg.mxu0
    %3688 = vmatpush.bf16.msra.mxu0 %v3171
    %3689 = vmatpush.bf16.msra.mxu0 %v3167
    %3690 = vmatpush.bf16.msra.mxu0 %v3163
    %3691 = vmatpush.bf16.msra.mxu0 %v3159
    %3692 = vmatpush.bf16.msra.mxu0 %v3155
    %3693 = vmatpush.bf16.msra.mxu0 %v3151
    %3694 = vmatpush.bf16.msra.mxu0 %v3147
    %3695 = vmatpush.bf16.msra.mxu0 %v3143
    %3696 = vmatmul.bf16.gmra.mxu0 %v2192
    %v3697 = vpop.f32.mrf.mxu0
    %v3698 = vadd.f32 %v3679, %v3697
    %v3699 = vpop.f32.mrf.mxu0
    %v3700 = vadd.f32 %v3681, %v3699
    %3701 = vmatmul.bf16.gmra.mxu0 %v2198
    %v3702 = vpop.f32.mrf.mxu0
    %v3703 = vadd.f32 %v3684, %v3702
    %v3704 = vpop.f32.mrf.mxu0
    %v3705 = vadd.f32 %v3686, %v3704
    %3706 = vdwg.mxu0
    %3707 = vmatpush.bf16.msra.mxu0 %v3012
    %3708 = vmatpush.bf16.msra.mxu0 %v3008
    %3709 = vmatpush.bf16.msra.mxu0 %v3004
    %3710 = vmatpush.bf16.msra.mxu0 %v3000
    %3711 = vmatpush.bf16.msra.mxu0 %v2996
    %3712 = vmatpush.bf16.msra.mxu0 %v2992
    %3713 = vmatpush.bf16.msra.mxu0 %v2988
    %3714 = vmatpush.bf16.msra.mxu0 %v2984
    %3715 = vmatmul.bf16.gmra.mxu0 %v2187
    %v3716 = vpop.f32.mrf.mxu0
    %v3717 = vadd.f32 %v2400, %v3716
    %v3718 = vpop.f32.mrf.mxu0
    %v3719 = vadd.f32 %v2400, %v3718
    %3720 = vmatmul.bf16.gmra.mxu0 %v2193
    %v3721 = vpop.f32.mrf.mxu0
    %v3722 = vadd.f32 %v2400, %v3721
    %v3723 = vpop.f32.mrf.mxu0
    %v3724 = vadd.f32 %v2400, %v3723
    %3725 = vdwg.mxu0
    %3726 = vmatpush.bf16.msra.mxu0 %v3044
    %3727 = vmatpush.bf16.msra.mxu0 %v3040
    %3728 = vmatpush.bf16.msra.mxu0 %v3036
    %3729 = vmatpush.bf16.msra.mxu0 %v3032
    %3730 = vmatpush.bf16.msra.mxu0 %v3028
    %3731 = vmatpush.bf16.msra.mxu0 %v3024
    %3732 = vmatpush.bf16.msra.mxu0 %v3020
    %3733 = vmatpush.bf16.msra.mxu0 %v3016
    %3734 = vmatmul.bf16.gmra.mxu0 %v2188
    %v3735 = vpop.f32.mrf.mxu0
    %v3736 = vadd.f32 %v3717, %v3735
    %v3737 = vpop.f32.mrf.mxu0
    %v3738 = vadd.f32 %v3719, %v3737
    %3739 = vmatmul.bf16.gmra.mxu0 %v2194
    %v3740 = vpop.f32.mrf.mxu0
    %v3741 = vadd.f32 %v3722, %v3740
    %v3742 = vpop.f32.mrf.mxu0
    %v3743 = vadd.f32 %v3724, %v3742
    %3744 = vdwg.mxu0
    %3745 = vmatpush.bf16.msra.mxu0 %v3076
    %3746 = vmatpush.bf16.msra.mxu0 %v3072
    %3747 = vmatpush.bf16.msra.mxu0 %v3068
    %3748 = vmatpush.bf16.msra.mxu0 %v3064
    %3749 = vmatpush.bf16.msra.mxu0 %v3060
    %3750 = vmatpush.bf16.msra.mxu0 %v3056
    %3751 = vmatpush.bf16.msra.mxu0 %v3052
    %3752 = vmatpush.bf16.msra.mxu0 %v3048
    %3753 = vmatmul.bf16.gmra.mxu0 %v2189
    %v3754 = vpop.f32.mrf.mxu0
    %v3755 = vadd.f32 %v3736, %v3754
    %v3756 = vpop.f32.mrf.mxu0
    %v3757 = vadd.f32 %v3738, %v3756
    %3758 = vmatmul.bf16.gmra.mxu0 %v2195
    %v3759 = vpop.f32.mrf.mxu0
    %v3760 = vadd.f32 %v3741, %v3759
    %v3761 = vpop.f32.mrf.mxu0
    %v3762 = vadd.f32 %v3743, %v3761
    %3763 = vdwg.mxu0
    %3764 = vmatpush.bf16.msra.mxu0 %v3108
    %3765 = vmatpush.bf16.msra.mxu0 %v3104
    %3766 = vmatpush.bf16.msra.mxu0 %v3100
    %3767 = vmatpush.bf16.msra.mxu0 %v3096
    %3768 = vmatpush.bf16.msra.mxu0 %v3092
    %3769 = vmatpush.bf16.msra.mxu0 %v3088
    %3770 = vmatpush.bf16.msra.mxu0 %v3084
    %3771 = vmatpush.bf16.msra.mxu0 %v3080
    %3772 = vmatmul.bf16.gmra.mxu0 %v2190
    %v3773 = vpop.f32.mrf.mxu0
    %v3774 = vadd.f32 %v3755, %v3773
    %v3775 = vpop.f32.mrf.mxu0
    %v3776 = vadd.f32 %v3757, %v3775
    %3777 = vmatmul.bf16.gmra.mxu0 %v2196
    %v3778 = vpop.f32.mrf.mxu0
    %v3779 = vadd.f32 %v3760, %v3778
    %v3780 = vpop.f32.mrf.mxu0
    %v3781 = vadd.f32 %v3762, %v3780
    %3782 = vdwg.mxu0
    %3783 = vmatpush.bf16.msra.mxu0 %v3140
    %3784 = vmatpush.bf16.msra.mxu0 %v3136
    %3785 = vmatpush.bf16.msra.mxu0 %v3132
    %3786 = vmatpush.bf16.msra.mxu0 %v3128
    %3787 = vmatpush.bf16.msra.mxu0 %v3124
    %3788 = vmatpush.bf16.msra.mxu0 %v3120
    %3789 = vmatpush.bf16.msra.mxu0 %v3116
    %3790 = vmatpush.bf16.msra.mxu0 %v3112
    %3791 = vmatmul.bf16.gmra.mxu0 %v2191
    %v3792 = vpop.f32.mrf.mxu0
    %v3793 = vadd.f32 %v3774, %v3792
    %v3794 = vpop.f32.mrf.mxu0
    %v3795 = vadd.f32 %v3776, %v3794
    %3796 = vmatmul.bf16.gmra.mxu0 %v2197
    %v3797 = vpop.f32.mrf.mxu0
    %v3798 = vadd.f32 %v3779, %v3797
    %v3799 = vpop.f32.mrf.mxu0
    %v3800 = vadd.f32 %v3781, %v3799
    %3801 = vdwg.mxu0
    %3802 = vmatpush.bf16.msra.mxu0 %v3172
    %3803 = vmatpush.bf16.msra.mxu0 %v3168
    %3804 = vmatpush.bf16.msra.mxu0 %v3164
    %3805 = vmatpush.bf16.msra.mxu0 %v3160
    %3806 = vmatpush.bf16.msra.mxu0 %v3156
    %3807 = vmatpush.bf16.msra.mxu0 %v3152
    %3808 = vmatpush.bf16.msra.mxu0 %v3148
    %3809 = vmatpush.bf16.msra.mxu0 %v3144
    %3810 = vmatmul.bf16.gmra.mxu0 %v2192
    %v3811 = vpop.f32.mrf.mxu0
    %v3812 = vadd.f32 %v3793, %v3811
    %v3813 = vpop.f32.mrf.mxu0
    %v3814 = vadd.f32 %v3795, %v3813
    %3815 = vmatmul.bf16.gmra.mxu0 %v2198
    %v3816 = vpop.f32.mrf.mxu0
    %v3817 = vadd.f32 %v3798, %v3816
    %v3818 = vpop.f32.mrf.mxu0
    %v3819 = vadd.f32 %v3800, %v3818
    %3820 = vdwg.mxu0
    %v3821 = vmax.f32 %v3470, 0.0
    %v3822 = vmax.f32 %v3584, 0.0
    %v3823 = vmax.f32 %v3698, 0.0
    %v3824 = vmax.f32 %v3812, 0.0
    %v3825 = vmax.f32 %v3472, 0.0
    %v3826 = vmax.f32 %v3586, 0.0
    %v3827 = vmax.f32 %v3700, 0.0
    %v3828 = vmax.f32 %v3814, 0.0
    %v3829 = vmax.f32 %v3475, 0.0
    %v3830 = vmax.f32 %v3589, 0.0
    %v3831 = vmax.f32 %v3703, 0.0
    %v3832 = vmax.f32 %v3817, 0.0
    %v3833 = vmax.f32 %v3477, 0.0
    %v3834 = vmax.f32 %v3591, 0.0
    %v3835 = vmax.f32 %v3705, 0.0
    %v3836 = vmax.f32 %v3819, 0.0
    %s3837 = smul.u32 4, 64
    %s3838 = smul.u32 %s3837, 4
    %s3839 = sshll.u32 %s3838, 4
    %3840 = dma.done %s205, %s3839
    %v3841 = vpack.c.bf16 %v3825, %v3821
    %v3842 = vpack.c.bf16 %v3826, %v3822
    %v3843 = vpack.c.bf16 %v3827, %v3823
    %v3844 = vpack.c.bf16 %v3828, %v3824
    %v3845 = vpack.c.bf16 %v3833, %v3829
    %v3846 = vpack.c.bf16 %v3834, %v3830
    %v3847 = vpack.c.bf16 %v3835, %v3831
    %v3848 = vpack.c.bf16 %v3836, %v3832
    %v3849 = vld [vmem:[#allocation3] sm:$0xff]
    %v3850 = vld [vmem:[#allocation3 + $0x8] sm:$0xff]
    %v3851 = vld [vmem:[#allocation3 + $0x10] sm:$0xff]
    %v3852 = vld [vmem:[#allocation3 + $0x18] sm:$0xff]
    %v3853 = vld [vmem:[#allocation3 + $0x20] sm:$0xff]
    %v3854 = vld [vmem:[#allocation3 + $0x28] sm:$0xff]
    %v3855 = vld [vmem:[#allocation3 + $0x30] sm:$0xff]
    %v3856 = vld [vmem:[#allocation3 + $0x38] sm:$0xff]
    %v3857 = vld [vmem:[#allocation3 + $0x40] sm:$0xff]
    %v3858 = vld [vmem:[#allocation3 + $0x48] sm:$0xff]
    %v3859 = vld [vmem:[#allocation3 + $0x50] sm:$0xff]
    %v3860 = vld [vmem:[#allocation3 + $0x58] sm:$0xff]
    %v3861 = vld [vmem:[#allocation3 + $0x60] sm:$0xff]
    %v3862 = vld [vmem:[#allocation3 + $0x68] sm:$0xff]
    %v3863 = vld [vmem:[#allocation3 + $0x70] sm:$0xff]
    %v3864 = vld [vmem:[#allocation3 + $0x78] sm:$0xff]
    %v3865 = vld [vmem:[#allocation3 + $0x80] sm:$0xff]
    %v3866 = vld [vmem:[#allocation3 + $0x88] sm:$0xff]
    %v3867 = vld [vmem:[#allocation3 + $0x90] sm:$0xff]
    %v3868 = vld [vmem:[#allocation3 + $0x98] sm:$0xff]
    %v3869 = vld [vmem:[#allocation3 + $0xa0] sm:$0xff]
    %v3870 = vld [vmem:[#allocation3 + $0xa8] sm:$0xff]
    %v3871 = vld [vmem:[#allocation3 + $0xb0] sm:$0xff]
    %v3872 = vld [vmem:[#allocation3 + $0xb8] sm:$0xff]
    %v3873 = vld [vmem:[#allocation3 + $0xc0] sm:$0xff]
    %v3874 = vld [vmem:[#allocation3 + $0xc8] sm:$0xff]
    %v3875 = vld [vmem:[#allocation3 + $0xd0] sm:$0xff]
    %v3876 = vld [vmem:[#allocation3 + $0xd8] sm:$0xff]
    %v3877 = vld [vmem:[#allocation3 + $0xe0] sm:$0xff]
    %v3878 = vld [vmem:[#allocation3 + $0xe8] sm:$0xff]
    %v3879 = vld [vmem:[#allocation3 + $0xf0] sm:$0xff]
    %v3880 = vld [vmem:[#allocation3 + $0xf8] sm:$0xff]
    %v3881 = vld [vmem:[#allocation3 + $0x100] sm:$0xff]
    %v3882 = vld [vmem:[#allocation3 + $0x108] sm:$0xff]
    %v3883 = vld [vmem:[#allocation3 + $0x110] sm:$0xff]
    %v3884 = vld [vmem:[#allocation3 + $0x118] sm:$0xff]
    %v3885 = vld [vmem:[#allocation3 + $0x120] sm:$0xff]
    %v3886 = vld [vmem:[#allocation3 + $0x128] sm:$0xff]
    %v3887 = vld [vmem:[#allocation3 + $0x130] sm:$0xff]
    %v3888 = vld [vmem:[#allocation3 + $0x138] sm:$0xff]
    %v3889 = vld [vmem:[#allocation3 + $0x140] sm:$0xff]
    %v3890 = vld [vmem:[#allocation3 + $0x148] sm:$0xff]
    %v3891 = vld [vmem:[#allocation3 + $0x150] sm:$0xff]
    %v3892 = vld [vmem:[#allocation3 + $0x158] sm:$0xff]
    %v3893 = vld [vmem:[#allocation3 + $0x160] sm:$0xff]
    %v3894 = vld [vmem:[#allocation3 + $0x168] sm:$0xff]
    %v3895 = vld [vmem:[#allocation3 + $0x170] sm:$0xff]
    %v3896 = vld [vmem:[#allocation3 + $0x178] sm:$0xff]
    %v3897 = vld [vmem:[#allocation3 + $0x180] sm:$0xff]
    %v3898 = vld [vmem:[#allocation3 + $0x188] sm:$0xff]
    %v3899 = vld [vmem:[#allocation3 + $0x190] sm:$0xff]
    %v3900 = vld [vmem:[#allocation3 + $0x198] sm:$0xff]
    %v3901 = vld [vmem:[#allocation3 + $0x1a0] sm:$0xff]
    %v3902 = vld [vmem:[#allocation3 + $0x1a8] sm:$0xff]
    %v3903 = vld [vmem:[#allocation3 + $0x1b0] sm:$0xff]
    %v3904 = vld [vmem:[#allocation3 + $0x1b8] sm:$0xff]
    %v3905 = vld [vmem:[#allocation3 + $0x1c0] sm:$0xff]
    %v3906 = vld [vmem:[#allocation3 + $0x1c8] sm:$0xff]
    %v3907 = vld [vmem:[#allocation3 + $0x1d0] sm:$0xff]
    %v3908 = vld [vmem:[#allocation3 + $0x1d8] sm:$0xff]
    %v3909 = vld [vmem:[#allocation3 + $0x1e0] sm:$0xff]
    %v3910 = vld [vmem:[#allocation3 + $0x1e8] sm:$0xff]
    %v3911 = vld [vmem:[#allocation3 + $0x1f0] sm:$0xff]
    %v3912 = vld [vmem:[#allocation3 + $0x1f8] sm:$0xff]
    %v3913 = vld [vmem:[#allocation3 + $0x200] sm:$0xff]
    %v3914 = vld [vmem:[#allocation3 + $0x208] sm:$0xff]
    %v3915 = vld [vmem:[#allocation3 + $0x210] sm:$0xff]
    %v3916 = vld [vmem:[#allocation3 + $0x218] sm:$0xff]
    %v3917 = vld [vmem:[#allocation3 + $0x220] sm:$0xff]
    %v3918 = vld [vmem:[#allocation3 + $0x228] sm:$0xff]
    %v3919 = vld [vmem:[#allocation3 + $0x230] sm:$0xff]
    %v3920 = vld [vmem:[#allocation3 + $0x238] sm:$0xff]
    %v3921 = vld [vmem:[#allocation3 + $0x240] sm:$0xff]
    %v3922 = vld [vmem:[#allocation3 + $0x248] sm:$0xff]
    %v3923 = vld [vmem:[#allocation3 + $0x250] sm:$0xff]
    %v3924 = vld [vmem:[#allocation3 + $0x258] sm:$0xff]
    %v3925 = vld [vmem:[#allocation3 + $0x260] sm:$0xff]
    %v3926 = vld [vmem:[#allocation3 + $0x268] sm:$0xff]
    %v3927 = vld [vmem:[#allocation3 + $0x270] sm:$0xff]
    %v3928 = vld [vmem:[#allocation3 + $0x278] sm:$0xff]
    %v3929 = vld [vmem:[#allocation3 + $0x280] sm:$0xff]
    %v3930 = vld [vmem:[#allocation3 + $0x288] sm:$0xff]
    %v3931 = vld [vmem:[#allocation3 + $0x290] sm:$0xff]
    %v3932 = vld [vmem:[#allocation3 + $0x298] sm:$0xff]
    %v3933 = vld [vmem:[#allocation3 + $0x2a0] sm:$0xff]
    %v3934 = vld [vmem:[#allocation3 + $0x2a8] sm:$0xff]
    %v3935 = vld [vmem:[#allocation3 + $0x2b0] sm:$0xff]
    %v3936 = vld [vmem:[#allocation3 + $0x2b8] sm:$0xff]
    %v3937 = vld [vmem:[#allocation3 + $0x2c0] sm:$0xff]
    %v3938 = vld [vmem:[#allocation3 + $0x2c8] sm:$0xff]
    %v3939 = vld [vmem:[#allocation3 + $0x2d0] sm:$0xff]
    %v3940 = vld [vmem:[#allocation3 + $0x2d8] sm:$0xff]
    %v3941 = vld [vmem:[#allocation3 + $0x2e0] sm:$0xff]
    %v3942 = vld [vmem:[#allocation3 + $0x2e8] sm:$0xff]
    %v3943 = vld [vmem:[#allocation3 + $0x2f0] sm:$0xff]
    %v3944 = vld [vmem:[#allocation3 + $0x2f8] sm:$0xff]
    %v3945 = vld [vmem:[#allocation3 + $0x300] sm:$0xff]
    %v3946 = vld [vmem:[#allocation3 + $0x308] sm:$0xff]
    %v3947 = vld [vmem:[#allocation3 + $0x310] sm:$0xff]
    %v3948 = vld [vmem:[#allocation3 + $0x318] sm:$0xff]
    %v3949 = vld [vmem:[#allocation3 + $0x320] sm:$0xff]
    %v3950 = vld [vmem:[#allocation3 + $0x328] sm:$0xff]
    %v3951 = vld [vmem:[#allocation3 + $0x330] sm:$0xff]
    %v3952 = vld [vmem:[#allocation3 + $0x338] sm:$0xff]
    %v3953 = vld [vmem:[#allocation3 + $0x340] sm:$0xff]
    %v3954 = vld [vmem:[#allocation3 + $0x348] sm:$0xff]
    %v3955 = vld [vmem:[#allocation3 + $0x350] sm:$0xff]
    %v3956 = vld [vmem:[#allocation3 + $0x358] sm:$0xff]
    %v3957 = vld [vmem:[#allocation3 + $0x360] sm:$0xff]
    %v3958 = vld [vmem:[#allocation3 + $0x368] sm:$0xff]
    %v3959 = vld [vmem:[#allocation3 + $0x370] sm:$0xff]
    %v3960 = vld [vmem:[#allocation3 + $0x378] sm:$0xff]
    %v3961 = vld [vmem:[#allocation3 + $0x380] sm:$0xff]
    %v3962 = vld [vmem:[#allocation3 + $0x388] sm:$0xff]
    %v3963 = vld [vmem:[#allocation3 + $0x390] sm:$0xff]
    %v3964 = vld [vmem:[#allocation3 + $0x398] sm:$0xff]
    %v3965 = vld [vmem:[#allocation3 + $0x3a0] sm:$0xff]
    %v3966 = vld [vmem:[#allocation3 + $0x3a8] sm:$0xff]
    %v3967 = vld [vmem:[#allocation3 + $0x3b0] sm:$0xff]
    %v3968 = vld [vmem:[#allocation3 + $0x3b8] sm:$0xff]
    %v3969 = vld [vmem:[#allocation3 + $0x3c0] sm:$0xff]
    %v3970 = vld [vmem:[#allocation3 + $0x3c8] sm:$0xff]
    %v3971 = vld [vmem:[#allocation3 + $0x3d0] sm:$0xff]
    %v3972 = vld [vmem:[#allocation3 + $0x3d8] sm:$0xff]
    %v3973 = vld [vmem:[#allocation3 + $0x3e0] sm:$0xff]
    %v3974 = vld [vmem:[#allocation3 + $0x3e8] sm:$0xff]
    %v3975 = vld [vmem:[#allocation3 + $0x3f0] sm:$0xff]
    %v3976 = vld [vmem:[#allocation3 + $0x3f8] sm:$0xff]
    %v3977 = vld [vmem:[%s10] sm:$0xf]
    %v3979 = vperm.slane %v3977, 0
    %v3980 = vperm.slane %v3977, 1
    %v3981 = vperm.slane %v3977, 2
    %v3982 = vperm.slane %v3977, 3
    %v4115 = vunpack.c.l.b16 %v3849
    %v4116 = vunpack.c.h.b16 %v3849
    %v4117 = vunpack.c.l.b16 %v3850
    %v4118 = vunpack.c.h.b16 %v3850
    %v4119 = vunpack.c.l.b16 %v3851
    %v4120 = vunpack.c.h.b16 %v3851
    %v4121 = vunpack.c.l.b16 %v3852
    %v4122 = vunpack.c.h.b16 %v3852
    %v4123 = vunpack.c.l.b16 %v3853
    %v4124 = vunpack.c.h.b16 %v3853
    %v4125 = vunpack.c.l.b16 %v3854
    %v4126 = vunpack.c.h.b16 %v3854
    %v4127 = vunpack.c.l.b16 %v3855
    %v4128 = vunpack.c.h.b16 %v3855
    %v4129 = vunpack.c.l.b16 %v3856
    %v4130 = vunpack.c.h.b16 %v3856
    %v4131 = vunpack.c.l.b16 %v3857
    %v4132 = vunpack.c.h.b16 %v3857
    %v4133 = vunpack.c.l.b16 %v3858
    %v4134 = vunpack.c.h.b16 %v3858
    %v4135 = vunpack.c.l.b16 %v3859
    %v4136 = vunpack.c.h.b16 %v3859
    %v4137 = vunpack.c.l.b16 %v3860
    %v4138 = vunpack.c.h.b16 %v3860
    %v4139 = vunpack.c.l.b16 %v3861
    %v4140 = vunpack.c.h.b16 %v3861
    %v4141 = vunpack.c.l.b16 %v3862
    %v4142 = vunpack.c.h.b16 %v3862
    %v4143 = vunpack.c.l.b16 %v3863
    %v4144 = vunpack.c.h.b16 %v3863
    %v4145 = vunpack.c.l.b16 %v3864
    %v4146 = vunpack.c.h.b16 %v3864
    %v4147 = vunpack.c.l.b16 %v3865
    %v4148 = vunpack.c.h.b16 %v3865
    %v4149 = vunpack.c.l.b16 %v3866
    %v4150 = vunpack.c.h.b16 %v3866
    %v4151 = vunpack.c.l.b16 %v3867
    %v4152 = vunpack.c.h.b16 %v3867
    %v4153 = vunpack.c.l.b16 %v3868
    %v4154 = vunpack.c.h.b16 %v3868
    %v4155 = vunpack.c.l.b16 %v3869
    %v4156 = vunpack.c.h.b16 %v3869
    %v4157 = vunpack.c.l.b16 %v3870
    %v4158 = vunpack.c.h.b16 %v3870
    %v4159 = vunpack.c.l.b16 %v3871
    %v4160 = vunpack.c.h.b16 %v3871
    %v4161 = vunpack.c.l.b16 %v3872
    %v4162 = vunpack.c.h.b16 %v3872
    %v4163 = vunpack.c.l.b16 %v3873
    %v4164 = vunpack.c.h.b16 %v3873
    %v4165 = vunpack.c.l.b16 %v3874
    %v4166 = vunpack.c.h.b16 %v3874
    %v4167 = vunpack.c.l.b16 %v3875
    %v4168 = vunpack.c.h.b16 %v3875
    %v4169 = vunpack.c.l.b16 %v3876
    %v4170 = vunpack.c.h.b16 %v3876
    %v4171 = vunpack.c.l.b16 %v3877
    %v4172 = vunpack.c.h.b16 %v3877
    %v4173 = vunpack.c.l.b16 %v3878
    %v4174 = vunpack.c.h.b16 %v3878
    %v4175 = vunpack.c.l.b16 %v3879
    %v4176 = vunpack.c.h.b16 %v3879
    %v4177 = vunpack.c.l.b16 %v3880
    %v4178 = vunpack.c.h.b16 %v3880
    %v4179 = vunpack.c.l.b16 %v3881
    %v4180 = vunpack.c.h.b16 %v3881
    %v4181 = vunpack.c.l.b16 %v3882
    %v4182 = vunpack.c.h.b16 %v3882
    %v4183 = vunpack.c.l.b16 %v3883
    %v4184 = vunpack.c.h.b16 %v3883
    %v4185 = vunpack.c.l.b16 %v3884
    %v4186 = vunpack.c.h.b16 %v3884
    %v4187 = vunpack.c.l.b16 %v3885
    %v4188 = vunpack.c.h.b16 %v3885
    %v4189 = vunpack.c.l.b16 %v3886
    %v4190 = vunpack.c.h.b16 %v3886
    %v4191 = vunpack.c.l.b16 %v3887
    %v4192 = vunpack.c.h.b16 %v3887
    %v4193 = vunpack.c.l.b16 %v3888
    %v4194 = vunpack.c.h.b16 %v3888
    %v4195 = vunpack.c.l.b16 %v3889
    %v4196 = vunpack.c.h.b16 %v3889
    %v4197 = vunpack.c.l.b16 %v3890
    %v4198 = vunpack.c.h.b16 %v3890
    %v4199 = vunpack.c.l.b16 %v3891
    %v4200 = vunpack.c.h.b16 %v3891
    %v4201 = vunpack.c.l.b16 %v3892
    %v4202 = vunpack.c.h.b16 %v3892
    %v4203 = vunpack.c.l.b16 %v3893
    %v4204 = vunpack.c.h.b16 %v3893
    %v4205 = vunpack.c.l.b16 %v3894
    %v4206 = vunpack.c.h.b16 %v3894
    %v4207 = vunpack.c.l.b16 %v3895
    %v4208 = vunpack.c.h.b16 %v3895
    %v4209 = vunpack.c.l.b16 %v3896
    %v4210 = vunpack.c.h.b16 %v3896
    %v4211 = vunpack.c.l.b16 %v3897
    %v4212 = vunpack.c.h.b16 %v3897
    %v4213 = vunpack.c.l.b16 %v3898
    %v4214 = vunpack.c.h.b16 %v3898
    %v4215 = vunpack.c.l.b16 %v3899
    %v4216 = vunpack.c.h.b16 %v3899
    %v4217 = vunpack.c.l.b16 %v3900
    %v4218 = vunpack.c.h.b16 %v3900
    %v4219 = vunpack.c.l.b16 %v3901
    %v4220 = vunpack.c.h.b16 %v3901
    %v4221 = vunpack.c.l.b16 %v3902
    %v4222 = vunpack.c.h.b16 %v3902
    %v4223 = vunpack.c.l.b16 %v3903
    %v4224 = vunpack.c.h.b16 %v3903
    %v4225 = vunpack.c.l.b16 %v3904
    %v4226 = vunpack.c.h.b16 %v3904
    %v4227 = vunpack.c.l.b16 %v3905
    %v4228 = vunpack.c.h.b16 %v3905
    %v4229 = vunpack.c.l.b16 %v3906
    %v4230 = vunpack.c.h.b16 %v3906
    %v4231 = vunpack.c.l.b16 %v3907
    %v4232 = vunpack.c.h.b16 %v3907
    %v4233 = vunpack.c.l.b16 %v3908
    %v4234 = vunpack.c.h.b16 %v3908
    %v4235 = vunpack.c.l.b16 %v3909
    %v4236 = vunpack.c.h.b16 %v3909
    %v4237 = vunpack.c.l.b16 %v3910
    %v4238 = vunpack.c.h.b16 %v3910
    %v4239 = vunpack.c.l.b16 %v3911
    %v4240 = vunpack.c.h.b16 %v3911
    %v4241 = vunpack.c.l.b16 %v3912
    %v4242 = vunpack.c.h.b16 %v3912
    %v4243 = vunpack.c.l.b16 %v3913
    %v4244 = vunpack.c.h.b16 %v3913
    %v4245 = vunpack.c.l.b16 %v3914
    %v4246 = vunpack.c.h.b16 %v3914
    %v4247 = vunpack.c.l.b16 %v3915
    %v4248 = vunpack.c.h.b16 %v3915
    %v4249 = vunpack.c.l.b16 %v3916
    %v4250 = vunpack.c.h.b16 %v3916
    %v4251 = vunpack.c.l.b16 %v3917
    %v4252 = vunpack.c.h.b16 %v3917
    %v4253 = vunpack.c.l.b16 %v3918
    %v4254 = vunpack.c.h.b16 %v3918
    %v4255 = vunpack.c.l.b16 %v3919
    %v4256 = vunpack.c.h.b16 %v3919
    %v4257 = vunpack.c.l.b16 %v3920
    %v4258 = vunpack.c.h.b16 %v3920
    %v4259 = vunpack.c.l.b16 %v3921
    %v4260 = vunpack.c.h.b16 %v3921
    %v4261 = vunpack.c.l.b16 %v3922
    %v4262 = vunpack.c.h.b16 %v3922
    %v4263 = vunpack.c.l.b16 %v3923
    %v4264 = vunpack.c.h.b16 %v3923
    %v4265 = vunpack.c.l.b16 %v3924
    %v4266 = vunpack.c.h.b16 %v3924
    %v4267 = vunpack.c.l.b16 %v3925
    %v4268 = vunpack.c.h.b16 %v3925
    %v4269 = vunpack.c.l.b16 %v3926
    %v4270 = vunpack.c.h.b16 %v3926
    %v4271 = vunpack.c.l.b16 %v3927
    %v4272 = vunpack.c.h.b16 %v3927
    %v4273 = vunpack.c.l.b16 %v3928
    %v4274 = vunpack.c.h.b16 %v3928
    %v4275 = vunpack.c.l.b16 %v3929
    %v4276 = vunpack.c.h.b16 %v3929
    %v4277 = vunpack.c.l.b16 %v3930
    %v4278 = vunpack.c.h.b16 %v3930
    %v4279 = vunpack.c.l.b16 %v3931
    %v4280 = vunpack.c.h.b16 %v3931
    %v4281 = vunpack.c.l.b16 %v3932
    %v4282 = vunpack.c.h.b16 %v3932
    %v4283 = vunpack.c.l.b16 %v3933
    %v4284 = vunpack.c.h.b16 %v3933
    %v4285 = vunpack.c.l.b16 %v3934
    %v4286 = vunpack.c.h.b16 %v3934
    %v4287 = vunpack.c.l.b16 %v3935
    %v4288 = vunpack.c.h.b16 %v3935
    %v4289 = vunpack.c.l.b16 %v3936
    %v4290 = vunpack.c.h.b16 %v3936
    %v4291 = vunpack.c.l.b16 %v3937
    %v4292 = vunpack.c.h.b16 %v3937
    %v4293 = vunpack.c.l.b16 %v3938
    %v4294 = vunpack.c.h.b16 %v3938
    %v4295 = vunpack.c.l.b16 %v3939
    %v4296 = vunpack.c.h.b16 %v3939
    %v4297 = vunpack.c.l.b16 %v3940
    %v4298 = vunpack.c.h.b16 %v3940
    %v4299 = vunpack.c.l.b16 %v3941
    %v4300 = vunpack.c.h.b16 %v3941
    %v4301 = vunpack.c.l.b16 %v3942
    %v4302 = vunpack.c.h.b16 %v3942
    %v4303 = vunpack.c.l.b16 %v3943
    %v4304 = vunpack.c.h.b16 %v3943
    %v4305 = vunpack.c.l.b16 %v3944
    %v4306 = vunpack.c.h.b16 %v3944
    %v4307 = vunpack.c.l.b16 %v3945
    %v4308 = vunpack.c.h.b16 %v3945
    %v4309 = vunpack.c.l.b16 %v3946
    %v4310 = vunpack.c.h.b16 %v3946
    %v4311 = vunpack.c.l.b16 %v3947
    %v4312 = vunpack.c.h.b16 %v3947
    %v4313 = vunpack.c.l.b16 %v3948
    %v4314 = vunpack.c.h.b16 %v3948
    %v4315 = vunpack.c.l.b16 %v3949
    %v4316 = vunpack.c.h.b16 %v3949
    %v4317 = vunpack.c.l.b16 %v3950
    %v4318 = vunpack.c.h.b16 %v3950
    %v4319 = vunpack.c.l.b16 %v3951
    %v4320 = vunpack.c.h.b16 %v3951
    %v4321 = vunpack.c.l.b16 %v3952
    %v4322 = vunpack.c.h.b16 %v3952
    %v4323 = vunpack.c.l.b16 %v3953
    %v4324 = vunpack.c.h.b16 %v3953
    %v4325 = vunpack.c.l.b16 %v3954
    %v4326 = vunpack.c.h.b16 %v3954
    %v4327 = vunpack.c.l.b16 %v3955
    %v4328 = vunpack.c.h.b16 %v3955
    %v4329 = vunpack.c.l.b16 %v3956
    %v4330 = vunpack.c.h.b16 %v3956
    %v4331 = vunpack.c.l.b16 %v3957
    %v4332 = vunpack.c.h.b16 %v3957
    %v4333 = vunpack.c.l.b16 %v3958
    %v4334 = vunpack.c.h.b16 %v3958
    %v4335 = vunpack.c.l.b16 %v3959
    %v4336 = vunpack.c.h.b16 %v3959
    %v4337 = vunpack.c.l.b16 %v3960
    %v4338 = vunpack.c.h.b16 %v3960
    %v4339 = vunpack.c.l.b16 %v3961
    %v4340 = vunpack.c.h.b16 %v3961
    %v4341 = vunpack.c.l.b16 %v3962
    %v4342 = vunpack.c.h.b16 %v3962
    %v4343 = vunpack.c.l.b16 %v3963
    %v4344 = vunpack.c.h.b16 %v3963
    %v4345 = vunpack.c.l.b16 %v3964
    %v4346 = vunpack.c.h.b16 %v3964
    %v4347 = vunpack.c.l.b16 %v3965
    %v4348 = vunpack.c.h.b16 %v3965
    %v4349 = vunpack.c.l.b16 %v3966
    %v4350 = vunpack.c.h.b16 %v3966
    %v4351 = vunpack.c.l.b16 %v3967
    %v4352 = vunpack.c.h.b16 %v3967
    %v4353 = vunpack.c.l.b16 %v3968
    %v4354 = vunpack.c.h.b16 %v3968
    %v4355 = vunpack.c.l.b16 %v3969
    %v4356 = vunpack.c.h.b16 %v3969
    %v4357 = vunpack.c.l.b16 %v3970
    %v4358 = vunpack.c.h.b16 %v3970
    %v4359 = vunpack.c.l.b16 %v3971
    %v4360 = vunpack.c.h.b16 %v3971
    %v4361 = vunpack.c.l.b16 %v3972
    %v4362 = vunpack.c.h.b16 %v3972
    %v4363 = vunpack.c.l.b16 %v3973
    %v4364 = vunpack.c.h.b16 %v3973
    %v4365 = vunpack.c.l.b16 %v3974
    %v4366 = vunpack.c.h.b16 %v3974
    %v4367 = vunpack.c.l.b16 %v3975
    %v4368 = vunpack.c.h.b16 %v3975
    %v4369 = vunpack.c.l.b16 %v3976
    %v4370 = vunpack.c.h.b16 %v3976
    %v4371 = vpack.c.b16 %v4119, %v4115
    %v4372 = vpack.c.b16 %v4120, %v4116
    %v4373 = vpack.c.b16 %v4121, %v4117
    %v4374 = vpack.c.b16 %v4122, %v4118
    %v4375 = vpack.c.b16 %v4127, %v4123
    %v4376 = vpack.c.b16 %v4128, %v4124
    %v4377 = vpack.c.b16 %v4129, %v4125
    %v4378 = vpack.c.b16 %v4130, %v4126
    %v4379 = vpack.c.b16 %v4135, %v4131
    %v4380 = vpack.c.b16 %v4136, %v4132
    %v4381 = vpack.c.b16 %v4137, %v4133
    %v4382 = vpack.c.b16 %v4138, %v4134
    %v4383 = vpack.c.b16 %v4143, %v4139
    %v4384 = vpack.c.b16 %v4144, %v4140
    %v4385 = vpack.c.b16 %v4145, %v4141
    %v4386 = vpack.c.b16 %v4146, %v4142
    %v4387 = vpack.c.b16 %v4151, %v4147
    %v4388 = vpack.c.b16 %v4152, %v4148
    %v4389 = vpack.c.b16 %v4153, %v4149
    %v4390 = vpack.c.b16 %v4154, %v4150
    %v4391 = vpack.c.b16 %v4159, %v4155
    %v4392 = vpack.c.b16 %v4160, %v4156
    %v4393 = vpack.c.b16 %v4161, %v4157
    %v4394 = vpack.c.b16 %v4162, %v4158
    %v4395 = vpack.c.b16 %v4167, %v4163
    %v4396 = vpack.c.b16 %v4168, %v4164
    %v4397 = vpack.c.b16 %v4169, %v4165
    %v4398 = vpack.c.b16 %v4170, %v4166
    %v4399 = vpack.c.b16 %v4175, %v4171
    %v4400 = vpack.c.b16 %v4176, %v4172
    %v4401 = vpack.c.b16 %v4177, %v4173
    %v4402 = vpack.c.b16 %v4178, %v4174
    %v4403 = vpack.c.b16 %v4183, %v4179
    %v4404 = vpack.c.b16 %v4184, %v4180
    %v4405 = vpack.c.b16 %v4185, %v4181
    %v4406 = vpack.c.b16 %v4186, %v4182
    %v4407 = vpack.c.b16 %v4191, %v4187
    %v4408 = vpack.c.b16 %v4192, %v4188
    %v4409 = vpack.c.b16 %v4193, %v4189
    %v4410 = vpack.c.b16 %v4194, %v4190
    %v4411 = vpack.c.b16 %v4199, %v4195
    %v4412 = vpack.c.b16 %v4200, %v4196
    %v4413 = vpack.c.b16 %v4201, %v4197
    %v4414 = vpack.c.b16 %v4202, %v4198
    %v4415 = vpack.c.b16 %v4207, %v4203
    %v4416 = vpack.c.b16 %v4208, %v4204
    %v4417 = vpack.c.b16 %v4209, %v4205
    %v4418 = vpack.c.b16 %v4210, %v4206
    %v4419 = vpack.c.b16 %v4215, %v4211
    %v4420 = vpack.c.b16 %v4216, %v4212
    %v4421 = vpack.c.b16 %v4217, %v4213
    %v4422 = vpack.c.b16 %v4218, %v4214
    %v4423 = vpack.c.b16 %v4223, %v4219
    %v4424 = vpack.c.b16 %v4224, %v4220
    %v4425 = vpack.c.b16 %v4225, %v4221
    %v4426 = vpack.c.b16 %v4226, %v4222
    %v4427 = vpack.c.b16 %v4231, %v4227
    %v4428 = vpack.c.b16 %v4232, %v4228
    %v4429 = vpack.c.b16 %v4233, %v4229
    %v4430 = vpack.c.b16 %v4234, %v4230
    %v4431 = vpack.c.b16 %v4239, %v4235
    %v4432 = vpack.c.b16 %v4240, %v4236
    %v4433 = vpack.c.b16 %v4241, %v4237
    %v4434 = vpack.c.b16 %v4242, %v4238
    %v4435 = vpack.c.b16 %v4247, %v4243
    %v4436 = vpack.c.b16 %v4248, %v4244
    %v4437 = vpack.c.b16 %v4249, %v4245
    %v4438 = vpack.c.b16 %v4250, %v4246
    %v4439 = vpack.c.b16 %v4255, %v4251
    %v4440 = vpack.c.b16 %v4256, %v4252
    %v4441 = vpack.c.b16 %v4257, %v4253
    %v4442 = vpack.c.b16 %v4258, %v4254
    %v4443 = vpack.c.b16 %v4263, %v4259
    %v4444 = vpack.c.b16 %v4264, %v4260
    %v4445 = vpack.c.b16 %v4265, %v4261
    %v4446 = vpack.c.b16 %v4266, %v4262
    %v4447 = vpack.c.b16 %v4271, %v4267
    %v4448 = vpack.c.b16 %v4272, %v4268
    %v4449 = vpack.c.b16 %v4273, %v4269
    %v4450 = vpack.c.b16 %v4274, %v4270
    %v4451 = vpack.c.b16 %v4279, %v4275
    %v4452 = vpack.c.b16 %v4280, %v4276
    %v4453 = vpack.c.b16 %v4281, %v4277
    %v4454 = vpack.c.b16 %v4282, %v4278
    %v4455 = vpack.c.b16 %v4287, %v4283
    %v4456 = vpack.c.b16 %v4288, %v4284
    %v4457 = vpack.c.b16 %v4289, %v4285
    %v4458 = vpack.c.b16 %v4290, %v4286
    %v4459 = vpack.c.b16 %v4295, %v4291
    %v4460 = vpack.c.b16 %v4296, %v4292
    %v4461 = vpack.c.b16 %v4297, %v4293
    %v4462 = vpack.c.b16 %v4298, %v4294
    %v4463 = vpack.c.b16 %v4303, %v4299
    %v4464 = vpack.c.b16 %v4304, %v4300
    %v4465 = vpack.c.b16 %v4305, %v4301
    %v4466 = vpack.c.b16 %v4306, %v4302
    %v4467 = vpack.c.b16 %v4311, %v4307
    %v4468 = vpack.c.b16 %v4312, %v4308
    %v4469 = vpack.c.b16 %v4313, %v4309
    %v4470 = vpack.c.b16 %v4314, %v4310
    %v4471 = vpack.c.b16 %v4319, %v4315
    %v4472 = vpack.c.b16 %v4320, %v4316
    %v4473 = vpack.c.b16 %v4321, %v4317
    %v4474 = vpack.c.b16 %v4322, %v4318
    %v4475 = vpack.c.b16 %v4327, %v4323
    %v4476 = vpack.c.b16 %v4328, %v4324
    %v4477 = vpack.c.b16 %v4329, %v4325
    %v4478 = vpack.c.b16 %v4330, %v4326
    %v4479 = vpack.c.b16 %v4335, %v4331
    %v4480 = vpack.c.b16 %v4336, %v4332
    %v4481 = vpack.c.b16 %v4337, %v4333
    %v4482 = vpack.c.b16 %v4338, %v4334
    %v4483 = vpack.c.b16 %v4343, %v4339
    %v4484 = vpack.c.b16 %v4344, %v4340
    %v4485 = vpack.c.b16 %v4345, %v4341
    %v4486 = vpack.c.b16 %v4346, %v4342
    %v4487 = vpack.c.b16 %v4351, %v4347
    %v4488 = vpack.c.b16 %v4352, %v4348
    %v4489 = vpack.c.b16 %v4353, %v4349
    %v4490 = vpack.c.b16 %v4354, %v4350
    %v4491 = vpack.c.b16 %v4359, %v4355
    %v4492 = vpack.c.b16 %v4360, %v4356
    %v4493 = vpack.c.b16 %v4361, %v4357
    %v4494 = vpack.c.b16 %v4362, %v4358
    %v4495 = vpack.c.b16 %v4367, %v4363
    %v4496 = vpack.c.b16 %v4368, %v4364
    %v4497 = vpack.c.b16 %v4369, %v4365
    %v4498 = vpack.c.b16 %v4370, %v4366
    %4627 = vmatpush.bf16.msra.mxu0 %v4399
    %4628 = vmatpush.bf16.msra.mxu0 %v4395
    %4629 = vmatpush.bf16.msra.mxu0 %v4391
    %4630 = vmatpush.bf16.msra.mxu0 %v4387
    %4631 = vmatpush.bf16.msra.mxu0 %v4383
    %4632 = vmatpush.bf16.msra.mxu0 %v4379
    %4633 = vmatpush.bf16.msra.mxu0 %v4375
    %4634 = vmatpush.bf16.msra.mxu0 %v4371
    %4635 = vmatmul.bf16.gmra.mxu0 %v3841
    %v4636 = vpop.f32.mrf.mxu0
    %v4637 = vadd.f32 %v3979, %v4636
    %v4638 = vpop.f32.mrf.mxu0
    %v4639 = vadd.f32 %v3979, %v4638
    %4640 = vmatmul.bf16.gmra.mxu0 %v3845
    %v4641 = vpop.f32.mrf.mxu0
    %v4642 = vadd.f32 %v3979, %v4641
    %v4643 = vpop.f32.mrf.mxu0
    %v4644 = vadd.f32 %v3979, %v4643
    %4645 = vdwg.mxu0
    %4646 = vmatpush.bf16.msra.mxu0 %v4431
    %4647 = vmatpush.bf16.msra.mxu0 %v4427
    %4648 = vmatpush.bf16.msra.mxu0 %v4423
    %4649 = vmatpush.bf16.msra.mxu0 %v4419
    %4650 = vmatpush.bf16.msra.mxu0 %v4415
    %4651 = vmatpush.bf16.msra.mxu0 %v4411
    %4652 = vmatpush.bf16.msra.mxu0 %v4407
    %4653 = vmatpush.bf16.msra.mxu0 %v4403
    %4654 = vmatmul.bf16.gmra.mxu0 %v3842
    %v4655 = vpop.f32.mrf.mxu0
    %v4656 = vadd.f32 %v4637, %v4655
    %v4657 = vpop.f32.mrf.mxu0
    %v4658 = vadd.f32 %v4639, %v4657
    %4659 = vmatmul.bf16.gmra.mxu0 %v3846
    %v4660 = vpop.f32.mrf.mxu0
    %v4661 = vadd.f32 %v4642, %v4660
    %v4662 = vpop.f32.mrf.mxu0
    %v4663 = vadd.f32 %v4644, %v4662
    %4664 = vdwg.mxu0
    %4665 = vmatpush.bf16.msra.mxu0 %v4463
    %4666 = vmatpush.bf16.msra.mxu0 %v4459
    %4667 = vmatpush.bf16.msra.mxu0 %v4455
    %4668 = vmatpush.bf16.msra.mxu0 %v4451
    %4669 = vmatpush.bf16.msra.mxu0 %v4447
    %4670 = vmatpush.bf16.msra.mxu0 %v4443
    %4671 = vmatpush.bf16.msra.mxu0 %v4439
    %4672 = vmatpush.bf16.msra.mxu0 %v4435
    %4673 = vmatmul.bf16.gmra.mxu0 %v3843
    %v4674 = vpop.f32.mrf.mxu0
    %v4675 = vadd.f32 %v4656, %v4674
    %v4676 = vpop.f32.mrf.mxu0
    %v4677 = vadd.f32 %v4658, %v4676
    %4678 = vmatmul.bf16.gmra.mxu0 %v3847
    %v4679 = vpop.f32.mrf.mxu0
    %v4680 = vadd.f32 %v4661, %v4679
    %v4681 = vpop.f32.mrf.mxu0
    %v4682 = vadd.f32 %v4663, %v4681
    %4683 = vdwg.mxu0
    %4684 = vmatpush.bf16.msra.mxu0 %v4495
    %4685 = vmatpush.bf16.msra.mxu0 %v4491
    %4686 = vmatpush.bf16.msra.mxu0 %v4487
    %4687 = vmatpush.bf16.msra.mxu0 %v4483
    %4688 = vmatpush.bf16.msra.mxu0 %v4479
    %4689 = vmatpush.bf16.msra.mxu0 %v4475
    %4690 = vmatpush.bf16.msra.mxu0 %v4471
    %4691 = vmatpush.bf16.msra.mxu0 %v4467
    %4692 = vmatmul.bf16.gmra.mxu0 %v3844
    %v4693 = vpop.f32.mrf.mxu0
    %v4694 = vadd.f32 %v4675, %v4693
    %v4695 = vpop.f32.mrf.mxu0
    %v4696 = vadd.f32 %v4677, %v4695
    %4697 = vmatmul.bf16.gmra.mxu0 %v3848
    %v4698 = vpop.f32.mrf.mxu0
    %v4699 = vadd.f32 %v4680, %v4698
    %v4700 = vpop.f32.mrf.mxu0
    %v4701 = vadd.f32 %v4682, %v4700
    %4702 = vdwg.mxu0
    %4703 = vmatpush.bf16.msra.mxu0 %v4400
    %4704 = vmatpush.bf16.msra.mxu0 %v4396
    %4705 = vmatpush.bf16.msra.mxu0 %v4392
    %4706 = vmatpush.bf16.msra.mxu0 %v4388
    %4707 = vmatpush.bf16.msra.mxu0 %v4384
    %4708 = vmatpush.bf16.msra.mxu0 %v4380
    %4709 = vmatpush.bf16.msra.mxu0 %v4376
    %4710 = vmatpush.bf16.msra.mxu0 %v4372
    %4711 = vmatmul.bf16.gmra.mxu0 %v3841
    %v4712 = vpop.f32.mrf.mxu0
    %v4713 = vadd.f32 %v3980, %v4712
    %v4714 = vpop.f32.mrf.mxu0
    %v4715 = vadd.f32 %v3980, %v4714
    %4716 = vmatmul.bf16.gmra.mxu0 %v3845
    %v4717 = vpop.f32.mrf.mxu0
    %v4718 = vadd.f32 %v3980, %v4717
    %v4719 = vpop.f32.mrf.mxu0
    %v4720 = vadd.f32 %v3980, %v4719
    %4721 = vdwg.mxu0
    %4722 = vmatpush.bf16.msra.mxu0 %v4432
    %4723 = vmatpush.bf16.msra.mxu0 %v4428
    %4724 = vmatpush.bf16.msra.mxu0 %v4424
    %4725 = vmatpush.bf16.msra.mxu0 %v4420
    %4726 = vmatpush.bf16.msra.mxu0 %v4416
    %4727 = vmatpush.bf16.msra.mxu0 %v4412
    %4728 = vmatpush.bf16.msra.mxu0 %v4408
    %4729 = vmatpush.bf16.msra.mxu0 %v4404
    %4730 = vmatmul.bf16.gmra.mxu0 %v3842
    %v4731 = vpop.f32.mrf.mxu0
    %v4732 = vadd.f32 %v4713, %v4731
    %v4733 = vpop.f32.mrf.mxu0
    %v4734 = vadd.f32 %v4715, %v4733
    %4735 = vmatmul.bf16.gmra.mxu0 %v3846
    %v4736 = vpop.f32.mrf.mxu0
    %v4737 = vadd.f32 %v4718, %v4736
    %v4738 = vpop.f32.mrf.mxu0
    %v4739 = vadd.f32 %v4720, %v4738
    %4740 = vdwg.mxu0
    %4741 = vmatpush.bf16.msra.mxu0 %v4464
    %4742 = vmatpush.bf16.msra.mxu0 %v4460
    %4743 = vmatpush.bf16.msra.mxu0 %v4456
    %4744 = vmatpush.bf16.msra.mxu0 %v4452
    %4745 = vmatpush.bf16.msra.mxu0 %v4448
    %4746 = vmatpush.bf16.msra.mxu0 %v4444
    %4747 = vmatpush.bf16.msra.mxu0 %v4440
    %4748 = vmatpush.bf16.msra.mxu0 %v4436
    %4749 = vmatmul.bf16.gmra.mxu0 %v3843
    %v4750 = vpop.f32.mrf.mxu0
    %v4751 = vadd.f32 %v4732, %v4750
    %v4752 = vpop.f32.mrf.mxu0
    %v4753 = vadd.f32 %v4734, %v4752
    %4754 = vmatmul.bf16.gmra.mxu0 %v3847
    %v4755 = vpop.f32.mrf.mxu0
    %v4756 = vadd.f32 %v4737, %v4755
    %v4757 = vpop.f32.mrf.mxu0
    %v4758 = vadd.f32 %v4739, %v4757
    %4759 = vdwg.mxu0
    %4760 = vmatpush.bf16.msra.mxu0 %v4496
    %4761 = vmatpush.bf16.msra.mxu0 %v4492
    %4762 = vmatpush.bf16.msra.mxu0 %v4488
    %4763 = vmatpush.bf16.msra.mxu0 %v4484
    %4764 = vmatpush.bf16.msra.mxu0 %v4480
    %4765 = vmatpush.bf16.msra.mxu0 %v4476
    %4766 = vmatpush.bf16.msra.mxu0 %v4472
    %4767 = vmatpush.bf16.msra.mxu0 %v4468
    %4768 = vmatmul.bf16.gmra.mxu0 %v3844
    %v4769 = vpop.f32.mrf.mxu0
    %v4770 = vadd.f32 %v4751, %v4769
    %v4771 = vpop.f32.mrf.mxu0
    %v4772 = vadd.f32 %v4753, %v4771
    %4773 = vmatmul.bf16.gmra.mxu0 %v3848
    %v4774 = vpop.f32.mrf.mxu0
    %v4775 = vadd.f32 %v4756, %v4774
    %v4776 = vpop.f32.mrf.mxu0
    %v4777 = vadd.f32 %v4758, %v4776
    %4778 = vdwg.mxu0
    %4779 = vmatpush.bf16.msra.mxu0 %v4401
    %4780 = vmatpush.bf16.msra.mxu0 %v4397
    %4781 = vmatpush.bf16.msra.mxu0 %v4393
    %4782 = vmatpush.bf16.msra.mxu0 %v4389
    %4783 = vmatpush.bf16.msra.mxu0 %v4385
    %4784 = vmatpush.bf16.msra.mxu0 %v4381
    %4785 = vmatpush.bf16.msra.mxu0 %v4377
    %4786 = vmatpush.bf16.msra.mxu0 %v4373
    %4787 = vmatmul.bf16.gmra.mxu0 %v3841
    %v4788 = vpop.f32.mrf.mxu0
    %v4789 = vadd.f32 %v3981, %v4788
    %v4790 = vpop.f32.mrf.mxu0
    %v4791 = vadd.f32 %v3981, %v4790
    %4792 = vmatmul.bf16.gmra.mxu0 %v3845
    %v4793 = vpop.f32.mrf.mxu0
    %v4794 = vadd.f32 %v3981, %v4793
    %v4795 = vpop.f32.mrf.mxu0
    %v4796 = vadd.f32 %v3981, %v4795
    %4797 = vdwg.mxu0
    %4798 = vmatpush.bf16.msra.mxu0 %v4433
    %4799 = vmatpush.bf16.msra.mxu0 %v4429
    %4800 = vmatpush.bf16.msra.mxu0 %v4425
    %4801 = vmatpush.bf16.msra.mxu0 %v4421
    %4802 = vmatpush.bf16.msra.mxu0 %v4417
    %4803 = vmatpush.bf16.msra.mxu0 %v4413
    %4804 = vmatpush.bf16.msra.mxu0 %v4409
    %4805 = vmatpush.bf16.msra.mxu0 %v4405
    %4806 = vmatmul.bf16.gmra.mxu0 %v3842
    %v4807 = vpop.f32.mrf.mxu0
    %v4808 = vadd.f32 %v4789, %v4807
    %v4809 = vpop.f32.mrf.mxu0
    %v4810 = vadd.f32 %v4791, %v4809
    %4811 = vmatmul.bf16.gmra.mxu0 %v3846
    %v4812 = vpop.f32.mrf.mxu0
    %v4813 = vadd.f32 %v4794, %v4812
    %v4814 = vpop.f32.mrf.mxu0
    %v4815 = vadd.f32 %v4796, %v4814
    %4816 = vdwg.mxu0
    %4817 = vmatpush.bf16.msra.mxu0 %v4465
    %4818 = vmatpush.bf16.msra.mxu0 %v4461
    %4819 = vmatpush.bf16.msra.mxu0 %v4457
    %4820 = vmatpush.bf16.msra.mxu0 %v4453
    %4821 = vmatpush.bf16.msra.mxu0 %v4449
    %4822 = vmatpush.bf16.msra.mxu0 %v4445
    %4823 = vmatpush.bf16.msra.mxu0 %v4441
    %4824 = vmatpush.bf16.msra.mxu0 %v4437
    %4825 = vmatmul.bf16.gmra.mxu0 %v3843
    %v4826 = vpop.f32.mrf.mxu0
    %v4827 = vadd.f32 %v4808, %v4826
    %v4828 = vpop.f32.mrf.mxu0
    %v4829 = vadd.f32 %v4810, %v4828
    %4830 = vmatmul.bf16.gmra.mxu0 %v3847
    %v4831 = vpop.f32.mrf.mxu0
    %v4832 = vadd.f32 %v4813, %v4831
    %v4833 = vpop.f32.mrf.mxu0
    %v4834 = vadd.f32 %v4815, %v4833
    %4835 = vdwg.mxu0
    %4836 = vmatpush.bf16.msra.mxu0 %v4497
    %4837 = vmatpush.bf16.msra.mxu0 %v4493
    %4838 = vmatpush.bf16.msra.mxu0 %v4489
    %4839 = vmatpush.bf16.msra.mxu0 %v4485
    %4840 = vmatpush.bf16.msra.mxu0 %v4481
    %4841 = vmatpush.bf16.msra.mxu0 %v4477
    %4842 = vmatpush.bf16.msra.mxu0 %v4473
    %4843 = vmatpush.bf16.msra.mxu0 %v4469
    %4844 = vmatmul.bf16.gmra.mxu0 %v3844
    %v4845 = vpop.f32.mrf.mxu0
    %v4846 = vadd.f32 %v4827, %v4845
    %v4847 = vpop.f32.mrf.mxu0
    %v4848 = vadd.f32 %v4829, %v4847
    %4849 = vmatmul.bf16.gmra.mxu0 %v3848
    %v4850 = vpop.f32.mrf.mxu0
    %v4851 = vadd.f32 %v4832, %v4850
    %v4852 = vpop.f32.mrf.mxu0
    %v4853 = vadd.f32 %v4834, %v4852
    %4854 = vdwg.mxu0
    %4855 = vmatpush.bf16.msra.mxu0 %v4402
    %4856 = vmatpush.bf16.msra.mxu0 %v4398
    %4857 = vmatpush.bf16.msra.mxu0 %v4394
    %4858 = vmatpush.bf16.msra.mxu0 %v4390
    %4859 = vmatpush.bf16.msra.mxu0 %v4386
    %4860 = vmatpush.bf16.msra.mxu0 %v4382
    %4861 = vmatpush.bf16.msra.mxu0 %v4378
    %4862 = vmatpush.bf16.msra.mxu0 %v4374
    %4863 = vmatmul.bf16.gmra.mxu0 %v3841
    %v4864 = vpop.f32.mrf.mxu0
    %v4865 = vadd.f32 %v3982, %v4864
    %v4866 = vpop.f32.mrf.mxu0
    %v4867 = vadd.f32 %v3982, %v4866
    %4868 = vmatmul.bf16.gmra.mxu0 %v3845
    %v4869 = vpop.f32.mrf.mxu0
    %v4870 = vadd.f32 %v3982, %v4869
    %v4871 = vpop.f32.mrf.mxu0
    %v4872 = vadd.f32 %v3982, %v4871
    %4873 = vdwg.mxu0
    %4874 = vmatpush.bf16.msra.mxu0 %v4434
    %4875 = vmatpush.bf16.msra.mxu0 %v4430
    %4876 = vmatpush.bf16.msra.mxu0 %v4426
    %4877 = vmatpush.bf16.msra.mxu0 %v4422
    %4878 = vmatpush.bf16.msra.mxu0 %v4418
    %4879 = vmatpush.bf16.msra.mxu0 %v4414
    %4880 = vmatpush.bf16.msra.mxu0 %v4410
    %4881 = vmatpush.bf16.msra.mxu0 %v4406
    %4882 = vmatmul.bf16.gmra.mxu0 %v3842
    %v4883 = vpop.f32.mrf.mxu0
    %v4884 = vadd.f32 %v4865, %v4883
    %v4885 = vpop.f32.mrf.mxu0
    %v4886 = vadd.f32 %v4867, %v4885
    %4887 = vmatmul.bf16.gmra.mxu0 %v3846
    %v4888 = vpop.f32.mrf.mxu0
    %v4889 = vadd.f32 %v4870, %v4888
    %v4890 = vpop.f32.mrf.mxu0
    %v4891 = vadd.f32 %v4872, %v4890
    %4892 = vdwg.mxu0
    %4893 = vmatpush.bf16.msra.mxu0 %v4466
    %4894 = vmatpush.bf16.msra.mxu0 %v4462
    %4895 = vmatpush.bf16.msra.mxu0 %v4458
    %4896 = vmatpush.bf16.msra.mxu0 %v4454
    %4897 = vmatpush.bf16.msra.mxu0 %v4450
    %4898 = vmatpush.bf16.msra.mxu0 %v4446
    %4899 = vmatpush.bf16.msra.mxu0 %v4442
    %4900 = vmatpush.bf16.msra.mxu0 %v4438
    %4901 = vmatmul.bf16.gmra.mxu0 %v3843
    %v4902 = vpop.f32.mrf.mxu0
    %v4903 = vadd.f32 %v4884, %v4902
    %v4904 = vpop.f32.mrf.mxu0
    %v4905 = vadd.f32 %v4886, %v4904
    %4906 = vmatmul.bf16.gmra.mxu0 %v3847
    %v4907 = vpop.f32.mrf.mxu0
    %v4908 = vadd.f32 %v4889, %v4907
    %v4909 = vpop.f32.mrf.mxu0
    %v4910 = vadd.f32 %v4891, %v4909
    %4911 = vdwg.mxu0
    %4912 = vmatpush.bf16.msra.mxu0 %v4498
    %4913 = vmatpush.bf16.msra.mxu0 %v4494
    %4914 = vmatpush.bf16.msra.mxu0 %v4490
    %4915 = vmatpush.bf16.msra.mxu0 %v4486
    %4916 = vmatpush.bf16.msra.mxu0 %v4482
    %4917 = vmatpush.bf16.msra.mxu0 %v4478
    %4918 = vmatpush.bf16.msra.mxu0 %v4474
    %4919 = vmatpush.bf16.msra.mxu0 %v4470
    %4920 = vmatmul.bf16.gmra.mxu0 %v3844
    %v4921 = vpop.f32.mrf.mxu0
    %v4922 = vadd.f32 %v4903, %v4921
    %v4923 = vpop.f32.mrf.mxu0
    %v4924 = vadd.f32 %v4905, %v4923
    %4925 = vmatmul.bf16.gmra.mxu0 %v3848
    %v4926 = vpop.f32.mrf.mxu0
    %v4927 = vadd.f32 %v4908, %v4926
    %v4928 = vpop.f32.mrf.mxu0
    %v4929 = vadd.f32 %v4910, %v4928
    %4930 = vdwg.mxu0
    %vm4931 = vcmp.lt.s32.totalorder %v248, %v268
    %vm4932 = vcmp.lt.s32.totalorder %v249, %v269
    %vm4933 = vcmp.lt.s32.totalorder %v250, %v270
    %vm4934 = vcmp.lt.s32.totalorder %v251, %v271
    %v4935 = vsel %vm4931, 1.0, 0.0
    %v4936 = vsel %vm4932, 1.0, 0.0
    %v4937 = vsel %vm4933, 1.0, 0.0
    %v4938 = vsel %vm4934, 1.0, 0.0
    %v4939 = vxor.u32 %v4694, 2147483648
    %v4940 = vxor.u32 %v4770, 2147483648
    %v4941 = vxor.u32 %v4846, 2147483648
    %v4942 = vxor.u32 %v4922, 2147483648
    %v4943 = vxor.u32 %v4696, 2147483648
    %v4944 = vxor.u32 %v4772, 2147483648
    %v4945 = vxor.u32 %v4848, 2147483648
    %v4946 = vxor.u32 %v4924, 2147483648
    %v4947 = vxor.u32 %v4699, 2147483648
    %v4948 = vxor.u32 %v4775, 2147483648
    %v4949 = vxor.u32 %v4851, 2147483648
    %v4950 = vxor.u32 %v4927, 2147483648
    %v4951 = vxor.u32 %v4701, 2147483648
    %v4952 = vxor.u32 %v4777, 2147483648
    %v4953 = vxor.u32 %v4853, 2147483648
    %v4954 = vxor.u32 %v4929, 2147483648
    %v4955 = vmul.f32 %v4939, 1.442695
    %v4956 = vpow.pop %v4955
    %v4957 = vmul.f32 %v4940, 1.442695
    %v4958 = vpow.pop %v4957
    %v4959 = vmul.f32 %v4941, 1.442695
    %v4960 = vpow.pop %v4959
    %v4961 = vmul.f32 %v4942, 1.442695
    %v4962 = vpow.pop %v4961
    %v4963 = vmul.f32 %v4943, 1.442695
    %v4964 = vpow.pop %v4963
    %v4965 = vmul.f32 %v4944, 1.442695
    %v4966 = vpow.pop %v4965
    %v4967 = vmul.f32 %v4945, 1.442695
    %v4968 = vpow.pop %v4967
    %v4969 = vmul.f32 %v4946, 1.442695
    %v4970 = vpow.pop %v4969
    %v4971 = vmul.f32 %v4947, 1.442695
    %v4972 = vpow.pop %v4971
    %v4973 = vmul.f32 %v4948, 1.442695
    %v4974 = vpow.pop %v4973
    %v4975 = vmul.f32 %v4949, 1.442695
    %v4976 = vpow.pop %v4975
    %v4977 = vmul.f32 %v4950, 1.442695
    %v4978 = vpow.pop %v4977
    %v4979 = vmul.f32 %v4951, 1.442695
    %v4980 = vpow.pop %v4979
    %v4981 = vmul.f32 %v4952, 1.442695
    %v4982 = vpow.pop %v4981
    %v4983 = vmul.f32 %v4953, 1.442695
    %v4984 = vpow.pop %v4983
    %v4985 = vmul.f32 %v4954, 1.442695
    %v4986 = vpow.pop %v4985
    %v4987 = vadd.f32 %v4956, 1.0
    %v4988 = vadd.f32 %v4958, 1.0
    %v4989 = vadd.f32 %v4960, 1.0
    %v4990 = vadd.f32 %v4962, 1.0
    %v4991 = vadd.f32 %v4964, 1.0
    %v4992 = vadd.f32 %v4966, 1.0
    %v4993 = vadd.f32 %v4968, 1.0
    %v4994 = vadd.f32 %v4970, 1.0
    %v4995 = vadd.f32 %v4972, 1.0
    %v4996 = vadd.f32 %v4974, 1.0
    %v4997 = vadd.f32 %v4976, 1.0
    %v4998 = vadd.f32 %v4978, 1.0
    %v4999 = vadd.f32 %v4980, 1.0
    %v5000 = vadd.f32 %v4982, 1.0
    %v5001 = vadd.f32 %v4984, 1.0
    %v5002 = vadd.f32 %v4986, 1.0
    %v5003 = vrcp.pop %v4987
    %v5004 = vmul.f32 %v4987, %v5003
    %v5005 = vsub.f32 1.0, %v5004
    %v5006 = vmul.f32 %v5003, %v5005
    %v5007 = vadd.f32 %v5003, %v5006
    %vm5008 = vweird.f32 %v4987
    %vm5009 = vweird.f32 %v5003
    %vm5010 = vmor %vm5008, %vm5009
    %v5011 = vsel %vm5010, %v5003, %v5007
    %v5012 = vand.u32 2147483647, %v4987
    %vm5013 = vcmp.eq.f32.partialorder %v5012, 8.507059e+37
    %v5014 = vand.u32 %v4987, 2147483648
    %v5015 = vor.u32 1.1754944e-38, %v5014
    %v5016 = vsel %vm5013, %v5015, %v5011
    %v5017 = vmul.f32 1.0, %v5016
    %v5018 = vrcp.pop %v4988
    %v5019 = vmul.f32 %v4988, %v5018
    %v5020 = vsub.f32 1.0, %v5019
    %v5021 = vmul.f32 %v5018, %v5020
    %v5022 = vadd.f32 %v5018, %v5021
    %vm5023 = vweird.f32 %v4988
    %vm5024 = vweird.f32 %v5018
    %vm5025 = vmor %vm5023, %vm5024
    %v5026 = vsel %vm5025, %v5018, %v5022
    %v5027 = vand.u32 2147483647, %v4988
    %vm5028 = vcmp.eq.f32.partialorder %v5027, 8.507059e+37
    %v5029 = vand.u32 %v4988, 2147483648
    %v5030 = vor.u32 1.1754944e-38, %v5029
    %v5031 = vsel %vm5028, %v5030, %v5026
    %v5032 = vmul.f32 1.0, %v5031
    %v5033 = vrcp.pop %v4989
    %v5034 = vmul.f32 %v4989, %v5033
    %v5035 = vsub.f32 1.0, %v5034
    %v5036 = vmul.f32 %v5033, %v5035
    %v5037 = vadd.f32 %v5033, %v5036
    %vm5038 = vweird.f32 %v4989
    %vm5039 = vweird.f32 %v5033
    %vm5040 = vmor %vm5038, %vm5039
    %v5041 = vsel %vm5040, %v5033, %v5037
    %v5042 = vand.u32 2147483647, %v4989
    %vm5043 = vcmp.eq.f32.partialorder %v5042, 8.507059e+37
    %v5044 = vand.u32 %v4989, 2147483648
    %v5045 = vor.u32 1.1754944e-38, %v5044
    %v5046 = vsel %vm5043, %v5045, %v5041
    %v5047 = vmul.f32 1.0, %v5046
    %v5048 = vrcp.pop %v4990
    %v5049 = vmul.f32 %v4990, %v5048
    %v5050 = vsub.f32 1.0, %v5049
    %v5051 = vmul.f32 %v5048, %v5050
    %v5052 = vadd.f32 %v5048, %v5051
    %vm5053 = vweird.f32 %v4990
    %vm5054 = vweird.f32 %v5048
    %vm5055 = vmor %vm5053, %vm5054
    %v5056 = vsel %vm5055, %v5048, %v5052
    %v5057 = vand.u32 2147483647, %v4990
    %vm5058 = vcmp.eq.f32.partialorder %v5057, 8.507059e+37
    %v5059 = vand.u32 %v4990, 2147483648
    %v5060 = vor.u32 1.1754944e-38, %v5059
    %v5061 = vsel %vm5058, %v5060, %v5056
    %v5062 = vmul.f32 1.0, %v5061
    %v5063 = vrcp.pop %v4991
    %v5064 = vmul.f32 %v4991, %v5063
    %v5065 = vsub.f32 1.0, %v5064
    %v5066 = vmul.f32 %v5063, %v5065
    %v5067 = vadd.f32 %v5063, %v5066
    %vm5068 = vweird.f32 %v4991
    %vm5069 = vweird.f32 %v5063
    %vm5070 = vmor %vm5068, %vm5069
    %v5071 = vsel %vm5070, %v5063, %v5067
    %v5072 = vand.u32 2147483647, %v4991
    %vm5073 = vcmp.eq.f32.partialorder %v5072, 8.507059e+37
    %v5074 = vand.u32 %v4991, 2147483648
    %v5075 = vor.u32 1.1754944e-38, %v5074
    %v5076 = vsel %vm5073, %v5075, %v5071
    %v5077 = vmul.f32 1.0, %v5076
    %v5078 = vrcp.pop %v4992
    %v5079 = vmul.f32 %v4992, %v5078
    %v5080 = vsub.f32 1.0, %v5079
    %v5081 = vmul.f32 %v5078, %v5080
    %v5082 = vadd.f32 %v5078, %v5081
    %vm5083 = vweird.f32 %v4992
    %vm5084 = vweird.f32 %v5078
    %vm5085 = vmor %vm5083, %vm5084
    %v5086 = vsel %vm5085, %v5078, %v5082
    %v5087 = vand.u32 2147483647, %v4992
    %vm5088 = vcmp.eq.f32.partialorder %v5087, 8.507059e+37
    %v5089 = vand.u32 %v4992, 2147483648
    %v5090 = vor.u32 1.1754944e-38, %v5089
    %v5091 = vsel %vm5088, %v5090, %v5086
    %v5092 = vmul.f32 1.0, %v5091
    %v5093 = vrcp.pop %v4993
    %v5094 = vmul.f32 %v4993, %v5093
    %v5095 = vsub.f32 1.0, %v5094
    %v5096 = vmul.f32 %v5093, %v5095
    %v5097 = vadd.f32 %v5093, %v5096
    %vm5098 = vweird.f32 %v4993
    %vm5099 = vweird.f32 %v5093
    %vm5100 = vmor %vm5098, %vm5099
    %v5101 = vsel %vm5100, %v5093, %v5097
    %v5102 = vand.u32 2147483647, %v4993
    %vm5103 = vcmp.eq.f32.partialorder %v5102, 8.507059e+37
    %v5104 = vand.u32 %v4993, 2147483648
    %v5105 = vor.u32 1.1754944e-38, %v5104
    %v5106 = vsel %vm5103, %v5105, %v5101
    %v5107 = vmul.f32 1.0, %v5106
    %v5108 = vrcp.pop %v4994
    %v5109 = vmul.f32 %v4994, %v5108
    %v5110 = vsub.f32 1.0, %v5109
    %v5111 = vmul.f32 %v5108, %v5110
    %v5112 = vadd.f32 %v5108, %v5111
    %vm5113 = vweird.f32 %v4994
    %vm5114 = vweird.f32 %v5108
    %vm5115 = vmor %vm5113, %vm5114
    %v5116 = vsel %vm5115, %v5108, %v5112
    %v5117 = vand.u32 2147483647, %v4994
    %vm5118 = vcmp.eq.f32.partialorder %v5117, 8.507059e+37
    %v5119 = vand.u32 %v4994, 2147483648
    %v5120 = vor.u32 1.1754944e-38, %v5119
    %v5121 = vsel %vm5118, %v5120, %v5116
    %v5122 = vmul.f32 1.0, %v5121
    %v5123 = vrcp.pop %v4995
    %v5124 = vmul.f32 %v4995, %v5123
    %v5125 = vsub.f32 1.0, %v5124
    %v5126 = vmul.f32 %v5123, %v5125
    %v5127 = vadd.f32 %v5123, %v5126
    %vm5128 = vweird.f32 %v4995
    %vm5129 = vweird.f32 %v5123
    %vm5130 = vmor %vm5128, %vm5129
    %v5131 = vsel %vm5130, %v5123, %v5127
    %v5132 = vand.u32 2147483647, %v4995
    %vm5133 = vcmp.eq.f32.partialorder %v5132, 8.507059e+37
    %v5134 = vand.u32 %v4995, 2147483648
    %v5135 = vor.u32 1.1754944e-38, %v5134
    %v5136 = vsel %vm5133, %v5135, %v5131
    %v5137 = vmul.f32 1.0, %v5136
    %v5138 = vrcp.pop %v4996
    %v5139 = vmul.f32 %v4996, %v5138
    %v5140 = vsub.f32 1.0, %v5139
    %v5141 = vmul.f32 %v5138, %v5140
    %v5142 = vadd.f32 %v5138, %v5141
    %vm5143 = vweird.f32 %v4996
    %vm5144 = vweird.f32 %v5138
    %vm5145 = vmor %vm5143, %vm5144
    %v5146 = vsel %vm5145, %v5138, %v5142
    %v5147 = vand.u32 2147483647, %v4996
    %vm5148 = vcmp.eq.f32.partialorder %v5147, 8.507059e+37
    %v5149 = vand.u32 %v4996, 2147483648
    %v5150 = vor.u32 1.1754944e-38, %v5149
    %v5151 = vsel %vm5148, %v5150, %v5146
    %v5152 = vmul.f32 1.0, %v5151
    %v5153 = vrcp.pop %v4997
    %v5154 = vmul.f32 %v4997, %v5153
    %v5155 = vsub.f32 1.0, %v5154
    %v5156 = vmul.f32 %v5153, %v5155
    %v5157 = vadd.f32 %v5153, %v5156
    %vm5158 = vweird.f32 %v4997
    %vm5159 = vweird.f32 %v5153
    %vm5160 = vmor %vm5158, %vm5159
    %v5161 = vsel %vm5160, %v5153, %v5157
    %v5162 = vand.u32 2147483647, %v4997
    %vm5163 = vcmp.eq.f32.partialorder %v5162, 8.507059e+37
    %v5164 = vand.u32 %v4997, 2147483648
    %v5165 = vor.u32 1.1754944e-38, %v5164
    %v5166 = vsel %vm5163, %v5165, %v5161
    %v5167 = vmul.f32 1.0, %v5166
    %v5168 = vrcp.pop %v4998
    %v5169 = vmul.f32 %v4998, %v5168
    %v5170 = vsub.f32 1.0, %v5169
    %v5171 = vmul.f32 %v5168, %v5170
    %v5172 = vadd.f32 %v5168, %v5171
    %vm5173 = vweird.f32 %v4998
    %vm5174 = vweird.f32 %v5168
    %vm5175 = vmor %vm5173, %vm5174
    %v5176 = vsel %vm5175, %v5168, %v5172
    %v5177 = vand.u32 2147483647, %v4998
    %vm5178 = vcmp.eq.f32.partialorder %v5177, 8.507059e+37
    %v5179 = vand.u32 %v4998, 2147483648
    %v5180 = vor.u32 1.1754944e-38, %v5179
    %v5181 = vsel %vm5178, %v5180, %v5176
    %v5182 = vmul.f32 1.0, %v5181
    %v5183 = vrcp.pop %v4999
    %v5184 = vmul.f32 %v4999, %v5183
    %v5185 = vsub.f32 1.0, %v5184
    %v5186 = vmul.f32 %v5183, %v5185
    %v5187 = vadd.f32 %v5183, %v5186
    %vm5188 = vweird.f32 %v4999
    %vm5189 = vweird.f32 %v5183
    %vm5190 = vmor %vm5188, %vm5189
    %v5191 = vsel %vm5190, %v5183, %v5187
    %v5192 = vand.u32 2147483647, %v4999
    %vm5193 = vcmp.eq.f32.partialorder %v5192, 8.507059e+37
    %v5194 = vand.u32 %v4999, 2147483648
    %v5195 = vor.u32 1.1754944e-38, %v5194
    %v5196 = vsel %vm5193, %v5195, %v5191
    %v5197 = vmul.f32 1.0, %v5196
    %v5198 = vrcp.pop %v5000
    %v5199 = vmul.f32 %v5000, %v5198
    %v5200 = vsub.f32 1.0, %v5199
    %v5201 = vmul.f32 %v5198, %v5200
    %v5202 = vadd.f32 %v5198, %v5201
    %vm5203 = vweird.f32 %v5000
    %vm5204 = vweird.f32 %v5198
    %vm5205 = vmor %vm5203, %vm5204
    %v5206 = vsel %vm5205, %v5198, %v5202
    %v5207 = vand.u32 2147483647, %v5000
    %vm5208 = vcmp.eq.f32.partialorder %v5207, 8.507059e+37
    %v5209 = vand.u32 %v5000, 2147483648
    %v5210 = vor.u32 1.1754944e-38, %v5209
    %v5211 = vsel %vm5208, %v5210, %v5206
    %v5212 = vmul.f32 1.0, %v5211
    %v5213 = vrcp.pop %v5001
    %v5214 = vmul.f32 %v5001, %v5213
    %v5215 = vsub.f32 1.0, %v5214
    %v5216 = vmul.f32 %v5213, %v5215
    %v5217 = vadd.f32 %v5213, %v5216
    %vm5218 = vweird.f32 %v5001
    %vm5219 = vweird.f32 %v5213
    %vm5220 = vmor %vm5218, %vm5219
    %v5221 = vsel %vm5220, %v5213, %v5217
    %v5222 = vand.u32 2147483647, %v5001
    %vm5223 = vcmp.eq.f32.partialorder %v5222, 8.507059e+37
    %v5224 = vand.u32 %v5001, 2147483648
    %v5225 = vor.u32 1.1754944e-38, %v5224
    %v5226 = vsel %vm5223, %v5225, %v5221
    %v5227 = vmul.f32 1.0, %v5226
    %v5228 = vrcp.pop %v5002
    %v5229 = vmul.f32 %v5002, %v5228
    %v5230 = vsub.f32 1.0, %v5229
    %v5231 = vmul.f32 %v5228, %v5230
    %v5232 = vadd.f32 %v5228, %v5231
    %vm5233 = vweird.f32 %v5002
    %vm5234 = vweird.f32 %v5228
    %vm5235 = vmor %vm5233, %vm5234
    %v5236 = vsel %vm5235, %v5228, %v5232
    %v5237 = vand.u32 2147483647, %v5002
    %vm5238 = vcmp.eq.f32.partialorder %v5237, 8.507059e+37
    %v5239 = vand.u32 %v5002, 2147483648
    %v5240 = vor.u32 1.1754944e-38, %v5239
    %v5241 = vsel %vm5238, %v5240, %v5236
    %v5242 = vmul.f32 1.0, %v5241
    %v5243 = vmul.f32 %v5017, %v4935
    %v5244 = vmul.f32 %v5032, %v4935
    %v5245 = vmul.f32 %v5047, %v4935
    %v5246 = vmul.f32 %v5062, %v4935
    %v5247 = vmul.f32 %v5077, %v4936
    %v5248 = vmul.f32 %v5092, %v4936
    %v5249 = vmul.f32 %v5107, %v4936
    %v5250 = vmul.f32 %v5122, %v4936
    %v5251 = vmul.f32 %v5137, %v4937
    %v5252 = vmul.f32 %v5152, %v4937
    %v5253 = vmul.f32 %v5167, %v4937
    %v5254 = vmul.f32 %v5182, %v4937
    %v5255 = vmul.f32 %v5197, %v4938
    %v5256 = vmul.f32 %v5212, %v4938
    %v5257 = vmul.f32 %v5227, %v4938
    %v5258 = vmul.f32 %v5242, %v4938
    %v5259 = vadd.f32 %v5243, 1.0
    %v5260 = vadd.f32 %v5244, 1.0
    %v5261 = vadd.f32 %v5245, 1.0
    %v5262 = vadd.f32 %v5246, 1.0
    %v5263 = vadd.f32 %v5247, 1.0
    %v5264 = vadd.f32 %v5248, 1.0
    %v5265 = vadd.f32 %v5249, 1.0
    %v5266 = vadd.f32 %v5250, 1.0
    %v5267 = vadd.f32 %v5251, 1.0
    %v5268 = vadd.f32 %v5252, 1.0
    %v5269 = vadd.f32 %v5253, 1.0
    %v5270 = vadd.f32 %v5254, 1.0
    %v5271 = vadd.f32 %v5255, 1.0
    %v5272 = vadd.f32 %v5256, 1.0
    %v5273 = vadd.f32 %v5257, 1.0
    %v5274 = vadd.f32 %v5258, 1.0
    %v5275 = vmul.f32 %v272, %v5259
    %v5276 = vmul.f32 %v273, %v5260
    %v5277 = vmul.f32 %v274, %v5261
    %v5278 = vmul.f32 %v275, %v5262
    %v5279 = vmul.f32 %v276, %v5263
    %v5280 = vmul.f32 %v277, %v5264
    %v5281 = vmul.f32 %v278, %v5265
    %v5282 = vmul.f32 %v279, %v5266
    %v5283 = vmul.f32 %v280, %v5267
    %v5284 = vmul.f32 %v281, %v5268
    %v5285 = vmul.f32 %v282, %v5269
    %v5286 = vmul.f32 %v283, %v5270
    %v5287 = vmul.f32 %v284, %v5271
    %v5288 = vmul.f32 %v285, %v5272
    %v5289 = vmul.f32 %v286, %v5273
    %v5290 = vmul.f32 %v287, %v5274
    %s5291 = sshll.u32 %s3838, 4
    %5292 = dma.done %s219, %s5291
    %s5293 = sshll.u32 %s3838, 4
    %5294 = dma.done %s233, %s5293
    %v5295 = vpack.c.bf16 %v5279, %v5275
    %v5296 = vpack.c.bf16 %v5280, %v5276
    %v5297 = vpack.c.bf16 %v5281, %v5277
    %v5298 = vpack.c.bf16 %v5282, %v5278
    %v5299 = vpack.c.bf16 %v5287, %v5283
    %v5300 = vpack.c.bf16 %v5288, %v5284
    %v5301 = vpack.c.bf16 %v5289, %v5285
    %v5302 = vpack.c.bf16 %v5290, %v5286
    %v5303 = vld [vmem:[#allocation4] sm:$0xff]
    %v5304 = vld [vmem:[#allocation4 + $0x8] sm:$0xff]
    %v5305 = vld [vmem:[#allocation4 + $0x10] sm:$0xff]
    %v5306 = vld [vmem:[#allocation4 + $0x18] sm:$0xff]
    %v5307 = vld [vmem:[#allocation4 + $0x20] sm:$0xff]
    %v5308 = vld [vmem:[#allocation4 + $0x28] sm:$0xff]
    %v5309 = vld [vmem:[#allocation4 + $0x30] sm:$0xff]
    %v5310 = vld [vmem:[#allocation4 + $0x38] sm:$0xff]
    %v5311 = vld [vmem:[#allocation4 + $0x40] sm:$0xff]
    %v5312 = vld [vmem:[#allocation4 + $0x48] sm:$0xff]
    %v5313 = vld [vmem:[#allocation4 + $0x50] sm:$0xff]
    %v5314 = vld [vmem:[#allocation4 + $0x58] sm:$0xff]
    %v5315 = vld [vmem:[#allocation4 + $0x60] sm:$0xff]
    %v5316 = vld [vmem:[#allocation4 + $0x68] sm:$0xff]
    %v5317 = vld [vmem:[#allocation4 + $0x70] sm:$0xff]
    %v5318 = vld [vmem:[#allocation4 + $0x78] sm:$0xff]
    %v5319 = vld [vmem:[#allocation4 + $0x80] sm:$0xff]
    %v5320 = vld [vmem:[#allocation4 + $0x88] sm:$0xff]
    %v5321 = vld [vmem:[#allocation4 + $0x90] sm:$0xff]
    %v5322 = vld [vmem:[#allocation4 + $0x98] sm:$0xff]
    %v5323 = vld [vmem:[#allocation4 + $0xa0] sm:$0xff]
    %v5324 = vld [vmem:[#allocation4 + $0xa8] sm:$0xff]
    %v5325 = vld [vmem:[#allocation4 + $0xb0] sm:$0xff]
    %v5326 = vld [vmem:[#allocation4 + $0xb8] sm:$0xff]
    %v5327 = vld [vmem:[#allocation4 + $0xc0] sm:$0xff]
    %v5328 = vld [vmem:[#allocation4 + $0xc8] sm:$0xff]
    %v5329 = vld [vmem:[#allocation4 + $0xd0] sm:$0xff]
    %v5330 = vld [vmem:[#allocation4 + $0xd8] sm:$0xff]
    %v5331 = vld [vmem:[#allocation4 + $0xe0] sm:$0xff]
    %v5332 = vld [vmem:[#allocation4 + $0xe8] sm:$0xff]
    %v5333 = vld [vmem:[#allocation4 + $0xf0] sm:$0xff]
    %v5334 = vld [vmem:[#allocation4 + $0xf8] sm:$0xff]
    %v5335 = vld [vmem:[#allocation4 + $0x100] sm:$0xff]
    %v5336 = vld [vmem:[#allocation4 + $0x108] sm:$0xff]
    %v5337 = vld [vmem:[#allocation4 + $0x110] sm:$0xff]
    %v5338 = vld [vmem:[#allocation4 + $0x118] sm:$0xff]
    %v5339 = vld [vmem:[#allocation4 + $0x120] sm:$0xff]
    %v5340 = vld [vmem:[#allocation4 + $0x128] sm:$0xff]
    %v5341 = vld [vmem:[#allocation4 + $0x130] sm:$0xff]
    %v5342 = vld [vmem:[#allocation4 + $0x138] sm:$0xff]
    %v5343 = vld [vmem:[#allocation4 + $0x140] sm:$0xff]
    %v5344 = vld [vmem:[#allocation4 + $0x148] sm:$0xff]
    %v5345 = vld [vmem:[#allocation4 + $0x150] sm:$0xff]
    %v5346 = vld [vmem:[#allocation4 + $0x158] sm:$0xff]
    %v5347 = vld [vmem:[#allocation4 + $0x160] sm:$0xff]
    %v5348 = vld [vmem:[#allocation4 + $0x168] sm:$0xff]
    %v5349 = vld [vmem:[#allocation4 + $0x170] sm:$0xff]
    %v5350 = vld [vmem:[#allocation4 + $0x178] sm:$0xff]
    %v5351 = vld [vmem:[#allocation4 + $0x180] sm:$0xff]
    %v5352 = vld [vmem:[#allocation4 + $0x188] sm:$0xff]
    %v5353 = vld [vmem:[#allocation4 + $0x190] sm:$0xff]
    %v5354 = vld [vmem:[#allocation4 + $0x198] sm:$0xff]
    %v5355 = vld [vmem:[#allocation4 + $0x1a0] sm:$0xff]
    %v5356 = vld [vmem:[#allocation4 + $0x1a8] sm:$0xff]
    %v5357 = vld [vmem:[#allocation4 + $0x1b0] sm:$0xff]
    %v5358 = vld [vmem:[#allocation4 + $0x1b8] sm:$0xff]
    %v5359 = vld [vmem:[#allocation4 + $0x1c0] sm:$0xff]
    %v5360 = vld [vmem:[#allocation4 + $0x1c8] sm:$0xff]
    %v5361 = vld [vmem:[#allocation4 + $0x1d0] sm:$0xff]
    %v5362 = vld [vmem:[#allocation4 + $0x1d8] sm:$0xff]
    %v5363 = vld [vmem:[#allocation4 + $0x1e0] sm:$0xff]
    %v5364 = vld [vmem:[#allocation4 + $0x1e8] sm:$0xff]
    %v5365 = vld [vmem:[#allocation4 + $0x1f0] sm:$0xff]
    %v5366 = vld [vmem:[#allocation4 + $0x1f8] sm:$0xff]
    %v5367 = vld [vmem:[#allocation4 + $0x200] sm:$0xff]
    %v5368 = vld [vmem:[#allocation4 + $0x208] sm:$0xff]
    %v5369 = vld [vmem:[#allocation4 + $0x210] sm:$0xff]
    %v5370 = vld [vmem:[#allocation4 + $0x218] sm:$0xff]
    %v5371 = vld [vmem:[#allocation4 + $0x220] sm:$0xff]
    %v5372 = vld [vmem:[#allocation4 + $0x228] sm:$0xff]
    %v5373 = vld [vmem:[#allocation4 + $0x230] sm:$0xff]
    %v5374 = vld [vmem:[#allocation4 + $0x238] sm:$0xff]
    %v5375 = vld [vmem:[#allocation4 + $0x240] sm:$0xff]
    %v5376 = vld [vmem:[#allocation4 + $0x248] sm:$0xff]
    %v5377 = vld [vmem:[#allocation4 + $0x250] sm:$0xff]
    %v5378 = vld [vmem:[#allocation4 + $0x258] sm:$0xff]
    %v5379 = vld [vmem:[#allocation4 + $0x260] sm:$0xff]
    %v5380 = vld [vmem:[#allocation4 + $0x268] sm:$0xff]
    %v5381 = vld [vmem:[#allocation4 + $0x270] sm:$0xff]
    %v5382 = vld [vmem:[#allocation4 + $0x278] sm:$0xff]
    %v5383 = vld [vmem:[#allocation4 + $0x280] sm:$0xff]
    %v5384 = vld [vmem:[#allocation4 + $0x288] sm:$0xff]
    %v5385 = vld [vmem:[#allocation4 + $0x290] sm:$0xff]
    %v5386 = vld [vmem:[#allocation4 + $0x298] sm:$0xff]
    %v5387 = vld [vmem:[#allocation4 + $0x2a0] sm:$0xff]
    %v5388 = vld [vmem:[#allocation4 + $0x2a8] sm:$0xff]
    %v5389 = vld [vmem:[#allocation4 + $0x2b0] sm:$0xff]
    %v5390 = vld [vmem:[#allocation4 + $0x2b8] sm:$0xff]
    %v5391 = vld [vmem:[#allocation4 + $0x2c0] sm:$0xff]
    %v5392 = vld [vmem:[#allocation4 + $0x2c8] sm:$0xff]
    %v5393 = vld [vmem:[#allocation4 + $0x2d0] sm:$0xff]
    %v5394 = vld [vmem:[#allocation4 + $0x2d8] sm:$0xff]
    %v5395 = vld [vmem:[#allocation4 + $0x2e0] sm:$0xff]
    %v5396 = vld [vmem:[#allocation4 + $0x2e8] sm:$0xff]
    %v5397 = vld [vmem:[#allocation4 + $0x2f0] sm:$0xff]
    %v5398 = vld [vmem:[#allocation4 + $0x2f8] sm:$0xff]
    %v5399 = vld [vmem:[#allocation4 + $0x300] sm:$0xff]
    %v5400 = vld [vmem:[#allocation4 + $0x308] sm:$0xff]
    %v5401 = vld [vmem:[#allocation4 + $0x310] sm:$0xff]
    %v5402 = vld [vmem:[#allocation4 + $0x318] sm:$0xff]
    %v5403 = vld [vmem:[#allocation4 + $0x320] sm:$0xff]
    %v5404 = vld [vmem:[#allocation4 + $0x328] sm:$0xff]
    %v5405 = vld [vmem:[#allocation4 + $0x330] sm:$0xff]
    %v5406 = vld [vmem:[#allocation4 + $0x338] sm:$0xff]
    %v5407 = vld [vmem:[#allocation4 + $0x340] sm:$0xff]
    %v5408 = vld [vmem:[#allocation4 + $0x348] sm:$0xff]
    %v5409 = vld [vmem:[#allocation4 + $0x350] sm:$0xff]
    %v5410 = vld [vmem:[#allocation4 + $0x358] sm:$0xff]
    %v5411 = vld [vmem:[#allocation4 + $0x360] sm:$0xff]
    %v5412 = vld [vmem:[#allocation4 + $0x368] sm:$0xff]
    %v5413 = vld [vmem:[#allocation4 + $0x370] sm:$0xff]
    %v5414 = vld [vmem:[#allocation4 + $0x378] sm:$0xff]
    %v5415 = vld [vmem:[#allocation4 + $0x380] sm:$0xff]
    %v5416 = vld [vmem:[#allocation4 + $0x388] sm:$0xff]
    %v5417 = vld [vmem:[#allocation4 + $0x390] sm:$0xff]
    %v5418 = vld [vmem:[#allocation4 + $0x398] sm:$0xff]
    %v5419 = vld [vmem:[#allocation4 + $0x3a0] sm:$0xff]
    %v5420 = vld [vmem:[#allocation4 + $0x3a8] sm:$0xff]
    %v5421 = vld [vmem:[#allocation4 + $0x3b0] sm:$0xff]
    %v5422 = vld [vmem:[#allocation4 + $0x3b8] sm:$0xff]
    %v5423 = vld [vmem:[#allocation4 + $0x3c0] sm:$0xff]
    %v5424 = vld [vmem:[#allocation4 + $0x3c8] sm:$0xff]
    %v5425 = vld [vmem:[#allocation4 + $0x3d0] sm:$0xff]
    %v5426 = vld [vmem:[#allocation4 + $0x3d8] sm:$0xff]
    %v5427 = vld [vmem:[#allocation4 + $0x3e0] sm:$0xff]
    %v5428 = vld [vmem:[#allocation4 + $0x3e8] sm:$0xff]
    %v5429 = vld [vmem:[#allocation4 + $0x3f0] sm:$0xff]
    %v5430 = vld [vmem:[#allocation4 + $0x3f8] sm:$0xff]
    %v5431 = vld [vmem:[#allocation5] sm:$0xff]
    %v5432 = vld [vmem:[#allocation5 + $0x8] sm:$0xff]
    %v5433 = vld [vmem:[#allocation5 + $0x10] sm:$0xff]
    %v5434 = vld [vmem:[#allocation5 + $0x18] sm:$0xff]
    %v5435 = vld [vmem:[#allocation5 + $0x20] sm:$0xff]
    %v5436 = vld [vmem:[#allocation5 + $0x28] sm:$0xff]
    %v5437 = vld [vmem:[#allocation5 + $0x30] sm:$0xff]
    %v5438 = vld [vmem:[#allocation5 + $0x38] sm:$0xff]
    %v5439 = vld [vmem:[#allocation5 + $0x40] sm:$0xff]
    %v5440 = vld [vmem:[#allocation5 + $0x48] sm:$0xff]
    %v5441 = vld [vmem:[#allocation5 + $0x50] sm:$0xff]
    %v5442 = vld [vmem:[#allocation5 + $0x58] sm:$0xff]
    %v5443 = vld [vmem:[#allocation5 + $0x60] sm:$0xff]
    %v5444 = vld [vmem:[#allocation5 + $0x68] sm:$0xff]
    %v5445 = vld [vmem:[#allocation5 + $0x70] sm:$0xff]
    %v5446 = vld [vmem:[#allocation5 + $0x78] sm:$0xff]
    %v5447 = vld [vmem:[#allocation5 + $0x80] sm:$0xff]
    %v5448 = vld [vmem:[#allocation5 + $0x88] sm:$0xff]
    %v5449 = vld [vmem:[#allocation5 + $0x90] sm:$0xff]
    %v5450 = vld [vmem:[#allocation5 + $0x98] sm:$0xff]
    %v5451 = vld [vmem:[#allocation5 + $0xa0] sm:$0xff]
    %v5452 = vld [vmem:[#allocation5 + $0xa8] sm:$0xff]
    %v5453 = vld [vmem:[#allocation5 + $0xb0] sm:$0xff]
    %v5454 = vld [vmem:[#allocation5 + $0xb8] sm:$0xff]
    %v5455 = vld [vmem:[#allocation5 + $0xc0] sm:$0xff]
    %v5456 = vld [vmem:[#allocation5 + $0xc8] sm:$0xff]
    %v5457 = vld [vmem:[#allocation5 + $0xd0] sm:$0xff]
    %v5458 = vld [vmem:[#allocation5 + $0xd8] sm:$0xff]
    %v5459 = vld [vmem:[#allocation5 + $0xe0] sm:$0xff]
    %v5460 = vld [vmem:[#allocation5 + $0xe8] sm:$0xff]
    %v5461 = vld [vmem:[#allocation5 + $0xf0] sm:$0xff]
    %v5462 = vld [vmem:[#allocation5 + $0xf8] sm:$0xff]
    %v5463 = vld [vmem:[#allocation5 + $0x100] sm:$0xff]
    %v5464 = vld [vmem:[#allocation5 + $0x108] sm:$0xff]
    %v5465 = vld [vmem:[#allocation5 + $0x110] sm:$0xff]
    %v5466 = vld [vmem:[#allocation5 + $0x118] sm:$0xff]
    %v5467 = vld [vmem:[#allocation5 + $0x120] sm:$0xff]
    %v5468 = vld [vmem:[#allocation5 + $0x128] sm:$0xff]
    %v5469 = vld [vmem:[#allocation5 + $0x130] sm:$0xff]
    %v5470 = vld [vmem:[#allocation5 + $0x138] sm:$0xff]
    %v5471 = vld [vmem:[#allocation5 + $0x140] sm:$0xff]
    %v5472 = vld [vmem:[#allocation5 + $0x148] sm:$0xff]
    %v5473 = vld [vmem:[#allocation5 + $0x150] sm:$0xff]
    %v5474 = vld [vmem:[#allocation5 + $0x158] sm:$0xff]
    %v5475 = vld [vmem:[#allocation5 + $0x160] sm:$0xff]
    %v5476 = vld [vmem:[#allocation5 + $0x168] sm:$0xff]
    %v5477 = vld [vmem:[#allocation5 + $0x170] sm:$0xff]
    %v5478 = vld [vmem:[#allocation5 + $0x178] sm:$0xff]
    %v5479 = vld [vmem:[#allocation5 + $0x180] sm:$0xff]
    %v5480 = vld [vmem:[#allocation5 + $0x188] sm:$0xff]
    %v5481 = vld [vmem:[#allocation5 + $0x190] sm:$0xff]
    %v5482 = vld [vmem:[#allocation5 + $0x198] sm:$0xff]
    %v5483 = vld [vmem:[#allocation5 + $0x1a0] sm:$0xff]
    %v5484 = vld [vmem:[#allocation5 + $0x1a8] sm:$0xff]
    %v5485 = vld [vmem:[#allocation5 + $0x1b0] sm:$0xff]
    %v5486 = vld [vmem:[#allocation5 + $0x1b8] sm:$0xff]
    %v5487 = vld [vmem:[#allocation5 + $0x1c0] sm:$0xff]
    %v5488 = vld [vmem:[#allocation5 + $0x1c8] sm:$0xff]
    %v5489 = vld [vmem:[#allocation5 + $0x1d0] sm:$0xff]
    %v5490 = vld [vmem:[#allocation5 + $0x1d8] sm:$0xff]
    %v5491 = vld [vmem:[#allocation5 + $0x1e0] sm:$0xff]
    %v5492 = vld [vmem:[#allocation5 + $0x1e8] sm:$0xff]
    %v5493 = vld [vmem:[#allocation5 + $0x1f0] sm:$0xff]
    %v5494 = vld [vmem:[#allocation5 + $0x1f8] sm:$0xff]
    %v5495 = vld [vmem:[#allocation5 + $0x200] sm:$0xff]
    %v5496 = vld [vmem:[#allocation5 + $0x208] sm:$0xff]
    %v5497 = vld [vmem:[#allocation5 + $0x210] sm:$0xff]
    %v5498 = vld [vmem:[#allocation5 + $0x218] sm:$0xff]
    %v5499 = vld [vmem:[#allocation5 + $0x220] sm:$0xff]
    %v5500 = vld [vmem:[#allocation5 + $0x228] sm:$0xff]
    %v5501 = vld [vmem:[#allocation5 + $0x230] sm:$0xff]
    %v5502 = vld [vmem:[#allocation5 + $0x238] sm:$0xff]
    %v5503 = vld [vmem:[#allocation5 + $0x240] sm:$0xff]
    %v5504 = vld [vmem:[#allocation5 + $0x248] sm:$0xff]
    %v5505 = vld [vmem:[#allocation5 + $0x250] sm:$0xff]
    %v5506 = vld [vmem:[#allocation5 + $0x258] sm:$0xff]
    %v5507 = vld [vmem:[#allocation5 + $0x260] sm:$0xff]
    %v5508 = vld [vmem:[#allocation5 + $0x268] sm:$0xff]
    %v5509 = vld [vmem:[#allocation5 + $0x270] sm:$0xff]
    %v5510 = vld [vmem:[#allocation5 + $0x278] sm:$0xff]
    %v5511 = vld [vmem:[#allocation5 + $0x280] sm:$0xff]
    %v5512 = vld [vmem:[#allocation5 + $0x288] sm:$0xff]
    %v5513 = vld [vmem:[#allocation5 + $0x290] sm:$0xff]
    %v5514 = vld [vmem:[#allocation5 + $0x298] sm:$0xff]
    %v5515 = vld [vmem:[#allocation5 + $0x2a0] sm:$0xff]
    %v5516 = vld [vmem:[#allocation5 + $0x2a8] sm:$0xff]
    %v5517 = vld [vmem:[#allocation5 + $0x2b0] sm:$0xff]
    %v5518 = vld [vmem:[#allocation5 + $0x2b8] sm:$0xff]
    %v5519 = vld [vmem:[#allocation5 + $0x2c0] sm:$0xff]
    %v5520 = vld [vmem:[#allocation5 + $0x2c8] sm:$0xff]
    %v5521 = vld [vmem:[#allocation5 + $0x2d0] sm:$0xff]
    %v5522 = vld [vmem:[#allocation5 + $0x2d8] sm:$0xff]
    %v5523 = vld [vmem:[#allocation5 + $0x2e0] sm:$0xff]
    %v5524 = vld [vmem:[#allocation5 + $0x2e8] sm:$0xff]
    %v5525 = vld [vmem:[#allocation5 + $0x2f0] sm:$0xff]
    %v5526 = vld [vmem:[#allocation5 + $0x2f8] sm:$0xff]
    %v5527 = vld [vmem:[#allocation5 + $0x300] sm:$0xff]
    %v5528 = vld [vmem:[#allocation5 + $0x308] sm:$0xff]
    %v5529 = vld [vmem:[#allocation5 + $0x310] sm:$0xff]
    %v5530 = vld [vmem:[#allocation5 + $0x318] sm:$0xff]
    %v5531 = vld [vmem:[#allocation5 + $0x320] sm:$0xff]
    %v5532 = vld [vmem:[#allocation5 + $0x328] sm:$0xff]
    %v5533 = vld [vmem:[#allocation5 + $0x330] sm:$0xff]
    %v5534 = vld [vmem:[#allocation5 + $0x338] sm:$0xff]
    %v5535 = vld [vmem:[#allocation5 + $0x340] sm:$0xff]
    %v5536 = vld [vmem:[#allocation5 + $0x348] sm:$0xff]
    %v5537 = vld [vmem:[#allocation5 + $0x350] sm:$0xff]
    %v5538 = vld [vmem:[#allocation5 + $0x358] sm:$0xff]
    %v5539 = vld [vmem:[#allocation5 + $0x360] sm:$0xff]
    %v5540 = vld [vmem:[#allocation5 + $0x368] sm:$0xff]
    %v5541 = vld [vmem:[#allocation5 + $0x370] sm:$0xff]
    %v5542 = vld [vmem:[#allocation5 + $0x378] sm:$0xff]
    %v5543 = vld [vmem:[#allocation5 + $0x380] sm:$0xff]
    %v5544 = vld [vmem:[#allocation5 + $0x388] sm:$0xff]
    %v5545 = vld [vmem:[#allocation5 + $0x390] sm:$0xff]
    %v5546 = vld [vmem:[#allocation5 + $0x398] sm:$0xff]
    %v5547 = vld [vmem:[#allocation5 + $0x3a0] sm:$0xff]
    %v5548 = vld [vmem:[#allocation5 + $0x3a8] sm:$0xff]
    %v5549 = vld [vmem:[#allocation5 + $0x3b0] sm:$0xff]
    %v5550 = vld [vmem:[#allocation5 + $0x3b8] sm:$0xff]
    %v5551 = vld [vmem:[#allocation5 + $0x3c0] sm:$0xff]
    %v5552 = vld [vmem:[#allocation5 + $0x3c8] sm:$0xff]
    %v5553 = vld [vmem:[#allocation5 + $0x3d0] sm:$0xff]
    %v5554 = vld [vmem:[#allocation5 + $0x3d8] sm:$0xff]
    %v5555 = vld [vmem:[#allocation5 + $0x3e0] sm:$0xff]
    %v5556 = vld [vmem:[#allocation5 + $0x3e8] sm:$0xff]
    %v5557 = vld [vmem:[#allocation5 + $0x3f0] sm:$0xff]
    %v5558 = vld [vmem:[#allocation5 + $0x3f8] sm:$0xff]
    %v5687 = vunpack.c.l.b16 %v5431
    %v5688 = vunpack.c.h.b16 %v5431
    %v5689 = vunpack.c.l.b16 %v5432
    %v5690 = vunpack.c.h.b16 %v5432
    %v5691 = vunpack.c.l.b16 %v5433
    %v5692 = vunpack.c.h.b16 %v5433
    %v5693 = vunpack.c.l.b16 %v5434
    %v5694 = vunpack.c.h.b16 %v5434
    %v5695 = vunpack.c.l.b16 %v5435
    %v5696 = vunpack.c.h.b16 %v5435
    %v5697 = vunpack.c.l.b16 %v5436
    %v5698 = vunpack.c.h.b16 %v5436
    %v5699 = vunpack.c.l.b16 %v5437
    %v5700 = vunpack.c.h.b16 %v5437
    %v5701 = vunpack.c.l.b16 %v5438
    %v5702 = vunpack.c.h.b16 %v5438
    %v5703 = vunpack.c.l.b16 %v5439
    %v5704 = vunpack.c.h.b16 %v5439
    %v5705 = vunpack.c.l.b16 %v5440
    %v5706 = vunpack.c.h.b16 %v5440
    %v5707 = vunpack.c.l.b16 %v5441
    %v5708 = vunpack.c.h.b16 %v5441
    %v5709 = vunpack.c.l.b16 %v5442
    %v5710 = vunpack.c.h.b16 %v5442
    %v5711 = vunpack.c.l.b16 %v5443
    %v5712 = vunpack.c.h.b16 %v5443
    %v5713 = vunpack.c.l.b16 %v5444
    %v5714 = vunpack.c.h.b16 %v5444
    %v5715 = vunpack.c.l.b16 %v5445
    %v5716 = vunpack.c.h.b16 %v5445
    %v5717 = vunpack.c.l.b16 %v5446
    %v5718 = vunpack.c.h.b16 %v5446
    %v5719 = vunpack.c.l.b16 %v5447
    %v5720 = vunpack.c.h.b16 %v5447
    %v5721 = vunpack.c.l.b16 %v5448
    %v5722 = vunpack.c.h.b16 %v5448
    %v5723 = vunpack.c.l.b16 %v5449
    %v5724 = vunpack.c.h.b16 %v5449
    %v5725 = vunpack.c.l.b16 %v5450
    %v5726 = vunpack.c.h.b16 %v5450
    %v5727 = vunpack.c.l.b16 %v5451
    %v5728 = vunpack.c.h.b16 %v5451
    %v5729 = vunpack.c.l.b16 %v5452
    %v5730 = vunpack.c.h.b16 %v5452
    %v5731 = vunpack.c.l.b16 %v5453
    %v5732 = vunpack.c.h.b16 %v5453
    %v5733 = vunpack.c.l.b16 %v5454
    %v5734 = vunpack.c.h.b16 %v5454
    %v5735 = vunpack.c.l.b16 %v5455
    %v5736 = vunpack.c.h.b16 %v5455
    %v5737 = vunpack.c.l.b16 %v5456
    %v5738 = vunpack.c.h.b16 %v5456
    %v5739 = vunpack.c.l.b16 %v5457
    %v5740 = vunpack.c.h.b16 %v5457
    %v5741 = vunpack.c.l.b16 %v5458
    %v5742 = vunpack.c.h.b16 %v5458
    %v5743 = vunpack.c.l.b16 %v5459
    %v5744 = vunpack.c.h.b16 %v5459
    %v5745 = vunpack.c.l.b16 %v5460
    %v5746 = vunpack.c.h.b16 %v5460
    %v5747 = vunpack.c.l.b16 %v5461
    %v5748 = vunpack.c.h.b16 %v5461
    %v5749 = vunpack.c.l.b16 %v5462
    %v5750 = vunpack.c.h.b16 %v5462
    %v5751 = vunpack.c.l.b16 %v5463
    %v5752 = vunpack.c.h.b16 %v5463
    %v5753 = vunpack.c.l.b16 %v5464
    %v5754 = vunpack.c.h.b16 %v5464
    %v5755 = vunpack.c.l.b16 %v5465
    %v5756 = vunpack.c.h.b16 %v5465
    %v5757 = vunpack.c.l.b16 %v5466
    %v5758 = vunpack.c.h.b16 %v5466
    %v5759 = vunpack.c.l.b16 %v5467
    %v5760 = vunpack.c.h.b16 %v5467
    %v5761 = vunpack.c.l.b16 %v5468
    %v5762 = vunpack.c.h.b16 %v5468
    %v5763 = vunpack.c.l.b16 %v5469
    %v5764 = vunpack.c.h.b16 %v5469
    %v5765 = vunpack.c.l.b16 %v5470
    %v5766 = vunpack.c.h.b16 %v5470
    %v5767 = vunpack.c.l.b16 %v5471
    %v5768 = vunpack.c.h.b16 %v5471
    %v5769 = vunpack.c.l.b16 %v5472
    %v5770 = vunpack.c.h.b16 %v5472
    %v5771 = vunpack.c.l.b16 %v5473
    %v5772 = vunpack.c.h.b16 %v5473
    %v5773 = vunpack.c.l.b16 %v5474
    %v5774 = vunpack.c.h.b16 %v5474
    %v5775 = vunpack.c.l.b16 %v5475
    %v5776 = vunpack.c.h.b16 %v5475
    %v5777 = vunpack.c.l.b16 %v5476
    %v5778 = vunpack.c.h.b16 %v5476
    %v5779 = vunpack.c.l.b16 %v5477
    %v5780 = vunpack.c.h.b16 %v5477
    %v5781 = vunpack.c.l.b16 %v5478
    %v5782 = vunpack.c.h.b16 %v5478
    %v5783 = vunpack.c.l.b16 %v5479
    %v5784 = vunpack.c.h.b16 %v5479
    %v5785 = vunpack.c.l.b16 %v5480
    %v5786 = vunpack.c.h.b16 %v5480
    %v5787 = vunpack.c.l.b16 %v5481
    %v5788 = vunpack.c.h.b16 %v5481
    %v5789 = vunpack.c.l.b16 %v5482
    %v5790 = vunpack.c.h.b16 %v5482
    %v5791 = vunpack.c.l.b16 %v5483
    %v5792 = vunpack.c.h.b16 %v5483
    %v5793 = vunpack.c.l.b16 %v5484
    %v5794 = vunpack.c.h.b16 %v5484
    %v5795 = vunpack.c.l.b16 %v5485
    %v5796 = vunpack.c.h.b16 %v5485
    %v5797 = vunpack.c.l.b16 %v5486
    %v5798 = vunpack.c.h.b16 %v5486
    %v5799 = vunpack.c.l.b16 %v5487
    %v5800 = vunpack.c.h.b16 %v5487
    %v5801 = vunpack.c.l.b16 %v5488
    %v5802 = vunpack.c.h.b16 %v5488
    %v5803 = vunpack.c.l.b16 %v5489
    %v5804 = vunpack.c.h.b16 %v5489
    %v5805 = vunpack.c.l.b16 %v5490
    %v5806 = vunpack.c.h.b16 %v5490
    %v5807 = vunpack.c.l.b16 %v5491
    %v5808 = vunpack.c.h.b16 %v5491
    %v5809 = vunpack.c.l.b16 %v5492
    %v5810 = vunpack.c.h.b16 %v5492
    %v5811 = vunpack.c.l.b16 %v5493
    %v5812 = vunpack.c.h.b16 %v5493
    %v5813 = vunpack.c.l.b16 %v5494
    %v5814 = vunpack.c.h.b16 %v5494
    %v5815 = vunpack.c.l.b16 %v5495
    %v5816 = vunpack.c.h.b16 %v5495
    %v5817 = vunpack.c.l.b16 %v5496
    %v5818 = vunpack.c.h.b16 %v5496
    %v5819 = vunpack.c.l.b16 %v5497
    %v5820 = vunpack.c.h.b16 %v5497
    %v5821 = vunpack.c.l.b16 %v5498
    %v5822 = vunpack.c.h.b16 %v5498
    %v5823 = vunpack.c.l.b16 %v5499
    %v5824 = vunpack.c.h.b16 %v5499
    %v5825 = vunpack.c.l.b16 %v5500
    %v5826 = vunpack.c.h.b16 %v5500
    %v5827 = vunpack.c.l.b16 %v5501
    %v5828 = vunpack.c.h.b16 %v5501
    %v5829 = vunpack.c.l.b16 %v5502
    %v5830 = vunpack.c.h.b16 %v5502
    %v5831 = vunpack.c.l.b16 %v5503
    %v5832 = vunpack.c.h.b16 %v5503
    %v5833 = vunpack.c.l.b16 %v5504
    %v5834 = vunpack.c.h.b16 %v5504
    %v5835 = vunpack.c.l.b16 %v5505
    %v5836 = vunpack.c.h.b16 %v5505
    %v5837 = vunpack.c.l.b16 %v5506
    %v5838 = vunpack.c.h.b16 %v5506
    %v5839 = vunpack.c.l.b16 %v5507
    %v5840 = vunpack.c.h.b16 %v5507
    %v5841 = vunpack.c.l.b16 %v5508
    %v5842 = vunpack.c.h.b16 %v5508
    %v5843 = vunpack.c.l.b16 %v5509
    %v5844 = vunpack.c.h.b16 %v5509
    %v5845 = vunpack.c.l.b16 %v5510
    %v5846 = vunpack.c.h.b16 %v5510
    %v5847 = vunpack.c.l.b16 %v5511
    %v5848 = vunpack.c.h.b16 %v5511
    %v5849 = vunpack.c.l.b16 %v5512
    %v5850 = vunpack.c.h.b16 %v5512
    %v5851 = vunpack.c.l.b16 %v5513
    %v5852 = vunpack.c.h.b16 %v5513
    %v5853 = vunpack.c.l.b16 %v5514
    %v5854 = vunpack.c.h.b16 %v5514
    %v5855 = vunpack.c.l.b16 %v5515
    %v5856 = vunpack.c.h.b16 %v5515
    %v5857 = vunpack.c.l.b16 %v5516
    %v5858 = vunpack.c.h.b16 %v5516
    %v5859 = vunpack.c.l.b16 %v5517
    %v5860 = vunpack.c.h.b16 %v5517
    %v5861 = vunpack.c.l.b16 %v5518
    %v5862 = vunpack.c.h.b16 %v5518
    %v5863 = vunpack.c.l.b16 %v5519
    %v5864 = vunpack.c.h.b16 %v5519
    %v5865 = vunpack.c.l.b16 %v5520
    %v5866 = vunpack.c.h.b16 %v5520
    %v5867 = vunpack.c.l.b16 %v5521
    %v5868 = vunpack.c.h.b16 %v5521
    %v5869 = vunpack.c.l.b16 %v5522
    %v5870 = vunpack.c.h.b16 %v5522
    %v5871 = vunpack.c.l.b16 %v5523
    %v5872 = vunpack.c.h.b16 %v5523
    %v5873 = vunpack.c.l.b16 %v5524
    %v5874 = vunpack.c.h.b16 %v5524
    %v5875 = vunpack.c.l.b16 %v5525
    %v5876 = vunpack.c.h.b16 %v5525
    %v5877 = vunpack.c.l.b16 %v5526
    %v5878 = vunpack.c.h.b16 %v5526
    %v5879 = vunpack.c.l.b16 %v5527
    %v5880 = vunpack.c.h.b16 %v5527
    %v5881 = vunpack.c.l.b16 %v5528
    %v5882 = vunpack.c.h.b16 %v5528
    %v5883 = vunpack.c.l.b16 %v5529
    %v5884 = vunpack.c.h.b16 %v5529
    %v5885 = vunpack.c.l.b16 %v5530
    %v5886 = vunpack.c.h.b16 %v5530
    %v5887 = vunpack.c.l.b16 %v5531
    %v5888 = vunpack.c.h.b16 %v5531
    %v5889 = vunpack.c.l.b16 %v5532
    %v5890 = vunpack.c.h.b16 %v5532
    %v5891 = vunpack.c.l.b16 %v5533
    %v5892 = vunpack.c.h.b16 %v5533
    %v5893 = vunpack.c.l.b16 %v5534
    %v5894 = vunpack.c.h.b16 %v5534
    %v5895 = vunpack.c.l.b16 %v5535
    %v5896 = vunpack.c.h.b16 %v5535
    %v5897 = vunpack.c.l.b16 %v5536
    %v5898 = vunpack.c.h.b16 %v5536
    %v5899 = vunpack.c.l.b16 %v5537
    %v5900 = vunpack.c.h.b16 %v5537
    %v5901 = vunpack.c.l.b16 %v5538
    %v5902 = vunpack.c.h.b16 %v5538
    %v5903 = vunpack.c.l.b16 %v5539
    %v5904 = vunpack.c.h.b16 %v5539
    %v5905 = vunpack.c.l.b16 %v5540
    %v5906 = vunpack.c.h.b16 %v5540
    %v5907 = vunpack.c.l.b16 %v5541
    %v5908 = vunpack.c.h.b16 %v5541
    %v5909 = vunpack.c.l.b16 %v5542
    %v5910 = vunpack.c.h.b16 %v5542
    %v5911 = vunpack.c.l.b16 %v5543
    %v5912 = vunpack.c.h.b16 %v5543
    %v5913 = vunpack.c.l.b16 %v5544
    %v5914 = vunpack.c.h.b16 %v5544
    %v5915 = vunpack.c.l.b16 %v5545
    %v5916 = vunpack.c.h.b16 %v5545
    %v5917 = vunpack.c.l.b16 %v5546
    %v5918 = vunpack.c.h.b16 %v5546
    %v5919 = vunpack.c.l.b16 %v5547
    %v5920 = vunpack.c.h.b16 %v5547
    %v5921 = vunpack.c.l.b16 %v5548
    %v5922 = vunpack.c.h.b16 %v5548
    %v5923 = vunpack.c.l.b16 %v5549
    %v5924 = vunpack.c.h.b16 %v5549
    %v5925 = vunpack.c.l.b16 %v5550
    %v5926 = vunpack.c.h.b16 %v5550
    %v5927 = vunpack.c.l.b16 %v5551
    %v5928 = vunpack.c.h.b16 %v5551
    %v5929 = vunpack.c.l.b16 %v5552
    %v5930 = vunpack.c.h.b16 %v5552
    %v5931 = vunpack.c.l.b16 %v5553
    %v5932 = vunpack.c.h.b16 %v5553
    %v5933 = vunpack.c.l.b16 %v5554
    %v5934 = vunpack.c.h.b16 %v5554
    %v5935 = vunpack.c.l.b16 %v5555
    %v5936 = vunpack.c.h.b16 %v5555
    %v5937 = vunpack.c.l.b16 %v5556
    %v5938 = vunpack.c.h.b16 %v5556
    %v5939 = vunpack.c.l.b16 %v5557
    %v5940 = vunpack.c.h.b16 %v5557
    %v5941 = vunpack.c.l.b16 %v5558
    %v5942 = vunpack.c.h.b16 %v5558
    %v5943 = vpack.c.b16 %v5691, %v5687
    %v5944 = vpack.c.b16 %v5692, %v5688
    %v5945 = vpack.c.b16 %v5693, %v5689
    %v5946 = vpack.c.b16 %v5694, %v5690
    %v5947 = vpack.c.b16 %v5699, %v5695
    %v5948 = vpack.c.b16 %v5700, %v5696
    %v5949 = vpack.c.b16 %v5701, %v5697
    %v5950 = vpack.c.b16 %v5702, %v5698
    %v5951 = vpack.c.b16 %v5707, %v5703
    %v5952 = vpack.c.b16 %v5708, %v5704
    %v5953 = vpack.c.b16 %v5709, %v5705
    %v5954 = vpack.c.b16 %v5710, %v5706
    %v5955 = vpack.c.b16 %v5715, %v5711
    %v5956 = vpack.c.b16 %v5716, %v5712
    %v5957 = vpack.c.b16 %v5717, %v5713
    %v5958 = vpack.c.b16 %v5718, %v5714
    %v5959 = vpack.c.b16 %v5723, %v5719
    %v5960 = vpack.c.b16 %v5724, %v5720
    %v5961 = vpack.c.b16 %v5725, %v5721
    %v5962 = vpack.c.b16 %v5726, %v5722
    %v5963 = vpack.c.b16 %v5731, %v5727
    %v5964 = vpack.c.b16 %v5732, %v5728
    %v5965 = vpack.c.b16 %v5733, %v5729
    %v5966 = vpack.c.b16 %v5734, %v5730
    %v5967 = vpack.c.b16 %v5739, %v5735
    %v5968 = vpack.c.b16 %v5740, %v5736
    %v5969 = vpack.c.b16 %v5741, %v5737
    %v5970 = vpack.c.b16 %v5742, %v5738
    %v5971 = vpack.c.b16 %v5747, %v5743
    %v5972 = vpack.c.b16 %v5748, %v5744
    %v5973 = vpack.c.b16 %v5749, %v5745
    %v5974 = vpack.c.b16 %v5750, %v5746
    %v5975 = vpack.c.b16 %v5755, %v5751
    %v5976 = vpack.c.b16 %v5756, %v5752
    %v5977 = vpack.c.b16 %v5757, %v5753
    %v5978 = vpack.c.b16 %v5758, %v5754
    %v5979 = vpack.c.b16 %v5763, %v5759
    %v5980 = vpack.c.b16 %v5764, %v5760
    %v5981 = vpack.c.b16 %v5765, %v5761
    %v5982 = vpack.c.b16 %v5766, %v5762
    %v5983 = vpack.c.b16 %v5771, %v5767
    %v5984 = vpack.c.b16 %v5772, %v5768
    %v5985 = vpack.c.b16 %v5773, %v5769
    %v5986 = vpack.c.b16 %v5774, %v5770
    %v5987 = vpack.c.b16 %v5779, %v5775
    %v5988 = vpack.c.b16 %v5780, %v5776
    %v5989 = vpack.c.b16 %v5781, %v5777
    %v5990 = vpack.c.b16 %v5782, %v5778
    %v5991 = vpack.c.b16 %v5787, %v5783
    %v5992 = vpack.c.b16 %v5788, %v5784
    %v5993 = vpack.c.b16 %v5789, %v5785
    %v5994 = vpack.c.b16 %v5790, %v5786
    %v5995 = vpack.c.b16 %v5795, %v5791
    %v5996 = vpack.c.b16 %v5796, %v5792
    %v5997 = vpack.c.b16 %v5797, %v5793
    %v5998 = vpack.c.b16 %v5798, %v5794
    %v5999 = vpack.c.b16 %v5803, %v5799
    %v6000 = vpack.c.b16 %v5804, %v5800
    %v6001 = vpack.c.b16 %v5805, %v5801
    %v6002 = vpack.c.b16 %v5806, %v5802
    %v6003 = vpack.c.b16 %v5811, %v5807
    %v6004 = vpack.c.b16 %v5812, %v5808
    %v6005 = vpack.c.b16 %v5813, %v5809
    %v6006 = vpack.c.b16 %v5814, %v5810
    %v6007 = vpack.c.b16 %v5819, %v5815
    %v6008 = vpack.c.b16 %v5820, %v5816
    %v6009 = vpack.c.b16 %v5821, %v5817
    %v6010 = vpack.c.b16 %v5822, %v5818
    %v6011 = vpack.c.b16 %v5827, %v5823
    %v6012 = vpack.c.b16 %v5828, %v5824
    %v6013 = vpack.c.b16 %v5829, %v5825
    %v6014 = vpack.c.b16 %v5830, %v5826
    %v6015 = vpack.c.b16 %v5835, %v5831
    %v6016 = vpack.c.b16 %v5836, %v5832
    %v6017 = vpack.c.b16 %v5837, %v5833
    %v6018 = vpack.c.b16 %v5838, %v5834
    %v6019 = vpack.c.b16 %v5843, %v5839
    %v6020 = vpack.c.b16 %v5844, %v5840
    %v6021 = vpack.c.b16 %v5845, %v5841
    %v6022 = vpack.c.b16 %v5846, %v5842
    %v6023 = vpack.c.b16 %v5851, %v5847
    %v6024 = vpack.c.b16 %v5852, %v5848
    %v6025 = vpack.c.b16 %v5853, %v5849
    %v6026 = vpack.c.b16 %v5854, %v5850
    %v6027 = vpack.c.b16 %v5859, %v5855
    %v6028 = vpack.c.b16 %v5860, %v5856
    %v6029 = vpack.c.b16 %v5861, %v5857
    %v6030 = vpack.c.b16 %v5862, %v5858
    %v6031 = vpack.c.b16 %v5867, %v5863
    %v6032 = vpack.c.b16 %v5868, %v5864
    %v6033 = vpack.c.b16 %v5869, %v5865
    %v6034 = vpack.c.b16 %v5870, %v5866
    %v6035 = vpack.c.b16 %v5875, %v5871
    %v6036 = vpack.c.b16 %v5876, %v5872
    %v6037 = vpack.c.b16 %v5877, %v5873
    %v6038 = vpack.c.b16 %v5878, %v5874
    %v6039 = vpack.c.b16 %v5883, %v5879
    %v6040 = vpack.c.b16 %v5884, %v5880
    %v6041 = vpack.c.b16 %v5885, %v5881
    %v6042 = vpack.c.b16 %v5886, %v5882
    %v6043 = vpack.c.b16 %v5891, %v5887
    %v6044 = vpack.c.b16 %v5892, %v5888
    %v6045 = vpack.c.b16 %v5893, %v5889
    %v6046 = vpack.c.b16 %v5894, %v5890
    %v6047 = vpack.c.b16 %v5899, %v5895
    %v6048 = vpack.c.b16 %v5900, %v5896
    %v6049 = vpack.c.b16 %v5901, %v5897
    %v6050 = vpack.c.b16 %v5902, %v5898
    %v6051 = vpack.c.b16 %v5907, %v5903
    %v6052 = vpack.c.b16 %v5908, %v5904
    %v6053 = vpack.c.b16 %v5909, %v5905
    %v6054 = vpack.c.b16 %v5910, %v5906
    %v6055 = vpack.c.b16 %v5915, %v5911
    %v6056 = vpack.c.b16 %v5916, %v5912
    %v6057 = vpack.c.b16 %v5917, %v5913
    %v6058 = vpack.c.b16 %v5918, %v5914
    %v6059 = vpack.c.b16 %v5923, %v5919
    %v6060 = vpack.c.b16 %v5924, %v5920
    %v6061 = vpack.c.b16 %v5925, %v5921
    %v6062 = vpack.c.b16 %v5926, %v5922
    %v6063 = vpack.c.b16 %v5931, %v5927
    %v6064 = vpack.c.b16 %v5932, %v5928
    %v6065 = vpack.c.b16 %v5933, %v5929
    %v6066 = vpack.c.b16 %v5934, %v5930
    %v6067 = vpack.c.b16 %v5939, %v5935
    %v6068 = vpack.c.b16 %v5940, %v5936
    %v6069 = vpack.c.b16 %v5941, %v5937
    %v6070 = vpack.c.b16 %v5942, %v5938
    %6199 = vmatpush.bf16.msra.mxu0 %v5971
    %6200 = vmatpush.bf16.msra.mxu0 %v5967
    %6201 = vmatpush.bf16.msra.mxu0 %v5963
    %6202 = vmatpush.bf16.msra.mxu0 %v5959
    %6203 = vmatpush.bf16.msra.mxu0 %v5955
    %6204 = vmatpush.bf16.msra.mxu0 %v5951
    %6205 = vmatpush.bf16.msra.mxu0 %v5947
    %6206 = vmatpush.bf16.msra.mxu0 %v5943
    %6207 = vmatmul.bf16.gmra.mxu0 %v312
    %v6208 = vpop.f32.mrf.mxu0
    %v6209 = vadd.f32 0.0, %v6208
    %v6210 = vpop.f32.mrf.mxu0
    %v6211 = vadd.f32 0.0, %v6210
    %6212 = vmatmul.bf16.gmra.mxu0 %v316
    %v6213 = vpop.f32.mrf.mxu0
    %v6214 = vadd.f32 0.0, %v6213
    %v6215 = vpop.f32.mrf.mxu0
    %v6216 = vadd.f32 0.0, %v6215
    %6217 = vdwg.mxu0
    %6218 = vmatpush.bf16.msra.mxu0 %v6003
    %6219 = vmatpush.bf16.msra.mxu0 %v5999
    %6220 = vmatpush.bf16.msra.mxu0 %v5995
    %6221 = vmatpush.bf16.msra.mxu0 %v5991
    %6222 = vmatpush.bf16.msra.mxu0 %v5987
    %6223 = vmatpush.bf16.msra.mxu0 %v5983
    %6224 = vmatpush.bf16.msra.mxu0 %v5979
    %6225 = vmatpush.bf16.msra.mxu0 %v5975
    %6226 = vmatmul.bf16.gmra.mxu0 %v313
    %v6227 = vpop.f32.mrf.mxu0
    %v6228 = vadd.f32 %v6209, %v6227
    %v6229 = vpop.f32.mrf.mxu0
    %v6230 = vadd.f32 %v6211, %v6229
    %6231 = vmatmul.bf16.gmra.mxu0 %v317
    %v6232 = vpop.f32.mrf.mxu0
    %v6233 = vadd.f32 %v6214, %v6232
    %v6234 = vpop.f32.mrf.mxu0
    %v6235 = vadd.f32 %v6216, %v6234
    %6236 = vdwg.mxu0
    %6237 = vmatpush.bf16.msra.mxu0 %v6035
    %6238 = vmatpush.bf16.msra.mxu0 %v6031
    %6239 = vmatpush.bf16.msra.mxu0 %v6027
    %6240 = vmatpush.bf16.msra.mxu0 %v6023
    %6241 = vmatpush.bf16.msra.mxu0 %v6019
    %6242 = vmatpush.bf16.msra.mxu0 %v6015
    %6243 = vmatpush.bf16.msra.mxu0 %v6011
    %6244 = vmatpush.bf16.msra.mxu0 %v6007
    %6245 = vmatmul.bf16.gmra.mxu0 %v314
    %v6246 = vpop.f32.mrf.mxu0
    %v6247 = vadd.f32 %v6228, %v6246
    %v6248 = vpop.f32.mrf.mxu0
    %v6249 = vadd.f32 %v6230, %v6248
    %6250 = vmatmul.bf16.gmra.mxu0 %v318
    %v6251 = vpop.f32.mrf.mxu0
    %v6252 = vadd.f32 %v6233, %v6251
    %v6253 = vpop.f32.mrf.mxu0
    %v6254 = vadd.f32 %v6235, %v6253
    %6255 = vdwg.mxu0
    %6256 = vmatpush.bf16.msra.mxu0 %v6067
    %6257 = vmatpush.bf16.msra.mxu0 %v6063
    %6258 = vmatpush.bf16.msra.mxu0 %v6059
    %6259 = vmatpush.bf16.msra.mxu0 %v6055
    %6260 = vmatpush.bf16.msra.mxu0 %v6051
    %6261 = vmatpush.bf16.msra.mxu0 %v6047
    %6262 = vmatpush.bf16.msra.mxu0 %v6043
    %6263 = vmatpush.bf16.msra.mxu0 %v6039
    %6264 = vmatmul.bf16.gmra.mxu0 %v315
    %v6265 = vpop.f32.mrf.mxu0
    %v6266 = vadd.f32 %v6247, %v6265
    %v6267 = vpop.f32.mrf.mxu0
    %v6268 = vadd.f32 %v6249, %v6267
    %6269 = vmatmul.bf16.gmra.mxu0 %v319
    %v6270 = vpop.f32.mrf.mxu0
    %v6271 = vadd.f32 %v6252, %v6270
    %v6272 = vpop.f32.mrf.mxu0
    %v6273 = vadd.f32 %v6254, %v6272
    %6274 = vdwg.mxu0
    %6275 = vmatpush.bf16.msra.mxu0 %v5972
    %6276 = vmatpush.bf16.msra.mxu0 %v5968
    %6277 = vmatpush.bf16.msra.mxu0 %v5964
    %6278 = vmatpush.bf16.msra.mxu0 %v5960
    %6279 = vmatpush.bf16.msra.mxu0 %v5956
    %6280 = vmatpush.bf16.msra.mxu0 %v5952
    %6281 = vmatpush.bf16.msra.mxu0 %v5948
    %6282 = vmatpush.bf16.msra.mxu0 %v5944
    %6283 = vmatmul.bf16.gmra.mxu0 %v312
    %v6284 = vpop.f32.mrf.mxu0
    %v6285 = vadd.f32 0.0, %v6284
    %v6286 = vpop.f32.mrf.mxu0
    %v6287 = vadd.f32 0.0, %v6286
    %6288 = vmatmul.bf16.gmra.mxu0 %v316
    %v6289 = vpop.f32.mrf.mxu0
    %v6290 = vadd.f32 0.0, %v6289
    %v6291 = vpop.f32.mrf.mxu0
    %v6292 = vadd.f32 0.0, %v6291
    %6293 = vdwg.mxu0
    %6294 = vmatpush.bf16.msra.mxu0 %v6004
    %6295 = vmatpush.bf16.msra.mxu0 %v6000
    %6296 = vmatpush.bf16.msra.mxu0 %v5996
    %6297 = vmatpush.bf16.msra.mxu0 %v5992
    %6298 = vmatpush.bf16.msra.mxu0 %v5988
    %6299 = vmatpush.bf16.msra.mxu0 %v5984
    %6300 = vmatpush.bf16.msra.mxu0 %v5980
    %6301 = vmatpush.bf16.msra.mxu0 %v5976
    %6302 = vmatmul.bf16.gmra.mxu0 %v313
    %v6303 = vpop.f32.mrf.mxu0
    %v6304 = vadd.f32 %v6285, %v6303
    %v6305 = vpop.f32.mrf.mxu0
    %v6306 = vadd.f32 %v6287, %v6305
    %6307 = vmatmul.bf16.gmra.mxu0 %v317
    %v6308 = vpop.f32.mrf.mxu0
    %v6309 = vadd.f32 %v6290, %v6308
    %v6310 = vpop.f32.mrf.mxu0
    %v6311 = vadd.f32 %v6292, %v6310
    %6312 = vdwg.mxu0
    %6313 = vmatpush.bf16.msra.mxu0 %v6036
    %6314 = vmatpush.bf16.msra.mxu0 %v6032
    %6315 = vmatpush.bf16.msra.mxu0 %v6028
    %6316 = vmatpush.bf16.msra.mxu0 %v6024
    %6317 = vmatpush.bf16.msra.mxu0 %v6020
    %6318 = vmatpush.bf16.msra.mxu0 %v6016
    %6319 = vmatpush.bf16.msra.mxu0 %v6012
    %6320 = vmatpush.bf16.msra.mxu0 %v6008
    %6321 = vmatmul.bf16.gmra.mxu0 %v314
    %v6322 = vpop.f32.mrf.mxu0
    %v6323 = vadd.f32 %v6304, %v6322
    %v6324 = vpop.f32.mrf.mxu0
    %v6325 = vadd.f32 %v6306, %v6324
    %6326 = vmatmul.bf16.gmra.mxu0 %v318
    %v6327 = vpop.f32.mrf.mxu0
    %v6328 = vadd.f32 %v6309, %v6327
    %v6329 = vpop.f32.mrf.mxu0
    %v6330 = vadd.f32 %v6311, %v6329
    %6331 = vdwg.mxu0
    %6332 = vmatpush.bf16.msra.mxu0 %v6068
    %6333 = vmatpush.bf16.msra.mxu0 %v6064
    %6334 = vmatpush.bf16.msra.mxu0 %v6060
    %6335 = vmatpush.bf16.msra.mxu0 %v6056
    %6336 = vmatpush.bf16.msra.mxu0 %v6052
    %6337 = vmatpush.bf16.msra.mxu0 %v6048
    %6338 = vmatpush.bf16.msra.mxu0 %v6044
    %6339 = vmatpush.bf16.msra.mxu0 %v6040
    %6340 = vmatmul.bf16.gmra.mxu0 %v315
    %v6341 = vpop.f32.mrf.mxu0
    %v6342 = vadd.f32 %v6323, %v6341
    %v6343 = vpop.f32.mrf.mxu0
    %v6344 = vadd.f32 %v6325, %v6343
    %6345 = vmatmul.bf16.gmra.mxu0 %v319
    %v6346 = vpop.f32.mrf.mxu0
    %v6347 = vadd.f32 %v6328, %v6346
    %v6348 = vpop.f32.mrf.mxu0
    %v6349 = vadd.f32 %v6330, %v6348
    %6350 = vdwg.mxu0
    %6351 = vmatpush.bf16.msra.mxu0 %v5973
    %6352 = vmatpush.bf16.msra.mxu0 %v5969
    %6353 = vmatpush.bf16.msra.mxu0 %v5965
    %6354 = vmatpush.bf16.msra.mxu0 %v5961
    %6355 = vmatpush.bf16.msra.mxu0 %v5957
    %6356 = vmatpush.bf16.msra.mxu0 %v5953
    %6357 = vmatpush.bf16.msra.mxu0 %v5949
    %6358 = vmatpush.bf16.msra.mxu0 %v5945
    %6359 = vmatmul.bf16.gmra.mxu0 %v312
    %v6360 = vpop.f32.mrf.mxu0
    %v6361 = vadd.f32 0.0, %v6360
    %v6362 = vpop.f32.mrf.mxu0
    %v6363 = vadd.f32 0.0, %v6362
    %6364 = vmatmul.bf16.gmra.mxu0 %v316
    %v6365 = vpop.f32.mrf.mxu0
    %v6366 = vadd.f32 0.0, %v6365
    %v6367 = vpop.f32.mrf.mxu0
    %v6368 = vadd.f32 0.0, %v6367
    %6369 = vdwg.mxu0
    %6370 = vmatpush.bf16.msra.mxu0 %v6005
    %6371 = vmatpush.bf16.msra.mxu0 %v6001
    %6372 = vmatpush.bf16.msra.mxu0 %v5997
    %6373 = vmatpush.bf16.msra.mxu0 %v5993
    %6374 = vmatpush.bf16.msra.mxu0 %v5989
    %6375 = vmatpush.bf16.msra.mxu0 %v5985
    %6376 = vmatpush.bf16.msra.mxu0 %v5981
    %6377 = vmatpush.bf16.msra.mxu0 %v5977
    %6378 = vmatmul.bf16.gmra.mxu0 %v313
    %v6379 = vpop.f32.mrf.mxu0
    %v6380 = vadd.f32 %v6361, %v6379
    %v6381 = vpop.f32.mrf.mxu0
    %v6382 = vadd.f32 %v6363, %v6381
    %6383 = vmatmul.bf16.gmra.mxu0 %v317
    %v6384 = vpop.f32.mrf.mxu0
    %v6385 = vadd.f32 %v6366, %v6384
    %v6386 = vpop.f32.mrf.mxu0
    %v6387 = vadd.f32 %v6368, %v6386
    %6388 = vdwg.mxu0
    %6389 = vmatpush.bf16.msra.mxu0 %v6037
    %6390 = vmatpush.bf16.msra.mxu0 %v6033
    %6391 = vmatpush.bf16.msra.mxu0 %v6029
    %6392 = vmatpush.bf16.msra.mxu0 %v6025
    %6393 = vmatpush.bf16.msra.mxu0 %v6021
    %6394 = vmatpush.bf16.msra.mxu0 %v6017
    %6395 = vmatpush.bf16.msra.mxu0 %v6013
    %6396 = vmatpush.bf16.msra.mxu0 %v6009
    %6397 = vmatmul.bf16.gmra.mxu0 %v314
    %v6398 = vpop.f32.mrf.mxu0
    %v6399 = vadd.f32 %v6380, %v6398
    %v6400 = vpop.f32.mrf.mxu0
    %v6401 = vadd.f32 %v6382, %v6400
    %6402 = vmatmul.bf16.gmra.mxu0 %v318
    %v6403 = vpop.f32.mrf.mxu0
    %v6404 = vadd.f32 %v6385, %v6403
    %v6405 = vpop.f32.mrf.mxu0
    %v6406 = vadd.f32 %v6387, %v6405
    %6407 = vdwg.mxu0
    %6408 = vmatpush.bf16.msra.mxu0 %v6069
    %6409 = vmatpush.bf16.msra.mxu0 %v6065
    %6410 = vmatpush.bf16.msra.mxu0 %v6061
    %6411 = vmatpush.bf16.msra.mxu0 %v6057
    %6412 = vmatpush.bf16.msra.mxu0 %v6053
    %6413 = vmatpush.bf16.msra.mxu0 %v6049
    %6414 = vmatpush.bf16.msra.mxu0 %v6045
    %6415 = vmatpush.bf16.msra.mxu0 %v6041
    %6416 = vmatmul.bf16.gmra.mxu0 %v315
    %v6417 = vpop.f32.mrf.mxu0
    %v6418 = vadd.f32 %v6399, %v6417
    %v6419 = vpop.f32.mrf.mxu0
    %v6420 = vadd.f32 %v6401, %v6419
    %6421 = vmatmul.bf16.gmra.mxu0 %v319
    %v6422 = vpop.f32.mrf.mxu0
    %v6423 = vadd.f32 %v6404, %v6422
    %v6424 = vpop.f32.mrf.mxu0
    %v6425 = vadd.f32 %v6406, %v6424
    %6426 = vdwg.mxu0
    %6427 = vmatpush.bf16.msra.mxu0 %v5974
    %6428 = vmatpush.bf16.msra.mxu0 %v5970
    %6429 = vmatpush.bf16.msra.mxu0 %v5966
    %6430 = vmatpush.bf16.msra.mxu0 %v5962
    %6431 = vmatpush.bf16.msra.mxu0 %v5958
    %6432 = vmatpush.bf16.msra.mxu0 %v5954
    %6433 = vmatpush.bf16.msra.mxu0 %v5950
    %6434 = vmatpush.bf16.msra.mxu0 %v5946
    %6435 = vmatmul.bf16.gmra.mxu0 %v312
    %v6436 = vpop.f32.mrf.mxu0
    %v6437 = vadd.f32 0.0, %v6436
    %v6438 = vpop.f32.mrf.mxu0
    %v6439 = vadd.f32 0.0, %v6438
    %6440 = vmatmul.bf16.gmra.mxu0 %v316
    %v6441 = vpop.f32.mrf.mxu0
    %v6442 = vadd.f32 0.0, %v6441
    %v6443 = vpop.f32.mrf.mxu0
    %v6444 = vadd.f32 0.0, %v6443
    %6445 = vdwg.mxu0
    %6446 = vmatpush.bf16.msra.mxu0 %v6006
    %6447 = vmatpush.bf16.msra.mxu0 %v6002
    %6448 = vmatpush.bf16.msra.mxu0 %v5998
    %6449 = vmatpush.bf16.msra.mxu0 %v5994
    %6450 = vmatpush.bf16.msra.mxu0 %v5990
    %6451 = vmatpush.bf16.msra.mxu0 %v5986
    %6452 = vmatpush.bf16.msra.mxu0 %v5982
    %6453 = vmatpush.bf16.msra.mxu0 %v5978
    %6454 = vmatmul.bf16.gmra.mxu0 %v313
    %v6455 = vpop.f32.mrf.mxu0
    %v6456 = vadd.f32 %v6437, %v6455
    %v6457 = vpop.f32.mrf.mxu0
    %v6458 = vadd.f32 %v6439, %v6457
    %6459 = vmatmul.bf16.gmra.mxu0 %v317
    %v6460 = vpop.f32.mrf.mxu0
    %v6461 = vadd.f32 %v6442, %v6460
    %v6462 = vpop.f32.mrf.mxu0
    %v6463 = vadd.f32 %v6444, %v6462
    %6464 = vdwg.mxu0
    %6465 = vmatpush.bf16.msra.mxu0 %v6038
    %6466 = vmatpush.bf16.msra.mxu0 %v6034
    %6467 = vmatpush.bf16.msra.mxu0 %v6030
    %6468 = vmatpush.bf16.msra.mxu0 %v6026
    %6469 = vmatpush.bf16.msra.mxu0 %v6022
    %6470 = vmatpush.bf16.msra.mxu0 %v6018
    %6471 = vmatpush.bf16.msra.mxu0 %v6014
    %6472 = vmatpush.bf16.msra.mxu0 %v6010
    %6473 = vmatmul.bf16.gmra.mxu0 %v314
    %v6474 = vpop.f32.mrf.mxu0
    %v6475 = vadd.f32 %v6456, %v6474
    %v6476 = vpop.f32.mrf.mxu0
    %v6477 = vadd.f32 %v6458, %v6476
    %6478 = vmatmul.bf16.gmra.mxu0 %v318
    %v6479 = vpop.f32.mrf.mxu0
    %v6480 = vadd.f32 %v6461, %v6479
    %v6481 = vpop.f32.mrf.mxu0
    %v6482 = vadd.f32 %v6463, %v6481
    %6483 = vdwg.mxu0
    %6484 = vmatpush.bf16.msra.mxu0 %v6070
    %6485 = vmatpush.bf16.msra.mxu0 %v6066
    %6486 = vmatpush.bf16.msra.mxu0 %v6062
    %6487 = vmatpush.bf16.msra.mxu0 %v6058
    %6488 = vmatpush.bf16.msra.mxu0 %v6054
    %6489 = vmatpush.bf16.msra.mxu0 %v6050
    %6490 = vmatpush.bf16.msra.mxu0 %v6046
    %6491 = vmatpush.bf16.msra.mxu0 %v6042
    %6492 = vmatmul.bf16.gmra.mxu0 %v315
    %v6493 = vpop.f32.mrf.mxu0
    %v6494 = vadd.f32 %v6475, %v6493
    %v6495 = vpop.f32.mrf.mxu0
    %v6496 = vadd.f32 %v6477, %v6495
    %6497 = vmatmul.bf16.gmra.mxu0 %v319
    %v6498 = vpop.f32.mrf.mxu0
    %v6499 = vadd.f32 %v6480, %v6498
    %v6500 = vpop.f32.mrf.mxu0
    %v6501 = vadd.f32 %v6482, %v6500
    %6502 = vdwg.mxu0
    %v6631 = vunpack.c.l.b16 %v5303
    %v6632 = vunpack.c.h.b16 %v5303
    %v6633 = vunpack.c.l.b16 %v5304
    %v6634 = vunpack.c.h.b16 %v5304
    %v6635 = vunpack.c.l.b16 %v5305
    %v6636 = vunpack.c.h.b16 %v5305
    %v6637 = vunpack.c.l.b16 %v5306
    %v6638 = vunpack.c.h.b16 %v5306
    %v6639 = vunpack.c.l.b16 %v5307
    %v6640 = vunpack.c.h.b16 %v5307
    %v6641 = vunpack.c.l.b16 %v5308
    %v6642 = vunpack.c.h.b16 %v5308
    %v6643 = vunpack.c.l.b16 %v5309
    %v6644 = vunpack.c.h.b16 %v5309
    %v6645 = vunpack.c.l.b16 %v5310
    %v6646 = vunpack.c.h.b16 %v5310
    %v6647 = vunpack.c.l.b16 %v5311
    %v6648 = vunpack.c.h.b16 %v5311
    %v6649 = vunpack.c.l.b16 %v5312
    %v6650 = vunpack.c.h.b16 %v5312
    %v6651 = vunpack.c.l.b16 %v5313
    %v6652 = vunpack.c.h.b16 %v5313
    %v6653 = vunpack.c.l.b16 %v5314
    %v6654 = vunpack.c.h.b16 %v5314
    %v6655 = vunpack.c.l.b16 %v5315
    %v6656 = vunpack.c.h.b16 %v5315
    %v6657 = vunpack.c.l.b16 %v5316
    %v6658 = vunpack.c.h.b16 %v5316
    %v6659 = vunpack.c.l.b16 %v5317
    %v6660 = vunpack.c.h.b16 %v5317
    %v6661 = vunpack.c.l.b16 %v5318
    %v6662 = vunpack.c.h.b16 %v5318
    %v6663 = vunpack.c.l.b16 %v5319
    %v6664 = vunpack.c.h.b16 %v5319
    %v6665 = vunpack.c.l.b16 %v5320
    %v6666 = vunpack.c.h.b16 %v5320
    %v6667 = vunpack.c.l.b16 %v5321
    %v6668 = vunpack.c.h.b16 %v5321
    %v6669 = vunpack.c.l.b16 %v5322
    %v6670 = vunpack.c.h.b16 %v5322
    %v6671 = vunpack.c.l.b16 %v5323
    %v6672 = vunpack.c.h.b16 %v5323
    %v6673 = vunpack.c.l.b16 %v5324
    %v6674 = vunpack.c.h.b16 %v5324
    %v6675 = vunpack.c.l.b16 %v5325
    %v6676 = vunpack.c.h.b16 %v5325
    %v6677 = vunpack.c.l.b16 %v5326
    %v6678 = vunpack.c.h.b16 %v5326
    %v6679 = vunpack.c.l.b16 %v5327
    %v6680 = vunpack.c.h.b16 %v5327
    %v6681 = vunpack.c.l.b16 %v5328
    %v6682 = vunpack.c.h.b16 %v5328
    %v6683 = vunpack.c.l.b16 %v5329
    %v6684 = vunpack.c.h.b16 %v5329
    %v6685 = vunpack.c.l.b16 %v5330
    %v6686 = vunpack.c.h.b16 %v5330
    %v6687 = vunpack.c.l.b16 %v5331
    %v6688 = vunpack.c.h.b16 %v5331
    %v6689 = vunpack.c.l.b16 %v5332
    %v6690 = vunpack.c.h.b16 %v5332
    %v6691 = vunpack.c.l.b16 %v5333
    %v6692 = vunpack.c.h.b16 %v5333
    %v6693 = vunpack.c.l.b16 %v5334
    %v6694 = vunpack.c.h.b16 %v5334
    %v6695 = vunpack.c.l.b16 %v5335
    %v6696 = vunpack.c.h.b16 %v5335
    %v6697 = vunpack.c.l.b16 %v5336
    %v6698 = vunpack.c.h.b16 %v5336
    %v6699 = vunpack.c.l.b16 %v5337
    %v6700 = vunpack.c.h.b16 %v5337
    %v6701 = vunpack.c.l.b16 %v5338
    %v6702 = vunpack.c.h.b16 %v5338
    %v6703 = vunpack.c.l.b16 %v5339
    %v6704 = vunpack.c.h.b16 %v5339
    %v6705 = vunpack.c.l.b16 %v5340
    %v6706 = vunpack.c.h.b16 %v5340
    %v6707 = vunpack.c.l.b16 %v5341
    %v6708 = vunpack.c.h.b16 %v5341
    %v6709 = vunpack.c.l.b16 %v5342
    %v6710 = vunpack.c.h.b16 %v5342
    %v6711 = vunpack.c.l.b16 %v5343
    %v6712 = vunpack.c.h.b16 %v5343
    %v6713 = vunpack.c.l.b16 %v5344
    %v6714 = vunpack.c.h.b16 %v5344
    %v6715 = vunpack.c.l.b16 %v5345
    %v6716 = vunpack.c.h.b16 %v5345
    %v6717 = vunpack.c.l.b16 %v5346
    %v6718 = vunpack.c.h.b16 %v5346
    %v6719 = vunpack.c.l.b16 %v5347
    %v6720 = vunpack.c.h.b16 %v5347
    %v6721 = vunpack.c.l.b16 %v5348
    %v6722 = vunpack.c.h.b16 %v5348
    %v6723 = vunpack.c.l.b16 %v5349
    %v6724 = vunpack.c.h.b16 %v5349
    %v6725 = vunpack.c.l.b16 %v5350
    %v6726 = vunpack.c.h.b16 %v5350
    %v6727 = vunpack.c.l.b16 %v5351
    %v6728 = vunpack.c.h.b16 %v5351
    %v6729 = vunpack.c.l.b16 %v5352
    %v6730 = vunpack.c.h.b16 %v5352
    %v6731 = vunpack.c.l.b16 %v5353
    %v6732 = vunpack.c.h.b16 %v5353
    %v6733 = vunpack.c.l.b16 %v5354
    %v6734 = vunpack.c.h.b16 %v5354
    %v6735 = vunpack.c.l.b16 %v5355
    %v6736 = vunpack.c.h.b16 %v5355
    %v6737 = vunpack.c.l.b16 %v5356
    %v6738 = vunpack.c.h.b16 %v5356
    %v6739 = vunpack.c.l.b16 %v5357
    %v6740 = vunpack.c.h.b16 %v5357
    %v6741 = vunpack.c.l.b16 %v5358
    %v6742 = vunpack.c.h.b16 %v5358
    %v6743 = vunpack.c.l.b16 %v5359
    %v6744 = vunpack.c.h.b16 %v5359
    %v6745 = vunpack.c.l.b16 %v5360
    %v6746 = vunpack.c.h.b16 %v5360
    %v6747 = vunpack.c.l.b16 %v5361
    %v6748 = vunpack.c.h.b16 %v5361
    %v6749 = vunpack.c.l.b16 %v5362
    %v6750 = vunpack.c.h.b16 %v5362
    %v6751 = vunpack.c.l.b16 %v5363
    %v6752 = vunpack.c.h.b16 %v5363
    %v6753 = vunpack.c.l.b16 %v5364
    %v6754 = vunpack.c.h.b16 %v5364
    %v6755 = vunpack.c.l.b16 %v5365
    %v6756 = vunpack.c.h.b16 %v5365
    %v6757 = vunpack.c.l.b16 %v5366
    %v6758 = vunpack.c.h.b16 %v5366
    %v6759 = vunpack.c.l.b16 %v5367
    %v6760 = vunpack.c.h.b16 %v5367
    %v6761 = vunpack.c.l.b16 %v5368
    %v6762 = vunpack.c.h.b16 %v5368
    %v6763 = vunpack.c.l.b16 %v5369
    %v6764 = vunpack.c.h.b16 %v5369
    %v6765 = vunpack.c.l.b16 %v5370
    %v6766 = vunpack.c.h.b16 %v5370
    %v6767 = vunpack.c.l.b16 %v5371
    %v6768 = vunpack.c.h.b16 %v5371
    %v6769 = vunpack.c.l.b16 %v5372
    %v6770 = vunpack.c.h.b16 %v5372
    %v6771 = vunpack.c.l.b16 %v5373
    %v6772 = vunpack.c.h.b16 %v5373
    %v6773 = vunpack.c.l.b16 %v5374
    %v6774 = vunpack.c.h.b16 %v5374
    %v6775 = vunpack.c.l.b16 %v5375
    %v6776 = vunpack.c.h.b16 %v5375
    %v6777 = vunpack.c.l.b16 %v5376
    %v6778 = vunpack.c.h.b16 %v5376
    %v6779 = vunpack.c.l.b16 %v5377
    %v6780 = vunpack.c.h.b16 %v5377
    %v6781 = vunpack.c.l.b16 %v5378
    %v6782 = vunpack.c.h.b16 %v5378
    %v6783 = vunpack.c.l.b16 %v5379
    %v6784 = vunpack.c.h.b16 %v5379
    %v6785 = vunpack.c.l.b16 %v5380
    %v6786 = vunpack.c.h.b16 %v5380
    %v6787 = vunpack.c.l.b16 %v5381
    %v6788 = vunpack.c.h.b16 %v5381
    %v6789 = vunpack.c.l.b16 %v5382
    %v6790 = vunpack.c.h.b16 %v5382
    %v6791 = vunpack.c.l.b16 %v5383
    %v6792 = vunpack.c.h.b16 %v5383
    %v6793 = vunpack.c.l.b16 %v5384
    %v6794 = vunpack.c.h.b16 %v5384
    %v6795 = vunpack.c.l.b16 %v5385
    %v6796 = vunpack.c.h.b16 %v5385
    %v6797 = vunpack.c.l.b16 %v5386
    %v6798 = vunpack.c.h.b16 %v5386
    %v6799 = vunpack.c.l.b16 %v5387
    %v6800 = vunpack.c.h.b16 %v5387
    %v6801 = vunpack.c.l.b16 %v5388
    %v6802 = vunpack.c.h.b16 %v5388
    %v6803 = vunpack.c.l.b16 %v5389
    %v6804 = vunpack.c.h.b16 %v5389
    %v6805 = vunpack.c.l.b16 %v5390
    %v6806 = vunpack.c.h.b16 %v5390
    %v6807 = vunpack.c.l.b16 %v5391
    %v6808 = vunpack.c.h.b16 %v5391
    %v6809 = vunpack.c.l.b16 %v5392
    %v6810 = vunpack.c.h.b16 %v5392
    %v6811 = vunpack.c.l.b16 %v5393
    %v6812 = vunpack.c.h.b16 %v5393
    %v6813 = vunpack.c.l.b16 %v5394
    %v6814 = vunpack.c.h.b16 %v5394
    %v6815 = vunpack.c.l.b16 %v5395
    %v6816 = vunpack.c.h.b16 %v5395
    %v6817 = vunpack.c.l.b16 %v5396
    %v6818 = vunpack.c.h.b16 %v5396
    %v6819 = vunpack.c.l.b16 %v5397
    %v6820 = vunpack.c.h.b16 %v5397
    %v6821 = vunpack.c.l.b16 %v5398
    %v6822 = vunpack.c.h.b16 %v5398
    %v6823 = vunpack.c.l.b16 %v5399
    %v6824 = vunpack.c.h.b16 %v5399
    %v6825 = vunpack.c.l.b16 %v5400
    %v6826 = vunpack.c.h.b16 %v5400
    %v6827 = vunpack.c.l.b16 %v5401
    %v6828 = vunpack.c.h.b16 %v5401
    %v6829 = vunpack.c.l.b16 %v5402
    %v6830 = vunpack.c.h.b16 %v5402
    %v6831 = vunpack.c.l.b16 %v5403
    %v6832 = vunpack.c.h.b16 %v5403
    %v6833 = vunpack.c.l.b16 %v5404
    %v6834 = vunpack.c.h.b16 %v5404
    %v6835 = vunpack.c.l.b16 %v5405
    %v6836 = vunpack.c.h.b16 %v5405
    %v6837 = vunpack.c.l.b16 %v5406
    %v6838 = vunpack.c.h.b16 %v5406
    %v6839 = vunpack.c.l.b16 %v5407
    %v6840 = vunpack.c.h.b16 %v5407
    %v6841 = vunpack.c.l.b16 %v5408
    %v6842 = vunpack.c.h.b16 %v5408
    %v6843 = vunpack.c.l.b16 %v5409
    %v6844 = vunpack.c.h.b16 %v5409
    %v6845 = vunpack.c.l.b16 %v5410
    %v6846 = vunpack.c.h.b16 %v5410
    %v6847 = vunpack.c.l.b16 %v5411
    %v6848 = vunpack.c.h.b16 %v5411
    %v6849 = vunpack.c.l.b16 %v5412
    %v6850 = vunpack.c.h.b16 %v5412
    %v6851 = vunpack.c.l.b16 %v5413
    %v6852 = vunpack.c.h.b16 %v5413
    %v6853 = vunpack.c.l.b16 %v5414
    %v6854 = vunpack.c.h.b16 %v5414
    %v6855 = vunpack.c.l.b16 %v5415
    %v6856 = vunpack.c.h.b16 %v5415
    %v6857 = vunpack.c.l.b16 %v5416
    %v6858 = vunpack.c.h.b16 %v5416
    %v6859 = vunpack.c.l.b16 %v5417
    %v6860 = vunpack.c.h.b16 %v5417
    %v6861 = vunpack.c.l.b16 %v5418
    %v6862 = vunpack.c.h.b16 %v5418
    %v6863 = vunpack.c.l.b16 %v5419
    %v6864 = vunpack.c.h.b16 %v5419
    %v6865 = vunpack.c.l.b16 %v5420
    %v6866 = vunpack.c.h.b16 %v5420
    %v6867 = vunpack.c.l.b16 %v5421
    %v6868 = vunpack.c.h.b16 %v5421
    %v6869 = vunpack.c.l.b16 %v5422
    %v6870 = vunpack.c.h.b16 %v5422
    %v6871 = vunpack.c.l.b16 %v5423
    %v6872 = vunpack.c.h.b16 %v5423
    %v6873 = vunpack.c.l.b16 %v5424
    %v6874 = vunpack.c.h.b16 %v5424
    %v6875 = vunpack.c.l.b16 %v5425
    %v6876 = vunpack.c.h.b16 %v5425
    %v6877 = vunpack.c.l.b16 %v5426
    %v6878 = vunpack.c.h.b16 %v5426
    %v6879 = vunpack.c.l.b16 %v5427
    %v6880 = vunpack.c.h.b16 %v5427
    %v6881 = vunpack.c.l.b16 %v5428
    %v6882 = vunpack.c.h.b16 %v5428
    %v6883 = vunpack.c.l.b16 %v5429
    %v6884 = vunpack.c.h.b16 %v5429
    %v6885 = vunpack.c.l.b16 %v5430
    %v6886 = vunpack.c.h.b16 %v5430
    %v6887 = vpack.c.b16 %v6635, %v6631
    %v6888 = vpack.c.b16 %v6636, %v6632
    %v6889 = vpack.c.b16 %v6637, %v6633
    %v6890 = vpack.c.b16 %v6638, %v6634
    %v6891 = vpack.c.b16 %v6643, %v6639
    %v6892 = vpack.c.b16 %v6644, %v6640
    %v6893 = vpack.c.b16 %v6645, %v6641
    %v6894 = vpack.c.b16 %v6646, %v6642
    %v6895 = vpack.c.b16 %v6651, %v6647
    %v6896 = vpack.c.b16 %v6652, %v6648
    %v6897 = vpack.c.b16 %v6653, %v6649
    %v6898 = vpack.c.b16 %v6654, %v6650
    %v6899 = vpack.c.b16 %v6659, %v6655
    %v6900 = vpack.c.b16 %v6660, %v6656
    %v6901 = vpack.c.b16 %v6661, %v6657
    %v6902 = vpack.c.b16 %v6662, %v6658
    %v6903 = vpack.c.b16 %v6667, %v6663
    %v6904 = vpack.c.b16 %v6668, %v6664
    %v6905 = vpack.c.b16 %v6669, %v6665
    %v6906 = vpack.c.b16 %v6670, %v6666
    %v6907 = vpack.c.b16 %v6675, %v6671
    %v6908 = vpack.c.b16 %v6676, %v6672
    %v6909 = vpack.c.b16 %v6677, %v6673
    %v6910 = vpack.c.b16 %v6678, %v6674
    %v6911 = vpack.c.b16 %v6683, %v6679
    %v6912 = vpack.c.b16 %v6684, %v6680
    %v6913 = vpack.c.b16 %v6685, %v6681
    %v6914 = vpack.c.b16 %v6686, %v6682
    %v6915 = vpack.c.b16 %v6691, %v6687
    %v6916 = vpack.c.b16 %v6692, %v6688
    %v6917 = vpack.c.b16 %v6693, %v6689
    %v6918 = vpack.c.b16 %v6694, %v6690
    %v6919 = vpack.c.b16 %v6699, %v6695
    %v6920 = vpack.c.b16 %v6700, %v6696
    %v6921 = vpack.c.b16 %v6701, %v6697
    %v6922 = vpack.c.b16 %v6702, %v6698
    %v6923 = vpack.c.b16 %v6707, %v6703
    %v6924 = vpack.c.b16 %v6708, %v6704
    %v6925 = vpack.c.b16 %v6709, %v6705
    %v6926 = vpack.c.b16 %v6710, %v6706
    %v6927 = vpack.c.b16 %v6715, %v6711
    %v6928 = vpack.c.b16 %v6716, %v6712
    %v6929 = vpack.c.b16 %v6717, %v6713
    %v6930 = vpack.c.b16 %v6718, %v6714
    %v6931 = vpack.c.b16 %v6723, %v6719
    %v6932 = vpack.c.b16 %v6724, %v6720
    %v6933 = vpack.c.b16 %v6725, %v6721
    %v6934 = vpack.c.b16 %v6726, %v6722
    %v6935 = vpack.c.b16 %v6731, %v6727
    %v6936 = vpack.c.b16 %v6732, %v6728
    %v6937 = vpack.c.b16 %v6733, %v6729
    %v6938 = vpack.c.b16 %v6734, %v6730
    %v6939 = vpack.c.b16 %v6739, %v6735
    %v6940 = vpack.c.b16 %v6740, %v6736
    %v6941 = vpack.c.b16 %v6741, %v6737
    %v6942 = vpack.c.b16 %v6742, %v6738
    %v6943 = vpack.c.b16 %v6747, %v6743
    %v6944 = vpack.c.b16 %v6748, %v6744
    %v6945 = vpack.c.b16 %v6749, %v6745
    %v6946 = vpack.c.b16 %v6750, %v6746
    %v6947 = vpack.c.b16 %v6755, %v6751
    %v6948 = vpack.c.b16 %v6756, %v6752
    %v6949 = vpack.c.b16 %v6757, %v6753
    %v6950 = vpack.c.b16 %v6758, %v6754
    %v6951 = vpack.c.b16 %v6763, %v6759
    %v6952 = vpack.c.b16 %v6764, %v6760
    %v6953 = vpack.c.b16 %v6765, %v6761
    %v6954 = vpack.c.b16 %v6766, %v6762
    %v6955 = vpack.c.b16 %v6771, %v6767
    %v6956 = vpack.c.b16 %v6772, %v6768
    %v6957 = vpack.c.b16 %v6773, %v6769
    %v6958 = vpack.c.b16 %v6774, %v6770
    %v6959 = vpack.c.b16 %v6779, %v6775
    %v6960 = vpack.c.b16 %v6780, %v6776
    %v6961 = vpack.c.b16 %v6781, %v6777
    %v6962 = vpack.c.b16 %v6782, %v6778
    %v6963 = vpack.c.b16 %v6787, %v6783
    %v6964 = vpack.c.b16 %v6788, %v6784
    %v6965 = vpack.c.b16 %v6789, %v6785
    %v6966 = vpack.c.b16 %v6790, %v6786
    %v6967 = vpack.c.b16 %v6795, %v6791
    %v6968 = vpack.c.b16 %v6796, %v6792
    %v6969 = vpack.c.b16 %v6797, %v6793
    %v6970 = vpack.c.b16 %v6798, %v6794
    %v6971 = vpack.c.b16 %v6803, %v6799
    %v6972 = vpack.c.b16 %v6804, %v6800
    %v6973 = vpack.c.b16 %v6805, %v6801
    %v6974 = vpack.c.b16 %v6806, %v6802
    %v6975 = vpack.c.b16 %v6811, %v6807
    %v6976 = vpack.c.b16 %v6812, %v6808
    %v6977 = vpack.c.b16 %v6813, %v6809
    %v6978 = vpack.c.b16 %v6814, %v6810
    %v6979 = vpack.c.b16 %v6819, %v6815
    %v6980 = vpack.c.b16 %v6820, %v6816
    %v6981 = vpack.c.b16 %v6821, %v6817
    %v6982 = vpack.c.b16 %v6822, %v6818
    %v6983 = vpack.c.b16 %v6827, %v6823
    %v6984 = vpack.c.b16 %v6828, %v6824
    %v6985 = vpack.c.b16 %v6829, %v6825
    %v6986 = vpack.c.b16 %v6830, %v6826
    %v6987 = vpack.c.b16 %v6835, %v6831
    %v6988 = vpack.c.b16 %v6836, %v6832
    %v6989 = vpack.c.b16 %v6837, %v6833
    %v6990 = vpack.c.b16 %v6838, %v6834
    %v6991 = vpack.c.b16 %v6843, %v6839
    %v6992 = vpack.c.b16 %v6844, %v6840
    %v6993 = vpack.c.b16 %v6845, %v6841
    %v6994 = vpack.c.b16 %v6846, %v6842
    %v6995 = vpack.c.b16 %v6851, %v6847
    %v6996 = vpack.c.b16 %v6852, %v6848
    %v6997 = vpack.c.b16 %v6853, %v6849
    %v6998 = vpack.c.b16 %v6854, %v6850
    %v6999 = vpack.c.b16 %v6859, %v6855
    %v7000 = vpack.c.b16 %v6860, %v6856
    %v7001 = vpack.c.b16 %v6861, %v6857
    %v7002 = vpack.c.b16 %v6862, %v6858
    %v7003 = vpack.c.b16 %v6867, %v6863
    %v7004 = vpack.c.b16 %v6868, %v6864
    %v7005 = vpack.c.b16 %v6869, %v6865
    %v7006 = vpack.c.b16 %v6870, %v6866
    %v7007 = vpack.c.b16 %v6875, %v6871
    %v7008 = vpack.c.b16 %v6876, %v6872
    %v7009 = vpack.c.b16 %v6877, %v6873
    %v7010 = vpack.c.b16 %v6878, %v6874
    %v7011 = vpack.c.b16 %v6883, %v6879
    %v7012 = vpack.c.b16 %v6884, %v6880
    %v7013 = vpack.c.b16 %v6885, %v6881
    %v7014 = vpack.c.b16 %v6886, %v6882
    %7143 = vmatpush.bf16.msra.mxu0 %v6915
    %7144 = vmatpush.bf16.msra.mxu0 %v6911
    %7145 = vmatpush.bf16.msra.mxu0 %v6907
    %7146 = vmatpush.bf16.msra.mxu0 %v6903
    %7147 = vmatpush.bf16.msra.mxu0 %v6899
    %7148 = vmatpush.bf16.msra.mxu0 %v6895
    %7149 = vmatpush.bf16.msra.mxu0 %v6891
    %7150 = vmatpush.bf16.msra.mxu0 %v6887
    %7151 = vmatmul.bf16.gmra.mxu0 %v5295
    %v7152 = vpop.f32.mrf.mxu0
    %v7153 = vadd.f32 %v6266, %v7152
    %v7154 = vpop.f32.mrf.mxu0
    %v7155 = vadd.f32 %v6268, %v7154
    %7156 = vmatmul.bf16.gmra.mxu0 %v5299
    %v7157 = vpop.f32.mrf.mxu0
    %v7158 = vadd.f32 %v6271, %v7157
    %v7159 = vpop.f32.mrf.mxu0
    %v7160 = vadd.f32 %v6273, %v7159
    %7161 = vdwg.mxu0
    %7162 = vmatpush.bf16.msra.mxu0 %v6947
    %7163 = vmatpush.bf16.msra.mxu0 %v6943
    %7164 = vmatpush.bf16.msra.mxu0 %v6939
    %7165 = vmatpush.bf16.msra.mxu0 %v6935
    %7166 = vmatpush.bf16.msra.mxu0 %v6931
    %7167 = vmatpush.bf16.msra.mxu0 %v6927
    %7168 = vmatpush.bf16.msra.mxu0 %v6923
    %7169 = vmatpush.bf16.msra.mxu0 %v6919
    %7170 = vmatmul.bf16.gmra.mxu0 %v5296
    %v7171 = vpop.f32.mrf.mxu0
    %v7172 = vadd.f32 %v7153, %v7171
    %v7173 = vpop.f32.mrf.mxu0
    %v7174 = vadd.f32 %v7155, %v7173
    %7175 = vmatmul.bf16.gmra.mxu0 %v5300
    %v7176 = vpop.f32.mrf.mxu0
    %v7177 = vadd.f32 %v7158, %v7176
    %v7178 = vpop.f32.mrf.mxu0
    %v7179 = vadd.f32 %v7160, %v7178
    %7180 = vdwg.mxu0
    %7181 = vmatpush.bf16.msra.mxu0 %v6979
    %7182 = vmatpush.bf16.msra.mxu0 %v6975
    %7183 = vmatpush.bf16.msra.mxu0 %v6971
    %7184 = vmatpush.bf16.msra.mxu0 %v6967
    %7185 = vmatpush.bf16.msra.mxu0 %v6963
    %7186 = vmatpush.bf16.msra.mxu0 %v6959
    %7187 = vmatpush.bf16.msra.mxu0 %v6955
    %7188 = vmatpush.bf16.msra.mxu0 %v6951
    %7189 = vmatmul.bf16.gmra.mxu0 %v5297
    %v7190 = vpop.f32.mrf.mxu0
    %v7191 = vadd.f32 %v7172, %v7190
    %v7192 = vpop.f32.mrf.mxu0
    %v7193 = vadd.f32 %v7174, %v7192
    %7194 = vmatmul.bf16.gmra.mxu0 %v5301
    %v7195 = vpop.f32.mrf.mxu0
    %v7196 = vadd.f32 %v7177, %v7195
    %v7197 = vpop.f32.mrf.mxu0
    %v7198 = vadd.f32 %v7179, %v7197
    %7199 = vdwg.mxu0
    %7200 = vmatpush.bf16.msra.mxu0 %v7011
    %7201 = vmatpush.bf16.msra.mxu0 %v7007
    %7202 = vmatpush.bf16.msra.mxu0 %v7003
    %7203 = vmatpush.bf16.msra.mxu0 %v6999
    %7204 = vmatpush.bf16.msra.mxu0 %v6995
    %7205 = vmatpush.bf16.msra.mxu0 %v6991
    %7206 = vmatpush.bf16.msra.mxu0 %v6987
    %7207 = vmatpush.bf16.msra.mxu0 %v6983
    %7208 = vmatmul.bf16.gmra.mxu0 %v5298
    %v7209 = vpop.f32.mrf.mxu0
    %v7210 = vadd.f32 %v7191, %v7209
    %v7211 = vpop.f32.mrf.mxu0
    %v7212 = vadd.f32 %v7193, %v7211
    %7213 = vmatmul.bf16.gmra.mxu0 %v5302
    %v7214 = vpop.f32.mrf.mxu0
    %v7215 = vadd.f32 %v7196, %v7214
    %v7216 = vpop.f32.mrf.mxu0
    %v7217 = vadd.f32 %v7198, %v7216
    %7218 = vdwg.mxu0
    %7219 = vmatpush.bf16.msra.mxu0 %v6916
    %7220 = vmatpush.bf16.msra.mxu0 %v6912
    %7221 = vmatpush.bf16.msra.mxu0 %v6908
    %7222 = vmatpush.bf16.msra.mxu0 %v6904
    %7223 = vmatpush.bf16.msra.mxu0 %v6900
    %7224 = vmatpush.bf16.msra.mxu0 %v6896
    %7225 = vmatpush.bf16.msra.mxu0 %v6892
    %7226 = vmatpush.bf16.msra.mxu0 %v6888
    %7227 = vmatmul.bf16.gmra.mxu0 %v5295
    %v7228 = vpop.f32.mrf.mxu0
    %v7229 = vadd.f32 %v6342, %v7228
    %v7230 = vpop.f32.mrf.mxu0
    %v7231 = vadd.f32 %v6344, %v7230
    %7232 = vmatmul.bf16.gmra.mxu0 %v5299
    %v7233 = vpop.f32.mrf.mxu0
    %v7234 = vadd.f32 %v6347, %v7233
    %v7235 = vpop.f32.mrf.mxu0
    %v7236 = vadd.f32 %v6349, %v7235
    %7237 = vdwg.mxu0
    %7238 = vmatpush.bf16.msra.mxu0 %v6948
    %7239 = vmatpush.bf16.msra.mxu0 %v6944
    %7240 = vmatpush.bf16.msra.mxu0 %v6940
    %7241 = vmatpush.bf16.msra.mxu0 %v6936
    %7242 = vmatpush.bf16.msra.mxu0 %v6932
    %7243 = vmatpush.bf16.msra.mxu0 %v6928
    %7244 = vmatpush.bf16.msra.mxu0 %v6924
    %7245 = vmatpush.bf16.msra.mxu0 %v6920
    %7246 = vmatmul.bf16.gmra.mxu0 %v5296
    %v7247 = vpop.f32.mrf.mxu0
    %v7248 = vadd.f32 %v7229, %v7247
    %v7249 = vpop.f32.mrf.mxu0
    %v7250 = vadd.f32 %v7231, %v7249
    %7251 = vmatmul.bf16.gmra.mxu0 %v5300
    %v7252 = vpop.f32.mrf.mxu0
    %v7253 = vadd.f32 %v7234, %v7252
    %v7254 = vpop.f32.mrf.mxu0
    %v7255 = vadd.f32 %v7236, %v7254
    %7256 = vdwg.mxu0
    %7257 = vmatpush.bf16.msra.mxu0 %v6980
    %7258 = vmatpush.bf16.msra.mxu0 %v6976
    %7259 = vmatpush.bf16.msra.mxu0 %v6972
    %7260 = vmatpush.bf16.msra.mxu0 %v6968
    %7261 = vmatpush.bf16.msra.mxu0 %v6964
    %7262 = vmatpush.bf16.msra.mxu0 %v6960
    %7263 = vmatpush.bf16.msra.mxu0 %v6956
    %7264 = vmatpush.bf16.msra.mxu0 %v6952
    %7265 = vmatmul.bf16.gmra.mxu0 %v5297
    %v7266 = vpop.f32.mrf.mxu0
    %v7267 = vadd.f32 %v7248, %v7266
    %v7268 = vpop.f32.mrf.mxu0
    %v7269 = vadd.f32 %v7250, %v7268
    %7270 = vmatmul.bf16.gmra.mxu0 %v5301
    %v7271 = vpop.f32.mrf.mxu0
    %v7272 = vadd.f32 %v7253, %v7271
    %v7273 = vpop.f32.mrf.mxu0
    %v7274 = vadd.f32 %v7255, %v7273
    %7275 = vdwg.mxu0
    %7276 = vmatpush.bf16.msra.mxu0 %v7012
    %7277 = vmatpush.bf16.msra.mxu0 %v7008
    %7278 = vmatpush.bf16.msra.mxu0 %v7004
    %7279 = vmatpush.bf16.msra.mxu0 %v7000
    %7280 = vmatpush.bf16.msra.mxu0 %v6996
    %7281 = vmatpush.bf16.msra.mxu0 %v6992
    %7282 = vmatpush.bf16.msra.mxu0 %v6988
    %7283 = vmatpush.bf16.msra.mxu0 %v6984
    %7284 = vmatmul.bf16.gmra.mxu0 %v5298
    %v7285 = vpop.f32.mrf.mxu0
    %v7286 = vadd.f32 %v7267, %v7285
    %v7287 = vpop.f32.mrf.mxu0
    %v7288 = vadd.f32 %v7269, %v7287
    %7289 = vmatmul.bf16.gmra.mxu0 %v5302
    %v7290 = vpop.f32.mrf.mxu0
    %v7291 = vadd.f32 %v7272, %v7290
    %v7292 = vpop.f32.mrf.mxu0
    %v7293 = vadd.f32 %v7274, %v7292
    %7294 = vdwg.mxu0
    %7295 = vmatpush.bf16.msra.mxu0 %v6917
    %7296 = vmatpush.bf16.msra.mxu0 %v6913
    %7297 = vmatpush.bf16.msra.mxu0 %v6909
    %7298 = vmatpush.bf16.msra.mxu0 %v6905
    %7299 = vmatpush.bf16.msra.mxu0 %v6901
    %7300 = vmatpush.bf16.msra.mxu0 %v6897
    %7301 = vmatpush.bf16.msra.mxu0 %v6893
    %7302 = vmatpush.bf16.msra.mxu0 %v6889
    %7303 = vmatmul.bf16.gmra.mxu0 %v5295
    %v7304 = vpop.f32.mrf.mxu0
    %v7305 = vadd.f32 %v6418, %v7304
    %v7306 = vpop.f32.mrf.mxu0
    %v7307 = vadd.f32 %v6420, %v7306
    %7308 = vmatmul.bf16.gmra.mxu0 %v5299
    %v7309 = vpop.f32.mrf.mxu0
    %v7310 = vadd.f32 %v6423, %v7309
    %v7311 = vpop.f32.mrf.mxu0
    %v7312 = vadd.f32 %v6425, %v7311
    %7313 = vdwg.mxu0
    %7314 = vmatpush.bf16.msra.mxu0 %v6949
    %7315 = vmatpush.bf16.msra.mxu0 %v6945
    %7316 = vmatpush.bf16.msra.mxu0 %v6941
    %7317 = vmatpush.bf16.msra.mxu0 %v6937
    %7318 = vmatpush.bf16.msra.mxu0 %v6933
    %7319 = vmatpush.bf16.msra.mxu0 %v6929
    %7320 = vmatpush.bf16.msra.mxu0 %v6925
    %7321 = vmatpush.bf16.msra.mxu0 %v6921
    %7322 = vmatmul.bf16.gmra.mxu0 %v5296
    %v7323 = vpop.f32.mrf.mxu0
    %v7324 = vadd.f32 %v7305, %v7323
    %v7325 = vpop.f32.mrf.mxu0
    %v7326 = vadd.f32 %v7307, %v7325
    %7327 = vmatmul.bf16.gmra.mxu0 %v5300
    %v7328 = vpop.f32.mrf.mxu0
    %v7329 = vadd.f32 %v7310, %v7328
    %v7330 = vpop.f32.mrf.mxu0
    %v7331 = vadd.f32 %v7312, %v7330
    %7332 = vdwg.mxu0
    %7333 = vmatpush.bf16.msra.mxu0 %v6981
    %7334 = vmatpush.bf16.msra.mxu0 %v6977
    %7335 = vmatpush.bf16.msra.mxu0 %v6973
    %7336 = vmatpush.bf16.msra.mxu0 %v6969
    %7337 = vmatpush.bf16.msra.mxu0 %v6965
    %7338 = vmatpush.bf16.msra.mxu0 %v6961
    %7339 = vmatpush.bf16.msra.mxu0 %v6957
    %7340 = vmatpush.bf16.msra.mxu0 %v6953
    %7341 = vmatmul.bf16.gmra.mxu0 %v5297
    %v7342 = vpop.f32.mrf.mxu0
    %v7343 = vadd.f32 %v7324, %v7342
    %v7344 = vpop.f32.mrf.mxu0
    %v7345 = vadd.f32 %v7326, %v7344
    %7346 = vmatmul.bf16.gmra.mxu0 %v5301
    %v7347 = vpop.f32.mrf.mxu0
    %v7348 = vadd.f32 %v7329, %v7347
    %v7349 = vpop.f32.mrf.mxu0
    %v7350 = vadd.f32 %v7331, %v7349
    %7351 = vdwg.mxu0
    %7352 = vmatpush.bf16.msra.mxu0 %v7013
    %7353 = vmatpush.bf16.msra.mxu0 %v7009
    %7354 = vmatpush.bf16.msra.mxu0 %v7005
    %7355 = vmatpush.bf16.msra.mxu0 %v7001
    %7356 = vmatpush.bf16.msra.mxu0 %v6997
    %7357 = vmatpush.bf16.msra.mxu0 %v6993
    %7358 = vmatpush.bf16.msra.mxu0 %v6989
    %7359 = vmatpush.bf16.msra.mxu0 %v6985
    %7360 = vmatmul.bf16.gmra.mxu0 %v5298
    %v7361 = vpop.f32.mrf.mxu0
    %v7362 = vadd.f32 %v7343, %v7361
    %v7363 = vpop.f32.mrf.mxu0
    %v7364 = vadd.f32 %v7345, %v7363
    %7365 = vmatmul.bf16.gmra.mxu0 %v5302
    %v7366 = vpop.f32.mrf.mxu0
    %v7367 = vadd.f32 %v7348, %v7366
    %v7368 = vpop.f32.mrf.mxu0
    %v7369 = vadd.f32 %v7350, %v7368
    %7370 = vdwg.mxu0
    %7371 = vmatpush.bf16.msra.mxu0 %v6918
    %7372 = vmatpush.bf16.msra.mxu0 %v6914
    %7373 = vmatpush.bf16.msra.mxu0 %v6910
    %7374 = vmatpush.bf16.msra.mxu0 %v6906
    %7375 = vmatpush.bf16.msra.mxu0 %v6902
    %7376 = vmatpush.bf16.msra.mxu0 %v6898
    %7377 = vmatpush.bf16.msra.mxu0 %v6894
    %7378 = vmatpush.bf16.msra.mxu0 %v6890
    %7379 = vmatmul.bf16.gmra.mxu0 %v5295
    %v7380 = vpop.f32.mrf.mxu0
    %v7381 = vadd.f32 %v6494, %v7380
    %v7382 = vpop.f32.mrf.mxu0
    %v7383 = vadd.f32 %v6496, %v7382
    %7384 = vmatmul.bf16.gmra.mxu0 %v5299
    %v7385 = vpop.f32.mrf.mxu0
    %v7386 = vadd.f32 %v6499, %v7385
    %v7387 = vpop.f32.mrf.mxu0
    %v7388 = vadd.f32 %v6501, %v7387
    %7389 = vdwg.mxu0
    %7390 = vmatpush.bf16.msra.mxu0 %v6950
    %7391 = vmatpush.bf16.msra.mxu0 %v6946
    %7392 = vmatpush.bf16.msra.mxu0 %v6942
    %7393 = vmatpush.bf16.msra.mxu0 %v6938
    %7394 = vmatpush.bf16.msra.mxu0 %v6934
    %7395 = vmatpush.bf16.msra.mxu0 %v6930
    %7396 = vmatpush.bf16.msra.mxu0 %v6926
    %7397 = vmatpush.bf16.msra.mxu0 %v6922
    %7398 = vmatmul.bf16.gmra.mxu0 %v5296
    %v7399 = vpop.f32.mrf.mxu0
    %v7400 = vadd.f32 %v7381, %v7399
    %v7401 = vpop.f32.mrf.mxu0
    %v7402 = vadd.f32 %v7383, %v7401
    %7403 = vmatmul.bf16.gmra.mxu0 %v5300
    %v7404 = vpop.f32.mrf.mxu0
    %v7405 = vadd.f32 %v7386, %v7404
    %v7406 = vpop.f32.mrf.mxu0
    %v7407 = vadd.f32 %v7388, %v7406
    %7408 = vdwg.mxu0
    %7409 = vmatpush.bf16.msra.mxu0 %v6982
    %7410 = vmatpush.bf16.msra.mxu0 %v6978
    %7411 = vmatpush.bf16.msra.mxu0 %v6974
    %7412 = vmatpush.bf16.msra.mxu0 %v6970
    %7413 = vmatpush.bf16.msra.mxu0 %v6966
    %7414 = vmatpush.bf16.msra.mxu0 %v6962
    %7415 = vmatpush.bf16.msra.mxu0 %v6958
    %7416 = vmatpush.bf16.msra.mxu0 %v6954
    %7417 = vmatmul.bf16.gmra.mxu0 %v5297
    %v7418 = vpop.f32.mrf.mxu0
    %v7419 = vadd.f32 %v7400, %v7418
    %v7420 = vpop.f32.mrf.mxu0
    %v7421 = vadd.f32 %v7402, %v7420
    %7422 = vmatmul.bf16.gmra.mxu0 %v5301
    %v7423 = vpop.f32.mrf.mxu0
    %v7424 = vadd.f32 %v7405, %v7423
    %v7425 = vpop.f32.mrf.mxu0
    %v7426 = vadd.f32 %v7407, %v7425
    %7427 = vdwg.mxu0
    %7428 = vmatpush.bf16.msra.mxu0 %v7014
    %7429 = vmatpush.bf16.msra.mxu0 %v7010
    %7430 = vmatpush.bf16.msra.mxu0 %v7006
    %7431 = vmatpush.bf16.msra.mxu0 %v7002
    %7432 = vmatpush.bf16.msra.mxu0 %v6998
    %7433 = vmatpush.bf16.msra.mxu0 %v6994
    %7434 = vmatpush.bf16.msra.mxu0 %v6990
    %7435 = vmatpush.bf16.msra.mxu0 %v6986
    %7436 = vmatmul.bf16.gmra.mxu0 %v5298
    %v7437 = vpop.f32.mrf.mxu0
    %v7438 = vadd.f32 %v7419, %v7437
    %v7439 = vpop.f32.mrf.mxu0
    %v7440 = vadd.f32 %v7421, %v7439
    %7441 = vmatmul.bf16.gmra.mxu0 %v5302
    %v7442 = vpop.f32.mrf.mxu0
    %v7443 = vadd.f32 %v7424, %v7442
    %v7444 = vpop.f32.mrf.mxu0
    %v7445 = vadd.f32 %v7426, %v7444
    %7446 = vdwg.mxu0
    %v7447 = vld [vmem:[#allocation23] sm:$0xf]
    %v7449 = vperm.slane %v7447, 0
    %v7450 = vperm.slane %v7447, 1
    %v7451 = vperm.slane %v7447, 2
    %v7452 = vperm.slane %v7447, 3
    %v7457 = vadd.f32 %v7210, %v7449
    %v7458 = vadd.f32 %v7286, %v7450
    %v7459 = vadd.f32 %v7362, %v7451
    %v7460 = vadd.f32 %v7438, %v7452
    %v7461 = vadd.f32 %v7212, %v7449
    %v7462 = vadd.f32 %v7288, %v7450
    %v7463 = vadd.f32 %v7364, %v7451
    %v7464 = vadd.f32 %v7440, %v7452
    %v7465 = vadd.f32 %v7215, %v7449
    %v7466 = vadd.f32 %v7291, %v7450
    %v7467 = vadd.f32 %v7367, %v7451
    %v7468 = vadd.f32 %v7443, %v7452
    %v7469 = vadd.f32 %v7217, %v7449
    %v7470 = vadd.f32 %v7293, %v7450
    %v7471 = vadd.f32 %v7369, %v7451
    %v7472 = vadd.f32 %v7445, %v7452
    %7473 = vst [vmem:[#allocation24] sm:$0xff] %v7457
    %7474 = vst [vmem:[#allocation24 + $0x8] sm:$0xff] %v7458
    %7475 = vst [vmem:[#allocation24 + $0x10] sm:$0xff] %v7459
    %7476 = vst [vmem:[#allocation24 + $0x18] sm:$0xff] %v7460
    %7477 = vst [vmem:[#allocation24 + $0x20] sm:$0xff] %v7461
    %7478 = vst [vmem:[#allocation24 + $0x28] sm:$0xff] %v7462
    %7479 = vst [vmem:[#allocation24 + $0x30] sm:$0xff] %v7463
    %7480 = vst [vmem:[#allocation24 + $0x38] sm:$0xff] %v7464
    %7481 = vst [vmem:[#allocation24 + $0x40] sm:$0xff] %v7465
    %7482 = vst [vmem:[#allocation24 + $0x48] sm:$0xff] %v7466
    %7483 = vst [vmem:[#allocation24 + $0x50] sm:$0xff] %v7467
    %7484 = vst [vmem:[#allocation24 + $0x58] sm:$0xff] %v7468
    %7485 = vst [vmem:[#allocation24 + $0x60] sm:$0xff] %v7469
    %7486 = vst [vmem:[#allocation24 + $0x68] sm:$0xff] %v7470
    %7487 = vst [vmem:[#allocation24 + $0x70] sm:$0xff] %v7471
    %7488 = vst [vmem:[#allocation24 + $0x78] sm:$0xff] %v7472
    // Predicated region
    $region106: #{tpu_custom_call.1} parent=1 // pred_check
      _
    $region107: #{tpu_custom_call.1} parent=1 // pred_check_branch
      %7490 = sbr.rel (0) target = $region109
    $region108: #{tpu_custom_call.1} parent=1 // pred_region
      %7492 = vsyncadd [#allocation9], 0
      %s7493 = sshll.u32 [#allocation24], 4
      %s7494 = int_to_ptr.vmem [resolvable:$true] %s7493
      %s7495 = sshll.u32 %s16, 4
      %s7496 = int_to_ptr.hbm [resolvable:$true] %s7495
      %7501 = dma.vmem_to_hbm [thread:$0]  %s7494, 2048, %s7496, [#allocation9], 512, 512, 32
    $region109: #{tpu_custom_call.1} parent=1 // pred_fallthru
      _
    // Predicated region
    $region110: #{tpu_custom_call.1} parent=1 // pred_check
      _
    $region111: #{tpu_custom_call.1} parent=1 // pred_check_branch
      %7503 = sbr.rel (0) target = $region113
    $region112: #{tpu_custom_call.1} parent=1 // pred_region
      %7505 = dma.done [#allocation9], 2048
    $region113: #{tpu_custom_call.1} parent=1 // pred_fallthru
      _
    %7506 = vsyncpa [#allocation8], 1
    %7507 = vsyncpa [#allocation13], 1
    %7508 = vsyncpa [#allocation16], 1
    %7509 = vsyncpa [#allocation19], 1
    %7510 = vsyncpa [#allocation22], 1
    %7511 = vsyncpa [#allocation9], 1
    %7512 = vsyncpa [#allocation10], 1
  %7513 = vsyncmov [#allocation6]
  %s7514 = vpop.sfrf %7513
  %p7515 = scmp.eq.s32.totalorder %s7514, 0
  %p7516 = pneg %p7515
  %7518 = shalt.err (%p7516)
  %s7519 = scalar_lea.sflag [#allocation6], 1
  %7520 = vsyncmov %s7519
  %s7521 = vpop.sfrf %7520
  %p7522 = scmp.eq.s32.totalorder %s7521, 0
  %p7523 = pneg %p7522
  %7525 = shalt.err (%p7523)
  %s7526 = scalar_lea.sflag [#allocation6], 2
  %7527 = vsyncmov %s7526
  %s7528 = vpop.sfrf %7527
  %p7529 = scmp.eq.s32.totalorder %s7528, 0
  %p7530 = pneg %p7529
  %7532 = shalt.err (%p7530)
  %s7533 = scalar_lea.sflag [#allocation6], 3
  %7534 = vsyncmov %s7533
  %s7535 = vpop.sfrf %7534
  %p7536 = scmp.eq.s32.totalorder %s7535, 0
  %p7537 = pneg %p7536
  %7539 = shalt.err (%p7537)

</llo_original>
